<compile_context>
chip_gen: v6e
topology: v6e:2x2x1
jax: 0.10.0
libtpu: 0.0.40
codegen_flags: <defaults>
</compile_context>

<pallas_src>
import jax
import jax.numpy as jnp
from jax import lax
from jax.experimental import pallas as pl
from jax.experimental.pallas import tpu as pltpu

VOCAB = 21        # 20 amino acids + padding token 0
VOCAB_PAD = 32    # pad fused (embedding @ W_ih1 + b1) table rows to a nice size


# ----------------------------------------------------------------------------
# Fused kernel: embedding + 2x (2-layer LSTM, last-step gather) + MLP head
# ----------------------------------------------------------------------------
def fused_forward_kernel(tcr_tok_ref, pep_tok_ref, tcr_len_ref, pep_len_ref,
                         e1_t_ref, whh1_t_ref, wih2_t_ref, whh2_t_ref, b2_t_ref,
                         e1_p_ref, whh1_p_ref, wih2_p_ref, whh2_p_ref, b2_p_ref,
                         wh_t_ref, wh_p_ref, bh_ref, wo_ref, bo_ref,
                         out_ref):
    f32 = jnp.float32
    B = tcr_len_ref.shape[0]
    H = whh1_t_ref.shape[0]
    TB = tcr_tok_ref.shape[0]
    T = TB // B
    V = e1_t_ref.shape[0]

    # --- preamble: embedding + layer-1 input projection hoisted out of the
    # recurrence.  Embedding lookup is expressed as a one-hot matmul against
    # the pre-fused (vocab, 4H) table e1 = emb @ W_ih1^T + (b_ih1 + b_hh1),
    # so ONE (T*B, V) x (V, 4H) matmul per sequence replaces T tiny dependent
    # projections (and the XLA gather / transpose / (T,B,E) HBM activations).
    def input_proj(tok_ref, e1_ref):
        tok = tok_ref[...]                                          # (T*B, 1) int32
        onehot = (tok == lax.broadcasted_iota(jnp.int32, (TB, V), 1)).astype(f32)
        return jnp.dot(onehot, e1_ref[...], preferred_element_type=f32)  # (T*B, 4H)

    xproj_t = input_proj(tcr_tok_ref, e1_t_ref)
    xproj_p = input_proj(pep_tok_ref, e1_p_ref)

    whh1_t = whh1_t_ref[...]
    wih2_t = wih2_t_ref[...]
    whh2_t = whh2_t_ref[...]
    b2_t = b2_t_ref[...]
    whh1_p = whh1_p_ref[...]
    wih2_p = wih2_p_ref[...]
    whh2_p = whh2_p_ref[...]
    b2_p = b2_p_ref[...]

    # (B, 1) selectors for t == len - 1 (precondition: len >= 1).
    tcr_lm1 = tcr_len_ref[...] - 1
    pep_lm1 = pep_len_ref[...] - 1

    def gates_to_hc(gates, c_prev):
        # Two full-width EUP passes, then 32-lane slices (gate order i, f, g, o).
        sg = jax.nn.sigmoid(gates)
        tg = jnp.tanh(gates)
        i = sg[:, 0 * H:1 * H]
        f = sg[:, 1 * H:2 * H]
        g = tg[:, 2 * H:3 * H]
        o = sg[:, 3 * H:4 * H]
        c_new = f * c_prev + i * g
        h_new = o * jnp.tanh(c_new)
        return h_new, c_new

    zeros = jnp.zeros((B, H), f32)
    h1t, c1t, h2t, c2t = zeros, zeros, zeros, zeros
    h1p, c1p, h2p, c2p = zeros, zeros, zeros, zeros
    tcr_last, pep_last = zeros, zeros

    # Fully unrolled (T is tiny and static); TCR/PEP chains interleaved.
    for t in range(T):
        xt_t = xproj_t[t * B:(t + 1) * B, :]
        xt_p = xproj_p[t * B:(t + 1) * B, :]

        # layer 1: only the recurrent matmul remains on the dependent chain.
        g1t = xt_t + jnp.dot(h1t, whh1_t, preferred_element_type=f32)
        g1p = xt_p + jnp.dot(h1p, whh1_p, preferred_element_type=f32)
        h1t, c1t = gates_to_hc(g1t, c1t)
        h1p, c1p = gates_to_hc(g1p, c1p)
        # TODO(synk): inter-layer LSTM dropout is identity at inference; omitted.

        # layer 2
        g2t = (jnp.dot(h1t, wih2_t, preferred_element_type=f32)
               + jnp.dot(h2t, whh2_t, preferred_element_type=f32) + b2_t)
        g2p = (jnp.dot(h1p, wih2_p, preferred_element_type=f32)
               + jnp.dot(h2p, whh2_p, preferred_element_type=f32) + b2_p)
        h2t, c2t = gates_to_hc(g2t, c2t)
        h2p, c2p = gates_to_hc(g2p, c2p)

        # keep h2 at t == len-1 in vregs; stored once after the loop.
        tcr_last = jnp.where(tcr_lm1 == t, h2t, tcr_last)
        pep_last = jnp.where(pep_lm1 == t, h2p, pep_last)

    # --- MLP head, fused in the same kernel.
    # Linear(2H -> H) over concat(tcr_last, pep_last) written as split halves
    # of the weight matrix (no in-kernel lane concatenate needed).
    h = (jnp.dot(tcr_last, wh_t_ref[...], preferred_element_type=f32)
         + jnp.dot(pep_last, wh_p_ref[...], preferred_element_type=f32)
         + bh_ref[...])
    h = jnp.where(h >= 0, h, 0.01 * h)          # LeakyReLU (default slope 0.01)
    # Dropout is identity in eval mode.
    o = jnp.dot(h, wo_ref[...], preferred_element_type=f32) + bo_ref[...]
    out_ref[...] = jax.nn.sigmoid(o)


def fused_forward(tcr_tok, pep_tok, tcr_lens, pep_lens, p):
    """tcr_tok / pep_tok: (T*B, 1) int32 time-major flattened token ids."""
    B = tcr_lens.shape[0]
    full = lambda shape: pl.BlockSpec(shape, lambda i: (0,) * len(shape))
    in_arrays = [tcr_tok, pep_tok, tcr_lens, pep_lens,
                 p["e1_t"], p["whh1_t"], p["wih2_t"], p["whh2_t"], p["b2_t"],
                 p["e1_p"], p["whh1_p"], p["wih2_p"], p["whh2_p"], p["b2_p"],
                 p["wh_t"], p["wh_p"], p["bh"], p["wo"], p["bo"]]
    in_specs = [full(a.shape) for a in in_arrays]
    return pl.pallas_call(
        fused_forward_kernel,
        out_shape=jax.ShapeDtypeStruct((B, 1), jnp.float32),
        grid=(1,),
        in_specs=in_specs,
        out_specs=full((B, 1)),
        compiler_params=pltpu.CompilerParams(
            dimension_semantics=("arbitrary",)),
    )(*in_arrays)


# ----------------------------------------------------------------------------
# Parameter construction (deterministic, PyTorch shapes, then pre-fused)
# ----------------------------------------------------------------------------
def init_params(key, E, H):
    keys = iter(jax.random.split(key, 32))
    k_lstm = 1.0 / jnp.sqrt(H)

    def uni(shape, k):
        return jax.random.uniform(next(keys), shape, jnp.float32, -k, k)

    def make_embedding():
        tbl = jax.random.normal(next(keys), (VOCAB, E), jnp.float32)
        return tbl.at[0].set(0.0)                   # padding_idx = 0

    def make_lstm(E_in):
        # PyTorch shapes: W_ih (4H, in), W_hh (4H, H), biases (4H,)
        return dict(
            wih1=uni((4 * H, E_in), k_lstm), whh1=uni((4 * H, H), k_lstm),
            b1=uni((4 * H,), k_lstm) + uni((4 * H,), k_lstm),
            wih2=uni((4 * H, H), k_lstm), whh2=uni((4 * H, H), k_lstm),
            b2=uni((4 * H,), k_lstm) + uni((4 * H,), k_lstm))

    def fold(emb, lstm):
        # Fuse embedding + layer-1 input projection + layer-1 bias into one
        # (padded-vocab, 4H) table: row v = emb[v] @ W_ih1^T + b1.
        e1 = emb @ lstm["wih1"].T + lstm["b1"][None, :]
        e1 = jnp.pad(e1, ((0, VOCAB_PAD - VOCAB), (0, 0)))
        return dict(e1=e1, whh1=lstm["whh1"].T, wih2=lstm["wih2"].T,
                    whh2=lstm["whh2"].T, b2=lstm["b2"][None, :])

    tcr = fold(make_embedding(), make_lstm(E))
    pep = fold(make_embedding(), make_lstm(E))

    k_h = 1.0 / jnp.sqrt(2 * H)
    wh = uni((H, 2 * H), k_h)                       # PyTorch (out, in)
    bh = uni((H,), k_h)
    k_o = 1.0 / jnp.sqrt(H)
    wo = uni((1, H), k_o)
    bo = uni((1,), k_o)
    whT = wh.T                                      # (2H, H)

    return {
        "e1_t": tcr["e1"], "whh1_t": tcr["whh1"], "wih2_t": tcr["wih2"],
        "whh2_t": tcr["whh2"], "b2_t": tcr["b2"],
        "e1_p": pep["e1"], "whh1_p": pep["whh1"], "wih2_p": pep["wih2"],
        "whh2_p": pep["whh2"], "b2_p": pep["b2"],
        "wh_t": whT[:H], "wh_p": whT[H:], "bh": bh[None, :],
        "wo": wo.T, "bo": bo[None, :],
    }


# ----------------------------------------------------------------------------
# Full forward pass: only trivial int-token reshaping happens outside the kernel
# ----------------------------------------------------------------------------
@jax.jit
def forward(params, tcrs, tcr_lens, peps, pep_lens):
    B, T_t = tcrs.shape
    _, T_p = peps.shape
    T = max(T_t, T_p)                # static under jit

    def prep(tokens):
        pad = T - tokens.shape[1]
        if pad:
            tokens = jnp.pad(tokens, ((0, 0), (0, pad)))   # pad with token 0
        # time-major flatten: row t*B + b holds token (b, t)
        return tokens.T.reshape(T * B, 1).astype(jnp.int32)

    return fused_forward(prep(tcrs), prep(peps),
                         tcr_lens.astype(jnp.int32)[:, None],
                         pep_lens.astype(jnp.int32)[:, None],
                         params)


if __name__ == "__main__":
    B, E, H = 4, 32, 32
    T_TCR, T_PEP = 12, 8

    key = jax.random.PRNGKey(0)
    k_par, k_tcr, k_pep, k_lt, k_lp = jax.random.split(key, 5)
    params = init_params(k_par, E, H)

    tcr_lens = jax.random.randint(k_lt, (B,), 2, T_TCR + 1, dtype=jnp.int32)
    pep_lens = jax.random.randint(k_lp, (B,), 2, T_PEP + 1, dtype=jnp.int32)

    tcrs = jax.random.randint(k_tcr, (B, T_TCR), 1, 21, dtype=jnp.int32)
    peps = jax.random.randint(k_pep, (B, T_PEP), 1, 21, dtype=jnp.int32)
    # zero out (padding token 0) positions beyond each sequence length
    tcrs = jnp.where(jnp.arange(T_TCR)[None, :] < tcr_lens[:, None], tcrs, 0)
    peps = jnp.where(jnp.arange(T_PEP)[None, :] < pep_lens[:, None], peps, 0)

    out = forward(params, tcrs, tcr_lens, peps, pep_lens)
    out = jax.block_until_ready(out)
    assert out.shape == (B, 1)
    assert bool(jnp.all((out >= 0.0) & (out <= 1.0)))
    print("KERNEL_OK")
</pallas_src>

<mosaic_0001>
module attributes {stable_mosaic.version = 11 : i64} {
  func.func @fused_forward_kernel(%arg0: i32, %arg1: memref<48x1xi32, #tpu.memory_space<vmem>>, %arg2: memref<48x1xi32, #tpu.memory_space<vmem>>, %arg3: memref<4x1xi32, #tpu.memory_space<vmem>>, %arg4: memref<4x1xi32, #tpu.memory_space<vmem>>, %arg5: memref<32x128xf32, #tpu.memory_space<vmem>>, %arg6: memref<32x128xf32, #tpu.memory_space<vmem>>, %arg7: memref<32x128xf32, #tpu.memory_space<vmem>>, %arg8: memref<32x128xf32, #tpu.memory_space<vmem>>, %arg9: memref<1x128xf32, #tpu.memory_space<vmem>>, %arg10: memref<32x128xf32, #tpu.memory_space<vmem>>, %arg11: memref<32x128xf32, #tpu.memory_space<vmem>>, %arg12: memref<32x128xf32, #tpu.memory_space<vmem>>, %arg13: memref<32x128xf32, #tpu.memory_space<vmem>>, %arg14: memref<1x128xf32, #tpu.memory_space<vmem>>, %arg15: memref<32x32xf32, #tpu.memory_space<vmem>>, %arg16: memref<32x32xf32, #tpu.memory_space<vmem>>, %arg17: memref<1x32xf32, #tpu.memory_space<vmem>>, %arg18: memref<32x1xf32, #tpu.memory_space<vmem>>, %arg19: memref<1x1xf32, #tpu.memory_space<vmem>>, %arg20: memref<4x1xf32, #tpu.memory_space<vmem>>) attributes {dimension_semantics = [#tpu.dimension_semantics<arbitrary>], iteration_bounds = array<i64: 1>, scalar_prefetch = 0 : i64, scratch_operands = 0 : i64, tpu.core_type = #tpu.core_type<tc>, window_params = [{pipeline_mode = #tpu.pipeline_mode<synchronous>, transform_indices = @transform_0, window_bounds = array<i64: 48, 1>}, {pipeline_mode = #tpu.pipeline_mode<synchronous>, transform_indices = @transform_1, window_bounds = array<i64: 48, 1>}, {pipeline_mode = #tpu.pipeline_mode<synchronous>, transform_indices = @transform_2, window_bounds = array<i64: 4, 1>}, {pipeline_mode = #tpu.pipeline_mode<synchronous>, transform_indices = @transform_3, window_bounds = array<i64: 4, 1>}, {pipeline_mode = #tpu.pipeline_mode<synchronous>, transform_indices = @transform_4, window_bounds = array<i64: 32, 128>}, {pipeline_mode = #tpu.pipeline_mode<synchronous>, transform_indices = @transform_5, window_bounds = array<i64: 32, 128>}, {pipeline_mode = #tpu.pipeline_mode<synchronous>, transform_indices = @transform_6, window_bounds = array<i64: 32, 128>}, {pipeline_mode = #tpu.pipeline_mode<synchronous>, transform_indices = @transform_7, window_bounds = array<i64: 32, 128>}, {pipeline_mode = #tpu.pipeline_mode<synchronous>, transform_indices = @transform_8, window_bounds = array<i64: 1, 128>}, {pipeline_mode = #tpu.pipeline_mode<synchronous>, transform_indices = @transform_9, window_bounds = array<i64: 32, 128>}, {pipeline_mode = #tpu.pipeline_mode<synchronous>, transform_indices = @transform_10, window_bounds = array<i64: 32, 128>}, {pipeline_mode = #tpu.pipeline_mode<synchronous>, transform_indices = @transform_11, window_bounds = array<i64: 32, 128>}, {pipeline_mode = #tpu.pipeline_mode<synchronous>, transform_indices = @transform_12, window_bounds = array<i64: 32, 128>}, {pipeline_mode = #tpu.pipeline_mode<synchronous>, transform_indices = @transform_13, window_bounds = array<i64: 1, 128>}, {pipeline_mode = #tpu.pipeline_mode<synchronous>, transform_indices = @transform_14, window_bounds = array<i64: 32, 32>}, {pipeline_mode = #tpu.pipeline_mode<synchronous>, transform_indices = @transform_15, window_bounds = array<i64: 32, 32>}, {pipeline_mode = #tpu.pipeline_mode<synchronous>, transform_indices = @transform_16, window_bounds = array<i64: 1, 32>}, {pipeline_mode = #tpu.pipeline_mode<synchronous>, transform_indices = @transform_17, window_bounds = array<i64: 32, 1>}, {pipeline_mode = #tpu.pipeline_mode<synchronous>, transform_indices = @transform_18, window_bounds = array<i64: 1, 1>}, {pipeline_mode = #tpu.pipeline_mode<synchronous>, transform_indices = @transform_19, window_bounds = array<i64: 4, 1>}]} {
    %c0 = arith.constant 0 : index
    %c0_0 = arith.constant 0 : index
    %0 = vector.load %arg1[%c0, %c0_0] : memref<48x1xi32, #tpu.memory_space<vmem>>, vector<48x1xi32>
    %1 = tpu.iota {dimensions = array<i32: 1>} : vector<48x32xi32>
    %2 = vector.broadcast %0 : vector<48x1xi32> to vector<48x32xi32>
    %3 = arith.cmpi eq, %2, %1 : vector<48x32xi32>
    %4 = arith.extui %3 : vector<48x32xi1> to vector<48x32xi32>
    %5 = arith.sitofp %4 : vector<48x32xi32> to vector<48x32xf32>
    %c0_1 = arith.constant 0 : index
    %c0_2 = arith.constant 0 : index
    %6 = vector.load %arg5[%c0_1, %c0_2] : memref<32x128xf32, #tpu.memory_space<vmem>>, vector<32x128xf32>
    %cst = arith.constant dense<0.000000e+00> : vector<48x128xf32>
    %7 = tpu.matmul %5, %6, %cst {dimension_numbers = #tpu.dot_dimension_numbers<[1], [0], [0], [1], [0, 0, 1, 1], [], []>} : vector<48x32xf32>, vector<32x128xf32>, vector<48x128xf32> -> vector<48x128xf32>
    %c0_3 = arith.constant 0 : index
    %c0_4 = arith.constant 0 : index
    %8 = vector.load %arg2[%c0_3, %c0_4] : memref<48x1xi32, #tpu.memory_space<vmem>>, vector<48x1xi32>
    %9 = tpu.iota {dimensions = array<i32: 1>} : vector<48x32xi32>
    %10 = vector.broadcast %8 : vector<48x1xi32> to vector<48x32xi32>
    %11 = arith.cmpi eq, %10, %9 : vector<48x32xi32>
    %12 = arith.extui %11 : vector<48x32xi1> to vector<48x32xi32>
    %13 = arith.sitofp %12 : vector<48x32xi32> to vector<48x32xf32>
    %c0_5 = arith.constant 0 : index
    %c0_6 = arith.constant 0 : index
    %14 = vector.load %arg10[%c0_5, %c0_6] : memref<32x128xf32, #tpu.memory_space<vmem>>, vector<32x128xf32>
    %cst_7 = arith.constant dense<0.000000e+00> : vector<48x128xf32>
    %15 = tpu.matmul %13, %14, %cst_7 {dimension_numbers = #tpu.dot_dimension_numbers<[1], [0], [0], [1], [0, 0, 1, 1], [], []>} : vector<48x32xf32>, vector<32x128xf32>, vector<48x128xf32> -> vector<48x128xf32>
    %c0_8 = arith.constant 0 : index
    %c0_9 = arith.constant 0 : index
    %16 = vector.load %arg6[%c0_8, %c0_9] : memref<32x128xf32, #tpu.memory_space<vmem>>, vector<32x128xf32>
    %c0_10 = arith.constant 0 : index
    %c0_11 = arith.constant 0 : index
    %17 = vector.load %arg7[%c0_10, %c0_11] : memref<32x128xf32, #tpu.memory_space<vmem>>, vector<32x128xf32>
    %c0_12 = arith.constant 0 : index
    %c0_13 = arith.constant 0 : index
    %18 = vector.load %arg8[%c0_12, %c0_13] : memref<32x128xf32, #tpu.memory_space<vmem>>, vector<32x128xf32>
    %c0_14 = arith.constant 0 : index
    %c0_15 = arith.constant 0 : index
    %19 = vector.load %arg9[%c0_14, %c0_15] : memref<1x128xf32, #tpu.memory_space<vmem>>, vector<1x128xf32>
    %c0_16 = arith.constant 0 : index
    %c0_17 = arith.constant 0 : index
    %20 = vector.load %arg11[%c0_16, %c0_17] : memref<32x128xf32, #tpu.memory_space<vmem>>, vector<32x128xf32>
    %c0_18 = arith.constant 0 : index
    %c0_19 = arith.constant 0 : index
    %21 = vector.load %arg12[%c0_18, %c0_19] : memref<32x128xf32, #tpu.memory_space<vmem>>, vector<32x128xf32>
    %c0_20 = arith.constant 0 : index
    %c0_21 = arith.constant 0 : index
    %22 = vector.load %arg13[%c0_20, %c0_21] : memref<32x128xf32, #tpu.memory_space<vmem>>, vector<32x128xf32>
    %c0_22 = arith.constant 0 : index
    %c0_23 = arith.constant 0 : index
    %23 = vector.load %arg14[%c0_22, %c0_23] : memref<1x128xf32, #tpu.memory_space<vmem>>, vector<1x128xf32>
    %c0_24 = arith.constant 0 : index
    %c0_25 = arith.constant 0 : index
    %24 = vector.load %arg3[%c0_24, %c0_25] : memref<4x1xi32, #tpu.memory_space<vmem>>, vector<4x1xi32>
    %c1_i32 = arith.constant 1 : i32
    %25 = vector.broadcast %c1_i32 : i32 to vector<4x1xi32>
    %26 = arith.subi %24, %25 : vector<4x1xi32>
    %c0_26 = arith.constant 0 : index
    %c0_27 = arith.constant 0 : index
    %27 = vector.load %arg4[%c0_26, %c0_27] : memref<4x1xi32, #tpu.memory_space<vmem>>, vector<4x1xi32>
    %c1_i32_28 = arith.constant 1 : i32
    %28 = vector.broadcast %c1_i32_28 : i32 to vector<4x1xi32>
    %29 = arith.subi %27, %28 : vector<4x1xi32>
    %cst_29 = arith.constant 0.000000e+00 : f32
    %30 = vector.broadcast %cst_29 : f32 to vector<4x32xf32>
    %31 = vector.extract_strided_slice %7 {offsets = [0, 0], sizes = [4, 128], strides = [1, 1]} : vector<48x128xf32> to vector<4x128xf32>
    %32 = vector.extract_strided_slice %15 {offsets = [0, 0], sizes = [4, 128], strides = [1, 1]} : vector<48x128xf32> to vector<4x128xf32>
    %cst_30 = arith.constant dense<0.000000e+00> : vector<4x128xf32>
    %33 = tpu.matmul %30, %16, %cst_30 {dimension_numbers = #tpu.dot_dimension_numbers<[1], [0], [0], [1], [0, 0, 1, 1], [], []>} : vector<4x32xf32>, vector<32x128xf32>, vector<4x128xf32> -> vector<4x128xf32>
    %34 = arith.addf %31, %33 : vector<4x128xf32>
    %cst_31 = arith.constant dense<0.000000e+00> : vector<4x128xf32>
    %35 = tpu.matmul %30, %20, %cst_31 {dimension_numbers = #tpu.dot_dimension_numbers<[1], [0], [0], [1], [0, 0, 1, 1], [], []>} : vector<4x32xf32>, vector<32x128xf32>, vector<4x128xf32> -> vector<4x128xf32>
    %36 = arith.addf %32, %35 : vector<4x128xf32>
    %37 = arith.negf %34 : vector<4x128xf32>
    %38 = math.exp %37 : vector<4x128xf32>
    %cst_32 = arith.constant 1.000000e+00 : f32
    %39 = vector.broadcast %cst_32 : f32 to vector<4x128xf32>
    %40 = arith.addf %39, %38 : vector<4x128xf32>
    %41 = arith.divf %39, %40 : vector<4x128xf32>
    %42 = math.tanh %34 : vector<4x128xf32>
    %43 = vector.extract_strided_slice %41 {offsets = [0, 0], sizes = [4, 32], strides = [1, 1]} : vector<4x128xf32> to vector<4x32xf32>
    %44 = vector.extract_strided_slice %41 {offsets = [0, 32], sizes = [4, 32], strides = [1, 1]} : vector<4x128xf32> to vector<4x32xf32>
    %45 = vector.extract_strided_slice %42 {offsets = [0, 64], sizes = [4, 32], strides = [1, 1]} : vector<4x128xf32> to vector<4x32xf32>
    %46 = vector.extract_strided_slice %41 {offsets = [0, 96], sizes = [4, 32], strides = [1, 1]} : vector<4x128xf32> to vector<4x32xf32>
    %47 = arith.mulf %44, %30 : vector<4x32xf32>
    %48 = arith.mulf %43, %45 : vector<4x32xf32>
    %49 = arith.addf %47, %48 : vector<4x32xf32>
    %50 = math.tanh %49 : vector<4x32xf32>
    %51 = arith.mulf %46, %50 : vector<4x32xf32>
    %52 = arith.negf %36 : vector<4x128xf32>
    %53 = math.exp %52 : vector<4x128xf32>
    %cst_33 = arith.constant 1.000000e+00 : f32
    %54 = vector.broadcast %cst_33 : f32 to vector<4x128xf32>
    %55 = arith.addf %54, %53 : vector<4x128xf32>
    %56 = arith.divf %54, %55 : vector<4x128xf32>
    %57 = math.tanh %36 : vector<4x128xf32>
    %58 = vector.extract_strided_slice %56 {offsets = [0, 0], sizes = [4, 32], strides = [1, 1]} : vector<4x128xf32> to vector<4x32xf32>
    %59 = vector.extract_strided_slice %56 {offsets = [0, 32], sizes = [4, 32], strides = [1, 1]} : vector<4x128xf32> to vector<4x32xf32>
    %60 = vector.extract_strided_slice %57 {offsets = [0, 64], sizes = [4, 32], strides = [1, 1]} : vector<4x128xf32> to vector<4x32xf32>
    %61 = vector.extract_strided_slice %56 {offsets = [0, 96], sizes = [4, 32], strides = [1, 1]} : vector<4x128xf32> to vector<4x32xf32>
    %62 = arith.mulf %59, %30 : vector<4x32xf32>
    %63 = arith.mulf %58, %60 : vector<4x32xf32>
    %64 = arith.addf %62, %63 : vector<4x32xf32>
    %65 = math.tanh %64 : vector<4x32xf32>
    %66 = arith.mulf %61, %65 : vector<4x32xf32>
    %cst_34 = arith.constant dense<0.000000e+00> : vector<4x128xf32>
    %67 = tpu.matmul %51, %17, %cst_34 {dimension_numbers = #tpu.dot_dimension_numbers<[1], [0], [0], [1], [0, 0, 1, 1], [], []>} : vector<4x32xf32>, vector<32x128xf32>, vector<4x128xf32> -> vector<4x128xf32>
    %cst_35 = arith.constant dense<0.000000e+00> : vector<4x128xf32>
    %68 = tpu.matmul %30, %18, %cst_35 {dimension_numbers = #tpu.dot_dimension_numbers<[1], [0], [0], [1], [0, 0, 1, 1], [], []>} : vector<4x32xf32>, vector<32x128xf32>, vector<4x128xf32> -> vector<4x128xf32>
    %69 = arith.addf %67, %68 : vector<4x128xf32>
    %70 = vector.broadcast %19 : vector<1x128xf32> to vector<4x128xf32>
    %71 = arith.addf %69, %70 : vector<4x128xf32>
    %cst_36 = arith.constant dense<0.000000e+00> : vector<4x128xf32>
    %72 = tpu.matmul %66, %21, %cst_36 {dimension_numbers = #tpu.dot_dimension_numbers<[1], [0], [0], [1], [0, 0, 1, 1], [], []>} : vector<4x32xf32>, vector<32x128xf32>, vector<4x128xf32> -> vector<4x128xf32>
    %cst_37 = arith.constant dense<0.000000e+00> : vector<4x128xf32>
    %73 = tpu.matmul %30, %22, %cst_37 {dimension_numbers = #tpu.dot_dimension_numbers<[1], [0], [0], [1], [0, 0, 1, 1], [], []>} : vector<4x32xf32>, vector<32x128xf32>, vector<4x128xf32> -> vector<4x128xf32>
    %74 = arith.addf %72, %73 : vector<4x128xf32>
    %75 = vector.broadcast %23 : vector<1x128xf32> to vector<4x128xf32>
    %76 = arith.addf %74, %75 : vector<4x128xf32>
    %77 = arith.negf %71 : vector<4x128xf32>
    %78 = math.exp %77 : vector<4x128xf32>
    %cst_38 = arith.constant 1.000000e+00 : f32
    %79 = vector.broadcast %cst_38 : f32 to vector<4x128xf32>
    %80 = arith.addf %79, %78 : vector<4x128xf32>
    %81 = arith.divf %79, %80 : vector<4x128xf32>
    %82 = math.tanh %71 : vector<4x128xf32>
    %83 = vector.extract_strided_slice %81 {offsets = [0, 0], sizes = [4, 32], strides = [1, 1]} : vector<4x128xf32> to vector<4x32xf32>
    %84 = vector.extract_strided_slice %81 {offsets = [0, 32], sizes = [4, 32], strides = [1, 1]} : vector<4x128xf32> to vector<4x32xf32>
    %85 = vector.extract_strided_slice %82 {offsets = [0, 64], sizes = [4, 32], strides = [1, 1]} : vector<4x128xf32> to vector<4x32xf32>
    %86 = vector.extract_strided_slice %81 {offsets = [0, 96], sizes = [4, 32], strides = [1, 1]} : vector<4x128xf32> to vector<4x32xf32>
    %87 = arith.mulf %84, %30 : vector<4x32xf32>
    %88 = arith.mulf %83, %85 : vector<4x32xf32>
    %89 = arith.addf %87, %88 : vector<4x32xf32>
    %90 = math.tanh %89 : vector<4x32xf32>
    %91 = arith.mulf %86, %90 : vector<4x32xf32>
    %92 = arith.negf %76 : vector<4x128xf32>
    %93 = math.exp %92 : vector<4x128xf32>
    %cst_39 = arith.constant 1.000000e+00 : f32
    %94 = vector.broadcast %cst_39 : f32 to vector<4x128xf32>
    %95 = arith.addf %94, %93 : vector<4x128xf32>
    %96 = arith.divf %94, %95 : vector<4x128xf32>
    %97 = math.tanh %76 : vector<4x128xf32>
    %98 = vector.extract_strided_slice %96 {offsets = [0, 0], sizes = [4, 32], strides = [1, 1]} : vector<4x128xf32> to vector<4x32xf32>
    %99 = vector.extract_strided_slice %96 {offsets = [0, 32], sizes = [4, 32], strides = [1, 1]} : vector<4x128xf32> to vector<4x32xf32>
    %100 = vector.extract_strided_slice %97 {offsets = [0, 64], sizes = [4, 32], strides = [1, 1]} : vector<4x128xf32> to vector<4x32xf32>
    %101 = vector.extract_strided_slice %96 {offsets = [0, 96], sizes = [4, 32], strides = [1, 1]} : vector<4x128xf32> to vector<4x32xf32>
    %102 = arith.mulf %99, %30 : vector<4x32xf32>
    %103 = arith.mulf %98, %100 : vector<4x32xf32>
    %104 = arith.addf %102, %103 : vector<4x32xf32>
    %105 = math.tanh %104 : vector<4x32xf32>
    %106 = arith.mulf %101, %105 : vector<4x32xf32>
    %c0_i32 = arith.constant 0 : i32
    %107 = vector.broadcast %c0_i32 : i32 to vector<4x1xi32>
    %108 = arith.cmpi eq, %26, %107 : vector<4x1xi32>
    %109 = vector.shape_cast %108 : vector<4x1xi1> to vector<4x1xi1>
    %110 = vector.broadcast %109 : vector<4x1xi1> to vector<4x32xi1>
    %111 = arith.select %110, %91, %30 : vector<4x32xi1>, vector<4x32xf32>
    %c0_i32_40 = arith.constant 0 : i32
    %112 = vector.broadcast %c0_i32_40 : i32 to vector<4x1xi32>
    %113 = arith.cmpi eq, %29, %112 : vector<4x1xi32>
    %114 = vector.shape_cast %113 : vector<4x1xi1> to vector<4x1xi1>
    %115 = vector.broadcast %114 : vector<4x1xi1> to vector<4x32xi1>
    %116 = arith.select %115, %106, %30 : vector<4x32xi1>, vector<4x32xf32>
    %117 = vector.extract_strided_slice %7 {offsets = [4, 0], sizes = [4, 128], strides = [1, 1]} : vector<48x128xf32> to vector<4x128xf32>
    %118 = vector.extract_strided_slice %15 {offsets = [4, 0], sizes = [4, 128], strides = [1, 1]} : vector<48x128xf32> to vector<4x128xf32>
    %cst_41 = arith.constant dense<0.000000e+00> : vector<4x128xf32>
    %119 = tpu.matmul %51, %16, %cst_41 {dimension_numbers = #tpu.dot_dimension_numbers<[1], [0], [0], [1], [0, 0, 1, 1], [], []>} : vector<4x32xf32>, vector<32x128xf32>, vector<4x128xf32> -> vector<4x128xf32>
    %120 = arith.addf %117, %119 : vector<4x128xf32>
    %cst_42 = arith.constant dense<0.000000e+00> : vector<4x128xf32>
    %121 = tpu.matmul %66, %20, %cst_42 {dimension_numbers = #tpu.dot_dimension_numbers<[1], [0], [0], [1], [0, 0, 1, 1], [], []>} : vector<4x32xf32>, vector<32x128xf32>, vector<4x128xf32> -> vector<4x128xf32>
    %122 = arith.addf %118, %121 : vector<4x128xf32>
    %123 = arith.negf %120 : vector<4x128xf32>
    %124 = math.exp %123 : vector<4x128xf32>
    %cst_43 = arith.constant 1.000000e+00 : f32
    %125 = vector.broadcast %cst_43 : f32 to vector<4x128xf32>
    %126 = arith.addf %125, %124 : vector<4x128xf32>
    %127 = arith.divf %125, %126 : vector<4x128xf32>
    %128 = math.tanh %120 : vector<4x128xf32>
    %129 = vector.extract_strided_slice %127 {offsets = [0, 0], sizes = [4, 32], strides = [1, 1]} : vector<4x128xf32> to vector<4x32xf32>
    %130 = vector.extract_strided_slice %127 {offsets = [0, 32], sizes = [4, 32], strides = [1, 1]} : vector<4x128xf32> to vector<4x32xf32>
    %131 = vector.extract_strided_slice %128 {offsets = [0, 64], sizes = [4, 32], strides = [1, 1]} : vector<4x128xf32> to vector<4x32xf32>
    %132 = vector.extract_strided_slice %127 {offsets = [0, 96], sizes = [4, 32], strides = [1, 1]} : vector<4x128xf32> to vector<4x32xf32>
    %133 = arith.mulf %130, %49 : vector<4x32xf32>
    %134 = arith.mulf %129, %131 : vector<4x32xf32>
    %135 = arith.addf %133, %134 : vector<4x32xf32>
    %136 = math.tanh %135 : vector<4x32xf32>
    %137 = arith.mulf %132, %136 : vector<4x32xf32>
    %138 = arith.negf %122 : vector<4x128xf32>
    %139 = math.exp %138 : vector<4x128xf32>
    %cst_44 = arith.constant 1.000000e+00 : f32
    %140 = vector.broadcast %cst_44 : f32 to vector<4x128xf32>
    %141 = arith.addf %140, %139 : vector<4x128xf32>
    %142 = arith.divf %140, %141 : vector<4x128xf32>
    %143 = math.tanh %122 : vector<4x128xf32>
    %144 = vector.extract_strided_slice %142 {offsets = [0, 0], sizes = [4, 32], strides = [1, 1]} : vector<4x128xf32> to vector<4x32xf32>
    %145 = vector.extract_strided_slice %142 {offsets = [0, 32], sizes = [4, 32], strides = [1, 1]} : vector<4x128xf32> to vector<4x32xf32>
    %146 = vector.extract_strided_slice %143 {offsets = [0, 64], sizes = [4, 32], strides = [1, 1]} : vector<4x128xf32> to vector<4x32xf32>
    %147 = vector.extract_strided_slice %142 {offsets = [0, 96], sizes = [4, 32], strides = [1, 1]} : vector<4x128xf32> to vector<4x32xf32>
    %148 = arith.mulf %145, %64 : vector<4x32xf32>
    %149 = arith.mulf %144, %146 : vector<4x32xf32>
    %150 = arith.addf %148, %149 : vector<4x32xf32>
    %151 = math.tanh %150 : vector<4x32xf32>
    %152 = arith.mulf %147, %151 : vector<4x32xf32>
    %cst_45 = arith.constant dense<0.000000e+00> : vector<4x128xf32>
    %153 = tpu.matmul %137, %17, %cst_45 {dimension_numbers = #tpu.dot_dimension_numbers<[1], [0], [0], [1], [0, 0, 1, 1], [], []>} : vector<4x32xf32>, vector<32x128xf32>, vector<4x128xf32> -> vector<4x128xf32>
    %cst_46 = arith.constant dense<0.000000e+00> : vector<4x128xf32>
    %154 = tpu.matmul %91, %18, %cst_46 {dimension_numbers = #tpu.dot_dimension_numbers<[1], [0], [0], [1], [0, 0, 1, 1], [], []>} : vector<4x32xf32>, vector<32x128xf32>, vector<4x128xf32> -> vector<4x128xf32>
    %155 = arith.addf %153, %154 : vector<4x128xf32>
    %156 = vector.broadcast %19 : vector<1x128xf32> to vector<4x128xf32>
    %157 = arith.addf %155, %156 : vector<4x128xf32>
    %cst_47 = arith.constant dense<0.000000e+00> : vector<4x128xf32>
    %158 = tpu.matmul %152, %21, %cst_47 {dimension_numbers = #tpu.dot_dimension_numbers<[1], [0], [0], [1], [0, 0, 1, 1], [], []>} : vector<4x32xf32>, vector<32x128xf32>, vector<4x128xf32> -> vector<4x128xf32>
    %cst_48 = arith.constant dense<0.000000e+00> : vector<4x128xf32>
    %159 = tpu.matmul %106, %22, %cst_48 {dimension_numbers = #tpu.dot_dimension_numbers<[1], [0], [0], [1], [0, 0, 1, 1], [], []>} : vector<4x32xf32>, vector<32x128xf32>, vector<4x128xf32> -> vector<4x128xf32>
    %160 = arith.addf %158, %159 : vector<4x128xf32>
    %161 = vector.broadcast %23 : vector<1x128xf32> to vector<4x128xf32>
    %162 = arith.addf %160, %161 : vector<4x128xf32>
    %163 = arith.negf %157 : vector<4x128xf32>
    %164 = math.exp %163 : vector<4x128xf32>
    %cst_49 = arith.constant 1.000000e+00 : f32
    %165 = vector.broadcast %cst_49 : f32 to vector<4x128xf32>
    %166 = arith.addf %165, %164 : vector<4x128xf32>
    %167 = arith.divf %165, %166 : vector<4x128xf32>
    %168 = math.tanh %157 : vector<4x128xf32>
    %169 = vector.extract_strided_slice %167 {offsets = [0, 0], sizes = [4, 32], strides = [1, 1]} : vector<4x128xf32> to vector<4x32xf32>
    %170 = vector.extract_strided_slice %167 {offsets = [0, 32], sizes = [4, 32], strides = [1, 1]} : vector<4x128xf32> to vector<4x32xf32>
    %171 = vector.extract_strided_slice %168 {offsets = [0, 64], sizes = [4, 32], strides = [1, 1]} : vector<4x128xf32> to vector<4x32xf32>
    %172 = vector.extract_strided_slice %167 {offsets = [0, 96], sizes = [4, 32], strides = [1, 1]} : vector<4x128xf32> to vector<4x32xf32>
    %173 = arith.mulf %170, %89 : vector<4x32xf32>
    %174 = arith.mulf %169, %171 : vector<4x32xf32>
    %175 = arith.addf %173, %174 : vector<4x32xf32>
    %176 = math.tanh %175 : vector<4x32xf32>
    %177 = arith.mulf %172, %176 : vector<4x32xf32>
    %178 = arith.negf %162 : vector<4x128xf32>
    %179 = math.exp %178 : vector<4x128xf32>
    %cst_50 = arith.constant 1.000000e+00 : f32
    %180 = vector.broadcast %cst_50 : f32 to vector<4x128xf32>
    %181 = arith.addf %180, %179 : vector<4x128xf32>
    %182 = arith.divf %180, %181 : vector<4x128xf32>
    %183 = math.tanh %162 : vector<4x128xf32>
    %184 = vector.extract_strided_slice %182 {offsets = [0, 0], sizes = [4, 32], strides = [1, 1]} : vector<4x128xf32> to vector<4x32xf32>
    %185 = vector.extract_strided_slice %182 {offsets = [0, 32], sizes = [4, 32], strides = [1, 1]} : vector<4x128xf32> to vector<4x32xf32>
    %186 = vector.extract_strided_slice %183 {offsets = [0, 64], sizes = [4, 32], strides = [1, 1]} : vector<4x128xf32> to vector<4x32xf32>
    %187 = vector.extract_strided_slice %182 {offsets = [0, 96], sizes = [4, 32], strides = [1, 1]} : vector<4x128xf32> to vector<4x32xf32>
    %188 = arith.mulf %185, %104 : vector<4x32xf32>
    %189 = arith.mulf %184, %186 : vector<4x32xf32>
    %190 = arith.addf %188, %189 : vector<4x32xf32>
    %191 = math.tanh %190 : vector<4x32xf32>
    %192 = arith.mulf %187, %191 : vector<4x32xf32>
    %c1_i32_51 = arith.constant 1 : i32
    %193 = vector.broadcast %c1_i32_51 : i32 to vector<4x1xi32>
    %194 = arith.cmpi eq, %26, %193 : vector<4x1xi32>
    %195 = vector.shape_cast %194 : vector<4x1xi1> to vector<4x1xi1>
    %196 = vector.broadcast %195 : vector<4x1xi1> to vector<4x32xi1>
    %197 = arith.select %196, %177, %111 : vector<4x32xi1>, vector<4x32xf32>
    %c1_i32_52 = arith.constant 1 : i32
    %198 = vector.broadcast %c1_i32_52 : i32 to vector<4x1xi32>
    %199 = arith.cmpi eq, %29, %198 : vector<4x1xi32>
    %200 = vector.shape_cast %199 : vector<4x1xi1> to vector<4x1xi1>
    %201 = vector.broadcast %200 : vector<4x1xi1> to vector<4x32xi1>
    %202 = arith.select %201, %192, %116 : vector<4x32xi1>, vector<4x32xf32>
    %203 = vector.extract_strided_slice %7 {offsets = [8, 0], sizes = [4, 128], strides = [1, 1]} : vector<48x128xf32> to vector<4x128xf32>
    %204 = vector.extract_strided_slice %15 {offsets = [8, 0], sizes = [4, 128], strides = [1, 1]} : vector<48x128xf32> to vector<4x128xf32>
    %cst_53 = arith.constant dense<0.000000e+00> : vector<4x128xf32>
    %205 = tpu.matmul %137, %16, %cst_53 {dimension_numbers = #tpu.dot_dimension_numbers<[1], [0], [0], [1], [0, 0, 1, 1], [], []>} : vector<4x32xf32>, vector<32x128xf32>, vector<4x128xf32> -> vector<4x128xf32>
    %206 = arith.addf %203, %205 : vector<4x128xf32>
    %cst_54 = arith.constant dense<0.000000e+00> : vector<4x128xf32>
    %207 = tpu.matmul %152, %20, %cst_54 {dimension_numbers = #tpu.dot_dimension_numbers<[1], [0], [0], [1], [0, 0, 1, 1], [], []>} : vector<4x32xf32>, vector<32x128xf32>, vector<4x128xf32> -> vector<4x128xf32>
    %208 = arith.addf %204, %207 : vector<4x128xf32>
    %209 = arith.negf %206 : vector<4x128xf32>
    %210 = math.exp %209 : vector<4x128xf32>
    %cst_55 = arith.constant 1.000000e+00 : f32
    %211 = vector.broadcast %cst_55 : f32 to vector<4x128xf32>
    %212 = arith.addf %211, %210 : vector<4x128xf32>
    %213 = arith.divf %211, %212 : vector<4x128xf32>
    %214 = math.tanh %206 : vector<4x128xf32>
    %215 = vector.extract_strided_slice %213 {offsets = [0, 0], sizes = [4, 32], strides = [1, 1]} : vector<4x128xf32> to vector<4x32xf32>
    %216 = vector.extract_strided_slice %213 {offsets = [0, 32], sizes = [4, 32], strides = [1, 1]} : vector<4x128xf32> to vector<4x32xf32>
    %217 = vector.extract_strided_slice %214 {offsets = [0, 64], sizes = [4, 32], strides = [1, 1]} : vector<4x128xf32> to vector<4x32xf32>
    %218 = vector.extract_strided_slice %213 {offsets = [0, 96], sizes = [4, 32], strides = [1, 1]} : vector<4x128xf32> to vector<4x32xf32>
    %219 = arith.mulf %216, %135 : vector<4x32xf32>
    %220 = arith.mulf %215, %217 : vector<4x32xf32>
    %221 = arith.addf %219, %220 : vector<4x32xf32>
    %222 = math.tanh %221 : vector<4x32xf32>
    %223 = arith.mulf %218, %222 : vector<4x32xf32>
    %224 = arith.negf %208 : vector<4x128xf32>
    %225 = math.exp %224 : vector<4x128xf32>
    %cst_56 = arith.constant 1.000000e+00 : f32
    %226 = vector.broadcast %cst_56 : f32 to vector<4x128xf32>
    %227 = arith.addf %226, %225 : vector<4x128xf32>
    %228 = arith.divf %226, %227 : vector<4x128xf32>
    %229 = math.tanh %208 : vector<4x128xf32>
    %230 = vector.extract_strided_slice %228 {offsets = [0, 0], sizes = [4, 32], strides = [1, 1]} : vector<4x128xf32> to vector<4x32xf32>
    %231 = vector.extract_strided_slice %228 {offsets = [0, 32], sizes = [4, 32], strides = [1, 1]} : vector<4x128xf32> to vector<4x32xf32>
    %232 = vector.extract_strided_slice %229 {offsets = [0, 64], sizes = [4, 32], strides = [1, 1]} : vector<4x128xf32> to vector<4x32xf32>
    %233 = vector.extract_strided_slice %228 {offsets = [0, 96], sizes = [4, 32], strides = [1, 1]} : vector<4x128xf32> to vector<4x32xf32>
    %234 = arith.mulf %231, %150 : vector<4x32xf32>
    %235 = arith.mulf %230, %232 : vector<4x32xf32>
    %236 = arith.addf %234, %235 : vector<4x32xf32>
    %237 = math.tanh %236 : vector<4x32xf32>
    %238 = arith.mulf %233, %237 : vector<4x32xf32>
    %cst_57 = arith.constant dense<0.000000e+00> : vector<4x128xf32>
    %239 = tpu.matmul %223, %17, %cst_57 {dimension_numbers = #tpu.dot_dimension_numbers<[1], [0], [0], [1], [0, 0, 1, 1], [], []>} : vector<4x32xf32>, vector<32x128xf32>, vector<4x128xf32> -> vector<4x128xf32>
    %cst_58 = arith.constant dense<0.000000e+00> : vector<4x128xf32>
    %240 = tpu.matmul %177, %18, %cst_58 {dimension_numbers = #tpu.dot_dimension_numbers<[1], [0], [0], [1], [0, 0, 1, 1], [], []>} : vector<4x32xf32>, vector<32x128xf32>, vector<4x128xf32> -> vector<4x128xf32>
    %241 = arith.addf %239, %240 : vector<4x128xf32>
    %242 = vector.broadcast %19 : vector<1x128xf32> to vector<4x128xf32>
    %243 = arith.addf %241, %242 : vector<4x128xf32>
    %cst_59 = arith.constant dense<0.000000e+00> : vector<4x128xf32>
    %244 = tpu.matmul %238, %21, %cst_59 {dimension_numbers = #tpu.dot_dimension_numbers<[1], [0], [0], [1], [0, 0, 1, 1], [], []>} : vector<4x32xf32>, vector<32x128xf32>, vector<4x128xf32> -> vector<4x128xf32>
    %cst_60 = arith.constant dense<0.000000e+00> : vector<4x128xf32>
    %245 = tpu.matmul %192, %22, %cst_60 {dimension_numbers = #tpu.dot_dimension_numbers<[1], [0], [0], [1], [0, 0, 1, 1], [], []>} : vector<4x32xf32>, vector<32x128xf32>, vector<4x128xf32> -> vector<4x128xf32>
    %246 = arith.addf %244, %245 : vector<4x128xf32>
    %247 = vector.broadcast %23 : vector<1x128xf32> to vector<4x128xf32>
    %248 = arith.addf %246, %247 : vector<4x128xf32>
    %249 = arith.negf %243 : vector<4x128xf32>
    %250 = math.exp %249 : vector<4x128xf32>
    %cst_61 = arith.constant 1.000000e+00 : f32
    %251 = vector.broadcast %cst_61 : f32 to vector<4x128xf32>
    %252 = arith.addf %251, %250 : vector<4x128xf32>
    %253 = arith.divf %251, %252 : vector<4x128xf32>
    %254 = math.tanh %243 : vector<4x128xf32>
    %255 = vector.extract_strided_slice %253 {offsets = [0, 0], sizes = [4, 32], strides = [1, 1]} : vector<4x128xf32> to vector<4x32xf32>
    %256 = vector.extract_strided_slice %253 {offsets = [0, 32], sizes = [4, 32], strides = [1, 1]} : vector<4x128xf32> to vector<4x32xf32>
    %257 = vector.extract_strided_slice %254 {offsets = [0, 64], sizes = [4, 32], strides = [1, 1]} : vector<4x128xf32> to vector<4x32xf32>
    %258 = vector.extract_strided_slice %253 {offsets = [0, 96], sizes = [4, 32], strides = [1, 1]} : vector<4x128xf32> to vector<4x32xf32>
    %259 = arith.mulf %256, %175 : vector<4x32xf32>
    %260 = arith.mulf %255, %257 : vector<4x32xf32>
    %261 = arith.addf %259, %260 : vector<4x32xf32>
    %262 = math.tanh %261 : vector<4x32xf32>
    %263 = arith.mulf %258, %262 : vector<4x32xf32>
    %264 = arith.negf %248 : vector<4x128xf32>
    %265 = math.exp %264 : vector<4x128xf32>
    %cst_62 = arith.constant 1.000000e+00 : f32
    %266 = vector.broadcast %cst_62 : f32 to vector<4x128xf32>
    %267 = arith.addf %266, %265 : vector<4x128xf32>
    %268 = arith.divf %266, %267 : vector<4x128xf32>
    %269 = math.tanh %248 : vector<4x128xf32>
    %270 = vector.extract_strided_slice %268 {offsets = [0, 0], sizes = [4, 32], strides = [1, 1]} : vector<4x128xf32> to vector<4x32xf32>
    %271 = vector.extract_strided_slice %268 {offsets = [0, 32], sizes = [4, 32], strides = [1, 1]} : vector<4x128xf32> to vector<4x32xf32>
    %272 = vector.extract_strided_slice %269 {offsets = [0, 64], sizes = [4, 32], strides = [1, 1]} : vector<4x128xf32> to vector<4x32xf32>
    %273 = vector.extract_strided_slice %268 {offsets = [0, 96], sizes = [4, 32], strides = [1, 1]} : vector<4x128xf32> to vector<4x32xf32>
    %274 = arith.mulf %271, %190 : vector<4x32xf32>
    %275 = arith.mulf %270, %272 : vector<4x32xf32>
    %276 = arith.addf %274, %275 : vector<4x32xf32>
    %277 = math.tanh %276 : vector<4x32xf32>
    %278 = arith.mulf %273, %277 : vector<4x32xf32>
    %c2_i32 = arith.constant 2 : i32
    %279 = vector.broadcast %c2_i32 : i32 to vector<4x1xi32>
    %280 = arith.cmpi eq, %26, %279 : vector<4x1xi32>
    %281 = vector.shape_cast %280 : vector<4x1xi1> to vector<4x1xi1>
    %282 = vector.broadcast %281 : vector<4x1xi1> to vector<4x32xi1>
    %283 = arith.select %282, %263, %197 : vector<4x32xi1>, vector<4x32xf32>
    %c2_i32_63 = arith.constant 2 : i32
    %284 = vector.broadcast %c2_i32_63 : i32 to vector<4x1xi32>
    %285 = arith.cmpi eq, %29, %284 : vector<4x1xi32>
    %286 = vector.shape_cast %285 : vector<4x1xi1> to vector<4x1xi1>
    %287 = vector.broadcast %286 : vector<4x1xi1> to vector<4x32xi1>
    %288 = arith.select %287, %278, %202 : vector<4x32xi1>, vector<4x32xf32>
    %289 = vector.extract_strided_slice %7 {offsets = [12, 0], sizes = [4, 128], strides = [1, 1]} : vector<48x128xf32> to vector<4x128xf32>
    %290 = vector.extract_strided_slice %15 {offsets = [12, 0], sizes = [4, 128], strides = [1, 1]} : vector<48x128xf32> to vector<4x128xf32>
    %cst_64 = arith.constant dense<0.000000e+00> : vector<4x128xf32>
    %291 = tpu.matmul %223, %16, %cst_64 {dimension_numbers = #tpu.dot_dimension_numbers<[1], [0], [0], [1], [0, 0, 1, 1], [], []>} : vector<4x32xf32>, vector<32x128xf32>, vector<4x128xf32> -> vector<4x128xf32>
    %292 = arith.addf %289, %291 : vector<4x128xf32>
    %cst_65 = arith.constant dense<0.000000e+00> : vector<4x128xf32>
    %293 = tpu.matmul %238, %20, %cst_65 {dimension_numbers = #tpu.dot_dimension_numbers<[1], [0], [0], [1], [0, 0, 1, 1], [], []>} : vector<4x32xf32>, vector<32x128xf32>, vector<4x128xf32> -> vector<4x128xf32>
    %294 = arith.addf %290, %293 : vector<4x128xf32>
    %295 = arith.negf %292 : vector<4x128xf32>
    %296 = math.exp %295 : vector<4x128xf32>
    %cst_66 = arith.constant 1.000000e+00 : f32
    %297 = vector.broadcast %cst_66 : f32 to vector<4x128xf32>
    %298 = arith.addf %297, %296 : vector<4x128xf32>
    %299 = arith.divf %297, %298 : vector<4x128xf32>
    %300 = math.tanh %292 : vector<4x128xf32>
    %301 = vector.extract_strided_slice %299 {offsets = [0, 0], sizes = [4, 32], strides = [1, 1]} : vector<4x128xf32> to vector<4x32xf32>
    %302 = vector.extract_strided_slice %299 {offsets = [0, 32], sizes = [4, 32], strides = [1, 1]} : vector<4x128xf32> to vector<4x32xf32>
    %303 = vector.extract_strided_slice %300 {offsets = [0, 64], sizes = [4, 32], strides = [1, 1]} : vector<4x128xf32> to vector<4x32xf32>
    %304 = vector.extract_strided_slice %299 {offsets = [0, 96], sizes = [4, 32], strides = [1, 1]} : vector<4x128xf32> to vector<4x32xf32>
    %305 = arith.mulf %302, %221 : vector<4x32xf32>
    %306 = arith.mulf %301, %303 : vector<4x32xf32>
    %307 = arith.addf %305, %306 : vector<4x32xf32>
    %308 = math.tanh %307 : vector<4x32xf32>
    %309 = arith.mulf %304, %308 : vector<4x32xf32>
    %310 = arith.negf %294 : vector<4x128xf32>
    %311 = math.exp %310 : vector<4x128xf32>
    %cst_67 = arith.constant 1.000000e+00 : f32
    %312 = vector.broadcast %cst_67 : f32 to vector<4x128xf32>
    %313 = arith.addf %312, %311 : vector<4x128xf32>
    %314 = arith.divf %312, %313 : vector<4x128xf32>
    %315 = math.tanh %294 : vector<4x128xf32>
    %316 = vector.extract_strided_slice %314 {offsets = [0, 0], sizes = [4, 32], strides = [1, 1]} : vector<4x128xf32> to vector<4x32xf32>
    %317 = vector.extract_strided_slice %314 {offsets = [0, 32], sizes = [4, 32], strides = [1, 1]} : vector<4x128xf32> to vector<4x32xf32>
    %318 = vector.extract_strided_slice %315 {offsets = [0, 64], sizes = [4, 32], strides = [1, 1]} : vector<4x128xf32> to vector<4x32xf32>
    %319 = vector.extract_strided_slice %314 {offsets = [0, 96], sizes = [4, 32], strides = [1, 1]} : vector<4x128xf32> to vector<4x32xf32>
    %320 = arith.mulf %317, %236 : vector<4x32xf32>
    %321 = arith.mulf %316, %318 : vector<4x32xf32>
    %322 = arith.addf %320, %321 : vector<4x32xf32>
    %323 = math.tanh %322 : vector<4x32xf32>
    %324 = arith.mulf %319, %323 : vector<4x32xf32>
    %cst_68 = arith.constant dense<0.000000e+00> : vector<4x128xf32>
    %325 = tpu.matmul %309, %17, %cst_68 {dimension_numbers = #tpu.dot_dimension_numbers<[1], [0], [0], [1], [0, 0, 1, 1], [], []>} : vector<4x32xf32>, vector<32x128xf32>, vector<4x128xf32> -> vector<4x128xf32>
    %cst_69 = arith.constant dense<0.000000e+00> : vector<4x128xf32>
    %326 = tpu.matmul %263, %18, %cst_69 {dimension_numbers = #tpu.dot_dimension_numbers<[1], [0], [0], [1], [0, 0, 1, 1], [], []>} : vector<4x32xf32>, vector<32x128xf32>, vector<4x128xf32> -> vector<4x128xf32>
    %327 = arith.addf %325, %326 : vector<4x128xf32>
    %328 = vector.broadcast %19 : vector<1x128xf32> to vector<4x128xf32>
    %329 = arith.addf %327, %328 : vector<4x128xf32>
    %cst_70 = arith.constant dense<0.000000e+00> : vector<4x128xf32>
    %330 = tpu.matmul %324, %21, %cst_70 {dimension_numbers = #tpu.dot_dimension_numbers<[1], [0], [0], [1], [0, 0, 1, 1], [], []>} : vector<4x32xf32>, vector<32x128xf32>, vector<4x128xf32> -> vector<4x128xf32>
    %cst_71 = arith.constant dense<0.000000e+00> : vector<4x128xf32>
    %331 = tpu.matmul %278, %22, %cst_71 {dimension_numbers = #tpu.dot_dimension_numbers<[1], [0], [0], [1], [0, 0, 1, 1], [], []>} : vector<4x32xf32>, vector<32x128xf32>, vector<4x128xf32> -> vector<4x128xf32>
    %332 = arith.addf %330, %331 : vector<4x128xf32>
    %333 = vector.broadcast %23 : vector<1x128xf32> to vector<4x128xf32>
    %334 = arith.addf %332, %333 : vector<4x128xf32>
    %335 = arith.negf %329 : vector<4x128xf32>
    %336 = math.exp %335 : vector<4x128xf32>
    %cst_72 = arith.constant 1.000000e+00 : f32
    %337 = vector.broadcast %cst_72 : f32 to vector<4x128xf32>
    %338 = arith.addf %337, %336 : vector<4x128xf32>
    %339 = arith.divf %337, %338 : vector<4x128xf32>
    %340 = math.tanh %329 : vector<4x128xf32>
    %341 = vector.extract_strided_slice %339 {offsets = [0, 0], sizes = [4, 32], strides = [1, 1]} : vector<4x128xf32> to vector<4x32xf32>
    %342 = vector.extract_strided_slice %339 {offsets = [0, 32], sizes = [4, 32], strides = [1, 1]} : vector<4x128xf32> to vector<4x32xf32>
    %343 = vector.extract_strided_slice %340 {offsets = [0, 64], sizes = [4, 32], strides = [1, 1]} : vector<4x128xf32> to vector<4x32xf32>
    %344 = vector.extract_strided_slice %339 {offsets = [0, 96], sizes = [4, 32], strides = [1, 1]} : vector<4x128xf32> to vector<4x32xf32>
    %345 = arith.mulf %342, %261 : vector<4x32xf32>
    %346 = arith.mulf %341, %343 : vector<4x32xf32>
    %347 = arith.addf %345, %346 : vector<4x32xf32>
    %348 = math.tanh %347 : vector<4x32xf32>
    %349 = arith.mulf %344, %348 : vector<4x32xf32>
    %350 = arith.negf %334 : vector<4x128xf32>
    %351 = math.exp %350 : vector<4x128xf32>
    %cst_73 = arith.constant 1.000000e+00 : f32
    %352 = vector.broadcast %cst_73 : f32 to vector<4x128xf32>
    %353 = arith.addf %352, %351 : vector<4x128xf32>
    %354 = arith.divf %352, %353 : vector<4x128xf32>
    %355 = math.tanh %334 : vector<4x128xf32>
    %356 = vector.extract_strided_slice %354 {offsets = [0, 0], sizes = [4, 32], strides = [1, 1]} : vector<4x128xf32> to vector<4x32xf32>
    %357 = vector.extract_strided_slice %354 {offsets = [0, 32], sizes = [4, 32], strides = [1, 1]} : vector<4x128xf32> to vector<4x32xf32>
    %358 = vector.extract_strided_slice %355 {offsets = [0, 64], sizes = [4, 32], strides = [1, 1]} : vector<4x128xf32> to vector<4x32xf32>
    %359 = vector.extract_strided_slice %354 {offsets = [0, 96], sizes = [4, 32], strides = [1, 1]} : vector<4x128xf32> to vector<4x32xf32>
    %360 = arith.mulf %357, %276 : vector<4x32xf32>
    %361 = arith.mulf %356, %358 : vector<4x32xf32>
    %362 = arith.addf %360, %361 : vector<4x32xf32>
    %363 = math.tanh %362 : vector<4x32xf32>
    %364 = arith.mulf %359, %363 : vector<4x32xf32>
    %c3_i32 = arith.constant 3 : i32
    %365 = vector.broadcast %c3_i32 : i32 to vector<4x1xi32>
    %366 = arith.cmpi eq, %26, %365 : vector<4x1xi32>
    %367 = vector.shape_cast %366 : vector<4x1xi1> to vector<4x1xi1>
    %368 = vector.broadcast %367 : vector<4x1xi1> to vector<4x32xi1>
    %369 = arith.select %368, %349, %283 : vector<4x32xi1>, vector<4x32xf32>
    %c3_i32_74 = arith.constant 3 : i32
    %370 = vector.broadcast %c3_i32_74 : i32 to vector<4x1xi32>
    %371 = arith.cmpi eq, %29, %370 : vector<4x1xi32>
    %372 = vector.shape_cast %371 : vector<4x1xi1> to vector<4x1xi1>
    %373 = vector.broadcast %372 : vector<4x1xi1> to vector<4x32xi1>
    %374 = arith.select %373, %364, %288 : vector<4x32xi1>, vector<4x32xf32>
    %375 = vector.extract_strided_slice %7 {offsets = [16, 0], sizes = [4, 128], strides = [1, 1]} : vector<48x128xf32> to vector<4x128xf32>
    %376 = vector.extract_strided_slice %15 {offsets = [16, 0], sizes = [4, 128], strides = [1, 1]} : vector<48x128xf32> to vector<4x128xf32>
    %cst_75 = arith.constant dense<0.000000e+00> : vector<4x128xf32>
    %377 = tpu.matmul %309, %16, %cst_75 {dimension_numbers = #tpu.dot_dimension_numbers<[1], [0], [0], [1], [0, 0, 1, 1], [], []>} : vector<4x32xf32>, vector<32x128xf32>, vector<4x128xf32> -> vector<4x128xf32>
    %378 = arith.addf %375, %377 : vector<4x128xf32>
    %cst_76 = arith.constant dense<0.000000e+00> : vector<4x128xf32>
    %379 = tpu.matmul %324, %20, %cst_76 {dimension_numbers = #tpu.dot_dimension_numbers<[1], [0], [0], [1], [0, 0, 1, 1], [], []>} : vector<4x32xf32>, vector<32x128xf32>, vector<4x128xf32> -> vector<4x128xf32>
    %380 = arith.addf %376, %379 : vector<4x128xf32>
    %381 = arith.negf %378 : vector<4x128xf32>
    %382 = math.exp %381 : vector<4x128xf32>
    %cst_77 = arith.constant 1.000000e+00 : f32
    %383 = vector.broadcast %cst_77 : f32 to vector<4x128xf32>
    %384 = arith.addf %383, %382 : vector<4x128xf32>
    %385 = arith.divf %383, %384 : vector<4x128xf32>
    %386 = math.tanh %378 : vector<4x128xf32>
    %387 = vector.extract_strided_slice %385 {offsets = [0, 0], sizes = [4, 32], strides = [1, 1]} : vector<4x128xf32> to vector<4x32xf32>
    %388 = vector.extract_strided_slice %385 {offsets = [0, 32], sizes = [4, 32], strides = [1, 1]} : vector<4x128xf32> to vector<4x32xf32>
    %389 = vector.extract_strided_slice %386 {offsets = [0, 64], sizes = [4, 32], strides = [1, 1]} : vector<4x128xf32> to vector<4x32xf32>
    %390 = vector.extract_strided_slice %385 {offsets = [0, 96], sizes = [4, 32], strides = [1, 1]} : vector<4x128xf32> to vector<4x32xf32>
    %391 = arith.mulf %388, %307 : vector<4x32xf32>
    %392 = arith.mulf %387, %389 : vector<4x32xf32>
    %393 = arith.addf %391, %392 : vector<4x32xf32>
    %394 = math.tanh %393 : vector<4x32xf32>
    %395 = arith.mulf %390, %394 : vector<4x32xf32>
    %396 = arith.negf %380 : vector<4x128xf32>
    %397 = math.exp %396 : vector<4x128xf32>
    %cst_78 = arith.constant 1.000000e+00 : f32
    %398 = vector.broadcast %cst_78 : f32 to vector<4x128xf32>
    %399 = arith.addf %398, %397 : vector<4x128xf32>
    %400 = arith.divf %398, %399 : vector<4x128xf32>
    %401 = math.tanh %380 : vector<4x128xf32>
    %402 = vector.extract_strided_slice %400 {offsets = [0, 0], sizes = [4, 32], strides = [1, 1]} : vector<4x128xf32> to vector<4x32xf32>
    %403 = vector.extract_strided_slice %400 {offsets = [0, 32], sizes = [4, 32], strides = [1, 1]} : vector<4x128xf32> to vector<4x32xf32>
    %404 = vector.extract_strided_slice %401 {offsets = [0, 64], sizes = [4, 32], strides = [1, 1]} : vector<4x128xf32> to vector<4x32xf32>
    %405 = vector.extract_strided_slice %400 {offsets = [0, 96], sizes = [4, 32], strides = [1, 1]} : vector<4x128xf32> to vector<4x32xf32>
    %406 = arith.mulf %403, %322 : vector<4x32xf32>
    %407 = arith.mulf %402, %404 : vector<4x32xf32>
    %408 = arith.addf %406, %407 : vector<4x32xf32>
    %409 = math.tanh %408 : vector<4x32xf32>
    %410 = arith.mulf %405, %409 : vector<4x32xf32>
    %cst_79 = arith.constant dense<0.000000e+00> : vector<4x128xf32>
    %411 = tpu.matmul %395, %17, %cst_79 {dimension_numbers = #tpu.dot_dimension_numbers<[1], [0], [0], [1], [0, 0, 1, 1], [], []>} : vector<4x32xf32>, vector<32x128xf32>, vector<4x128xf32> -> vector<4x128xf32>
    %cst_80 = arith.constant dense<0.000000e+00> : vector<4x128xf32>
    %412 = tpu.matmul %349, %18, %cst_80 {dimension_numbers = #tpu.dot_dimension_numbers<[1], [0], [0], [1], [0, 0, 1, 1], [], []>} : vector<4x32xf32>, vector<32x128xf32>, vector<4x128xf32> -> vector<4x128xf32>
    %413 = arith.addf %411, %412 : vector<4x128xf32>
    %414 = vector.broadcast %19 : vector<1x128xf32> to vector<4x128xf32>
    %415 = arith.addf %413, %414 : vector<4x128xf32>
    %cst_81 = arith.constant dense<0.000000e+00> : vector<4x128xf32>
    %416 = tpu.matmul %410, %21, %cst_81 {dimension_numbers = #tpu.dot_dimension_numbers<[1], [0], [0], [1], [0, 0, 1, 1], [], []>} : vector<4x32xf32>, vector<32x128xf32>, vector<4x128xf32> -> vector<4x128xf32>
    %cst_82 = arith.constant dense<0.000000e+00> : vector<4x128xf32>
    %417 = tpu.matmul %364, %22, %cst_82 {dimension_numbers = #tpu.dot_dimension_numbers<[1], [0], [0], [1], [0, 0, 1, 1], [], []>} : vector<4x32xf32>, vector<32x128xf32>, vector<4x128xf32> -> vector<4x128xf32>
    %418 = arith.addf %416, %417 : vector<4x128xf32>
    %419 = vector.broadcast %23 : vector<1x128xf32> to vector<4x128xf32>
    %420 = arith.addf %418, %419 : vector<4x128xf32>
    %421 = arith.negf %415 : vector<4x128xf32>
    %422 = math.exp %421 : vector<4x128xf32>
    %cst_83 = arith.constant 1.000000e+00 : f32
    %423 = vector.broadcast %cst_83 : f32 to vector<4x128xf32>
    %424 = arith.addf %423, %422 : vector<4x128xf32>
    %425 = arith.divf %423, %424 : vector<4x128xf32>
    %426 = math.tanh %415 : vector<4x128xf32>
    %427 = vector.extract_strided_slice %425 {offsets = [0, 0], sizes = [4, 32], strides = [1, 1]} : vector<4x128xf32> to vector<4x32xf32>
    %428 = vector.extract_strided_slice %425 {offsets = [0, 32], sizes = [4, 32], strides = [1, 1]} : vector<4x128xf32> to vector<4x32xf32>
    %429 = vector.extract_strided_slice %426 {offsets = [0, 64], sizes = [4, 32], strides = [1, 1]} : vector<4x128xf32> to vector<4x32xf32>
    %430 = vector.extract_strided_slice %425 {offsets = [0, 96], sizes = [4, 32], strides = [1, 1]} : vector<4x128xf32> to vector<4x32xf32>
    %431 = arith.mulf %428, %347 : vector<4x32xf32>
    %432 = arith.mulf %427, %429 : vector<4x32xf32>
    %433 = arith.addf %431, %432 : vector<4x32xf32>
    %434 = math.tanh %433 : vector<4x32xf32>
    %435 = arith.mulf %430, %434 : vector<4x32xf32>
    %436 = arith.negf %420 : vector<4x128xf32>
    %437 = math.exp %436 : vector<4x128xf32>
    %cst_84 = arith.constant 1.000000e+00 : f32
    %438 = vector.broadcast %cst_84 : f32 to vector<4x128xf32>
    %439 = arith.addf %438, %437 : vector<4x128xf32>
    %440 = arith.divf %438, %439 : vector<4x128xf32>
    %441 = math.tanh %420 : vector<4x128xf32>
    %442 = vector.extract_strided_slice %440 {offsets = [0, 0], sizes = [4, 32], strides = [1, 1]} : vector<4x128xf32> to vector<4x32xf32>
    %443 = vector.extract_strided_slice %440 {offsets = [0, 32], sizes = [4, 32], strides = [1, 1]} : vector<4x128xf32> to vector<4x32xf32>
    %444 = vector.extract_strided_slice %441 {offsets = [0, 64], sizes = [4, 32], strides = [1, 1]} : vector<4x128xf32> to vector<4x32xf32>
    %445 = vector.extract_strided_slice %440 {offsets = [0, 96], sizes = [4, 32], strides = [1, 1]} : vector<4x128xf32> to vector<4x32xf32>
    %446 = arith.mulf %443, %362 : vector<4x32xf32>
    %447 = arith.mulf %442, %444 : vector<4x32xf32>
    %448 = arith.addf %446, %447 : vector<4x32xf32>
    %449 = math.tanh %448 : vector<4x32xf32>
    %450 = arith.mulf %445, %449 : vector<4x32xf32>
    %c4_i32 = arith.constant 4 : i32
    %451 = vector.broadcast %c4_i32 : i32 to vector<4x1xi32>
    %452 = arith.cmpi eq, %26, %451 : vector<4x1xi32>
    %453 = vector.shape_cast %452 : vector<4x1xi1> to vector<4x1xi1>
    %454 = vector.broadcast %453 : vector<4x1xi1> to vector<4x32xi1>
    %455 = arith.select %454, %435, %369 : vector<4x32xi1>, vector<4x32xf32>
    %c4_i32_85 = arith.constant 4 : i32
    %456 = vector.broadcast %c4_i32_85 : i32 to vector<4x1xi32>
    %457 = arith.cmpi eq, %29, %456 : vector<4x1xi32>
    %458 = vector.shape_cast %457 : vector<4x1xi1> to vector<4x1xi1>
    %459 = vector.broadcast %458 : vector<4x1xi1> to vector<4x32xi1>
    %460 = arith.select %459, %450, %374 : vector<4x32xi1>, vector<4x32xf32>
    %461 = vector.extract_strided_slice %7 {offsets = [20, 0], sizes = [4, 128], strides = [1, 1]} : vector<48x128xf32> to vector<4x128xf32>
    %462 = vector.extract_strided_slice %15 {offsets = [20, 0], sizes = [4, 128], strides = [1, 1]} : vector<48x128xf32> to vector<4x128xf32>
    %cst_86 = arith.constant dense<0.000000e+00> : vector<4x128xf32>
    %463 = tpu.matmul %395, %16, %cst_86 {dimension_numbers = #tpu.dot_dimension_numbers<[1], [0], [0], [1], [0, 0, 1, 1], [], []>} : vector<4x32xf32>, vector<32x128xf32>, vector<4x128xf32> -> vector<4x128xf32>
    %464 = arith.addf %461, %463 : vector<4x128xf32>
    %cst_87 = arith.constant dense<0.000000e+00> : vector<4x128xf32>
    %465 = tpu.matmul %410, %20, %cst_87 {dimension_numbers = #tpu.dot_dimension_numbers<[1], [0], [0], [1], [0, 0, 1, 1], [], []>} : vector<4x32xf32>, vector<32x128xf32>, vector<4x128xf32> -> vector<4x128xf32>
    %466 = arith.addf %462, %465 : vector<4x128xf32>
    %467 = arith.negf %464 : vector<4x128xf32>
    %468 = math.exp %467 : vector<4x128xf32>
    %cst_88 = arith.constant 1.000000e+00 : f32
    %469 = vector.broadcast %cst_88 : f32 to vector<4x128xf32>
    %470 = arith.addf %469, %468 : vector<4x128xf32>
    %471 = arith.divf %469, %470 : vector<4x128xf32>
    %472 = math.tanh %464 : vector<4x128xf32>
    %473 = vector.extract_strided_slice %471 {offsets = [0, 0], sizes = [4, 32], strides = [1, 1]} : vector<4x128xf32> to vector<4x32xf32>
    %474 = vector.extract_strided_slice %471 {offsets = [0, 32], sizes = [4, 32], strides = [1, 1]} : vector<4x128xf32> to vector<4x32xf32>
    %475 = vector.extract_strided_slice %472 {offsets = [0, 64], sizes = [4, 32], strides = [1, 1]} : vector<4x128xf32> to vector<4x32xf32>
    %476 = vector.extract_strided_slice %471 {offsets = [0, 96], sizes = [4, 32], strides = [1, 1]} : vector<4x128xf32> to vector<4x32xf32>
    %477 = arith.mulf %474, %393 : vector<4x32xf32>
    %478 = arith.mulf %473, %475 : vector<4x32xf32>
    %479 = arith.addf %477, %478 : vector<4x32xf32>
    %480 = math.tanh %479 : vector<4x32xf32>
    %481 = arith.mulf %476, %480 : vector<4x32xf32>
    %482 = arith.negf %466 : vector<4x128xf32>
    %483 = math.exp %482 : vector<4x128xf32>
    %cst_89 = arith.constant 1.000000e+00 : f32
    %484 = vector.broadcast %cst_89 : f32 to vector<4x128xf32>
    %485 = arith.addf %484, %483 : vector<4x128xf32>
    %486 = arith.divf %484, %485 : vector<4x128xf32>
    %487 = math.tanh %466 : vector<4x128xf32>
    %488 = vector.extract_strided_slice %486 {offsets = [0, 0], sizes = [4, 32], strides = [1, 1]} : vector<4x128xf32> to vector<4x32xf32>
    %489 = vector.extract_strided_slice %486 {offsets = [0, 32], sizes = [4, 32], strides = [1, 1]} : vector<4x128xf32> to vector<4x32xf32>
    %490 = vector.extract_strided_slice %487 {offsets = [0, 64], sizes = [4, 32], strides = [1, 1]} : vector<4x128xf32> to vector<4x32xf32>
    %491 = vector.extract_strided_slice %486 {offsets = [0, 96], sizes = [4, 32], strides = [1, 1]} : vector<4x128xf32> to vector<4x32xf32>
    %492 = arith.mulf %489, %408 : vector<4x32xf32>
    %493 = arith.mulf %488, %490 : vector<4x32xf32>
    %494 = arith.addf %492, %493 : vector<4x32xf32>
    %495 = math.tanh %494 : vector<4x32xf32>
    %496 = arith.mulf %491, %495 : vector<4x32xf32>
    %cst_90 = arith.constant dense<0.000000e+00> : vector<4x128xf32>
    %497 = tpu.matmul %481, %17, %cst_90 {dimension_numbers = #tpu.dot_dimension_numbers<[1], [0], [0], [1], [0, 0, 1, 1], [], []>} : vector<4x32xf32>, vector<32x128xf32>, vector<4x128xf32> -> vector<4x128xf32>
    %cst_91 = arith.constant dense<0.000000e+00> : vector<4x128xf32>
    %498 = tpu.matmul %435, %18, %cst_91 {dimension_numbers = #tpu.dot_dimension_numbers<[1], [0], [0], [1], [0, 0, 1, 1], [], []>} : vector<4x32xf32>, vector<32x128xf32>, vector<4x128xf32> -> vector<4x128xf32>
    %499 = arith.addf %497, %498 : vector<4x128xf32>
    %500 = vector.broadcast %19 : vector<1x128xf32> to vector<4x128xf32>
    %501 = arith.addf %499, %500 : vector<4x128xf32>
    %cst_92 = arith.constant dense<0.000000e+00> : vector<4x128xf32>
    %502 = tpu.matmul %496, %21, %cst_92 {dimension_numbers = #tpu.dot_dimension_numbers<[1], [0], [0], [1], [0, 0, 1, 1], [], []>} : vector<4x32xf32>, vector<32x128xf32>, vector<4x128xf32> -> vector<4x128xf32>
    %cst_93 = arith.constant dense<0.000000e+00> : vector<4x128xf32>
    %503 = tpu.matmul %450, %22, %cst_93 {dimension_numbers = #tpu.dot_dimension_numbers<[1], [0], [0], [1], [0, 0, 1, 1], [], []>} : vector<4x32xf32>, vector<32x128xf32>, vector<4x128xf32> -> vector<4x128xf32>
    %504 = arith.addf %502, %503 : vector<4x128xf32>
    %505 = vector.broadcast %23 : vector<1x128xf32> to vector<4x128xf32>
    %506 = arith.addf %504, %505 : vector<4x128xf32>
    %507 = arith.negf %501 : vector<4x128xf32>
    %508 = math.exp %507 : vector<4x128xf32>
    %cst_94 = arith.constant 1.000000e+00 : f32
    %509 = vector.broadcast %cst_94 : f32 to vector<4x128xf32>
    %510 = arith.addf %509, %508 : vector<4x128xf32>
    %511 = arith.divf %509, %510 : vector<4x128xf32>
    %512 = math.tanh %501 : vector<4x128xf32>
    %513 = vector.extract_strided_slice %511 {offsets = [0, 0], sizes = [4, 32], strides = [1, 1]} : vector<4x128xf32> to vector<4x32xf32>
    %514 = vector.extract_strided_slice %511 {offsets = [0, 32], sizes = [4, 32], strides = [1, 1]} : vector<4x128xf32> to vector<4x32xf32>
    %515 = vector.extract_strided_slice %512 {offsets = [0, 64], sizes = [4, 32], strides = [1, 1]} : vector<4x128xf32> to vector<4x32xf32>
    %516 = vector.extract_strided_slice %511 {offsets = [0, 96], sizes = [4, 32], strides = [1, 1]} : vector<4x128xf32> to vector<4x32xf32>
    %517 = arith.mulf %514, %433 : vector<4x32xf32>
    %518 = arith.mulf %513, %515 : vector<4x32xf32>
    %519 = arith.addf %517, %518 : vector<4x32xf32>
    %520 = math.tanh %519 : vector<4x32xf32>
    %521 = arith.mulf %516, %520 : vector<4x32xf32>
    %522 = arith.negf %506 : vector<4x128xf32>
    %523 = math.exp %522 : vector<4x128xf32>
    %cst_95 = arith.constant 1.000000e+00 : f32
    %524 = vector.broadcast %cst_95 : f32 to vector<4x128xf32>
    %525 = arith.addf %524, %523 : vector<4x128xf32>
    %526 = arith.divf %524, %525 : vector<4x128xf32>
    %527 = math.tanh %506 : vector<4x128xf32>
    %528 = vector.extract_strided_slice %526 {offsets = [0, 0], sizes = [4, 32], strides = [1, 1]} : vector<4x128xf32> to vector<4x32xf32>
    %529 = vector.extract_strided_slice %526 {offsets = [0, 32], sizes = [4, 32], strides = [1, 1]} : vector<4x128xf32> to vector<4x32xf32>
    %530 = vector.extract_strided_slice %527 {offsets = [0, 64], sizes = [4, 32], strides = [1, 1]} : vector<4x128xf32> to vector<4x32xf32>
    %531 = vector.extract_strided_slice %526 {offsets = [0, 96], sizes = [4, 32], strides = [1, 1]} : vector<4x128xf32> to vector<4x32xf32>
    %532 = arith.mulf %529, %448 : vector<4x32xf32>
    %533 = arith.mulf %528, %530 : vector<4x32xf32>
    %534 = arith.addf %532, %533 : vector<4x32xf32>
    %535 = math.tanh %534 : vector<4x32xf32>
    %536 = arith.mulf %531, %535 : vector<4x32xf32>
    %c5_i32 = arith.constant 5 : i32
    %537 = vector.broadcast %c5_i32 : i32 to vector<4x1xi32>
    %538 = arith.cmpi eq, %26, %537 : vector<4x1xi32>
    %539 = vector.shape_cast %538 : vector<4x1xi1> to vector<4x1xi1>
    %540 = vector.broadcast %539 : vector<4x1xi1> to vector<4x32xi1>
    %541 = arith.select %540, %521, %455 : vector<4x32xi1>, vector<4x32xf32>
    %c5_i32_96 = arith.constant 5 : i32
    %542 = vector.broadcast %c5_i32_96 : i32 to vector<4x1xi32>
    %543 = arith.cmpi eq, %29, %542 : vector<4x1xi32>
    %544 = vector.shape_cast %543 : vector<4x1xi1> to vector<4x1xi1>
    %545 = vector.broadcast %544 : vector<4x1xi1> to vector<4x32xi1>
    %546 = arith.select %545, %536, %460 : vector<4x32xi1>, vector<4x32xf32>
    %547 = vector.extract_strided_slice %7 {offsets = [24, 0], sizes = [4, 128], strides = [1, 1]} : vector<48x128xf32> to vector<4x128xf32>
    %548 = vector.extract_strided_slice %15 {offsets = [24, 0], sizes = [4, 128], strides = [1, 1]} : vector<48x128xf32> to vector<4x128xf32>
    %cst_97 = arith.constant dense<0.000000e+00> : vector<4x128xf32>
    %549 = tpu.matmul %481, %16, %cst_97 {dimension_numbers = #tpu.dot_dimension_numbers<[1], [0], [0], [1], [0, 0, 1, 1], [], []>} : vector<4x32xf32>, vector<32x128xf32>, vector<4x128xf32> -> vector<4x128xf32>
    %550 = arith.addf %547, %549 : vector<4x128xf32>
    %cst_98 = arith.constant dense<0.000000e+00> : vector<4x128xf32>
    %551 = tpu.matmul %496, %20, %cst_98 {dimension_numbers = #tpu.dot_dimension_numbers<[1], [0], [0], [1], [0, 0, 1, 1], [], []>} : vector<4x32xf32>, vector<32x128xf32>, vector<4x128xf32> -> vector<4x128xf32>
    %552 = arith.addf %548, %551 : vector<4x128xf32>
    %553 = arith.negf %550 : vector<4x128xf32>
    %554 = math.exp %553 : vector<4x128xf32>
    %cst_99 = arith.constant 1.000000e+00 : f32
    %555 = vector.broadcast %cst_99 : f32 to vector<4x128xf32>
    %556 = arith.addf %555, %554 : vector<4x128xf32>
    %557 = arith.divf %555, %556 : vector<4x128xf32>
    %558 = math.tanh %550 : vector<4x128xf32>
    %559 = vector.extract_strided_slice %557 {offsets = [0, 0], sizes = [4, 32], strides = [1, 1]} : vector<4x128xf32> to vector<4x32xf32>
    %560 = vector.extract_strided_slice %557 {offsets = [0, 32], sizes = [4, 32], strides = [1, 1]} : vector<4x128xf32> to vector<4x32xf32>
    %561 = vector.extract_strided_slice %558 {offsets = [0, 64], sizes = [4, 32], strides = [1, 1]} : vector<4x128xf32> to vector<4x32xf32>
    %562 = vector.extract_strided_slice %557 {offsets = [0, 96], sizes = [4, 32], strides = [1, 1]} : vector<4x128xf32> to vector<4x32xf32>
    %563 = arith.mulf %560, %479 : vector<4x32xf32>
    %564 = arith.mulf %559, %561 : vector<4x32xf32>
    %565 = arith.addf %563, %564 : vector<4x32xf32>
    %566 = math.tanh %565 : vector<4x32xf32>
    %567 = arith.mulf %562, %566 : vector<4x32xf32>
    %568 = arith.negf %552 : vector<4x128xf32>
    %569 = math.exp %568 : vector<4x128xf32>
    %cst_100 = arith.constant 1.000000e+00 : f32
    %570 = vector.broadcast %cst_100 : f32 to vector<4x128xf32>
    %571 = arith.addf %570, %569 : vector<4x128xf32>
    %572 = arith.divf %570, %571 : vector<4x128xf32>
    %573 = math.tanh %552 : vector<4x128xf32>
    %574 = vector.extract_strided_slice %572 {offsets = [0, 0], sizes = [4, 32], strides = [1, 1]} : vector<4x128xf32> to vector<4x32xf32>
    %575 = vector.extract_strided_slice %572 {offsets = [0, 32], sizes = [4, 32], strides = [1, 1]} : vector<4x128xf32> to vector<4x32xf32>
    %576 = vector.extract_strided_slice %573 {offsets = [0, 64], sizes = [4, 32], strides = [1, 1]} : vector<4x128xf32> to vector<4x32xf32>
    %577 = vector.extract_strided_slice %572 {offsets = [0, 96], sizes = [4, 32], strides = [1, 1]} : vector<4x128xf32> to vector<4x32xf32>
    %578 = arith.mulf %575, %494 : vector<4x32xf32>
    %579 = arith.mulf %574, %576 : vector<4x32xf32>
    %580 = arith.addf %578, %579 : vector<4x32xf32>
    %581 = math.tanh %580 : vector<4x32xf32>
    %582 = arith.mulf %577, %581 : vector<4x32xf32>
    %cst_101 = arith.constant dense<0.000000e+00> : vector<4x128xf32>
    %583 = tpu.matmul %567, %17, %cst_101 {dimension_numbers = #tpu.dot_dimension_numbers<[1], [0], [0], [1], [0, 0, 1, 1], [], []>} : vector<4x32xf32>, vector<32x128xf32>, vector<4x128xf32> -> vector<4x128xf32>
    %cst_102 = arith.constant dense<0.000000e+00> : vector<4x128xf32>
    %584 = tpu.matmul %521, %18, %cst_102 {dimension_numbers = #tpu.dot_dimension_numbers<[1], [0], [0], [1], [0, 0, 1, 1], [], []>} : vector<4x32xf32>, vector<32x128xf32>, vector<4x128xf32> -> vector<4x128xf32>
    %585 = arith.addf %583, %584 : vector<4x128xf32>
    %586 = vector.broadcast %19 : vector<1x128xf32> to vector<4x128xf32>
    %587 = arith.addf %585, %586 : vector<4x128xf32>
    %cst_103 = arith.constant dense<0.000000e+00> : vector<4x128xf32>
    %588 = tpu.matmul %582, %21, %cst_103 {dimension_numbers = #tpu.dot_dimension_numbers<[1], [0], [0], [1], [0, 0, 1, 1], [], []>} : vector<4x32xf32>, vector<32x128xf32>, vector<4x128xf32> -> vector<4x128xf32>
    %cst_104 = arith.constant dense<0.000000e+00> : vector<4x128xf32>
    %589 = tpu.matmul %536, %22, %cst_104 {dimension_numbers = #tpu.dot_dimension_numbers<[1], [0], [0], [1], [0, 0, 1, 1], [], []>} : vector<4x32xf32>, vector<32x128xf32>, vector<4x128xf32> -> vector<4x128xf32>
    %590 = arith.addf %588, %589 : vector<4x128xf32>
    %591 = vector.broadcast %23 : vector<1x128xf32> to vector<4x128xf32>
    %592 = arith.addf %590, %591 : vector<4x128xf32>
    %593 = arith.negf %587 : vector<4x128xf32>
    %594 = math.exp %593 : vector<4x128xf32>
    %cst_105 = arith.constant 1.000000e+00 : f32
    %595 = vector.broadcast %cst_105 : f32 to vector<4x128xf32>
    %596 = arith.addf %595, %594 : vector<4x128xf32>
    %597 = arith.divf %595, %596 : vector<4x128xf32>
    %598 = math.tanh %587 : vector<4x128xf32>
    %599 = vector.extract_strided_slice %597 {offsets = [0, 0], sizes = [4, 32], strides = [1, 1]} : vector<4x128xf32> to vector<4x32xf32>
    %600 = vector.extract_strided_slice %597 {offsets = [0, 32], sizes = [4, 32], strides = [1, 1]} : vector<4x128xf32> to vector<4x32xf32>
    %601 = vector.extract_strided_slice %598 {offsets = [0, 64], sizes = [4, 32], strides = [1, 1]} : vector<4x128xf32> to vector<4x32xf32>
    %602 = vector.extract_strided_slice %597 {offsets = [0, 96], sizes = [4, 32], strides = [1, 1]} : vector<4x128xf32> to vector<4x32xf32>
    %603 = arith.mulf %600, %519 : vector<4x32xf32>
    %604 = arith.mulf %599, %601 : vector<4x32xf32>
    %605 = arith.addf %603, %604 : vector<4x32xf32>
    %606 = math.tanh %605 : vector<4x32xf32>
    %607 = arith.mulf %602, %606 : vector<4x32xf32>
    %608 = arith.negf %592 : vector<4x128xf32>
    %609 = math.exp %608 : vector<4x128xf32>
    %cst_106 = arith.constant 1.000000e+00 : f32
    %610 = vector.broadcast %cst_106 : f32 to vector<4x128xf32>
    %611 = arith.addf %610, %609 : vector<4x128xf32>
    %612 = arith.divf %610, %611 : vector<4x128xf32>
    %613 = math.tanh %592 : vector<4x128xf32>
    %614 = vector.extract_strided_slice %612 {offsets = [0, 0], sizes = [4, 32], strides = [1, 1]} : vector<4x128xf32> to vector<4x32xf32>
    %615 = vector.extract_strided_slice %612 {offsets = [0, 32], sizes = [4, 32], strides = [1, 1]} : vector<4x128xf32> to vector<4x32xf32>
    %616 = vector.extract_strided_slice %613 {offsets = [0, 64], sizes = [4, 32], strides = [1, 1]} : vector<4x128xf32> to vector<4x32xf32>
    %617 = vector.extract_strided_slice %612 {offsets = [0, 96], sizes = [4, 32], strides = [1, 1]} : vector<4x128xf32> to vector<4x32xf32>
    %618 = arith.mulf %615, %534 : vector<4x32xf32>
    %619 = arith.mulf %614, %616 : vector<4x32xf32>
    %620 = arith.addf %618, %619 : vector<4x32xf32>
    %621 = math.tanh %620 : vector<4x32xf32>
    %622 = arith.mulf %617, %621 : vector<4x32xf32>
    %c6_i32 = arith.constant 6 : i32
    %623 = vector.broadcast %c6_i32 : i32 to vector<4x1xi32>
    %624 = arith.cmpi eq, %26, %623 : vector<4x1xi32>
    %625 = vector.shape_cast %624 : vector<4x1xi1> to vector<4x1xi1>
    %626 = vector.broadcast %625 : vector<4x1xi1> to vector<4x32xi1>
    %627 = arith.select %626, %607, %541 : vector<4x32xi1>, vector<4x32xf32>
    %c6_i32_107 = arith.constant 6 : i32
    %628 = vector.broadcast %c6_i32_107 : i32 to vector<4x1xi32>
    %629 = arith.cmpi eq, %29, %628 : vector<4x1xi32>
    %630 = vector.shape_cast %629 : vector<4x1xi1> to vector<4x1xi1>
    %631 = vector.broadcast %630 : vector<4x1xi1> to vector<4x32xi1>
    %632 = arith.select %631, %622, %546 : vector<4x32xi1>, vector<4x32xf32>
    %633 = vector.extract_strided_slice %7 {offsets = [28, 0], sizes = [4, 128], strides = [1, 1]} : vector<48x128xf32> to vector<4x128xf32>
    %634 = vector.extract_strided_slice %15 {offsets = [28, 0], sizes = [4, 128], strides = [1, 1]} : vector<48x128xf32> to vector<4x128xf32>
    %cst_108 = arith.constant dense<0.000000e+00> : vector<4x128xf32>
    %635 = tpu.matmul %567, %16, %cst_108 {dimension_numbers = #tpu.dot_dimension_numbers<[1], [0], [0], [1], [0, 0, 1, 1], [], []>} : vector<4x32xf32>, vector<32x128xf32>, vector<4x128xf32> -> vector<4x128xf32>
    %636 = arith.addf %633, %635 : vector<4x128xf32>
    %cst_109 = arith.constant dense<0.000000e+00> : vector<4x128xf32>
    %637 = tpu.matmul %582, %20, %cst_109 {dimension_numbers = #tpu.dot_dimension_numbers<[1], [0], [0], [1], [0, 0, 1, 1], [], []>} : vector<4x32xf32>, vector<32x128xf32>, vector<4x128xf32> -> vector<4x128xf32>
    %638 = arith.addf %634, %637 : vector<4x128xf32>
    %639 = arith.negf %636 : vector<4x128xf32>
    %640 = math.exp %639 : vector<4x128xf32>
    %cst_110 = arith.constant 1.000000e+00 : f32
    %641 = vector.broadcast %cst_110 : f32 to vector<4x128xf32>
    %642 = arith.addf %641, %640 : vector<4x128xf32>
    %643 = arith.divf %641, %642 : vector<4x128xf32>
    %644 = math.tanh %636 : vector<4x128xf32>
    %645 = vector.extract_strided_slice %643 {offsets = [0, 0], sizes = [4, 32], strides = [1, 1]} : vector<4x128xf32> to vector<4x32xf32>
    %646 = vector.extract_strided_slice %643 {offsets = [0, 32], sizes = [4, 32], strides = [1, 1]} : vector<4x128xf32> to vector<4x32xf32>
    %647 = vector.extract_strided_slice %644 {offsets = [0, 64], sizes = [4, 32], strides = [1, 1]} : vector<4x128xf32> to vector<4x32xf32>
    %648 = vector.extract_strided_slice %643 {offsets = [0, 96], sizes = [4, 32], strides = [1, 1]} : vector<4x128xf32> to vector<4x32xf32>
    %649 = arith.mulf %646, %565 : vector<4x32xf32>
    %650 = arith.mulf %645, %647 : vector<4x32xf32>
    %651 = arith.addf %649, %650 : vector<4x32xf32>
    %652 = math.tanh %651 : vector<4x32xf32>
    %653 = arith.mulf %648, %652 : vector<4x32xf32>
    %654 = arith.negf %638 : vector<4x128xf32>
    %655 = math.exp %654 : vector<4x128xf32>
    %cst_111 = arith.constant 1.000000e+00 : f32
    %656 = vector.broadcast %cst_111 : f32 to vector<4x128xf32>
    %657 = arith.addf %656, %655 : vector<4x128xf32>
    %658 = arith.divf %656, %657 : vector<4x128xf32>
    %659 = math.tanh %638 : vector<4x128xf32>
    %660 = vector.extract_strided_slice %658 {offsets = [0, 0], sizes = [4, 32], strides = [1, 1]} : vector<4x128xf32> to vector<4x32xf32>
    %661 = vector.extract_strided_slice %658 {offsets = [0, 32], sizes = [4, 32], strides = [1, 1]} : vector<4x128xf32> to vector<4x32xf32>
    %662 = vector.extract_strided_slice %659 {offsets = [0, 64], sizes = [4, 32], strides = [1, 1]} : vector<4x128xf32> to vector<4x32xf32>
    %663 = vector.extract_strided_slice %658 {offsets = [0, 96], sizes = [4, 32], strides = [1, 1]} : vector<4x128xf32> to vector<4x32xf32>
    %664 = arith.mulf %661, %580 : vector<4x32xf32>
    %665 = arith.mulf %660, %662 : vector<4x32xf32>
    %666 = arith.addf %664, %665 : vector<4x32xf32>
    %667 = math.tanh %666 : vector<4x32xf32>
    %668 = arith.mulf %663, %667 : vector<4x32xf32>
    %cst_112 = arith.constant dense<0.000000e+00> : vector<4x128xf32>
    %669 = tpu.matmul %653, %17, %cst_112 {dimension_numbers = #tpu.dot_dimension_numbers<[1], [0], [0], [1], [0, 0, 1, 1], [], []>} : vector<4x32xf32>, vector<32x128xf32>, vector<4x128xf32> -> vector<4x128xf32>
    %cst_113 = arith.constant dense<0.000000e+00> : vector<4x128xf32>
    %670 = tpu.matmul %607, %18, %cst_113 {dimension_numbers = #tpu.dot_dimension_numbers<[1], [0], [0], [1], [0, 0, 1, 1], [], []>} : vector<4x32xf32>, vector<32x128xf32>, vector<4x128xf32> -> vector<4x128xf32>
    %671 = arith.addf %669, %670 : vector<4x128xf32>
    %672 = vector.broadcast %19 : vector<1x128xf32> to vector<4x128xf32>
    %673 = arith.addf %671, %672 : vector<4x128xf32>
    %cst_114 = arith.constant dense<0.000000e+00> : vector<4x128xf32>
    %674 = tpu.matmul %668, %21, %cst_114 {dimension_numbers = #tpu.dot_dimension_numbers<[1], [0], [0], [1], [0, 0, 1, 1], [], []>} : vector<4x32xf32>, vector<32x128xf32>, vector<4x128xf32> -> vector<4x128xf32>
    %cst_115 = arith.constant dense<0.000000e+00> : vector<4x128xf32>
    %675 = tpu.matmul %622, %22, %cst_115 {dimension_numbers = #tpu.dot_dimension_numbers<[1], [0], [0], [1], [0, 0, 1, 1], [], []>} : vector<4x32xf32>, vector<32x128xf32>, vector<4x128xf32> -> vector<4x128xf32>
    %676 = arith.addf %674, %675 : vector<4x128xf32>
    %677 = vector.broadcast %23 : vector<1x128xf32> to vector<4x128xf32>
    %678 = arith.addf %676, %677 : vector<4x128xf32>
    %679 = arith.negf %673 : vector<4x128xf32>
    %680 = math.exp %679 : vector<4x128xf32>
    %cst_116 = arith.constant 1.000000e+00 : f32
    %681 = vector.broadcast %cst_116 : f32 to vector<4x128xf32>
    %682 = arith.addf %681, %680 : vector<4x128xf32>
    %683 = arith.divf %681, %682 : vector<4x128xf32>
    %684 = math.tanh %673 : vector<4x128xf32>
    %685 = vector.extract_strided_slice %683 {offsets = [0, 0], sizes = [4, 32], strides = [1, 1]} : vector<4x128xf32> to vector<4x32xf32>
    %686 = vector.extract_strided_slice %683 {offsets = [0, 32], sizes = [4, 32], strides = [1, 1]} : vector<4x128xf32> to vector<4x32xf32>
    %687 = vector.extract_strided_slice %684 {offsets = [0, 64], sizes = [4, 32], strides = [1, 1]} : vector<4x128xf32> to vector<4x32xf32>
    %688 = vector.extract_strided_slice %683 {offsets = [0, 96], sizes = [4, 32], strides = [1, 1]} : vector<4x128xf32> to vector<4x32xf32>
    %689 = arith.mulf %686, %605 : vector<4x32xf32>
    %690 = arith.mulf %685, %687 : vector<4x32xf32>
    %691 = arith.addf %689, %690 : vector<4x32xf32>
    %692 = math.tanh %691 : vector<4x32xf32>
    %693 = arith.mulf %688, %692 : vector<4x32xf32>
    %694 = arith.negf %678 : vector<4x128xf32>
    %695 = math.exp %694 : vector<4x128xf32>
    %cst_117 = arith.constant 1.000000e+00 : f32
    %696 = vector.broadcast %cst_117 : f32 to vector<4x128xf32>
    %697 = arith.addf %696, %695 : vector<4x128xf32>
    %698 = arith.divf %696, %697 : vector<4x128xf32>
    %699 = math.tanh %678 : vector<4x128xf32>
    %700 = vector.extract_strided_slice %698 {offsets = [0, 0], sizes = [4, 32], strides = [1, 1]} : vector<4x128xf32> to vector<4x32xf32>
    %701 = vector.extract_strided_slice %698 {offsets = [0, 32], sizes = [4, 32], strides = [1, 1]} : vector<4x128xf32> to vector<4x32xf32>
    %702 = vector.extract_strided_slice %699 {offsets = [0, 64], sizes = [4, 32], strides = [1, 1]} : vector<4x128xf32> to vector<4x32xf32>
    %703 = vector.extract_strided_slice %698 {offsets = [0, 96], sizes = [4, 32], strides = [1, 1]} : vector<4x128xf32> to vector<4x32xf32>
    %704 = arith.mulf %701, %620 : vector<4x32xf32>
    %705 = arith.mulf %700, %702 : vector<4x32xf32>
    %706 = arith.addf %704, %705 : vector<4x32xf32>
    %707 = math.tanh %706 : vector<4x32xf32>
    %708 = arith.mulf %703, %707 : vector<4x32xf32>
    %c7_i32 = arith.constant 7 : i32
    %709 = vector.broadcast %c7_i32 : i32 to vector<4x1xi32>
    %710 = arith.cmpi eq, %26, %709 : vector<4x1xi32>
    %711 = vector.shape_cast %710 : vector<4x1xi1> to vector<4x1xi1>
    %712 = vector.broadcast %711 : vector<4x1xi1> to vector<4x32xi1>
    %713 = arith.select %712, %693, %627 : vector<4x32xi1>, vector<4x32xf32>
    %c7_i32_118 = arith.constant 7 : i32
    %714 = vector.broadcast %c7_i32_118 : i32 to vector<4x1xi32>
    %715 = arith.cmpi eq, %29, %714 : vector<4x1xi32>
    %716 = vector.shape_cast %715 : vector<4x1xi1> to vector<4x1xi1>
    %717 = vector.broadcast %716 : vector<4x1xi1> to vector<4x32xi1>
    %718 = arith.select %717, %708, %632 : vector<4x32xi1>, vector<4x32xf32>
    %719 = vector.extract_strided_slice %7 {offsets = [32, 0], sizes = [4, 128], strides = [1, 1]} : vector<48x128xf32> to vector<4x128xf32>
    %720 = vector.extract_strided_slice %15 {offsets = [32, 0], sizes = [4, 128], strides = [1, 1]} : vector<48x128xf32> to vector<4x128xf32>
    %cst_119 = arith.constant dense<0.000000e+00> : vector<4x128xf32>
    %721 = tpu.matmul %653, %16, %cst_119 {dimension_numbers = #tpu.dot_dimension_numbers<[1], [0], [0], [1], [0, 0, 1, 1], [], []>} : vector<4x32xf32>, vector<32x128xf32>, vector<4x128xf32> -> vector<4x128xf32>
    %722 = arith.addf %719, %721 : vector<4x128xf32>
    %cst_120 = arith.constant dense<0.000000e+00> : vector<4x128xf32>
    %723 = tpu.matmul %668, %20, %cst_120 {dimension_numbers = #tpu.dot_dimension_numbers<[1], [0], [0], [1], [0, 0, 1, 1], [], []>} : vector<4x32xf32>, vector<32x128xf32>, vector<4x128xf32> -> vector<4x128xf32>
    %724 = arith.addf %720, %723 : vector<4x128xf32>
    %725 = arith.negf %722 : vector<4x128xf32>
    %726 = math.exp %725 : vector<4x128xf32>
    %cst_121 = arith.constant 1.000000e+00 : f32
    %727 = vector.broadcast %cst_121 : f32 to vector<4x128xf32>
    %728 = arith.addf %727, %726 : vector<4x128xf32>
    %729 = arith.divf %727, %728 : vector<4x128xf32>
    %730 = math.tanh %722 : vector<4x128xf32>
    %731 = vector.extract_strided_slice %729 {offsets = [0, 0], sizes = [4, 32], strides = [1, 1]} : vector<4x128xf32> to vector<4x32xf32>
    %732 = vector.extract_strided_slice %729 {offsets = [0, 32], sizes = [4, 32], strides = [1, 1]} : vector<4x128xf32> to vector<4x32xf32>
    %733 = vector.extract_strided_slice %730 {offsets = [0, 64], sizes = [4, 32], strides = [1, 1]} : vector<4x128xf32> to vector<4x32xf32>
    %734 = vector.extract_strided_slice %729 {offsets = [0, 96], sizes = [4, 32], strides = [1, 1]} : vector<4x128xf32> to vector<4x32xf32>
    %735 = arith.mulf %732, %651 : vector<4x32xf32>
    %736 = arith.mulf %731, %733 : vector<4x32xf32>
    %737 = arith.addf %735, %736 : vector<4x32xf32>
    %738 = math.tanh %737 : vector<4x32xf32>
    %739 = arith.mulf %734, %738 : vector<4x32xf32>
    %740 = arith.negf %724 : vector<4x128xf32>
    %741 = math.exp %740 : vector<4x128xf32>
    %cst_122 = arith.constant 1.000000e+00 : f32
    %742 = vector.broadcast %cst_122 : f32 to vector<4x128xf32>
    %743 = arith.addf %742, %741 : vector<4x128xf32>
    %744 = arith.divf %742, %743 : vector<4x128xf32>
    %745 = math.tanh %724 : vector<4x128xf32>
    %746 = vector.extract_strided_slice %744 {offsets = [0, 0], sizes = [4, 32], strides = [1, 1]} : vector<4x128xf32> to vector<4x32xf32>
    %747 = vector.extract_strided_slice %744 {offsets = [0, 32], sizes = [4, 32], strides = [1, 1]} : vector<4x128xf32> to vector<4x32xf32>
    %748 = vector.extract_strided_slice %745 {offsets = [0, 64], sizes = [4, 32], strides = [1, 1]} : vector<4x128xf32> to vector<4x32xf32>
    %749 = vector.extract_strided_slice %744 {offsets = [0, 96], sizes = [4, 32], strides = [1, 1]} : vector<4x128xf32> to vector<4x32xf32>
    %750 = arith.mulf %747, %666 : vector<4x32xf32>
    %751 = arith.mulf %746, %748 : vector<4x32xf32>
    %752 = arith.addf %750, %751 : vector<4x32xf32>
    %753 = math.tanh %752 : vector<4x32xf32>
    %754 = arith.mulf %749, %753 : vector<4x32xf32>
    %cst_123 = arith.constant dense<0.000000e+00> : vector<4x128xf32>
    %755 = tpu.matmul %739, %17, %cst_123 {dimension_numbers = #tpu.dot_dimension_numbers<[1], [0], [0], [1], [0, 0, 1, 1], [], []>} : vector<4x32xf32>, vector<32x128xf32>, vector<4x128xf32> -> vector<4x128xf32>
    %cst_124 = arith.constant dense<0.000000e+00> : vector<4x128xf32>
    %756 = tpu.matmul %693, %18, %cst_124 {dimension_numbers = #tpu.dot_dimension_numbers<[1], [0], [0], [1], [0, 0, 1, 1], [], []>} : vector<4x32xf32>, vector<32x128xf32>, vector<4x128xf32> -> vector<4x128xf32>
    %757 = arith.addf %755, %756 : vector<4x128xf32>
    %758 = vector.broadcast %19 : vector<1x128xf32> to vector<4x128xf32>
    %759 = arith.addf %757, %758 : vector<4x128xf32>
    %cst_125 = arith.constant dense<0.000000e+00> : vector<4x128xf32>
    %760 = tpu.matmul %754, %21, %cst_125 {dimension_numbers = #tpu.dot_dimension_numbers<[1], [0], [0], [1], [0, 0, 1, 1], [], []>} : vector<4x32xf32>, vector<32x128xf32>, vector<4x128xf32> -> vector<4x128xf32>
    %cst_126 = arith.constant dense<0.000000e+00> : vector<4x128xf32>
    %761 = tpu.matmul %708, %22, %cst_126 {dimension_numbers = #tpu.dot_dimension_numbers<[1], [0], [0], [1], [0, 0, 1, 1], [], []>} : vector<4x32xf32>, vector<32x128xf32>, vector<4x128xf32> -> vector<4x128xf32>
    %762 = arith.addf %760, %761 : vector<4x128xf32>
    %763 = vector.broadcast %23 : vector<1x128xf32> to vector<4x128xf32>
    %764 = arith.addf %762, %763 : vector<4x128xf32>
    %765 = arith.negf %759 : vector<4x128xf32>
    %766 = math.exp %765 : vector<4x128xf32>
    %cst_127 = arith.constant 1.000000e+00 : f32
    %767 = vector.broadcast %cst_127 : f32 to vector<4x128xf32>
    %768 = arith.addf %767, %766 : vector<4x128xf32>
    %769 = arith.divf %767, %768 : vector<4x128xf32>
    %770 = math.tanh %759 : vector<4x128xf32>
    %771 = vector.extract_strided_slice %769 {offsets = [0, 0], sizes = [4, 32], strides = [1, 1]} : vector<4x128xf32> to vector<4x32xf32>
    %772 = vector.extract_strided_slice %769 {offsets = [0, 32], sizes = [4, 32], strides = [1, 1]} : vector<4x128xf32> to vector<4x32xf32>
    %773 = vector.extract_strided_slice %770 {offsets = [0, 64], sizes = [4, 32], strides = [1, 1]} : vector<4x128xf32> to vector<4x32xf32>
    %774 = vector.extract_strided_slice %769 {offsets = [0, 96], sizes = [4, 32], strides = [1, 1]} : vector<4x128xf32> to vector<4x32xf32>
    %775 = arith.mulf %772, %691 : vector<4x32xf32>
    %776 = arith.mulf %771, %773 : vector<4x32xf32>
    %777 = arith.addf %775, %776 : vector<4x32xf32>
    %778 = math.tanh %777 : vector<4x32xf32>
    %779 = arith.mulf %774, %778 : vector<4x32xf32>
    %780 = arith.negf %764 : vector<4x128xf32>
    %781 = math.exp %780 : vector<4x128xf32>
    %cst_128 = arith.constant 1.000000e+00 : f32
    %782 = vector.broadcast %cst_128 : f32 to vector<4x128xf32>
    %783 = arith.addf %782, %781 : vector<4x128xf32>
    %784 = arith.divf %782, %783 : vector<4x128xf32>
    %785 = math.tanh %764 : vector<4x128xf32>
    %786 = vector.extract_strided_slice %784 {offsets = [0, 0], sizes = [4, 32], strides = [1, 1]} : vector<4x128xf32> to vector<4x32xf32>
    %787 = vector.extract_strided_slice %784 {offsets = [0, 32], sizes = [4, 32], strides = [1, 1]} : vector<4x128xf32> to vector<4x32xf32>
    %788 = vector.extract_strided_slice %785 {offsets = [0, 64], sizes = [4, 32], strides = [1, 1]} : vector<4x128xf32> to vector<4x32xf32>
    %789 = vector.extract_strided_slice %784 {offsets = [0, 96], sizes = [4, 32], strides = [1, 1]} : vector<4x128xf32> to vector<4x32xf32>
    %790 = arith.mulf %787, %706 : vector<4x32xf32>
    %791 = arith.mulf %786, %788 : vector<4x32xf32>
    %792 = arith.addf %790, %791 : vector<4x32xf32>
    %793 = math.tanh %792 : vector<4x32xf32>
    %794 = arith.mulf %789, %793 : vector<4x32xf32>
    %c8_i32 = arith.constant 8 : i32
    %795 = vector.broadcast %c8_i32 : i32 to vector<4x1xi32>
    %796 = arith.cmpi eq, %26, %795 : vector<4x1xi32>
    %797 = vector.shape_cast %796 : vector<4x1xi1> to vector<4x1xi1>
    %798 = vector.broadcast %797 : vector<4x1xi1> to vector<4x32xi1>
    %799 = arith.select %798, %779, %713 : vector<4x32xi1>, vector<4x32xf32>
    %c8_i32_129 = arith.constant 8 : i32
    %800 = vector.broadcast %c8_i32_129 : i32 to vector<4x1xi32>
    %801 = arith.cmpi eq, %29, %800 : vector<4x1xi32>
    %802 = vector.shape_cast %801 : vector<4x1xi1> to vector<4x1xi1>
    %803 = vector.broadcast %802 : vector<4x1xi1> to vector<4x32xi1>
    %804 = arith.select %803, %794, %718 : vector<4x32xi1>, vector<4x32xf32>
    %805 = vector.extract_strided_slice %7 {offsets = [36, 0], sizes = [4, 128], strides = [1, 1]} : vector<48x128xf32> to vector<4x128xf32>
    %806 = vector.extract_strided_slice %15 {offsets = [36, 0], sizes = [4, 128], strides = [1, 1]} : vector<48x128xf32> to vector<4x128xf32>
    %cst_130 = arith.constant dense<0.000000e+00> : vector<4x128xf32>
    %807 = tpu.matmul %739, %16, %cst_130 {dimension_numbers = #tpu.dot_dimension_numbers<[1], [0], [0], [1], [0, 0, 1, 1], [], []>} : vector<4x32xf32>, vector<32x128xf32>, vector<4x128xf32> -> vector<4x128xf32>
    %808 = arith.addf %805, %807 : vector<4x128xf32>
    %cst_131 = arith.constant dense<0.000000e+00> : vector<4x128xf32>
    %809 = tpu.matmul %754, %20, %cst_131 {dimension_numbers = #tpu.dot_dimension_numbers<[1], [0], [0], [1], [0, 0, 1, 1], [], []>} : vector<4x32xf32>, vector<32x128xf32>, vector<4x128xf32> -> vector<4x128xf32>
    %810 = arith.addf %806, %809 : vector<4x128xf32>
    %811 = arith.negf %808 : vector<4x128xf32>
    %812 = math.exp %811 : vector<4x128xf32>
    %cst_132 = arith.constant 1.000000e+00 : f32
    %813 = vector.broadcast %cst_132 : f32 to vector<4x128xf32>
    %814 = arith.addf %813, %812 : vector<4x128xf32>
    %815 = arith.divf %813, %814 : vector<4x128xf32>
    %816 = math.tanh %808 : vector<4x128xf32>
    %817 = vector.extract_strided_slice %815 {offsets = [0, 0], sizes = [4, 32], strides = [1, 1]} : vector<4x128xf32> to vector<4x32xf32>
    %818 = vector.extract_strided_slice %815 {offsets = [0, 32], sizes = [4, 32], strides = [1, 1]} : vector<4x128xf32> to vector<4x32xf32>
    %819 = vector.extract_strided_slice %816 {offsets = [0, 64], sizes = [4, 32], strides = [1, 1]} : vector<4x128xf32> to vector<4x32xf32>
    %820 = vector.extract_strided_slice %815 {offsets = [0, 96], sizes = [4, 32], strides = [1, 1]} : vector<4x128xf32> to vector<4x32xf32>
    %821 = arith.mulf %818, %737 : vector<4x32xf32>
    %822 = arith.mulf %817, %819 : vector<4x32xf32>
    %823 = arith.addf %821, %822 : vector<4x32xf32>
    %824 = math.tanh %823 : vector<4x32xf32>
    %825 = arith.mulf %820, %824 : vector<4x32xf32>
    %826 = arith.negf %810 : vector<4x128xf32>
    %827 = math.exp %826 : vector<4x128xf32>
    %cst_133 = arith.constant 1.000000e+00 : f32
    %828 = vector.broadcast %cst_133 : f32 to vector<4x128xf32>
    %829 = arith.addf %828, %827 : vector<4x128xf32>
    %830 = arith.divf %828, %829 : vector<4x128xf32>
    %831 = math.tanh %810 : vector<4x128xf32>
    %832 = vector.extract_strided_slice %830 {offsets = [0, 0], sizes = [4, 32], strides = [1, 1]} : vector<4x128xf32> to vector<4x32xf32>
    %833 = vector.extract_strided_slice %830 {offsets = [0, 32], sizes = [4, 32], strides = [1, 1]} : vector<4x128xf32> to vector<4x32xf32>
    %834 = vector.extract_strided_slice %831 {offsets = [0, 64], sizes = [4, 32], strides = [1, 1]} : vector<4x128xf32> to vector<4x32xf32>
    %835 = vector.extract_strided_slice %830 {offsets = [0, 96], sizes = [4, 32], strides = [1, 1]} : vector<4x128xf32> to vector<4x32xf32>
    %836 = arith.mulf %833, %752 : vector<4x32xf32>
    %837 = arith.mulf %832, %834 : vector<4x32xf32>
    %838 = arith.addf %836, %837 : vector<4x32xf32>
    %839 = math.tanh %838 : vector<4x32xf32>
    %840 = arith.mulf %835, %839 : vector<4x32xf32>
    %cst_134 = arith.constant dense<0.000000e+00> : vector<4x128xf32>
    %841 = tpu.matmul %825, %17, %cst_134 {dimension_numbers = #tpu.dot_dimension_numbers<[1], [0], [0], [1], [0, 0, 1, 1], [], []>} : vector<4x32xf32>, vector<32x128xf32>, vector<4x128xf32> -> vector<4x128xf32>
    %cst_135 = arith.constant dense<0.000000e+00> : vector<4x128xf32>
    %842 = tpu.matmul %779, %18, %cst_135 {dimension_numbers = #tpu.dot_dimension_numbers<[1], [0], [0], [1], [0, 0, 1, 1], [], []>} : vector<4x32xf32>, vector<32x128xf32>, vector<4x128xf32> -> vector<4x128xf32>
    %843 = arith.addf %841, %842 : vector<4x128xf32>
    %844 = vector.broadcast %19 : vector<1x128xf32> to vector<4x128xf32>
    %845 = arith.addf %843, %844 : vector<4x128xf32>
    %cst_136 = arith.constant dense<0.000000e+00> : vector<4x128xf32>
    %846 = tpu.matmul %840, %21, %cst_136 {dimension_numbers = #tpu.dot_dimension_numbers<[1], [0], [0], [1], [0, 0, 1, 1], [], []>} : vector<4x32xf32>, vector<32x128xf32>, vector<4x128xf32> -> vector<4x128xf32>
    %cst_137 = arith.constant dense<0.000000e+00> : vector<4x128xf32>
    %847 = tpu.matmul %794, %22, %cst_137 {dimension_numbers = #tpu.dot_dimension_numbers<[1], [0], [0], [1], [0, 0, 1, 1], [], []>} : vector<4x32xf32>, vector<32x128xf32>, vector<4x128xf32> -> vector<4x128xf32>
    %848 = arith.addf %846, %847 : vector<4x128xf32>
    %849 = vector.broadcast %23 : vector<1x128xf32> to vector<4x128xf32>
    %850 = arith.addf %848, %849 : vector<4x128xf32>
    %851 = arith.negf %845 : vector<4x128xf32>
    %852 = math.exp %851 : vector<4x128xf32>
    %cst_138 = arith.constant 1.000000e+00 : f32
    %853 = vector.broadcast %cst_138 : f32 to vector<4x128xf32>
    %854 = arith.addf %853, %852 : vector<4x128xf32>
    %855 = arith.divf %853, %854 : vector<4x128xf32>
    %856 = math.tanh %845 : vector<4x128xf32>
    %857 = vector.extract_strided_slice %855 {offsets = [0, 0], sizes = [4, 32], strides = [1, 1]} : vector<4x128xf32> to vector<4x32xf32>
    %858 = vector.extract_strided_slice %855 {offsets = [0, 32], sizes = [4, 32], strides = [1, 1]} : vector<4x128xf32> to vector<4x32xf32>
    %859 = vector.extract_strided_slice %856 {offsets = [0, 64], sizes = [4, 32], strides = [1, 1]} : vector<4x128xf32> to vector<4x32xf32>
    %860 = vector.extract_strided_slice %855 {offsets = [0, 96], sizes = [4, 32], strides = [1, 1]} : vector<4x128xf32> to vector<4x32xf32>
    %861 = arith.mulf %858, %777 : vector<4x32xf32>
    %862 = arith.mulf %857, %859 : vector<4x32xf32>
    %863 = arith.addf %861, %862 : vector<4x32xf32>
    %864 = math.tanh %863 : vector<4x32xf32>
    %865 = arith.mulf %860, %864 : vector<4x32xf32>
    %866 = arith.negf %850 : vector<4x128xf32>
    %867 = math.exp %866 : vector<4x128xf32>
    %cst_139 = arith.constant 1.000000e+00 : f32
    %868 = vector.broadcast %cst_139 : f32 to vector<4x128xf32>
    %869 = arith.addf %868, %867 : vector<4x128xf32>
    %870 = arith.divf %868, %869 : vector<4x128xf32>
    %871 = math.tanh %850 : vector<4x128xf32>
    %872 = vector.extract_strided_slice %870 {offsets = [0, 0], sizes = [4, 32], strides = [1, 1]} : vector<4x128xf32> to vector<4x32xf32>
    %873 = vector.extract_strided_slice %870 {offsets = [0, 32], sizes = [4, 32], strides = [1, 1]} : vector<4x128xf32> to vector<4x32xf32>
    %874 = vector.extract_strided_slice %871 {offsets = [0, 64], sizes = [4, 32], strides = [1, 1]} : vector<4x128xf32> to vector<4x32xf32>
    %875 = vector.extract_strided_slice %870 {offsets = [0, 96], sizes = [4, 32], strides = [1, 1]} : vector<4x128xf32> to vector<4x32xf32>
    %876 = arith.mulf %873, %792 : vector<4x32xf32>
    %877 = arith.mulf %872, %874 : vector<4x32xf32>
    %878 = arith.addf %876, %877 : vector<4x32xf32>
    %879 = math.tanh %878 : vector<4x32xf32>
    %880 = arith.mulf %875, %879 : vector<4x32xf32>
    %c9_i32 = arith.constant 9 : i32
    %881 = vector.broadcast %c9_i32 : i32 to vector<4x1xi32>
    %882 = arith.cmpi eq, %26, %881 : vector<4x1xi32>
    %883 = vector.shape_cast %882 : vector<4x1xi1> to vector<4x1xi1>
    %884 = vector.broadcast %883 : vector<4x1xi1> to vector<4x32xi1>
    %885 = arith.select %884, %865, %799 : vector<4x32xi1>, vector<4x32xf32>
    %c9_i32_140 = arith.constant 9 : i32
    %886 = vector.broadcast %c9_i32_140 : i32 to vector<4x1xi32>
    %887 = arith.cmpi eq, %29, %886 : vector<4x1xi32>
    %888 = vector.shape_cast %887 : vector<4x1xi1> to vector<4x1xi1>
    %889 = vector.broadcast %888 : vector<4x1xi1> to vector<4x32xi1>
    %890 = arith.select %889, %880, %804 : vector<4x32xi1>, vector<4x32xf32>
    %891 = vector.extract_strided_slice %7 {offsets = [40, 0], sizes = [4, 128], strides = [1, 1]} : vector<48x128xf32> to vector<4x128xf32>
    %892 = vector.extract_strided_slice %15 {offsets = [40, 0], sizes = [4, 128], strides = [1, 1]} : vector<48x128xf32> to vector<4x128xf32>
    %cst_141 = arith.constant dense<0.000000e+00> : vector<4x128xf32>
    %893 = tpu.matmul %825, %16, %cst_141 {dimension_numbers = #tpu.dot_dimension_numbers<[1], [0], [0], [1], [0, 0, 1, 1], [], []>} : vector<4x32xf32>, vector<32x128xf32>, vector<4x128xf32> -> vector<4x128xf32>
    %894 = arith.addf %891, %893 : vector<4x128xf32>
    %cst_142 = arith.constant dense<0.000000e+00> : vector<4x128xf32>
    %895 = tpu.matmul %840, %20, %cst_142 {dimension_numbers = #tpu.dot_dimension_numbers<[1], [0], [0], [1], [0, 0, 1, 1], [], []>} : vector<4x32xf32>, vector<32x128xf32>, vector<4x128xf32> -> vector<4x128xf32>
    %896 = arith.addf %892, %895 : vector<4x128xf32>
    %897 = arith.negf %894 : vector<4x128xf32>
    %898 = math.exp %897 : vector<4x128xf32>
    %cst_143 = arith.constant 1.000000e+00 : f32
    %899 = vector.broadcast %cst_143 : f32 to vector<4x128xf32>
    %900 = arith.addf %899, %898 : vector<4x128xf32>
    %901 = arith.divf %899, %900 : vector<4x128xf32>
    %902 = math.tanh %894 : vector<4x128xf32>
    %903 = vector.extract_strided_slice %901 {offsets = [0, 0], sizes = [4, 32], strides = [1, 1]} : vector<4x128xf32> to vector<4x32xf32>
    %904 = vector.extract_strided_slice %901 {offsets = [0, 32], sizes = [4, 32], strides = [1, 1]} : vector<4x128xf32> to vector<4x32xf32>
    %905 = vector.extract_strided_slice %902 {offsets = [0, 64], sizes = [4, 32], strides = [1, 1]} : vector<4x128xf32> to vector<4x32xf32>
    %906 = vector.extract_strided_slice %901 {offsets = [0, 96], sizes = [4, 32], strides = [1, 1]} : vector<4x128xf32> to vector<4x32xf32>
    %907 = arith.mulf %904, %823 : vector<4x32xf32>
    %908 = arith.mulf %903, %905 : vector<4x32xf32>
    %909 = arith.addf %907, %908 : vector<4x32xf32>
    %910 = math.tanh %909 : vector<4x32xf32>
    %911 = arith.mulf %906, %910 : vector<4x32xf32>
    %912 = arith.negf %896 : vector<4x128xf32>
    %913 = math.exp %912 : vector<4x128xf32>
    %cst_144 = arith.constant 1.000000e+00 : f32
    %914 = vector.broadcast %cst_144 : f32 to vector<4x128xf32>
    %915 = arith.addf %914, %913 : vector<4x128xf32>
    %916 = arith.divf %914, %915 : vector<4x128xf32>
    %917 = math.tanh %896 : vector<4x128xf32>
    %918 = vector.extract_strided_slice %916 {offsets = [0, 0], sizes = [4, 32], strides = [1, 1]} : vector<4x128xf32> to vector<4x32xf32>
    %919 = vector.extract_strided_slice %916 {offsets = [0, 32], sizes = [4, 32], strides = [1, 1]} : vector<4x128xf32> to vector<4x32xf32>
    %920 = vector.extract_strided_slice %917 {offsets = [0, 64], sizes = [4, 32], strides = [1, 1]} : vector<4x128xf32> to vector<4x32xf32>
    %921 = vector.extract_strided_slice %916 {offsets = [0, 96], sizes = [4, 32], strides = [1, 1]} : vector<4x128xf32> to vector<4x32xf32>
    %922 = arith.mulf %919, %838 : vector<4x32xf32>
    %923 = arith.mulf %918, %920 : vector<4x32xf32>
    %924 = arith.addf %922, %923 : vector<4x32xf32>
    %925 = math.tanh %924 : vector<4x32xf32>
    %926 = arith.mulf %921, %925 : vector<4x32xf32>
    %cst_145 = arith.constant dense<0.000000e+00> : vector<4x128xf32>
    %927 = tpu.matmul %911, %17, %cst_145 {dimension_numbers = #tpu.dot_dimension_numbers<[1], [0], [0], [1], [0, 0, 1, 1], [], []>} : vector<4x32xf32>, vector<32x128xf32>, vector<4x128xf32> -> vector<4x128xf32>
    %cst_146 = arith.constant dense<0.000000e+00> : vector<4x128xf32>
    %928 = tpu.matmul %865, %18, %cst_146 {dimension_numbers = #tpu.dot_dimension_numbers<[1], [0], [0], [1], [0, 0, 1, 1], [], []>} : vector<4x32xf32>, vector<32x128xf32>, vector<4x128xf32> -> vector<4x128xf32>
    %929 = arith.addf %927, %928 : vector<4x128xf32>
    %930 = vector.broadcast %19 : vector<1x128xf32> to vector<4x128xf32>
    %931 = arith.addf %929, %930 : vector<4x128xf32>
    %cst_147 = arith.constant dense<0.000000e+00> : vector<4x128xf32>
    %932 = tpu.matmul %926, %21, %cst_147 {dimension_numbers = #tpu.dot_dimension_numbers<[1], [0], [0], [1], [0, 0, 1, 1], [], []>} : vector<4x32xf32>, vector<32x128xf32>, vector<4x128xf32> -> vector<4x128xf32>
    %cst_148 = arith.constant dense<0.000000e+00> : vector<4x128xf32>
    %933 = tpu.matmul %880, %22, %cst_148 {dimension_numbers = #tpu.dot_dimension_numbers<[1], [0], [0], [1], [0, 0, 1, 1], [], []>} : vector<4x32xf32>, vector<32x128xf32>, vector<4x128xf32> -> vector<4x128xf32>
    %934 = arith.addf %932, %933 : vector<4x128xf32>
    %935 = vector.broadcast %23 : vector<1x128xf32> to vector<4x128xf32>
    %936 = arith.addf %934, %935 : vector<4x128xf32>
    %937 = arith.negf %931 : vector<4x128xf32>
    %938 = math.exp %937 : vector<4x128xf32>
    %cst_149 = arith.constant 1.000000e+00 : f32
    %939 = vector.broadcast %cst_149 : f32 to vector<4x128xf32>
    %940 = arith.addf %939, %938 : vector<4x128xf32>
    %941 = arith.divf %939, %940 : vector<4x128xf32>
    %942 = math.tanh %931 : vector<4x128xf32>
    %943 = vector.extract_strided_slice %941 {offsets = [0, 0], sizes = [4, 32], strides = [1, 1]} : vector<4x128xf32> to vector<4x32xf32>
    %944 = vector.extract_strided_slice %941 {offsets = [0, 32], sizes = [4, 32], strides = [1, 1]} : vector<4x128xf32> to vector<4x32xf32>
    %945 = vector.extract_strided_slice %942 {offsets = [0, 64], sizes = [4, 32], strides = [1, 1]} : vector<4x128xf32> to vector<4x32xf32>
    %946 = vector.extract_strided_slice %941 {offsets = [0, 96], sizes = [4, 32], strides = [1, 1]} : vector<4x128xf32> to vector<4x32xf32>
    %947 = arith.mulf %944, %863 : vector<4x32xf32>
    %948 = arith.mulf %943, %945 : vector<4x32xf32>
    %949 = arith.addf %947, %948 : vector<4x32xf32>
    %950 = math.tanh %949 : vector<4x32xf32>
    %951 = arith.mulf %946, %950 : vector<4x32xf32>
    %952 = arith.negf %936 : vector<4x128xf32>
    %953 = math.exp %952 : vector<4x128xf32>
    %cst_150 = arith.constant 1.000000e+00 : f32
    %954 = vector.broadcast %cst_150 : f32 to vector<4x128xf32>
    %955 = arith.addf %954, %953 : vector<4x128xf32>
    %956 = arith.divf %954, %955 : vector<4x128xf32>
    %957 = math.tanh %936 : vector<4x128xf32>
    %958 = vector.extract_strided_slice %956 {offsets = [0, 0], sizes = [4, 32], strides = [1, 1]} : vector<4x128xf32> to vector<4x32xf32>
    %959 = vector.extract_strided_slice %956 {offsets = [0, 32], sizes = [4, 32], strides = [1, 1]} : vector<4x128xf32> to vector<4x32xf32>
    %960 = vector.extract_strided_slice %957 {offsets = [0, 64], sizes = [4, 32], strides = [1, 1]} : vector<4x128xf32> to vector<4x32xf32>
    %961 = vector.extract_strided_slice %956 {offsets = [0, 96], sizes = [4, 32], strides = [1, 1]} : vector<4x128xf32> to vector<4x32xf32>
    %962 = arith.mulf %959, %878 : vector<4x32xf32>
    %963 = arith.mulf %958, %960 : vector<4x32xf32>
    %964 = arith.addf %962, %963 : vector<4x32xf32>
    %965 = math.tanh %964 : vector<4x32xf32>
    %966 = arith.mulf %961, %965 : vector<4x32xf32>
    %c10_i32 = arith.constant 10 : i32
    %967 = vector.broadcast %c10_i32 : i32 to vector<4x1xi32>
    %968 = arith.cmpi eq, %26, %967 : vector<4x1xi32>
    %969 = vector.shape_cast %968 : vector<4x1xi1> to vector<4x1xi1>
    %970 = vector.broadcast %969 : vector<4x1xi1> to vector<4x32xi1>
    %971 = arith.select %970, %951, %885 : vector<4x32xi1>, vector<4x32xf32>
    %c10_i32_151 = arith.constant 10 : i32
    %972 = vector.broadcast %c10_i32_151 : i32 to vector<4x1xi32>
    %973 = arith.cmpi eq, %29, %972 : vector<4x1xi32>
    %974 = vector.shape_cast %973 : vector<4x1xi1> to vector<4x1xi1>
    %975 = vector.broadcast %974 : vector<4x1xi1> to vector<4x32xi1>
    %976 = arith.select %975, %966, %890 : vector<4x32xi1>, vector<4x32xf32>
    %977 = vector.extract_strided_slice %7 {offsets = [44, 0], sizes = [4, 128], strides = [1, 1]} : vector<48x128xf32> to vector<4x128xf32>
    %978 = vector.extract_strided_slice %15 {offsets = [44, 0], sizes = [4, 128], strides = [1, 1]} : vector<48x128xf32> to vector<4x128xf32>
    %cst_152 = arith.constant dense<0.000000e+00> : vector<4x128xf32>
    %979 = tpu.matmul %911, %16, %cst_152 {dimension_numbers = #tpu.dot_dimension_numbers<[1], [0], [0], [1], [0, 0, 1, 1], [], []>} : vector<4x32xf32>, vector<32x128xf32>, vector<4x128xf32> -> vector<4x128xf32>
    %980 = arith.addf %977, %979 : vector<4x128xf32>
    %cst_153 = arith.constant dense<0.000000e+00> : vector<4x128xf32>
    %981 = tpu.matmul %926, %20, %cst_153 {dimension_numbers = #tpu.dot_dimension_numbers<[1], [0], [0], [1], [0, 0, 1, 1], [], []>} : vector<4x32xf32>, vector<32x128xf32>, vector<4x128xf32> -> vector<4x128xf32>
    %982 = arith.addf %978, %981 : vector<4x128xf32>
    %983 = arith.negf %980 : vector<4x128xf32>
    %984 = math.exp %983 : vector<4x128xf32>
    %cst_154 = arith.constant 1.000000e+00 : f32
    %985 = vector.broadcast %cst_154 : f32 to vector<4x128xf32>
    %986 = arith.addf %985, %984 : vector<4x128xf32>
    %987 = arith.divf %985, %986 : vector<4x128xf32>
    %988 = math.tanh %980 : vector<4x128xf32>
    %989 = vector.extract_strided_slice %987 {offsets = [0, 0], sizes = [4, 32], strides = [1, 1]} : vector<4x128xf32> to vector<4x32xf32>
    %990 = vector.extract_strided_slice %987 {offsets = [0, 32], sizes = [4, 32], strides = [1, 1]} : vector<4x128xf32> to vector<4x32xf32>
    %991 = vector.extract_strided_slice %988 {offsets = [0, 64], sizes = [4, 32], strides = [1, 1]} : vector<4x128xf32> to vector<4x32xf32>
    %992 = vector.extract_strided_slice %987 {offsets = [0, 96], sizes = [4, 32], strides = [1, 1]} : vector<4x128xf32> to vector<4x32xf32>
    %993 = arith.mulf %990, %909 : vector<4x32xf32>
    %994 = arith.mulf %989, %991 : vector<4x32xf32>
    %995 = arith.addf %993, %994 : vector<4x32xf32>
    %996 = math.tanh %995 : vector<4x32xf32>
    %997 = arith.mulf %992, %996 : vector<4x32xf32>
    %998 = arith.negf %982 : vector<4x128xf32>
    %999 = math.exp %998 : vector<4x128xf32>
    %cst_155 = arith.constant 1.000000e+00 : f32
    %1000 = vector.broadcast %cst_155 : f32 to vector<4x128xf32>
    %1001 = arith.addf %1000, %999 : vector<4x128xf32>
    %1002 = arith.divf %1000, %1001 : vector<4x128xf32>
    %1003 = math.tanh %982 : vector<4x128xf32>
    %1004 = vector.extract_strided_slice %1002 {offsets = [0, 0], sizes = [4, 32], strides = [1, 1]} : vector<4x128xf32> to vector<4x32xf32>
    %1005 = vector.extract_strided_slice %1002 {offsets = [0, 32], sizes = [4, 32], strides = [1, 1]} : vector<4x128xf32> to vector<4x32xf32>
    %1006 = vector.extract_strided_slice %1003 {offsets = [0, 64], sizes = [4, 32], strides = [1, 1]} : vector<4x128xf32> to vector<4x32xf32>
    %1007 = vector.extract_strided_slice %1002 {offsets = [0, 96], sizes = [4, 32], strides = [1, 1]} : vector<4x128xf32> to vector<4x32xf32>
    %1008 = arith.mulf %1005, %924 : vector<4x32xf32>
    %1009 = arith.mulf %1004, %1006 : vector<4x32xf32>
    %1010 = arith.addf %1008, %1009 : vector<4x32xf32>
    %1011 = math.tanh %1010 : vector<4x32xf32>
    %1012 = arith.mulf %1007, %1011 : vector<4x32xf32>
    %cst_156 = arith.constant dense<0.000000e+00> : vector<4x128xf32>
    %1013 = tpu.matmul %997, %17, %cst_156 {dimension_numbers = #tpu.dot_dimension_numbers<[1], [0], [0], [1], [0, 0, 1, 1], [], []>} : vector<4x32xf32>, vector<32x128xf32>, vector<4x128xf32> -> vector<4x128xf32>
    %cst_157 = arith.constant dense<0.000000e+00> : vector<4x128xf32>
    %1014 = tpu.matmul %951, %18, %cst_157 {dimension_numbers = #tpu.dot_dimension_numbers<[1], [0], [0], [1], [0, 0, 1, 1], [], []>} : vector<4x32xf32>, vector<32x128xf32>, vector<4x128xf32> -> vector<4x128xf32>
    %1015 = arith.addf %1013, %1014 : vector<4x128xf32>
    %1016 = vector.broadcast %19 : vector<1x128xf32> to vector<4x128xf32>
    %1017 = arith.addf %1015, %1016 : vector<4x128xf32>
    %cst_158 = arith.constant dense<0.000000e+00> : vector<4x128xf32>
    %1018 = tpu.matmul %1012, %21, %cst_158 {dimension_numbers = #tpu.dot_dimension_numbers<[1], [0], [0], [1], [0, 0, 1, 1], [], []>} : vector<4x32xf32>, vector<32x128xf32>, vector<4x128xf32> -> vector<4x128xf32>
    %cst_159 = arith.constant dense<0.000000e+00> : vector<4x128xf32>
    %1019 = tpu.matmul %966, %22, %cst_159 {dimension_numbers = #tpu.dot_dimension_numbers<[1], [0], [0], [1], [0, 0, 1, 1], [], []>} : vector<4x32xf32>, vector<32x128xf32>, vector<4x128xf32> -> vector<4x128xf32>
    %1020 = arith.addf %1018, %1019 : vector<4x128xf32>
    %1021 = vector.broadcast %23 : vector<1x128xf32> to vector<4x128xf32>
    %1022 = arith.addf %1020, %1021 : vector<4x128xf32>
    %1023 = arith.negf %1017 : vector<4x128xf32>
    %1024 = math.exp %1023 : vector<4x128xf32>
    %cst_160 = arith.constant 1.000000e+00 : f32
    %1025 = vector.broadcast %cst_160 : f32 to vector<4x128xf32>
    %1026 = arith.addf %1025, %1024 : vector<4x128xf32>
    %1027 = arith.divf %1025, %1026 : vector<4x128xf32>
    %1028 = math.tanh %1017 : vector<4x128xf32>
    %1029 = vector.extract_strided_slice %1027 {offsets = [0, 0], sizes = [4, 32], strides = [1, 1]} : vector<4x128xf32> to vector<4x32xf32>
    %1030 = vector.extract_strided_slice %1027 {offsets = [0, 32], sizes = [4, 32], strides = [1, 1]} : vector<4x128xf32> to vector<4x32xf32>
    %1031 = vector.extract_strided_slice %1028 {offsets = [0, 64], sizes = [4, 32], strides = [1, 1]} : vector<4x128xf32> to vector<4x32xf32>
    %1032 = vector.extract_strided_slice %1027 {offsets = [0, 96], sizes = [4, 32], strides = [1, 1]} : vector<4x128xf32> to vector<4x32xf32>
    %1033 = arith.mulf %1030, %949 : vector<4x32xf32>
    %1034 = arith.mulf %1029, %1031 : vector<4x32xf32>
    %1035 = arith.addf %1033, %1034 : vector<4x32xf32>
    %1036 = math.tanh %1035 : vector<4x32xf32>
    %1037 = arith.mulf %1032, %1036 : vector<4x32xf32>
    %1038 = arith.negf %1022 : vector<4x128xf32>
    %1039 = math.exp %1038 : vector<4x128xf32>
    %cst_161 = arith.constant 1.000000e+00 : f32
    %1040 = vector.broadcast %cst_161 : f32 to vector<4x128xf32>
    %1041 = arith.addf %1040, %1039 : vector<4x128xf32>
    %1042 = arith.divf %1040, %1041 : vector<4x128xf32>
    %1043 = math.tanh %1022 : vector<4x128xf32>
    %1044 = vector.extract_strided_slice %1042 {offsets = [0, 0], sizes = [4, 32], strides = [1, 1]} : vector<4x128xf32> to vector<4x32xf32>
    %1045 = vector.extract_strided_slice %1042 {offsets = [0, 32], sizes = [4, 32], strides = [1, 1]} : vector<4x128xf32> to vector<4x32xf32>
    %1046 = vector.extract_strided_slice %1043 {offsets = [0, 64], sizes = [4, 32], strides = [1, 1]} : vector<4x128xf32> to vector<4x32xf32>
    %1047 = vector.extract_strided_slice %1042 {offsets = [0, 96], sizes = [4, 32], strides = [1, 1]} : vector<4x128xf32> to vector<4x32xf32>
    %1048 = arith.mulf %1045, %964 : vector<4x32xf32>
    %1049 = arith.mulf %1044, %1046 : vector<4x32xf32>
    %1050 = arith.addf %1048, %1049 : vector<4x32xf32>
    %1051 = math.tanh %1050 : vector<4x32xf32>
    %1052 = arith.mulf %1047, %1051 : vector<4x32xf32>
    %c11_i32 = arith.constant 11 : i32
    %1053 = vector.broadcast %c11_i32 : i32 to vector<4x1xi32>
    %1054 = arith.cmpi eq, %26, %1053 : vector<4x1xi32>
    %1055 = vector.shape_cast %1054 : vector<4x1xi1> to vector<4x1xi1>
    %1056 = vector.broadcast %1055 : vector<4x1xi1> to vector<4x32xi1>
    %1057 = arith.select %1056, %1037, %971 : vector<4x32xi1>, vector<4x32xf32>
    %c11_i32_162 = arith.constant 11 : i32
    %1058 = vector.broadcast %c11_i32_162 : i32 to vector<4x1xi32>
    %1059 = arith.cmpi eq, %29, %1058 : vector<4x1xi32>
    %1060 = vector.shape_cast %1059 : vector<4x1xi1> to vector<4x1xi1>
    %1061 = vector.broadcast %1060 : vector<4x1xi1> to vector<4x32xi1>
    %1062 = arith.select %1061, %1052, %976 : vector<4x32xi1>, vector<4x32xf32>
    %c0_163 = arith.constant 0 : index
    %c0_164 = arith.constant 0 : index
    %1063 = vector.load %arg15[%c0_163, %c0_164] : memref<32x32xf32, #tpu.memory_space<vmem>>, vector<32x32xf32>
    %cst_165 = arith.constant dense<0.000000e+00> : vector<4x32xf32>
    %1064 = tpu.matmul %1057, %1063, %cst_165 {dimension_numbers = #tpu.dot_dimension_numbers<[1], [0], [0], [1], [0, 0, 1, 1], [], []>} : vector<4x32xf32>, vector<32x32xf32>, vector<4x32xf32> -> vector<4x32xf32>
    %c0_166 = arith.constant 0 : index
    %c0_167 = arith.constant 0 : index
    %1065 = vector.load %arg16[%c0_166, %c0_167] : memref<32x32xf32, #tpu.memory_space<vmem>>, vector<32x32xf32>
    %cst_168 = arith.constant dense<0.000000e+00> : vector<4x32xf32>
    %1066 = tpu.matmul %1062, %1065, %cst_168 {dimension_numbers = #tpu.dot_dimension_numbers<[1], [0], [0], [1], [0, 0, 1, 1], [], []>} : vector<4x32xf32>, vector<32x32xf32>, vector<4x32xf32> -> vector<4x32xf32>
    %1067 = arith.addf %1064, %1066 : vector<4x32xf32>
    %c0_169 = arith.constant 0 : index
    %c0_170 = arith.constant 0 : index
    %1068 = vector.load %arg17[%c0_169, %c0_170] : memref<1x32xf32, #tpu.memory_space<vmem>>, vector<1x32xf32>
    %1069 = vector.broadcast %1068 : vector<1x32xf32> to vector<4x32xf32>
    %1070 = arith.addf %1067, %1069 : vector<4x32xf32>
    %cst_171 = arith.constant 0.000000e+00 : f32
    %1071 = vector.broadcast %cst_171 : f32 to vector<4x32xf32>
    %1072 = arith.cmpf oge, %1070, %1071 : vector<4x32xf32>
    %cst_172 = arith.constant 0.00999999977 : f32
    %1073 = vector.broadcast %cst_172 : f32 to vector<4x32xf32>
    %1074 = arith.mulf %1073, %1070 : vector<4x32xf32>
    %1075 = arith.select %1072, %1070, %1074 : vector<4x32xi1>, vector<4x32xf32>
    %c0_173 = arith.constant 0 : index
    %c0_174 = arith.constant 0 : index
    %1076 = vector.load %arg18[%c0_173, %c0_174] : memref<32x1xf32, #tpu.memory_space<vmem>>, vector<32x1xf32>
    %cst_175 = arith.constant dense<0.000000e+00> : vector<4x1xf32>
    %1077 = tpu.matmul %1075, %1076, %cst_175 {dimension_numbers = #tpu.dot_dimension_numbers<[1], [0], [0], [1], [0, 0, 1, 1], [], []>} : vector<4x32xf32>, vector<32x1xf32>, vector<4x1xf32> -> vector<4x1xf32>
    %c0_176 = arith.constant 0 : index
    %c0_177 = arith.constant 0 : index
    %1078 = vector.load %arg19[%c0_176, %c0_177] : memref<1x1xf32, #tpu.memory_space<vmem>>, vector<1x1xf32>
    %1079 = vector.broadcast %1078 : vector<1x1xf32> to vector<4x1xf32>
    %1080 = arith.addf %1077, %1079 : vector<4x1xf32>
    %1081 = arith.negf %1080 : vector<4x1xf32>
    %1082 = math.exp %1081 : vector<4x1xf32>
    %cst_178 = arith.constant 1.000000e+00 : f32
    %1083 = vector.broadcast %cst_178 : f32 to vector<4x1xf32>
    %1084 = arith.addf %1083, %1082 : vector<4x1xf32>
    %1085 = arith.divf %1083, %1084 : vector<4x1xf32>
    %c0_179 = arith.constant 0 : index
    %c0_180 = arith.constant 0 : index
    %1086 = vector.load %arg20[%c0_179, %c0_180] : memref<4x1xf32, #tpu.memory_space<vmem>>, vector<4x1xf32>
    tpu.vector_store %arg20[%c0_179, %c0_180], %1085 {strides = array<i32>} : memref<4x1xf32, #tpu.memory_space<vmem>>, vector<4x1xf32>,
    return
  }
  func.func @transform_0(%arg0: i32) -> (i32, i32) {
    %c0_i32 = arith.constant 0 : i32
    %c0_i32_0 = arith.constant 0 : i32
    %c0_i32_1 = arith.constant 0 : i32
    return %c0_i32, %c0_i32_0 : i32, i32
  }
  func.func @transform_1(%arg0: i32) -> (i32, i32) {
    %c0_i32 = arith.constant 0 : i32
    %c0_i32_0 = arith.constant 0 : i32
    %c0_i32_1 = arith.constant 0 : i32
    return %c0_i32, %c0_i32_0 : i32, i32
  }
  func.func @transform_2(%arg0: i32) -> (i32, i32) {
    %c0_i32 = arith.constant 0 : i32
    %c0_i32_0 = arith.constant 0 : i32
    %c0_i32_1 = arith.constant 0 : i32
    return %c0_i32, %c0_i32_0 : i32, i32
  }
  func.func @transform_3(%arg0: i32) -> (i32, i32) {
    %c0_i32 = arith.constant 0 : i32
    %c0_i32_0 = arith.constant 0 : i32
    %c0_i32_1 = arith.constant 0 : i32
    return %c0_i32, %c0_i32_0 : i32, i32
  }
  func.func @transform_4(%arg0: i32) -> (i32, i32) {
    %c0_i32 = arith.constant 0 : i32
    %c0_i32_0 = arith.constant 0 : i32
    %c0_i32_1 = arith.constant 0 : i32
    return %c0_i32, %c0_i32_0 : i32, i32
  }
  func.func @transform_5(%arg0: i32) -> (i32, i32) {
    %c0_i32 = arith.constant 0 : i32
    %c0_i32_0 = arith.constant 0 : i32
    %c0_i32_1 = arith.constant 0 : i32
    return %c0_i32, %c0_i32_0 : i32, i32
  }
  func.func @transform_6(%arg0: i32) -> (i32, i32) {
    %c0_i32 = arith.constant 0 : i32
    %c0_i32_0 = arith.constant 0 : i32
    %c0_i32_1 = arith.constant 0 : i32
    return %c0_i32, %c0_i32_0 : i32, i32
  }
  func.func @transform_7(%arg0: i32) -> (i32, i32) {
    %c0_i32 = arith.constant 0 : i32
    %c0_i32_0 = arith.constant 0 : i32
    %c0_i32_1 = arith.constant 0 : i32
    return %c0_i32, %c0_i32_0 : i32, i32
  }
  func.func @transform_8(%arg0: i32) -> (i32, i32) {
    %c0_i32 = arith.constant 0 : i32
    %c0_i32_0 = arith.constant 0 : i32
    %c0_i32_1 = arith.constant 0 : i32
    return %c0_i32, %c0_i32_0 : i32, i32
  }
  func.func @transform_9(%arg0: i32) -> (i32, i32) {
    %c0_i32 = arith.constant 0 : i32
    %c0_i32_0 = arith.constant 0 : i32
    %c0_i32_1 = arith.constant 0 : i32
    return %c0_i32, %c0_i32_0 : i32, i32
  }
  func.func @transform_10(%arg0: i32) -> (i32, i32) {
    %c0_i32 = arith.constant 0 : i32
    %c0_i32_0 = arith.constant 0 : i32
    %c0_i32_1 = arith.constant 0 : i32
    return %c0_i32, %c0_i32_0 : i32, i32
  }
  func.func @transform_11(%arg0: i32) -> (i32, i32) {
    %c0_i32 = arith.constant 0 : i32
    %c0_i32_0 = arith.constant 0 : i32
    %c0_i32_1 = arith.constant 0 : i32
    return %c0_i32, %c0_i32_0 : i32, i32
  }
  func.func @transform_12(%arg0: i32) -> (i32, i32) {
    %c0_i32 = arith.constant 0 : i32
    %c0_i32_0 = arith.constant 0 : i32
    %c0_i32_1 = arith.constant 0 : i32
    return %c0_i32, %c0_i32_0 : i32, i32
  }
  func.func @transform_13(%arg0: i32) -> (i32, i32) {
    %c0_i32 = arith.constant 0 : i32
    %c0_i32_0 = arith.constant 0 : i32
    %c0_i32_1 = arith.constant 0 : i32
    return %c0_i32, %c0_i32_0 : i32, i32
  }
  func.func @transform_14(%arg0: i32) -> (i32, i32) {
    %c0_i32 = arith.constant 0 : i32
    %c0_i32_0 = arith.constant 0 : i32
    %c0_i32_1 = arith.constant 0 : i32
    return %c0_i32, %c0_i32_0 : i32, i32
  }
  func.func @transform_15(%arg0: i32) -> (i32, i32) {
    %c0_i32 = arith.constant 0 : i32
    %c0_i32_0 = arith.constant 0 : i32
    %c0_i32_1 = arith.constant 0 : i32
    return %c0_i32, %c0_i32_0 : i32, i32
  }
  func.func @transform_16(%arg0: i32) -> (i32, i32) {
    %c0_i32 = arith.constant 0 : i32
    %c0_i32_0 = arith.constant 0 : i32
    %c0_i32_1 = arith.constant 0 : i32
    return %c0_i32, %c0_i32_0 : i32, i32
  }
  func.func @transform_17(%arg0: i32) -> (i32, i32) {
    %c0_i32 = arith.constant 0 : i32
    %c0_i32_0 = arith.constant 0 : i32
    %c0_i32_1 = arith.constant 0 : i32
    return %c0_i32, %c0_i32_0 : i32, i32
  }
  func.func @transform_18(%arg0: i32) -> (i32, i32) {
    %c0_i32 = arith.constant 0 : i32
    %c0_i32_0 = arith.constant 0 : i32
    %c0_i32_1 = arith.constant 0 : i32
    return %c0_i32, %c0_i32_0 : i32, i32
  }
  func.func @transform_19(%arg0: i32) -> (i32, i32) {
    %c0_i32 = arith.constant 0 : i32
    %c0_i32_0 = arith.constant 0 : i32
    %c0_i32_1 = arith.constant 0 : i32
    return %c0_i32, %c0_i32_0 : i32, i32
  }
}

</mosaic_0001>

<llo_original>
// kernel: forward.1
$region0: #{forward.1}
  #allocation0 [shape = 'u32[]', space=smem, size = 0x4, offset = 0x4, fixed_abs, tag = 'smem constant byte address 0x4 - core index']
  #allocation1 [shape = 'u32[144,128]{1,0:T(1,128)}', space=vmem, size = 0x12000, scoped, tag = 'internal scratch']
  #allocation2 [shape = 'f32[1,1]{1,0:T(1,128)S(1)}', space=vmem, size = 0x200, scoped, tag = 'scoped memory for forward.1']
  %s0 = inlined_call_operand.vmem [shape: s32[48,1], index: 0, kind: input, shape index: {}]
  %s1 = inlined_call_operand.vmem [shape: s32[48,1], index: 1, kind: input, shape index: {}]
  %s2 = inlined_call_operand.vmem [shape: s32[4,1], index: 2, kind: input, shape index: {}]
  %s3 = inlined_call_operand.vmem [shape: s32[4,1], index: 3, kind: input, shape index: {}]
  %s4 = inlined_call_operand.vmem [shape: f32[32,128], index: 4, kind: input, shape index: {}]
  %s5 = inlined_call_operand.vmem [shape: f32[32,128], index: 5, kind: input, shape index: {}]
  %s6 = inlined_call_operand.vmem [shape: f32[32,128], index: 6, kind: input, shape index: {}]
  %s7 = inlined_call_operand.vmem [shape: f32[32,128], index: 7, kind: input, shape index: {}]
  %s8 = inlined_call_operand.hbm [shape: f32[1,128], index: 8, kind: input, shape index: {}]
  %s9 = inlined_call_operand.vmem [shape: f32[32,128], index: 9, kind: input, shape index: {}]
  %s10 = inlined_call_operand.vmem [shape: f32[32,128], index: 10, kind: input, shape index: {}]
  %s11 = inlined_call_operand.vmem [shape: f32[32,128], index: 11, kind: input, shape index: {}]
  %s12 = inlined_call_operand.hbm [shape: f32[32,128], index: 12, kind: input, shape index: {}]
  %s13 = inlined_call_operand.hbm [shape: f32[1,128], index: 13, kind: input, shape index: {}]
  %s14 = inlined_call_operand.hbm [shape: f32[32,32], index: 14, kind: input, shape index: {}]
  %s15 = inlined_call_operand.hbm [shape: f32[32,32], index: 15, kind: input, shape index: {}]
  %s16 = inlined_call_operand.vmem [shape: f32[1,32], index: 16, kind: input, shape index: {}]
  %s17 = inlined_call_operand.vmem [shape: f32[32,1], index: 17, kind: input, shape index: {}]
  %s18 = inlined_call_operand.<no memory space> [shape: f32[1,1], index: 18, kind: input, shape index: {}]
  %s19 = inlined_call_operand.vmem [shape: f32[4,1], index: 19, kind: output, shape index: {}]
  %s20 = sld [smem:[#allocation0]]
  $region106: #{forward.1} parent=0
    _
  %s22 = ssub.s32 1, %s20
  %s23 = scalar_select 0, %s22, %s20
  %v24 = vstv %s18
  %25 = vst [vmem:[#allocation2] sm:$0x1] %v24
  $region1: #{forward.1} parent=0
    #allocation3 [shape = 'u8[512]{0}', space=vmem, size = 0x400, scoped, tag = 'input window, operand 8, single buffered']
    #allocation4 [shape = 's32[1]{0}', space=sflag, size = 0x4, scoped, tag = 'scoped memory for forward.1']
    #allocation5 [shape = 'u8[16384]{0}', space=vmem, size = 0x4000, scoped, tag = 'input window, operand 12, single buffered']
    #allocation6 [shape = 's32[1]{0}', space=sflag, size = 0x4, scoped, tag = 'scoped memory for forward.1']
    #allocation7 [shape = 'u8[512]{0}', space=vmem, size = 0x400, scoped, tag = 'input window, operand 13, single buffered']
    #allocation8 [shape = 'u8[16384]{0}', space=vmem, size = 0x4000, scoped, tag = 'input window, operand 14, single buffered']
    #allocation9 [shape = 's32[1]{0}', space=sflag, size = 0x4, scoped, tag = 'scoped memory for forward.1']
    #allocation10 [shape = 'u8[16384]{0}', space=vmem, size = 0x4000, scoped, tag = 'input window, operand 15, single buffered']
    %26 = vsyncpa [#allocation4], 0
    %27 = vsyncpa [#allocation6], 0
    %28 = vsyncpa [#allocation9], 0
    // Predicated region
    $region2: #{forward.1} parent=1 // pred_check
      _
    $region3: #{forward.1} parent=1 // pred_check_branch
      %30 = sbr.rel (0) target = $region5
    $region4: #{forward.1} parent=1 // pred_region
      _
    $region5: #{forward.1} parent=1 // pred_fallthru
      _
    // Predicated region
    $region6: #{forward.1} parent=1 // pred_check
      _
    $region7: #{forward.1} parent=1 // pred_check_branch
      %32 = sbr.rel (0) target = $region9
    $region8: #{forward.1} parent=1 // pred_region
      _
    $region9: #{forward.1} parent=1 // pred_fallthru
      _
    // Predicated region
    $region10: #{forward.1} parent=1 // pred_check
      _
    $region11: #{forward.1} parent=1 // pred_check_branch
      %34 = sbr.rel (0) target = $region13
    $region12: #{forward.1} parent=1 // pred_region
      _
    $region13: #{forward.1} parent=1 // pred_fallthru
      _
    // Predicated region
    $region14: #{forward.1} parent=1 // pred_check
      _
    $region15: #{forward.1} parent=1 // pred_check_branch
      %36 = sbr.rel (0) target = $region17
    $region16: #{forward.1} parent=1 // pred_region
      _
    $region17: #{forward.1} parent=1 // pred_fallthru
      _
    // Predicated region
    $region18: #{forward.1} parent=1 // pred_check
      _
    $region19: #{forward.1} parent=1 // pred_check_branch
      %38 = sbr.rel (0) target = $region21
    $region20: #{forward.1} parent=1 // pred_region
      _
    $region21: #{forward.1} parent=1 // pred_fallthru
      _
    // Predicated region
    $region22: #{forward.1} parent=1 // pred_check
      _
    $region23: #{forward.1} parent=1 // pred_check_branch
      %40 = sbr.rel (0) target = $region25
    $region24: #{forward.1} parent=1 // pred_region
      _
    $region25: #{forward.1} parent=1 // pred_fallthru
      _
    // Predicated region
    $region26: #{forward.1} parent=1 // pred_check
      _
    $region27: #{forward.1} parent=1 // pred_check_branch
      %42 = sbr.rel (0) target = $region29
    $region28: #{forward.1} parent=1 // pred_region
      _
    $region29: #{forward.1} parent=1 // pred_fallthru
      _
    // Predicated region
    $region30: #{forward.1} parent=1 // pred_check
      _
    $region31: #{forward.1} parent=1 // pred_check_branch
      %44 = sbr.rel (0) target = $region33
    $region32: #{forward.1} parent=1 // pred_region
      _
    $region33: #{forward.1} parent=1 // pred_fallthru
      _
    // Predicated region
    $region34: #{forward.1} parent=1 // pred_check
      _
    $region35: #{forward.1} parent=1 // pred_check_branch
      %46 = sbr.rel (0) target = $region37
    $region36: #{forward.1} parent=1 // pred_region
      %s48 = ssub.s32 16, 16
      %49 = vsyncadd [#allocation4], %s48
      %s51 = sshll.u32 [#allocation3], 4
      %s52 = int_to_ptr.vmem [resolvable:$true] %s51
      %54 = dma.hbm_to_vmem [thread:$0]  %s8, 16, %s52, [#allocation4]
    $region37: #{forward.1} parent=1 // pred_fallthru
      _
    // Predicated region
    $region38: #{forward.1} parent=1 // pred_check
      _
    $region39: #{forward.1} parent=1 // pred_check_branch
      %56 = sbr.rel (0) target = $region41
    $region40: #{forward.1} parent=1 // pred_region
      _
    $region41: #{forward.1} parent=1 // pred_fallthru
      _
    // Predicated region
    $region42: #{forward.1} parent=1 // pred_check
      _
    $region43: #{forward.1} parent=1 // pred_check_branch
      %58 = sbr.rel (0) target = $region45
    $region44: #{forward.1} parent=1 // pred_region
      _
    $region45: #{forward.1} parent=1 // pred_fallthru
      _
    // Predicated region
    $region46: #{forward.1} parent=1 // pred_check
      _
    $region47: #{forward.1} parent=1 // pred_check_branch
      %60 = sbr.rel (0) target = $region49
    $region48: #{forward.1} parent=1 // pred_region
      _
    $region49: #{forward.1} parent=1 // pred_fallthru
      _
    // Predicated region
    $region50: #{forward.1} parent=1 // pred_check
      _
    $region51: #{forward.1} parent=1 // pred_check_branch
      %62 = sbr.rel (0) target = $region53
    $region52: #{forward.1} parent=1 // pred_region
      %s64 = ssub.s32 512, 512
      %65 = vsyncadd [#allocation6], %s64
      %s66 = sshll.u32 [#allocation5], 4
      %s67 = int_to_ptr.vmem [resolvable:$true] %s66
      %72 = dma.hbm_to_vmem [thread:$0]  %s12, 512, %s67, [#allocation6], 128, 128, 8
    $region53: #{forward.1} parent=1 // pred_fallthru
      _
    // Predicated region
    $region54: #{forward.1} parent=1 // pred_check
      _
    $region55: #{forward.1} parent=1 // pred_check_branch
      %74 = sbr.rel (0) target = $region57
    $region56: #{forward.1} parent=1 // pred_region
      %s76 = ssub.s32 16, 16
      %77 = vsyncadd [#allocation6], %s76
      %s79 = sshll.u32 [#allocation7], 4
      %s80 = int_to_ptr.vmem [resolvable:$true] %s79
      %82 = dma.hbm_to_vmem [thread:$0]  %s13, 16, %s80, [#allocation6]
    $region57: #{forward.1} parent=1 // pred_fallthru
      _
    // Predicated region
    $region58: #{forward.1} parent=1 // pred_check
      _
    $region59: #{forward.1} parent=1 // pred_check_branch
      %84 = sbr.rel (0) target = $region61
    $region60: #{forward.1} parent=1 // pred_region
      %s86 = ssub.s32 512, 512
      %87 = vsyncadd [#allocation9], %s86
      %s88 = sshll.u32 [#allocation8], 4
      %s89 = int_to_ptr.vmem [resolvable:$true] %s88
      %94 = dma.hbm_to_vmem [thread:$0]  %s14, 512, %s89, [#allocation9], 128, 128, 8
    $region61: #{forward.1} parent=1 // pred_fallthru
      _
    // Predicated region
    $region62: #{forward.1} parent=1 // pred_check
      _
    $region63: #{forward.1} parent=1 // pred_check_branch
      %96 = sbr.rel (0) target = $region65
    $region64: #{forward.1} parent=1 // pred_region
      %s98 = ssub.s32 512, 512
      %99 = vsyncadd [#allocation9], %s98
      %s100 = sshll.u32 [#allocation10], 4
      %s101 = int_to_ptr.vmem [resolvable:$true] %s100
      %106 = dma.hbm_to_vmem [thread:$0]  %s15, 512, %s101, [#allocation9], 128, 128, 8
    $region65: #{forward.1} parent=1 // pred_fallthru
      _
    // Predicated region
    $region66: #{forward.1} parent=1 // pred_check
      _
    $region67: #{forward.1} parent=1 // pred_check_branch
      %108 = sbr.rel (0) target = $region69
    $region68: #{forward.1} parent=1 // pred_region
      _
    $region69: #{forward.1} parent=1 // pred_fallthru
      _
    // Predicated region
    $region70: #{forward.1} parent=1 // pred_check
      _
    $region71: #{forward.1} parent=1 // pred_check_branch
      %110 = sbr.rel (0) target = $region73
    $region72: #{forward.1} parent=1 // pred_region
      _
    $region73: #{forward.1} parent=1 // pred_fallthru
      _
    // Predicated region
    $region74: #{forward.1} parent=1 // pred_check
      _
    $region75: #{forward.1} parent=1 // pred_check_branch
      %112 = sbr.rel (0) target = $region77
    $region76: #{forward.1} parent=1 // pred_region
      _
    $region77: #{forward.1} parent=1 // pred_fallthru
      _
    // Predicated region
    $region78: #{forward.1} parent=1 // pred_check
      _
    $region79: #{forward.1} parent=1 // pred_check_branch
      %114 = sbr.rel (0) target = $region81
    $region80: #{forward.1} parent=1 // pred_region
      %115 = dma.done [#allocation4], 16
    $region81: #{forward.1} parent=1 // pred_fallthru
      _
    // Predicated region
    $region82: #{forward.1} parent=1 // pred_check
      _
    $region83: #{forward.1} parent=1 // pred_check_branch
      %117 = sbr.rel (0) target = $region85
    $region84: #{forward.1} parent=1 // pred_region
      %118 = dma.done [#allocation6], 512
    $region85: #{forward.1} parent=1 // pred_fallthru
      _
    // Predicated region
    $region86: #{forward.1} parent=1 // pred_check
      _
    $region87: #{forward.1} parent=1 // pred_check_branch
      %120 = sbr.rel (0) target = $region89
    $region88: #{forward.1} parent=1 // pred_region
      %121 = dma.done [#allocation6], 16
    $region89: #{forward.1} parent=1 // pred_fallthru
      _
    // Predicated region
    $region90: #{forward.1} parent=1 // pred_check
      _
    $region91: #{forward.1} parent=1 // pred_check_branch
      %123 = sbr.rel (0) target = $region93
    $region92: #{forward.1} parent=1 // pred_region
      %124 = dma.done [#allocation9], 512
    $region93: #{forward.1} parent=1 // pred_fallthru
      _
    // Predicated region
    $region94: #{forward.1} parent=1 // pred_check
      _
    $region95: #{forward.1} parent=1 // pred_check_branch
      %126 = sbr.rel (0) target = $region97
    $region96: #{forward.1} parent=1 // pred_region
      %127 = dma.done [#allocation9], 512
    $region97: #{forward.1} parent=1 // pred_fallthru
      _
    %v128 = vld [vmem:[%s0] sm:$0xff]
    %v129 = vld [vmem:[%s0 + $0x8] sm:$0xff]
    %v130 = vld [vmem:[%s0 + $0x10] sm:$0xff]
    %v131 = vld [vmem:[%s0 + $0x18] sm:$0xff]
    %v132 = vld [vmem:[%s0 + $0x20] sm:$0xff]
    %v133 = vld [vmem:[%s0 + $0x28] sm:$0xff]
    %v134 = vlaneseq
    %v135 = vand.u32 %v134, 127
    %136 = vset.pattern.permute.xlu0 0
    %137 = vperm.xlu0 %136, %v128
    %v138 = vpop.permute.xlu0 %137
    %139 = vset.pattern.permute.xlu0 0
    %140 = vperm.xlu0 %139, %v129
    %v141 = vpop.permute.xlu0 %140
    %142 = vset.pattern.permute.xlu0 0
    %143 = vperm.xlu0 %142, %v130
    %v144 = vpop.permute.xlu0 %143
    %145 = vset.pattern.permute.xlu0 0
    %146 = vperm.xlu0 %145, %v131
    %v147 = vpop.permute.xlu0 %146
    %148 = vset.pattern.permute.xlu0 0
    %149 = vperm.xlu0 %148, %v132
    %v150 = vpop.permute.xlu0 %149
    %151 = vset.pattern.permute.xlu0 0
    %152 = vperm.xlu0 %151, %v133
    %v153 = vpop.permute.xlu0 %152
    %vm154 = vcmp.eq.s32.totalorder %v138, %v135
    %vm155 = vcmp.eq.s32.totalorder %v141, %v135
    %vm156 = vcmp.eq.s32.totalorder %v144, %v135
    %vm157 = vcmp.eq.s32.totalorder %v147, %v135
    %vm158 = vcmp.eq.s32.totalorder %v150, %v135
    %vm159 = vcmp.eq.s32.totalorder %v153, %v135
    %v160 = vsel %vm154, 1, 0
    %v161 = vsel %vm155, 1, 0
    %v162 = vsel %vm156, 1, 0
    %v163 = vsel %vm157, 1, 0
    %v164 = vsel %vm158, 1, 0
    %v165 = vsel %vm159, 1, 0
    %v166 = vcvt.s32.f32 %v160
    %v167 = vcvt.s32.f32 %v161
    %v168 = vcvt.s32.f32 %v162
    %v169 = vcvt.s32.f32 %v163
    %v170 = vcvt.s32.f32 %v164
    %v171 = vcvt.s32.f32 %v165
    %v172 = vld [vmem:[%s4] sm:$0xff]
    %v173 = vld [vmem:[%s4 + $0x8] sm:$0xff]
    %v174 = vld [vmem:[%s4 + $0x10] sm:$0xff]
    %v175 = vld [vmem:[%s4 + $0x18] sm:$0xff]
    %vm176 = vcmask 261120
    %v178 = vsel %vm176, %v166, 0
    %v181 = vsel %vm176, %v167, 0
    %v184 = vsel %vm176, %v168, 0
    %v187 = vsel %vm176, %v169, 0
    %v190 = vsel %vm176, %v170, 0
    %v193 = vsel %vm176, %v171, 0
    %195 = vmatprep.subr.mxu0 0.0
    %196 = vmatpush1.msra.mxu0 0.0
    %197 = vmatprep.subr.mxu0 0.0
    %198 = vmatpush1.msra.mxu0 0.0
    %199 = vmatprep.subr.mxu0 0.0
    %200 = vmatpush1.msra.mxu0 0.0
    %201 = vmatprep.subr.mxu0 0.0
    %202 = vmatpush1.msra.mxu0 0.0
    %203 = vmatprep.subr.mxu0 0.0
    %204 = vmatpush1.msra.mxu0 0.0
    %205 = vmatprep.subr.mxu0 0.0
    %206 = vmatpush1.msra.mxu0 0.0
    %207 = vmatprep.subr.mxu0 0.0
    %208 = vmatpush1.msra.mxu0 0.0
    %209 = vmatprep.subr.mxu0 0.0
    %210 = vmatpush1.msra.mxu0 0.0
    %211 = vmatprep.subr.mxu0 0.0
    %212 = vmatpush1.msra.mxu0 0.0
    %213 = vmatprep.subr.mxu0 0.0
    %214 = vmatpush1.msra.mxu0 0.0
    %215 = vmatprep.subr.mxu0 0.0
    %216 = vmatpush1.msra.mxu0 0.0
    %217 = vmatprep.subr.mxu0 0.0
    %218 = vmatpush1.msra.mxu0 0.0
    %219 = vmatprep.subr.mxu0 0.0
    %220 = vmatpush1.msra.mxu0 %v175
    %221 = vmatprep.subr.mxu0 0.0
    %222 = vmatpush1.msra.mxu0 %v174
    %223 = vmatprep.subr.mxu0 0.0
    %224 = vmatpush1.msra.mxu0 %v173
    %225 = vmatprep.subr.mxu0 0.0
    %226 = vmatpush1.msra.mxu0 %v172
    %227 = vmatprep.subr.mxu0 0.0
    %228 = vmatpush2.msra.mxu0 0.0
    %229 = vmatprep.subr.mxu0 0.0
    %230 = vmatpush2.msra.mxu0 0.0
    %231 = vmatprep.subr.mxu0 0.0
    %232 = vmatpush2.msra.mxu0 0.0
    %233 = vmatprep.subr.mxu0 0.0
    %234 = vmatpush2.msra.mxu0 0.0
    %235 = vmatprep.subr.mxu0 0.0
    %236 = vmatpush2.msra.mxu0 0.0
    %237 = vmatprep.subr.mxu0 0.0
    %238 = vmatpush2.msra.mxu0 0.0
    %239 = vmatprep.subr.mxu0 0.0
    %240 = vmatpush2.msra.mxu0 0.0
    %241 = vmatprep.subr.mxu0 0.0
    %242 = vmatpush2.msra.mxu0 0.0
    %243 = vmatprep.subr.mxu0 0.0
    %244 = vmatpush2.msra.mxu0 0.0
    %245 = vmatprep.subr.mxu0 0.0
    %246 = vmatpush2.msra.mxu0 0.0
    %247 = vmatprep.subr.mxu0 0.0
    %248 = vmatpush2.msra.mxu0 0.0
    %249 = vmatprep.subr.mxu0 0.0
    %250 = vmatpush2.msra.mxu0 0.0
    %251 = vmatprep.subr.mxu0 0.0
    %252 = vmatpush2.msra.mxu0 0.0
    %253 = vmatprep.subr.mxu0 0.0
    %254 = vmatpush2.msra.mxu0 0.0
    %255 = vmatprep.subr.mxu0 0.0
    %256 = vmatpush2.msra.mxu0 0.0
    %257 = vmatprep.subr.mxu0 0.0
    %258 = vmatpush2.msra.mxu0 0.0
    %259 = vmatprep.mubr.f32.mxu0 0.0
    %260 = vmatmul.mubr.f32.gmra.mxu0 %v178
    %v261 = vpop.f32.mrf.mxu0
    %v262 = vadd.f32 0.0, %v261
    %v263 = vpop.f32.mrf.mxu0
    %264 = vmatprep.mubr.f32.mxu0 0.0
    %265 = vmatmul.mubr.f32.gmra.mxu0 %v181
    %v266 = vpop.f32.mrf.mxu0
    %v267 = vadd.f32 0.0, %v266
    %v268 = vpop.f32.mrf.mxu0
    %269 = vmatprep.mubr.f32.mxu0 0.0
    %270 = vmatmul.mubr.f32.gmra.mxu0 %v184
    %v271 = vpop.f32.mrf.mxu0
    %v272 = vadd.f32 0.0, %v271
    %v273 = vpop.f32.mrf.mxu0
    %274 = vmatprep.mubr.f32.mxu0 0.0
    %275 = vmatmul.mubr.f32.gmra.mxu0 %v187
    %v276 = vpop.f32.mrf.mxu0
    %v277 = vadd.f32 0.0, %v276
    %v278 = vpop.f32.mrf.mxu0
    %279 = vmatprep.mubr.f32.mxu0 0.0
    %280 = vmatmul.mubr.f32.gmra.mxu0 %v190
    %v281 = vpop.f32.mrf.mxu0
    %v282 = vadd.f32 0.0, %v281
    %v283 = vpop.f32.mrf.mxu0
    %284 = vmatprep.mubr.f32.mxu0 0.0
    %285 = vmatmul.mubr.f32.gmra.mxu0 %v193
    %v286 = vpop.f32.mrf.mxu0
    %v287 = vadd.f32 0.0, %v286
    %v288 = vpop.f32.mrf.mxu0
    %289 = vdwg.mxu0
    %v290 = vld [vmem:[%s1] sm:$0xff]
    %v291 = vld [vmem:[%s1 + $0x8] sm:$0xff]
    %v292 = vld [vmem:[%s1 + $0x10] sm:$0xff]
    %v293 = vld [vmem:[%s1 + $0x18] sm:$0xff]
    %v294 = vld [vmem:[%s1 + $0x20] sm:$0xff]
    %v295 = vld [vmem:[%s1 + $0x28] sm:$0xff]
    %296 = vset.pattern.permute.xlu0 0
    %297 = vperm.xlu0 %296, %v290
    %v298 = vpop.permute.xlu0 %297
    %299 = vset.pattern.permute.xlu0 0
    %300 = vperm.xlu0 %299, %v291
    %v301 = vpop.permute.xlu0 %300
    %302 = vset.pattern.permute.xlu0 0
    %303 = vperm.xlu0 %302, %v292
    %v304 = vpop.permute.xlu0 %303
    %305 = vset.pattern.permute.xlu0 0
    %306 = vperm.xlu0 %305, %v293
    %v307 = vpop.permute.xlu0 %306
    %308 = vset.pattern.permute.xlu0 0
    %309 = vperm.xlu0 %308, %v294
    %v310 = vpop.permute.xlu0 %309
    %311 = vset.pattern.permute.xlu0 0
    %312 = vperm.xlu0 %311, %v295
    %v313 = vpop.permute.xlu0 %312
    %vm314 = vcmp.eq.s32.totalorder %v298, %v135
    %vm315 = vcmp.eq.s32.totalorder %v301, %v135
    %vm316 = vcmp.eq.s32.totalorder %v304, %v135
    %vm317 = vcmp.eq.s32.totalorder %v307, %v135
    %vm318 = vcmp.eq.s32.totalorder %v310, %v135
    %vm319 = vcmp.eq.s32.totalorder %v313, %v135
    %v320 = vsel %vm314, 1, 0
    %v321 = vsel %vm315, 1, 0
    %v322 = vsel %vm316, 1, 0
    %v323 = vsel %vm317, 1, 0
    %v324 = vsel %vm318, 1, 0
    %v325 = vsel %vm319, 1, 0
    %v326 = vcvt.s32.f32 %v320
    %v327 = vcvt.s32.f32 %v321
    %v328 = vcvt.s32.f32 %v322
    %v329 = vcvt.s32.f32 %v323
    %v330 = vcvt.s32.f32 %v324
    %v331 = vcvt.s32.f32 %v325
    %v332 = vld [vmem:[%s9] sm:$0xff]
    %v333 = vld [vmem:[%s9 + $0x8] sm:$0xff]
    %v334 = vld [vmem:[%s9 + $0x10] sm:$0xff]
    %v335 = vld [vmem:[%s9 + $0x18] sm:$0xff]
    %v337 = vsel %vm176, %v326, 0
    %v340 = vsel %vm176, %v327, 0
    %v343 = vsel %vm176, %v328, 0
    %v346 = vsel %vm176, %v329, 0
    %v349 = vsel %vm176, %v330, 0
    %v352 = vsel %vm176, %v331, 0
    %354 = vmatprep.subr.mxu0 0.0
    %355 = vmatpush1.msra.mxu0 0.0
    %356 = vmatprep.subr.mxu0 0.0
    %357 = vmatpush1.msra.mxu0 0.0
    %358 = vmatprep.subr.mxu0 0.0
    %359 = vmatpush1.msra.mxu0 0.0
    %360 = vmatprep.subr.mxu0 0.0
    %361 = vmatpush1.msra.mxu0 0.0
    %362 = vmatprep.subr.mxu0 0.0
    %363 = vmatpush1.msra.mxu0 0.0
    %364 = vmatprep.subr.mxu0 0.0
    %365 = vmatpush1.msra.mxu0 0.0
    %366 = vmatprep.subr.mxu0 0.0
    %367 = vmatpush1.msra.mxu0 0.0
    %368 = vmatprep.subr.mxu0 0.0
    %369 = vmatpush1.msra.mxu0 0.0
    %370 = vmatprep.subr.mxu0 0.0
    %371 = vmatpush1.msra.mxu0 0.0
    %372 = vmatprep.subr.mxu0 0.0
    %373 = vmatpush1.msra.mxu0 0.0
    %374 = vmatprep.subr.mxu0 0.0
    %375 = vmatpush1.msra.mxu0 0.0
    %376 = vmatprep.subr.mxu0 0.0
    %377 = vmatpush1.msra.mxu0 0.0
    %378 = vmatprep.subr.mxu0 0.0
    %379 = vmatpush1.msra.mxu0 %v335
    %380 = vmatprep.subr.mxu0 0.0
    %381 = vmatpush1.msra.mxu0 %v334
    %382 = vmatprep.subr.mxu0 0.0
    %383 = vmatpush1.msra.mxu0 %v333
    %384 = vmatprep.subr.mxu0 0.0
    %385 = vmatpush1.msra.mxu0 %v332
    %386 = vmatprep.subr.mxu0 0.0
    %387 = vmatpush2.msra.mxu0 0.0
    %388 = vmatprep.subr.mxu0 0.0
    %389 = vmatpush2.msra.mxu0 0.0
    %390 = vmatprep.subr.mxu0 0.0
    %391 = vmatpush2.msra.mxu0 0.0
    %392 = vmatprep.subr.mxu0 0.0
    %393 = vmatpush2.msra.mxu0 0.0
    %394 = vmatprep.subr.mxu0 0.0
    %395 = vmatpush2.msra.mxu0 0.0
    %396 = vmatprep.subr.mxu0 0.0
    %397 = vmatpush2.msra.mxu0 0.0
    %398 = vmatprep.subr.mxu0 0.0
    %399 = vmatpush2.msra.mxu0 0.0
    %400 = vmatprep.subr.mxu0 0.0
    %401 = vmatpush2.msra.mxu0 0.0
    %402 = vmatprep.subr.mxu0 0.0
    %403 = vmatpush2.msra.mxu0 0.0
    %404 = vmatprep.subr.mxu0 0.0
    %405 = vmatpush2.msra.mxu0 0.0
    %406 = vmatprep.subr.mxu0 0.0
    %407 = vmatpush2.msra.mxu0 0.0
    %408 = vmatprep.subr.mxu0 0.0
    %409 = vmatpush2.msra.mxu0 0.0
    %410 = vmatprep.subr.mxu0 0.0
    %411 = vmatpush2.msra.mxu0 0.0
    %412 = vmatprep.subr.mxu0 0.0
    %413 = vmatpush2.msra.mxu0 0.0
    %414 = vmatprep.subr.mxu0 0.0
    %415 = vmatpush2.msra.mxu0 0.0
    %416 = vmatprep.subr.mxu0 0.0
    %417 = vmatpush2.msra.mxu0 0.0
    %418 = vmatprep.mubr.f32.mxu0 0.0
    %419 = vmatmul.mubr.f32.gmra.mxu0 %v337
    %v420 = vpop.f32.mrf.mxu0
    %v421 = vadd.f32 0.0, %v420
    %v422 = vpop.f32.mrf.mxu0
    %423 = vmatprep.mubr.f32.mxu0 0.0
    %424 = vmatmul.mubr.f32.gmra.mxu0 %v340
    %v425 = vpop.f32.mrf.mxu0
    %v426 = vadd.f32 0.0, %v425
    %v427 = vpop.f32.mrf.mxu0
    %428 = vmatprep.mubr.f32.mxu0 0.0
    %429 = vmatmul.mubr.f32.gmra.mxu0 %v343
    %v430 = vpop.f32.mrf.mxu0
    %v431 = vadd.f32 0.0, %v430
    %v432 = vpop.f32.mrf.mxu0
    %433 = vmatprep.mubr.f32.mxu0 0.0
    %434 = vmatmul.mubr.f32.gmra.mxu0 %v346
    %v435 = vpop.f32.mrf.mxu0
    %v436 = vadd.f32 0.0, %v435
    %v437 = vpop.f32.mrf.mxu0
    %438 = vmatprep.mubr.f32.mxu0 0.0
    %439 = vmatmul.mubr.f32.gmra.mxu0 %v349
    %v440 = vpop.f32.mrf.mxu0
    %v441 = vadd.f32 0.0, %v440
    %v442 = vpop.f32.mrf.mxu0
    %443 = vmatprep.mubr.f32.mxu0 0.0
    %444 = vmatmul.mubr.f32.gmra.mxu0 %v352
    %v445 = vpop.f32.mrf.mxu0
    %v446 = vadd.f32 0.0, %v445
    %v447 = vpop.f32.mrf.mxu0
    %448 = vdwg.mxu0
    %v449 = vld [vmem:[%s5] sm:$0xff]
    %v450 = vld [vmem:[%s5 + $0x8] sm:$0xff]
    %v451 = vld [vmem:[%s5 + $0x10] sm:$0xff]
    %v452 = vld [vmem:[%s5 + $0x18] sm:$0xff]
    %v453 = vld [vmem:[%s6] sm:$0xff]
    %v454 = vld [vmem:[%s6 + $0x8] sm:$0xff]
    %v455 = vld [vmem:[%s6 + $0x10] sm:$0xff]
    %v456 = vld [vmem:[%s6 + $0x18] sm:$0xff]
    %v457 = vld [vmem:[%s7] sm:$0xff]
    %v458 = vld [vmem:[%s7 + $0x8] sm:$0xff]
    %v459 = vld [vmem:[%s7 + $0x10] sm:$0xff]
    %v460 = vld [vmem:[%s7 + $0x18] sm:$0xff]
    %v461 = vld [vmem:[#allocation3] sm:$0x1]
    %v462 = vld [vmem:[%s10] sm:$0xff]
    %v463 = vld [vmem:[%s10 + $0x8] sm:$0xff]
    %v464 = vld [vmem:[%s10 + $0x10] sm:$0xff]
    %v465 = vld [vmem:[%s10 + $0x18] sm:$0xff]
    %v466 = vld [vmem:[%s11] sm:$0xff]
    %v467 = vld [vmem:[%s11 + $0x8] sm:$0xff]
    %v468 = vld [vmem:[%s11 + $0x10] sm:$0xff]
    %v469 = vld [vmem:[%s11 + $0x18] sm:$0xff]
    %v470 = vld [vmem:[#allocation5] sm:$0xff]
    %v471 = vld [vmem:[#allocation5 + $0x8] sm:$0xff]
    %v472 = vld [vmem:[#allocation5 + $0x10] sm:$0xff]
    %v473 = vld [vmem:[#allocation5 + $0x18] sm:$0xff]
    %v474 = vld [vmem:[#allocation7] sm:$0x1]
    %v475 = vld [vmem:[%s2] sm:$0xf]
    %v476 = vsub.s32 %v475, 1
    %v477 = vld [vmem:[%s3] sm:$0xf]
    %v478 = vsub.s32 %v477, 1
    %v480 = vsel %vm176, 0.0, 0
    %482 = vmatprep.subr.mxu0 0.0
    %483 = vmatpush1.msra.mxu0 0.0
    %484 = vmatprep.subr.mxu0 0.0
    %485 = vmatpush1.msra.mxu0 0.0
    %486 = vmatprep.subr.mxu0 0.0
    %487 = vmatpush1.msra.mxu0 0.0
    %488 = vmatprep.subr.mxu0 0.0
    %489 = vmatpush1.msra.mxu0 0.0
    %490 = vmatprep.subr.mxu0 0.0
    %491 = vmatpush1.msra.mxu0 0.0
    %492 = vmatprep.subr.mxu0 0.0
    %493 = vmatpush1.msra.mxu0 0.0
    %494 = vmatprep.subr.mxu0 0.0
    %495 = vmatpush1.msra.mxu0 0.0
    %496 = vmatprep.subr.mxu0 0.0
    %497 = vmatpush1.msra.mxu0 0.0
    %498 = vmatprep.subr.mxu0 0.0
    %499 = vmatpush1.msra.mxu0 0.0
    %500 = vmatprep.subr.mxu0 0.0
    %501 = vmatpush1.msra.mxu0 0.0
    %502 = vmatprep.subr.mxu0 0.0
    %503 = vmatpush1.msra.mxu0 0.0
    %504 = vmatprep.subr.mxu0 0.0
    %505 = vmatpush1.msra.mxu0 0.0
    %506 = vmatprep.subr.mxu0 0.0
    %507 = vmatpush1.msra.mxu0 %v452
    %508 = vmatprep.subr.mxu0 0.0
    %509 = vmatpush1.msra.mxu0 %v451
    %510 = vmatprep.subr.mxu0 0.0
    %511 = vmatpush1.msra.mxu0 %v450
    %512 = vmatprep.subr.mxu0 0.0
    %513 = vmatpush1.msra.mxu0 %v449
    %514 = vmatprep.subr.mxu0 0.0
    %515 = vmatpush2.msra.mxu0 0.0
    %516 = vmatprep.subr.mxu0 0.0
    %517 = vmatpush2.msra.mxu0 0.0
    %518 = vmatprep.subr.mxu0 0.0
    %519 = vmatpush2.msra.mxu0 0.0
    %520 = vmatprep.subr.mxu0 0.0
    %521 = vmatpush2.msra.mxu0 0.0
    %522 = vmatprep.subr.mxu0 0.0
    %523 = vmatpush2.msra.mxu0 0.0
    %524 = vmatprep.subr.mxu0 0.0
    %525 = vmatpush2.msra.mxu0 0.0
    %526 = vmatprep.subr.mxu0 0.0
    %527 = vmatpush2.msra.mxu0 0.0
    %528 = vmatprep.subr.mxu0 0.0
    %529 = vmatpush2.msra.mxu0 0.0
    %530 = vmatprep.subr.mxu0 0.0
    %531 = vmatpush2.msra.mxu0 0.0
    %532 = vmatprep.subr.mxu0 0.0
    %533 = vmatpush2.msra.mxu0 0.0
    %534 = vmatprep.subr.mxu0 0.0
    %535 = vmatpush2.msra.mxu0 0.0
    %536 = vmatprep.subr.mxu0 0.0
    %537 = vmatpush2.msra.mxu0 0.0
    %538 = vmatprep.subr.mxu0 0.0
    %539 = vmatpush2.msra.mxu0 0.0
    %540 = vmatprep.subr.mxu0 0.0
    %541 = vmatpush2.msra.mxu0 0.0
    %542 = vmatprep.subr.mxu0 0.0
    %543 = vmatpush2.msra.mxu0 0.0
    %544 = vmatprep.subr.mxu0 0.0
    %545 = vmatpush2.msra.mxu0 0.0
    %546 = vmatprep.mubr.f32.mxu0 0.0
    %547 = vmatmul.mubr.f32.gmra.mxu0 %v480
    %v548 = vpop.f32.mrf.mxu0
    %v549 = vadd.f32 0.0, %v548
    %v550 = vpop.f32.mrf.mxu0
    %551 = vdwg.mxu0
    %v552 = vadd.f32 %v262, %v549
    %553 = vmatprep.subr.mxu0 0.0
    %554 = vmatpush1.msra.mxu0 0.0
    %555 = vmatprep.subr.mxu0 0.0
    %556 = vmatpush1.msra.mxu0 0.0
    %557 = vmatprep.subr.mxu0 0.0
    %558 = vmatpush1.msra.mxu0 0.0
    %559 = vmatprep.subr.mxu0 0.0
    %560 = vmatpush1.msra.mxu0 0.0
    %561 = vmatprep.subr.mxu0 0.0
    %562 = vmatpush1.msra.mxu0 0.0
    %563 = vmatprep.subr.mxu0 0.0
    %564 = vmatpush1.msra.mxu0 0.0
    %565 = vmatprep.subr.mxu0 0.0
    %566 = vmatpush1.msra.mxu0 0.0
    %567 = vmatprep.subr.mxu0 0.0
    %568 = vmatpush1.msra.mxu0 0.0
    %569 = vmatprep.subr.mxu0 0.0
    %570 = vmatpush1.msra.mxu0 0.0
    %571 = vmatprep.subr.mxu0 0.0
    %572 = vmatpush1.msra.mxu0 0.0
    %573 = vmatprep.subr.mxu0 0.0
    %574 = vmatpush1.msra.mxu0 0.0
    %575 = vmatprep.subr.mxu0 0.0
    %576 = vmatpush1.msra.mxu0 0.0
    %577 = vmatprep.subr.mxu0 0.0
    %578 = vmatpush1.msra.mxu0 %v465
    %579 = vmatprep.subr.mxu0 0.0
    %580 = vmatpush1.msra.mxu0 %v464
    %581 = vmatprep.subr.mxu0 0.0
    %582 = vmatpush1.msra.mxu0 %v463
    %583 = vmatprep.subr.mxu0 0.0
    %584 = vmatpush1.msra.mxu0 %v462
    %585 = vmatprep.subr.mxu0 0.0
    %586 = vmatpush2.msra.mxu0 0.0
    %587 = vmatprep.subr.mxu0 0.0
    %588 = vmatpush2.msra.mxu0 0.0
    %589 = vmatprep.subr.mxu0 0.0
    %590 = vmatpush2.msra.mxu0 0.0
    %591 = vmatprep.subr.mxu0 0.0
    %592 = vmatpush2.msra.mxu0 0.0
    %593 = vmatprep.subr.mxu0 0.0
    %594 = vmatpush2.msra.mxu0 0.0
    %595 = vmatprep.subr.mxu0 0.0
    %596 = vmatpush2.msra.mxu0 0.0
    %597 = vmatprep.subr.mxu0 0.0
    %598 = vmatpush2.msra.mxu0 0.0
    %599 = vmatprep.subr.mxu0 0.0
    %600 = vmatpush2.msra.mxu0 0.0
    %601 = vmatprep.subr.mxu0 0.0
    %602 = vmatpush2.msra.mxu0 0.0
    %603 = vmatprep.subr.mxu0 0.0
    %604 = vmatpush2.msra.mxu0 0.0
    %605 = vmatprep.subr.mxu0 0.0
    %606 = vmatpush2.msra.mxu0 0.0
    %607 = vmatprep.subr.mxu0 0.0
    %608 = vmatpush2.msra.mxu0 0.0
    %609 = vmatprep.subr.mxu0 0.0
    %610 = vmatpush2.msra.mxu0 0.0
    %611 = vmatprep.subr.mxu0 0.0
    %612 = vmatpush2.msra.mxu0 0.0
    %613 = vmatprep.subr.mxu0 0.0
    %614 = vmatpush2.msra.mxu0 0.0
    %615 = vmatprep.subr.mxu0 0.0
    %616 = vmatpush2.msra.mxu0 0.0
    %617 = vmatprep.mubr.f32.mxu0 0.0
    %618 = vmatmul.mubr.f32.gmra.mxu0 %v480
    %v619 = vpop.f32.mrf.mxu0
    %v620 = vadd.f32 0.0, %v619
    %v621 = vpop.f32.mrf.mxu0
    %622 = vdwg.mxu0
    %v623 = vadd.f32 %v421, %v620
    %v624 = vxor.u32 %v552, 2147483648
    %v625 = vmul.f32 %v624, 1.442695
    %v626 = vpow.pop %v625
    %v627 = vadd.f32 %v626, 1.0
    %v628 = vrcp.pop %v627
    %v629 = vmul.f32 1.0, %v628
    %v630 = vtanh.pop %v552
    %v631 = vmul.f32 %v629, 0.0
    %633 = vrot.lane.b32.xlu0 %v630, 64
    %v634 = vpop.permute.xlu0 %633
    %v636 = vmul.f32 %v629, %v634
    %638 = vrot.lane.b32.xlu0 %v636, 32
    %v639 = vpop.permute.xlu0 %638
    %v641 = vadd.f32 %v631, %v639
    %v642 = vtanh.pop %v641
    %644 = vrot.lane.b32.xlu0 %v642, 64
    %v645 = vpop.permute.xlu0 %644
    %v647 = vmul.f32 %v629, %v645
    %v648 = vxor.u32 %v623, 2147483648
    %v649 = vmul.f32 %v648, 1.442695
    %v650 = vpow.pop %v649
    %v651 = vadd.f32 %v650, 1.0
    %v652 = vrcp.pop %v651
    %v653 = vmul.f32 1.0, %v652
    %v654 = vtanh.pop %v623
    %v655 = vmul.f32 %v653, 0.0
    %657 = vrot.lane.b32.xlu0 %v654, 64
    %v658 = vpop.permute.xlu0 %657
    %v660 = vmul.f32 %v653, %v658
    %662 = vrot.lane.b32.xlu0 %v660, 32
    %v663 = vpop.permute.xlu0 %662
    %v665 = vadd.f32 %v655, %v663
    %v666 = vtanh.pop %v665
    %668 = vrot.lane.b32.xlu0 %v666, 64
    %v669 = vpop.permute.xlu0 %668
    %v671 = vmul.f32 %v653, %v669
    %672 = vmatprep.subr.mxu0 0.0
    %673 = vmatpush1.msra.mxu0 0.0
    %674 = vmatprep.subr.mxu0 0.0
    %675 = vmatpush1.msra.mxu0 0.0
    %676 = vmatprep.subr.mxu0 0.0
    %677 = vmatpush1.msra.mxu0 0.0
    %678 = vmatprep.subr.mxu0 0.0
    %679 = vmatpush1.msra.mxu0 0.0
    %680 = vmatprep.subr.mxu0 0.0
    %681 = vmatpush1.msra.mxu0 0.0
    %682 = vmatprep.subr.mxu0 0.0
    %683 = vmatpush1.msra.mxu0 0.0
    %684 = vmatprep.subr.mxu0 0.0
    %685 = vmatpush1.msra.mxu0 0.0
    %686 = vmatprep.subr.mxu0 0.0
    %687 = vmatpush1.msra.mxu0 0.0
    %688 = vmatprep.subr.mxu0 0.0
    %689 = vmatpush1.msra.mxu0 0.0
    %690 = vmatprep.subr.mxu0 0.0
    %691 = vmatpush1.msra.mxu0 0.0
    %692 = vmatprep.subr.mxu0 0.0
    %693 = vmatpush1.msra.mxu0 0.0
    %694 = vmatprep.subr.mxu0 0.0
    %695 = vmatpush1.msra.mxu0 0.0
    %696 = vmatprep.subr.mxu0 0.0
    %697 = vmatpush1.msra.mxu0 %v460
    %698 = vmatprep.subr.mxu0 0.0
    %699 = vmatpush1.msra.mxu0 %v459
    %700 = vmatprep.subr.mxu0 0.0
    %701 = vmatpush1.msra.mxu0 %v458
    %702 = vmatprep.subr.mxu0 0.0
    %703 = vmatpush1.msra.mxu0 %v457
    %704 = vmatprep.subr.mxu0 0.0
    %705 = vmatpush2.msra.mxu0 0.0
    %706 = vmatprep.subr.mxu0 0.0
    %707 = vmatpush2.msra.mxu0 0.0
    %708 = vmatprep.subr.mxu0 0.0
    %709 = vmatpush2.msra.mxu0 0.0
    %710 = vmatprep.subr.mxu0 0.0
    %711 = vmatpush2.msra.mxu0 0.0
    %712 = vmatprep.subr.mxu0 0.0
    %713 = vmatpush2.msra.mxu0 0.0
    %714 = vmatprep.subr.mxu0 0.0
    %715 = vmatpush2.msra.mxu0 0.0
    %716 = vmatprep.subr.mxu0 0.0
    %717 = vmatpush2.msra.mxu0 0.0
    %718 = vmatprep.subr.mxu0 0.0
    %719 = vmatpush2.msra.mxu0 0.0
    %720 = vmatprep.subr.mxu0 0.0
    %721 = vmatpush2.msra.mxu0 0.0
    %722 = vmatprep.subr.mxu0 0.0
    %723 = vmatpush2.msra.mxu0 0.0
    %724 = vmatprep.subr.mxu0 0.0
    %725 = vmatpush2.msra.mxu0 0.0
    %726 = vmatprep.subr.mxu0 0.0
    %727 = vmatpush2.msra.mxu0 0.0
    %728 = vmatprep.subr.mxu0 0.0
    %729 = vmatpush2.msra.mxu0 0.0
    %730 = vmatprep.subr.mxu0 0.0
    %731 = vmatpush2.msra.mxu0 0.0
    %732 = vmatprep.subr.mxu0 0.0
    %733 = vmatpush2.msra.mxu0 0.0
    %734 = vmatprep.subr.mxu0 0.0
    %735 = vmatpush2.msra.mxu0 0.0
    %736 = vmatprep.mubr.f32.mxu0 0.0
    %737 = vmatmul.mubr.f32.gmra.mxu0 %v480
    %v738 = vpop.f32.mrf.mxu0
    %v739 = vadd.f32 0.0, %v738
    %v740 = vpop.f32.mrf.mxu0
    %741 = vdwg.mxu0
    %743 = vrot.lane.b32.xlu0 %v647, 32
    %v744 = vpop.permute.xlu0 %743
    %v745 = vsel %vm176, %v744, 0
    %747 = vmatprep.subr.mxu0 0.0
    %748 = vmatpush1.msra.mxu0 0.0
    %749 = vmatprep.subr.mxu0 0.0
    %750 = vmatpush1.msra.mxu0 0.0
    %751 = vmatprep.subr.mxu0 0.0
    %752 = vmatpush1.msra.mxu0 0.0
    %753 = vmatprep.subr.mxu0 0.0
    %754 = vmatpush1.msra.mxu0 0.0
    %755 = vmatprep.subr.mxu0 0.0
    %756 = vmatpush1.msra.mxu0 0.0
    %757 = vmatprep.subr.mxu0 0.0
    %758 = vmatpush1.msra.mxu0 0.0
    %759 = vmatprep.subr.mxu0 0.0
    %760 = vmatpush1.msra.mxu0 0.0
    %761 = vmatprep.subr.mxu0 0.0
    %762 = vmatpush1.msra.mxu0 0.0
    %763 = vmatprep.subr.mxu0 0.0
    %764 = vmatpush1.msra.mxu0 0.0
    %765 = vmatprep.subr.mxu0 0.0
    %766 = vmatpush1.msra.mxu0 0.0
    %767 = vmatprep.subr.mxu0 0.0
    %768 = vmatpush1.msra.mxu0 0.0
    %769 = vmatprep.subr.mxu0 0.0
    %770 = vmatpush1.msra.mxu0 0.0
    %771 = vmatprep.subr.mxu0 0.0
    %772 = vmatpush1.msra.mxu0 %v456
    %773 = vmatprep.subr.mxu0 0.0
    %774 = vmatpush1.msra.mxu0 %v455
    %775 = vmatprep.subr.mxu0 0.0
    %776 = vmatpush1.msra.mxu0 %v454
    %777 = vmatprep.subr.mxu0 0.0
    %778 = vmatpush1.msra.mxu0 %v453
    %779 = vmatprep.subr.mxu0 0.0
    %780 = vmatpush2.msra.mxu0 0.0
    %781 = vmatprep.subr.mxu0 0.0
    %782 = vmatpush2.msra.mxu0 0.0
    %783 = vmatprep.subr.mxu0 0.0
    %784 = vmatpush2.msra.mxu0 0.0
    %785 = vmatprep.subr.mxu0 0.0
    %786 = vmatpush2.msra.mxu0 0.0
    %787 = vmatprep.subr.mxu0 0.0
    %788 = vmatpush2.msra.mxu0 0.0
    %789 = vmatprep.subr.mxu0 0.0
    %790 = vmatpush2.msra.mxu0 0.0
    %791 = vmatprep.subr.mxu0 0.0
    %792 = vmatpush2.msra.mxu0 0.0
    %793 = vmatprep.subr.mxu0 0.0
    %794 = vmatpush2.msra.mxu0 0.0
    %795 = vmatprep.subr.mxu0 0.0
    %796 = vmatpush2.msra.mxu0 0.0
    %797 = vmatprep.subr.mxu0 0.0
    %798 = vmatpush2.msra.mxu0 0.0
    %799 = vmatprep.subr.mxu0 0.0
    %800 = vmatpush2.msra.mxu0 0.0
    %801 = vmatprep.subr.mxu0 0.0
    %802 = vmatpush2.msra.mxu0 0.0
    %803 = vmatprep.subr.mxu0 0.0
    %804 = vmatpush2.msra.mxu0 0.0
    %805 = vmatprep.subr.mxu0 0.0
    %806 = vmatpush2.msra.mxu0 0.0
    %807 = vmatprep.subr.mxu0 0.0
    %808 = vmatpush2.msra.mxu0 0.0
    %809 = vmatprep.subr.mxu0 0.0
    %810 = vmatpush2.msra.mxu0 0.0
    %811 = vmatprep.mubr.f32.mxu0 0.0
    %812 = vmatmul.mubr.f32.gmra.mxu0 %v745
    %v813 = vpop.f32.mrf.mxu0
    %v814 = vadd.f32 %v739, %v813
    %v815 = vpop.f32.mrf.mxu0
    %816 = vdwg.mxu0
    %v818 = vlaneseq
    %v819 = vshrl.u32 %v818, 7
    %v820 = vsub.s32 0, %v819
    %v821 = vrot.slane %v461, %v820
    %v823 = vadd.f32 %v814, %v821
    %824 = vmatprep.subr.mxu0 0.0
    %825 = vmatpush1.msra.mxu0 0.0
    %826 = vmatprep.subr.mxu0 0.0
    %827 = vmatpush1.msra.mxu0 0.0
    %828 = vmatprep.subr.mxu0 0.0
    %829 = vmatpush1.msra.mxu0 0.0
    %830 = vmatprep.subr.mxu0 0.0
    %831 = vmatpush1.msra.mxu0 0.0
    %832 = vmatprep.subr.mxu0 0.0
    %833 = vmatpush1.msra.mxu0 0.0
    %834 = vmatprep.subr.mxu0 0.0
    %835 = vmatpush1.msra.mxu0 0.0
    %836 = vmatprep.subr.mxu0 0.0
    %837 = vmatpush1.msra.mxu0 0.0
    %838 = vmatprep.subr.mxu0 0.0
    %839 = vmatpush1.msra.mxu0 0.0
    %840 = vmatprep.subr.mxu0 0.0
    %841 = vmatpush1.msra.mxu0 0.0
    %842 = vmatprep.subr.mxu0 0.0
    %843 = vmatpush1.msra.mxu0 0.0
    %844 = vmatprep.subr.mxu0 0.0
    %845 = vmatpush1.msra.mxu0 0.0
    %846 = vmatprep.subr.mxu0 0.0
    %847 = vmatpush1.msra.mxu0 0.0
    %848 = vmatprep.subr.mxu0 0.0
    %849 = vmatpush1.msra.mxu0 %v473
    %850 = vmatprep.subr.mxu0 0.0
    %851 = vmatpush1.msra.mxu0 %v472
    %852 = vmatprep.subr.mxu0 0.0
    %853 = vmatpush1.msra.mxu0 %v471
    %854 = vmatprep.subr.mxu0 0.0
    %855 = vmatpush1.msra.mxu0 %v470
    %856 = vmatprep.subr.mxu0 0.0
    %857 = vmatpush2.msra.mxu0 0.0
    %858 = vmatprep.subr.mxu0 0.0
    %859 = vmatpush2.msra.mxu0 0.0
    %860 = vmatprep.subr.mxu0 0.0
    %861 = vmatpush2.msra.mxu0 0.0
    %862 = vmatprep.subr.mxu0 0.0
    %863 = vmatpush2.msra.mxu0 0.0
    %864 = vmatprep.subr.mxu0 0.0
    %865 = vmatpush2.msra.mxu0 0.0
    %866 = vmatprep.subr.mxu0 0.0
    %867 = vmatpush2.msra.mxu0 0.0
    %868 = vmatprep.subr.mxu0 0.0
    %869 = vmatpush2.msra.mxu0 0.0
    %870 = vmatprep.subr.mxu0 0.0
    %871 = vmatpush2.msra.mxu0 0.0
    %872 = vmatprep.subr.mxu0 0.0
    %873 = vmatpush2.msra.mxu0 0.0
    %874 = vmatprep.subr.mxu0 0.0
    %875 = vmatpush2.msra.mxu0 0.0
    %876 = vmatprep.subr.mxu0 0.0
    %877 = vmatpush2.msra.mxu0 0.0
    %878 = vmatprep.subr.mxu0 0.0
    %879 = vmatpush2.msra.mxu0 0.0
    %880 = vmatprep.subr.mxu0 0.0
    %881 = vmatpush2.msra.mxu0 0.0
    %882 = vmatprep.subr.mxu0 0.0
    %883 = vmatpush2.msra.mxu0 0.0
    %884 = vmatprep.subr.mxu0 0.0
    %885 = vmatpush2.msra.mxu0 0.0
    %886 = vmatprep.subr.mxu0 0.0
    %887 = vmatpush2.msra.mxu0 0.0
    %888 = vmatprep.mubr.f32.mxu0 0.0
    %889 = vmatmul.mubr.f32.gmra.mxu0 %v480
    %v890 = vpop.f32.mrf.mxu0
    %v891 = vadd.f32 0.0, %v890
    %v892 = vpop.f32.mrf.mxu0
    %893 = vdwg.mxu0
    %895 = vrot.lane.b32.xlu0 %v671, 32
    %v896 = vpop.permute.xlu0 %895
    %v897 = vsel %vm176, %v896, 0
    %899 = vmatprep.subr.mxu0 0.0
    %900 = vmatpush1.msra.mxu0 0.0
    %901 = vmatprep.subr.mxu0 0.0
    %902 = vmatpush1.msra.mxu0 0.0
    %903 = vmatprep.subr.mxu0 0.0
    %904 = vmatpush1.msra.mxu0 0.0
    %905 = vmatprep.subr.mxu0 0.0
    %906 = vmatpush1.msra.mxu0 0.0
    %907 = vmatprep.subr.mxu0 0.0
    %908 = vmatpush1.msra.mxu0 0.0
    %909 = vmatprep.subr.mxu0 0.0
    %910 = vmatpush1.msra.mxu0 0.0
    %911 = vmatprep.subr.mxu0 0.0
    %912 = vmatpush1.msra.mxu0 0.0
    %913 = vmatprep.subr.mxu0 0.0
    %914 = vmatpush1.msra.mxu0 0.0
    %915 = vmatprep.subr.mxu0 0.0
    %916 = vmatpush1.msra.mxu0 0.0
    %917 = vmatprep.subr.mxu0 0.0
    %918 = vmatpush1.msra.mxu0 0.0
    %919 = vmatprep.subr.mxu0 0.0
    %920 = vmatpush1.msra.mxu0 0.0
    %921 = vmatprep.subr.mxu0 0.0
    %922 = vmatpush1.msra.mxu0 0.0
    %923 = vmatprep.subr.mxu0 0.0
    %924 = vmatpush1.msra.mxu0 %v469
    %925 = vmatprep.subr.mxu0 0.0
    %926 = vmatpush1.msra.mxu0 %v468
    %927 = vmatprep.subr.mxu0 0.0
    %928 = vmatpush1.msra.mxu0 %v467
    %929 = vmatprep.subr.mxu0 0.0
    %930 = vmatpush1.msra.mxu0 %v466
    %931 = vmatprep.subr.mxu0 0.0
    %932 = vmatpush2.msra.mxu0 0.0
    %933 = vmatprep.subr.mxu0 0.0
    %934 = vmatpush2.msra.mxu0 0.0
    %935 = vmatprep.subr.mxu0 0.0
    %936 = vmatpush2.msra.mxu0 0.0
    %937 = vmatprep.subr.mxu0 0.0
    %938 = vmatpush2.msra.mxu0 0.0
    %939 = vmatprep.subr.mxu0 0.0
    %940 = vmatpush2.msra.mxu0 0.0
    %941 = vmatprep.subr.mxu0 0.0
    %942 = vmatpush2.msra.mxu0 0.0
    %943 = vmatprep.subr.mxu0 0.0
    %944 = vmatpush2.msra.mxu0 0.0
    %945 = vmatprep.subr.mxu0 0.0
    %946 = vmatpush2.msra.mxu0 0.0
    %947 = vmatprep.subr.mxu0 0.0
    %948 = vmatpush2.msra.mxu0 0.0
    %949 = vmatprep.subr.mxu0 0.0
    %950 = vmatpush2.msra.mxu0 0.0
    %951 = vmatprep.subr.mxu0 0.0
    %952 = vmatpush2.msra.mxu0 0.0
    %953 = vmatprep.subr.mxu0 0.0
    %954 = vmatpush2.msra.mxu0 0.0
    %955 = vmatprep.subr.mxu0 0.0
    %956 = vmatpush2.msra.mxu0 0.0
    %957 = vmatprep.subr.mxu0 0.0
    %958 = vmatpush2.msra.mxu0 0.0
    %959 = vmatprep.subr.mxu0 0.0
    %960 = vmatpush2.msra.mxu0 0.0
    %961 = vmatprep.subr.mxu0 0.0
    %962 = vmatpush2.msra.mxu0 0.0
    %963 = vmatprep.mubr.f32.mxu0 0.0
    %964 = vmatmul.mubr.f32.gmra.mxu0 %v897
    %v965 = vpop.f32.mrf.mxu0
    %v966 = vadd.f32 %v891, %v965
    %v967 = vpop.f32.mrf.mxu0
    %968 = vdwg.mxu0
    %v970 = vlaneseq
    %v971 = vshrl.u32 %v970, 7
    %v972 = vsub.s32 0, %v971
    %v973 = vrot.slane %v474, %v972
    %v975 = vadd.f32 %v966, %v973
    %v976 = vxor.u32 %v823, 2147483648
    %v977 = vmul.f32 %v976, 1.442695
    %v978 = vpow.pop %v977
    %v979 = vadd.f32 %v978, 1.0
    %v980 = vrcp.pop %v979
    %v981 = vmul.f32 1.0, %v980
    %v982 = vtanh.pop %v823
    %v983 = vmul.f32 %v981, 0.0
    %985 = vrot.lane.b32.xlu0 %v982, 64
    %v986 = vpop.permute.xlu0 %985
    %v988 = vmul.f32 %v981, %v986
    %990 = vrot.lane.b32.xlu0 %v988, 32
    %v991 = vpop.permute.xlu0 %990
    %v993 = vadd.f32 %v983, %v991
    %v994 = vtanh.pop %v993
    %996 = vrot.lane.b32.xlu0 %v994, 64
    %v997 = vpop.permute.xlu0 %996
    %v999 = vmul.f32 %v981, %v997
    %v1000 = vxor.u32 %v975, 2147483648
    %v1001 = vmul.f32 %v1000, 1.442695
    %v1002 = vpow.pop %v1001
    %v1003 = vadd.f32 %v1002, 1.0
    %v1004 = vrcp.pop %v1003
    %v1005 = vmul.f32 1.0, %v1004
    %v1006 = vtanh.pop %v975
    %v1007 = vmul.f32 %v1005, 0.0
    %1009 = vrot.lane.b32.xlu0 %v1006, 64
    %v1010 = vpop.permute.xlu0 %1009
    %v1012 = vmul.f32 %v1005, %v1010
    %1014 = vrot.lane.b32.xlu0 %v1012, 32
    %v1015 = vpop.permute.xlu0 %1014
    %v1017 = vadd.f32 %v1007, %v1015
    %v1018 = vtanh.pop %v1017
    %1020 = vrot.lane.b32.xlu0 %v1018, 64
    %v1021 = vpop.permute.xlu0 %1020
    %v1023 = vmul.f32 %v1005, %v1021
    %vm1024 = vcmp.eq.s32.totalorder %v476, 0
    %v1025 = vsel %vm1024, 1, 0
    %1026 = vset.pattern.permute.xlu0 0
    %1027 = vperm.xlu0 %1026, %v1025
    %v1028 = vpop.permute.xlu0 %1027
    %vm1029 = vcmp.eq.s32.totalorder %v1028, 1
    %v1030 = vsel %vm1029, %v999, 0.0
    %vm1031 = vcmp.eq.s32.totalorder %v478, 0
    %v1032 = vsel %vm1031, 1, 0
    %1033 = vset.pattern.permute.xlu0 0
    %1034 = vperm.xlu0 %1033, %v1032
    %v1035 = vpop.permute.xlu0 %1034
    %vm1036 = vcmp.eq.s32.totalorder %v1035, 1
    %v1037 = vsel %vm1036, %v1023, 0.0
    %1038 = vmatprep.subr.mxu0 0.0
    %1039 = vmatpush1.msra.mxu0 0.0
    %1040 = vmatprep.subr.mxu0 0.0
    %1041 = vmatpush1.msra.mxu0 0.0
    %1042 = vmatprep.subr.mxu0 0.0
    %1043 = vmatpush1.msra.mxu0 0.0
    %1044 = vmatprep.subr.mxu0 0.0
    %1045 = vmatpush1.msra.mxu0 0.0
    %1046 = vmatprep.subr.mxu0 0.0
    %1047 = vmatpush1.msra.mxu0 0.0
    %1048 = vmatprep.subr.mxu0 0.0
    %1049 = vmatpush1.msra.mxu0 0.0
    %1050 = vmatprep.subr.mxu0 0.0
    %1051 = vmatpush1.msra.mxu0 0.0
    %1052 = vmatprep.subr.mxu0 0.0
    %1053 = vmatpush1.msra.mxu0 0.0
    %1054 = vmatprep.subr.mxu0 0.0
    %1055 = vmatpush1.msra.mxu0 0.0
    %1056 = vmatprep.subr.mxu0 0.0
    %1057 = vmatpush1.msra.mxu0 0.0
    %1058 = vmatprep.subr.mxu0 0.0
    %1059 = vmatpush1.msra.mxu0 0.0
    %1060 = vmatprep.subr.mxu0 0.0
    %1061 = vmatpush1.msra.mxu0 0.0
    %1062 = vmatprep.subr.mxu0 0.0
    %1063 = vmatpush1.msra.mxu0 %v452
    %1064 = vmatprep.subr.mxu0 0.0
    %1065 = vmatpush1.msra.mxu0 %v451
    %1066 = vmatprep.subr.mxu0 0.0
    %1067 = vmatpush1.msra.mxu0 %v450
    %1068 = vmatprep.subr.mxu0 0.0
    %1069 = vmatpush1.msra.mxu0 %v449
    %1070 = vmatprep.subr.mxu0 0.0
    %1071 = vmatpush2.msra.mxu0 0.0
    %1072 = vmatprep.subr.mxu0 0.0
    %1073 = vmatpush2.msra.mxu0 0.0
    %1074 = vmatprep.subr.mxu0 0.0
    %1075 = vmatpush2.msra.mxu0 0.0
    %1076 = vmatprep.subr.mxu0 0.0
    %1077 = vmatpush2.msra.mxu0 0.0
    %1078 = vmatprep.subr.mxu0 0.0
    %1079 = vmatpush2.msra.mxu0 0.0
    %1080 = vmatprep.subr.mxu0 0.0
    %1081 = vmatpush2.msra.mxu0 0.0
    %1082 = vmatprep.subr.mxu0 0.0
    %1083 = vmatpush2.msra.mxu0 0.0
    %1084 = vmatprep.subr.mxu0 0.0
    %1085 = vmatpush2.msra.mxu0 0.0
    %1086 = vmatprep.subr.mxu0 0.0
    %1087 = vmatpush2.msra.mxu0 0.0
    %1088 = vmatprep.subr.mxu0 0.0
    %1089 = vmatpush2.msra.mxu0 0.0
    %1090 = vmatprep.subr.mxu0 0.0
    %1091 = vmatpush2.msra.mxu0 0.0
    %1092 = vmatprep.subr.mxu0 0.0
    %1093 = vmatpush2.msra.mxu0 0.0
    %1094 = vmatprep.subr.mxu0 0.0
    %1095 = vmatpush2.msra.mxu0 0.0
    %1096 = vmatprep.subr.mxu0 0.0
    %1097 = vmatpush2.msra.mxu0 0.0
    %1098 = vmatprep.subr.mxu0 0.0
    %1099 = vmatpush2.msra.mxu0 0.0
    %1100 = vmatprep.subr.mxu0 0.0
    %1101 = vmatpush2.msra.mxu0 0.0
    %1102 = vmatprep.mubr.f32.mxu0 0.0
    %1103 = vmatmul.mubr.f32.gmra.mxu0 %v745
    %v1104 = vpop.f32.mrf.mxu0
    %v1105 = vadd.f32 0.0, %v1104
    %v1106 = vpop.f32.mrf.mxu0
    %1107 = vdwg.mxu0
    %v1109 = vrot.slane %v1105, 4
    %v1111 = vadd.f32 %v262, %v1109
    %1112 = vmatprep.subr.mxu0 0.0
    %1113 = vmatpush1.msra.mxu0 0.0
    %1114 = vmatprep.subr.mxu0 0.0
    %1115 = vmatpush1.msra.mxu0 0.0
    %1116 = vmatprep.subr.mxu0 0.0
    %1117 = vmatpush1.msra.mxu0 0.0
    %1118 = vmatprep.subr.mxu0 0.0
    %1119 = vmatpush1.msra.mxu0 0.0
    %1120 = vmatprep.subr.mxu0 0.0
    %1121 = vmatpush1.msra.mxu0 0.0
    %1122 = vmatprep.subr.mxu0 0.0
    %1123 = vmatpush1.msra.mxu0 0.0
    %1124 = vmatprep.subr.mxu0 0.0
    %1125 = vmatpush1.msra.mxu0 0.0
    %1126 = vmatprep.subr.mxu0 0.0
    %1127 = vmatpush1.msra.mxu0 0.0
    %1128 = vmatprep.subr.mxu0 0.0
    %1129 = vmatpush1.msra.mxu0 0.0
    %1130 = vmatprep.subr.mxu0 0.0
    %1131 = vmatpush1.msra.mxu0 0.0
    %1132 = vmatprep.subr.mxu0 0.0
    %1133 = vmatpush1.msra.mxu0 0.0
    %1134 = vmatprep.subr.mxu0 0.0
    %1135 = vmatpush1.msra.mxu0 0.0
    %1136 = vmatprep.subr.mxu0 0.0
    %1137 = vmatpush1.msra.mxu0 %v465
    %1138 = vmatprep.subr.mxu0 0.0
    %1139 = vmatpush1.msra.mxu0 %v464
    %1140 = vmatprep.subr.mxu0 0.0
    %1141 = vmatpush1.msra.mxu0 %v463
    %1142 = vmatprep.subr.mxu0 0.0
    %1143 = vmatpush1.msra.mxu0 %v462
    %1144 = vmatprep.subr.mxu0 0.0
    %1145 = vmatpush2.msra.mxu0 0.0
    %1146 = vmatprep.subr.mxu0 0.0
    %1147 = vmatpush2.msra.mxu0 0.0
    %1148 = vmatprep.subr.mxu0 0.0
    %1149 = vmatpush2.msra.mxu0 0.0
    %1150 = vmatprep.subr.mxu0 0.0
    %1151 = vmatpush2.msra.mxu0 0.0
    %1152 = vmatprep.subr.mxu0 0.0
    %1153 = vmatpush2.msra.mxu0 0.0
    %1154 = vmatprep.subr.mxu0 0.0
    %1155 = vmatpush2.msra.mxu0 0.0
    %1156 = vmatprep.subr.mxu0 0.0
    %1157 = vmatpush2.msra.mxu0 0.0
    %1158 = vmatprep.subr.mxu0 0.0
    %1159 = vmatpush2.msra.mxu0 0.0
    %1160 = vmatprep.subr.mxu0 0.0
    %1161 = vmatpush2.msra.mxu0 0.0
    %1162 = vmatprep.subr.mxu0 0.0
    %1163 = vmatpush2.msra.mxu0 0.0
    %1164 = vmatprep.subr.mxu0 0.0
    %1165 = vmatpush2.msra.mxu0 0.0
    %1166 = vmatprep.subr.mxu0 0.0
    %1167 = vmatpush2.msra.mxu0 0.0
    %1168 = vmatprep.subr.mxu0 0.0
    %1169 = vmatpush2.msra.mxu0 0.0
    %1170 = vmatprep.subr.mxu0 0.0
    %1171 = vmatpush2.msra.mxu0 0.0
    %1172 = vmatprep.subr.mxu0 0.0
    %1173 = vmatpush2.msra.mxu0 0.0
    %1174 = vmatprep.subr.mxu0 0.0
    %1175 = vmatpush2.msra.mxu0 0.0
    %1176 = vmatprep.mubr.f32.mxu0 0.0
    %1177 = vmatmul.mubr.f32.gmra.mxu0 %v897
    %v1178 = vpop.f32.mrf.mxu0
    %v1179 = vadd.f32 0.0, %v1178
    %v1180 = vpop.f32.mrf.mxu0
    %1181 = vdwg.mxu0
    %v1183 = vrot.slane %v1179, 4
    %v1185 = vadd.f32 %v421, %v1183
    %v1186 = vxor.u32 %v1111, 2147483648
    %v1187 = vmul.f32 %v1186, 1.442695
    %v1188 = vpow.pop %v1187
    %v1189 = vadd.f32 %v1188, 1.0
    %v1190 = vrcp.pop %v1189
    %v1191 = vmul.f32 1.0, %v1190
    %v1192 = vtanh.pop %v1111
    %v1194 = vrot.slane %v641, 4
    %v1196 = vmul.f32 %v1191, %v1194
    %1198 = vrot.lane.b32.xlu0 %v1192, 64
    %v1199 = vpop.permute.xlu0 %1198
    %v1201 = vmul.f32 %v1191, %v1199
    %1203 = vrot.lane.b32.xlu0 %v1201, 32
    %v1204 = vpop.permute.xlu0 %1203
    %v1206 = vadd.f32 %v1196, %v1204
    %v1207 = vtanh.pop %v1206
    %1209 = vrot.lane.b32.xlu0 %v1207, 64
    %v1210 = vpop.permute.xlu0 %1209
    %v1212 = vmul.f32 %v1191, %v1210
    %v1213 = vxor.u32 %v1185, 2147483648
    %v1214 = vmul.f32 %v1213, 1.442695
    %v1215 = vpow.pop %v1214
    %v1216 = vadd.f32 %v1215, 1.0
    %v1217 = vrcp.pop %v1216
    %v1218 = vmul.f32 1.0, %v1217
    %v1219 = vtanh.pop %v1185
    %v1221 = vrot.slane %v665, 4
    %v1223 = vmul.f32 %v1218, %v1221
    %1225 = vrot.lane.b32.xlu0 %v1219, 64
    %v1226 = vpop.permute.xlu0 %1225
    %v1228 = vmul.f32 %v1218, %v1226
    %1230 = vrot.lane.b32.xlu0 %v1228, 32
    %v1231 = vpop.permute.xlu0 %1230
    %v1233 = vadd.f32 %v1223, %v1231
    %v1234 = vtanh.pop %v1233
    %1236 = vrot.lane.b32.xlu0 %v1234, 64
    %v1237 = vpop.permute.xlu0 %1236
    %v1239 = vmul.f32 %v1218, %v1237
    %1241 = vrot.lane.b32.xlu0 %v999, 32
    %v1242 = vpop.permute.xlu0 %1241
    %v1243 = vsel %vm176, %v1242, 0
    %1245 = vmatprep.subr.mxu0 0.0
    %1246 = vmatpush1.msra.mxu0 0.0
    %1247 = vmatprep.subr.mxu0 0.0
    %1248 = vmatpush1.msra.mxu0 0.0
    %1249 = vmatprep.subr.mxu0 0.0
    %1250 = vmatpush1.msra.mxu0 0.0
    %1251 = vmatprep.subr.mxu0 0.0
    %1252 = vmatpush1.msra.mxu0 0.0
    %1253 = vmatprep.subr.mxu0 0.0
    %1254 = vmatpush1.msra.mxu0 0.0
    %1255 = vmatprep.subr.mxu0 0.0
    %1256 = vmatpush1.msra.mxu0 0.0
    %1257 = vmatprep.subr.mxu0 0.0
    %1258 = vmatpush1.msra.mxu0 0.0
    %1259 = vmatprep.subr.mxu0 0.0
    %1260 = vmatpush1.msra.mxu0 0.0
    %1261 = vmatprep.subr.mxu0 0.0
    %1262 = vmatpush1.msra.mxu0 0.0
    %1263 = vmatprep.subr.mxu0 0.0
    %1264 = vmatpush1.msra.mxu0 0.0
    %1265 = vmatprep.subr.mxu0 0.0
    %1266 = vmatpush1.msra.mxu0 0.0
    %1267 = vmatprep.subr.mxu0 0.0
    %1268 = vmatpush1.msra.mxu0 0.0
    %1269 = vmatprep.subr.mxu0 0.0
    %1270 = vmatpush1.msra.mxu0 %v460
    %1271 = vmatprep.subr.mxu0 0.0
    %1272 = vmatpush1.msra.mxu0 %v459
    %1273 = vmatprep.subr.mxu0 0.0
    %1274 = vmatpush1.msra.mxu0 %v458
    %1275 = vmatprep.subr.mxu0 0.0
    %1276 = vmatpush1.msra.mxu0 %v457
    %1277 = vmatprep.subr.mxu0 0.0
    %1278 = vmatpush2.msra.mxu0 0.0
    %1279 = vmatprep.subr.mxu0 0.0
    %1280 = vmatpush2.msra.mxu0 0.0
    %1281 = vmatprep.subr.mxu0 0.0
    %1282 = vmatpush2.msra.mxu0 0.0
    %1283 = vmatprep.subr.mxu0 0.0
    %1284 = vmatpush2.msra.mxu0 0.0
    %1285 = vmatprep.subr.mxu0 0.0
    %1286 = vmatpush2.msra.mxu0 0.0
    %1287 = vmatprep.subr.mxu0 0.0
    %1288 = vmatpush2.msra.mxu0 0.0
    %1289 = vmatprep.subr.mxu0 0.0
    %1290 = vmatpush2.msra.mxu0 0.0
    %1291 = vmatprep.subr.mxu0 0.0
    %1292 = vmatpush2.msra.mxu0 0.0
    %1293 = vmatprep.subr.mxu0 0.0
    %1294 = vmatpush2.msra.mxu0 0.0
    %1295 = vmatprep.subr.mxu0 0.0
    %1296 = vmatpush2.msra.mxu0 0.0
    %1297 = vmatprep.subr.mxu0 0.0
    %1298 = vmatpush2.msra.mxu0 0.0
    %1299 = vmatprep.subr.mxu0 0.0
    %1300 = vmatpush2.msra.mxu0 0.0
    %1301 = vmatprep.subr.mxu0 0.0
    %1302 = vmatpush2.msra.mxu0 0.0
    %1303 = vmatprep.subr.mxu0 0.0
    %1304 = vmatpush2.msra.mxu0 0.0
    %1305 = vmatprep.subr.mxu0 0.0
    %1306 = vmatpush2.msra.mxu0 0.0
    %1307 = vmatprep.subr.mxu0 0.0
    %1308 = vmatpush2.msra.mxu0 0.0
    %1309 = vmatprep.mubr.f32.mxu0 0.0
    %1310 = vmatmul.mubr.f32.gmra.mxu0 %v1243
    %v1311 = vpop.f32.mrf.mxu0
    %v1312 = vadd.f32 0.0, %v1311
    %v1313 = vpop.f32.mrf.mxu0
    %1314 = vdwg.mxu0
    %v1316 = vrot.slane %v1212, 4
    %1317 = vrot.lane.b32.xlu0 %v1316, 32
    %v1318 = vpop.permute.xlu0 %1317
    %v1319 = vsel %vm176, %v1318, 0
    %1321 = vmatprep.subr.mxu0 0.0
    %1322 = vmatpush1.msra.mxu0 0.0
    %1323 = vmatprep.subr.mxu0 0.0
    %1324 = vmatpush1.msra.mxu0 0.0
    %1325 = vmatprep.subr.mxu0 0.0
    %1326 = vmatpush1.msra.mxu0 0.0
    %1327 = vmatprep.subr.mxu0 0.0
    %1328 = vmatpush1.msra.mxu0 0.0
    %1329 = vmatprep.subr.mxu0 0.0
    %1330 = vmatpush1.msra.mxu0 0.0
    %1331 = vmatprep.subr.mxu0 0.0
    %1332 = vmatpush1.msra.mxu0 0.0
    %1333 = vmatprep.subr.mxu0 0.0
    %1334 = vmatpush1.msra.mxu0 0.0
    %1335 = vmatprep.subr.mxu0 0.0
    %1336 = vmatpush1.msra.mxu0 0.0
    %1337 = vmatprep.subr.mxu0 0.0
    %1338 = vmatpush1.msra.mxu0 0.0
    %1339 = vmatprep.subr.mxu0 0.0
    %1340 = vmatpush1.msra.mxu0 0.0
    %1341 = vmatprep.subr.mxu0 0.0
    %1342 = vmatpush1.msra.mxu0 0.0
    %1343 = vmatprep.subr.mxu0 0.0
    %1344 = vmatpush1.msra.mxu0 0.0
    %1345 = vmatprep.subr.mxu0 0.0
    %1346 = vmatpush1.msra.mxu0 %v456
    %1347 = vmatprep.subr.mxu0 0.0
    %1348 = vmatpush1.msra.mxu0 %v455
    %1349 = vmatprep.subr.mxu0 0.0
    %1350 = vmatpush1.msra.mxu0 %v454
    %1351 = vmatprep.subr.mxu0 0.0
    %1352 = vmatpush1.msra.mxu0 %v453
    %1353 = vmatprep.subr.mxu0 0.0
    %1354 = vmatpush2.msra.mxu0 0.0
    %1355 = vmatprep.subr.mxu0 0.0
    %1356 = vmatpush2.msra.mxu0 0.0
    %1357 = vmatprep.subr.mxu0 0.0
    %1358 = vmatpush2.msra.mxu0 0.0
    %1359 = vmatprep.subr.mxu0 0.0
    %1360 = vmatpush2.msra.mxu0 0.0
    %1361 = vmatprep.subr.mxu0 0.0
    %1362 = vmatpush2.msra.mxu0 0.0
    %1363 = vmatprep.subr.mxu0 0.0
    %1364 = vmatpush2.msra.mxu0 0.0
    %1365 = vmatprep.subr.mxu0 0.0
    %1366 = vmatpush2.msra.mxu0 0.0
    %1367 = vmatprep.subr.mxu0 0.0
    %1368 = vmatpush2.msra.mxu0 0.0
    %1369 = vmatprep.subr.mxu0 0.0
    %1370 = vmatpush2.msra.mxu0 0.0
    %1371 = vmatprep.subr.mxu0 0.0
    %1372 = vmatpush2.msra.mxu0 0.0
    %1373 = vmatprep.subr.mxu0 0.0
    %1374 = vmatpush2.msra.mxu0 0.0
    %1375 = vmatprep.subr.mxu0 0.0
    %1376 = vmatpush2.msra.mxu0 0.0
    %1377 = vmatprep.subr.mxu0 0.0
    %1378 = vmatpush2.msra.mxu0 0.0
    %1379 = vmatprep.subr.mxu0 0.0
    %1380 = vmatpush2.msra.mxu0 0.0
    %1381 = vmatprep.subr.mxu0 0.0
    %1382 = vmatpush2.msra.mxu0 0.0
    %1383 = vmatprep.subr.mxu0 0.0
    %1384 = vmatpush2.msra.mxu0 0.0
    %1385 = vmatprep.mubr.f32.mxu0 0.0
    %1386 = vmatmul.mubr.f32.gmra.mxu0 %v1319
    %v1387 = vpop.f32.mrf.mxu0
    %v1388 = vadd.f32 %v1312, %v1387
    %v1389 = vpop.f32.mrf.mxu0
    %1390 = vdwg.mxu0
    %v1391 = vadd.f32 %v1388, %v821
    %1393 = vrot.lane.b32.xlu0 %v1023, 32
    %v1394 = vpop.permute.xlu0 %1393
    %v1395 = vsel %vm176, %v1394, 0
    %1397 = vmatprep.subr.mxu0 0.0
    %1398 = vmatpush1.msra.mxu0 0.0
    %1399 = vmatprep.subr.mxu0 0.0
    %1400 = vmatpush1.msra.mxu0 0.0
    %1401 = vmatprep.subr.mxu0 0.0
    %1402 = vmatpush1.msra.mxu0 0.0
    %1403 = vmatprep.subr.mxu0 0.0
    %1404 = vmatpush1.msra.mxu0 0.0
    %1405 = vmatprep.subr.mxu0 0.0
    %1406 = vmatpush1.msra.mxu0 0.0
    %1407 = vmatprep.subr.mxu0 0.0
    %1408 = vmatpush1.msra.mxu0 0.0
    %1409 = vmatprep.subr.mxu0 0.0
    %1410 = vmatpush1.msra.mxu0 0.0
    %1411 = vmatprep.subr.mxu0 0.0
    %1412 = vmatpush1.msra.mxu0 0.0
    %1413 = vmatprep.subr.mxu0 0.0
    %1414 = vmatpush1.msra.mxu0 0.0
    %1415 = vmatprep.subr.mxu0 0.0
    %1416 = vmatpush1.msra.mxu0 0.0
    %1417 = vmatprep.subr.mxu0 0.0
    %1418 = vmatpush1.msra.mxu0 0.0
    %1419 = vmatprep.subr.mxu0 0.0
    %1420 = vmatpush1.msra.mxu0 0.0
    %1421 = vmatprep.subr.mxu0 0.0
    %1422 = vmatpush1.msra.mxu0 %v473
    %1423 = vmatprep.subr.mxu0 0.0
    %1424 = vmatpush1.msra.mxu0 %v472
    %1425 = vmatprep.subr.mxu0 0.0
    %1426 = vmatpush1.msra.mxu0 %v471
    %1427 = vmatprep.subr.mxu0 0.0
    %1428 = vmatpush1.msra.mxu0 %v470
    %1429 = vmatprep.subr.mxu0 0.0
    %1430 = vmatpush2.msra.mxu0 0.0
    %1431 = vmatprep.subr.mxu0 0.0
    %1432 = vmatpush2.msra.mxu0 0.0
    %1433 = vmatprep.subr.mxu0 0.0
    %1434 = vmatpush2.msra.mxu0 0.0
    %1435 = vmatprep.subr.mxu0 0.0
    %1436 = vmatpush2.msra.mxu0 0.0
    %1437 = vmatprep.subr.mxu0 0.0
    %1438 = vmatpush2.msra.mxu0 0.0
    %1439 = vmatprep.subr.mxu0 0.0
    %1440 = vmatpush2.msra.mxu0 0.0
    %1441 = vmatprep.subr.mxu0 0.0
    %1442 = vmatpush2.msra.mxu0 0.0
    %1443 = vmatprep.subr.mxu0 0.0
    %1444 = vmatpush2.msra.mxu0 0.0
    %1445 = vmatprep.subr.mxu0 0.0
    %1446 = vmatpush2.msra.mxu0 0.0
    %1447 = vmatprep.subr.mxu0 0.0
    %1448 = vmatpush2.msra.mxu0 0.0
    %1449 = vmatprep.subr.mxu0 0.0
    %1450 = vmatpush2.msra.mxu0 0.0
    %1451 = vmatprep.subr.mxu0 0.0
    %1452 = vmatpush2.msra.mxu0 0.0
    %1453 = vmatprep.subr.mxu0 0.0
    %1454 = vmatpush2.msra.mxu0 0.0
    %1455 = vmatprep.subr.mxu0 0.0
    %1456 = vmatpush2.msra.mxu0 0.0
    %1457 = vmatprep.subr.mxu0 0.0
    %1458 = vmatpush2.msra.mxu0 0.0
    %1459 = vmatprep.subr.mxu0 0.0
    %1460 = vmatpush2.msra.mxu0 0.0
    %1461 = vmatprep.mubr.f32.mxu0 0.0
    %1462 = vmatmul.mubr.f32.gmra.mxu0 %v1395
    %v1463 = vpop.f32.mrf.mxu0
    %v1464 = vadd.f32 0.0, %v1463
    %v1465 = vpop.f32.mrf.mxu0
    %1466 = vdwg.mxu0
    %v1468 = vrot.slane %v1239, 4
    %1469 = vrot.lane.b32.xlu0 %v1468, 32
    %v1470 = vpop.permute.xlu0 %1469
    %v1471 = vsel %vm176, %v1470, 0
    %1473 = vmatprep.subr.mxu0 0.0
    %1474 = vmatpush1.msra.mxu0 0.0
    %1475 = vmatprep.subr.mxu0 0.0
    %1476 = vmatpush1.msra.mxu0 0.0
    %1477 = vmatprep.subr.mxu0 0.0
    %1478 = vmatpush1.msra.mxu0 0.0
    %1479 = vmatprep.subr.mxu0 0.0
    %1480 = vmatpush1.msra.mxu0 0.0
    %1481 = vmatprep.subr.mxu0 0.0
    %1482 = vmatpush1.msra.mxu0 0.0
    %1483 = vmatprep.subr.mxu0 0.0
    %1484 = vmatpush1.msra.mxu0 0.0
    %1485 = vmatprep.subr.mxu0 0.0
    %1486 = vmatpush1.msra.mxu0 0.0
    %1487 = vmatprep.subr.mxu0 0.0
    %1488 = vmatpush1.msra.mxu0 0.0
    %1489 = vmatprep.subr.mxu0 0.0
    %1490 = vmatpush1.msra.mxu0 0.0
    %1491 = vmatprep.subr.mxu0 0.0
    %1492 = vmatpush1.msra.mxu0 0.0
    %1493 = vmatprep.subr.mxu0 0.0
    %1494 = vmatpush1.msra.mxu0 0.0
    %1495 = vmatprep.subr.mxu0 0.0
    %1496 = vmatpush1.msra.mxu0 0.0
    %1497 = vmatprep.subr.mxu0 0.0
    %1498 = vmatpush1.msra.mxu0 %v469
    %1499 = vmatprep.subr.mxu0 0.0
    %1500 = vmatpush1.msra.mxu0 %v468
    %1501 = vmatprep.subr.mxu0 0.0
    %1502 = vmatpush1.msra.mxu0 %v467
    %1503 = vmatprep.subr.mxu0 0.0
    %1504 = vmatpush1.msra.mxu0 %v466
    %1505 = vmatprep.subr.mxu0 0.0
    %1506 = vmatpush2.msra.mxu0 0.0
    %1507 = vmatprep.subr.mxu0 0.0
    %1508 = vmatpush2.msra.mxu0 0.0
    %1509 = vmatprep.subr.mxu0 0.0
    %1510 = vmatpush2.msra.mxu0 0.0
    %1511 = vmatprep.subr.mxu0 0.0
    %1512 = vmatpush2.msra.mxu0 0.0
    %1513 = vmatprep.subr.mxu0 0.0
    %1514 = vmatpush2.msra.mxu0 0.0
    %1515 = vmatprep.subr.mxu0 0.0
    %1516 = vmatpush2.msra.mxu0 0.0
    %1517 = vmatprep.subr.mxu0 0.0
    %1518 = vmatpush2.msra.mxu0 0.0
    %1519 = vmatprep.subr.mxu0 0.0
    %1520 = vmatpush2.msra.mxu0 0.0
    %1521 = vmatprep.subr.mxu0 0.0
    %1522 = vmatpush2.msra.mxu0 0.0
    %1523 = vmatprep.subr.mxu0 0.0
    %1524 = vmatpush2.msra.mxu0 0.0
    %1525 = vmatprep.subr.mxu0 0.0
    %1526 = vmatpush2.msra.mxu0 0.0
    %1527 = vmatprep.subr.mxu0 0.0
    %1528 = vmatpush2.msra.mxu0 0.0
    %1529 = vmatprep.subr.mxu0 0.0
    %1530 = vmatpush2.msra.mxu0 0.0
    %1531 = vmatprep.subr.mxu0 0.0
    %1532 = vmatpush2.msra.mxu0 0.0
    %1533 = vmatprep.subr.mxu0 0.0
    %1534 = vmatpush2.msra.mxu0 0.0
    %1535 = vmatprep.subr.mxu0 0.0
    %1536 = vmatpush2.msra.mxu0 0.0
    %1537 = vmatprep.mubr.f32.mxu0 0.0
    %1538 = vmatmul.mubr.f32.gmra.mxu0 %v1471
    %v1539 = vpop.f32.mrf.mxu0
    %v1540 = vadd.f32 %v1464, %v1539
    %v1541 = vpop.f32.mrf.mxu0
    %1542 = vdwg.mxu0
    %v1543 = vadd.f32 %v1540, %v973
    %v1544 = vxor.u32 %v1391, 2147483648
    %v1545 = vmul.f32 %v1544, 1.442695
    %v1546 = vpow.pop %v1545
    %v1547 = vadd.f32 %v1546, 1.0
    %v1548 = vrcp.pop %v1547
    %v1549 = vmul.f32 1.0, %v1548
    %v1550 = vtanh.pop %v1391
    %v1551 = vmul.f32 %v1549, %v993
    %1553 = vrot.lane.b32.xlu0 %v1550, 64
    %v1554 = vpop.permute.xlu0 %1553
    %v1556 = vmul.f32 %v1549, %v1554
    %1558 = vrot.lane.b32.xlu0 %v1556, 32
    %v1559 = vpop.permute.xlu0 %1558
    %v1561 = vadd.f32 %v1551, %v1559
    %v1562 = vtanh.pop %v1561
    %1564 = vrot.lane.b32.xlu0 %v1562, 64
    %v1565 = vpop.permute.xlu0 %1564
    %v1567 = vmul.f32 %v1549, %v1565
    %v1568 = vxor.u32 %v1543, 2147483648
    %v1569 = vmul.f32 %v1568, 1.442695
    %v1570 = vpow.pop %v1569
    %v1571 = vadd.f32 %v1570, 1.0
    %v1572 = vrcp.pop %v1571
    %v1573 = vmul.f32 1.0, %v1572
    %v1574 = vtanh.pop %v1543
    %v1575 = vmul.f32 %v1573, %v1017
    %1577 = vrot.lane.b32.xlu0 %v1574, 64
    %v1578 = vpop.permute.xlu0 %1577
    %v1580 = vmul.f32 %v1573, %v1578
    %1582 = vrot.lane.b32.xlu0 %v1580, 32
    %v1583 = vpop.permute.xlu0 %1582
    %v1585 = vadd.f32 %v1575, %v1583
    %v1586 = vtanh.pop %v1585
    %1588 = vrot.lane.b32.xlu0 %v1586, 64
    %v1589 = vpop.permute.xlu0 %1588
    %v1591 = vmul.f32 %v1573, %v1589
    %vm1592 = vcmp.eq.s32.totalorder %v476, 1
    %v1593 = vsel %vm1592, 1, 0
    %1594 = vset.pattern.permute.xlu0 0
    %1595 = vperm.xlu0 %1594, %v1593
    %v1596 = vpop.permute.xlu0 %1595
    %vm1597 = vcmp.eq.s32.totalorder %v1596, 1
    %v1598 = vsel %vm1597, %v1567, %v1030
    %vm1599 = vcmp.eq.s32.totalorder %v478, 1
    %v1600 = vsel %vm1599, 1, 0
    %1601 = vset.pattern.permute.xlu0 0
    %1602 = vperm.xlu0 %1601, %v1600
    %v1603 = vpop.permute.xlu0 %1602
    %vm1604 = vcmp.eq.s32.totalorder %v1603, 1
    %v1605 = vsel %vm1604, %v1591, %v1037
    %1606 = vmatprep.subr.mxu0 0.0
    %1607 = vmatpush1.msra.mxu0 0.0
    %1608 = vmatprep.subr.mxu0 0.0
    %1609 = vmatpush1.msra.mxu0 0.0
    %1610 = vmatprep.subr.mxu0 0.0
    %1611 = vmatpush1.msra.mxu0 0.0
    %1612 = vmatprep.subr.mxu0 0.0
    %1613 = vmatpush1.msra.mxu0 0.0
    %1614 = vmatprep.subr.mxu0 0.0
    %1615 = vmatpush1.msra.mxu0 0.0
    %1616 = vmatprep.subr.mxu0 0.0
    %1617 = vmatpush1.msra.mxu0 0.0
    %1618 = vmatprep.subr.mxu0 0.0
    %1619 = vmatpush1.msra.mxu0 0.0
    %1620 = vmatprep.subr.mxu0 0.0
    %1621 = vmatpush1.msra.mxu0 0.0
    %1622 = vmatprep.subr.mxu0 0.0
    %1623 = vmatpush1.msra.mxu0 0.0
    %1624 = vmatprep.subr.mxu0 0.0
    %1625 = vmatpush1.msra.mxu0 0.0
    %1626 = vmatprep.subr.mxu0 0.0
    %1627 = vmatpush1.msra.mxu0 0.0
    %1628 = vmatprep.subr.mxu0 0.0
    %1629 = vmatpush1.msra.mxu0 0.0
    %1630 = vmatprep.subr.mxu0 0.0
    %1631 = vmatpush1.msra.mxu0 %v452
    %1632 = vmatprep.subr.mxu0 0.0
    %1633 = vmatpush1.msra.mxu0 %v451
    %1634 = vmatprep.subr.mxu0 0.0
    %1635 = vmatpush1.msra.mxu0 %v450
    %1636 = vmatprep.subr.mxu0 0.0
    %1637 = vmatpush1.msra.mxu0 %v449
    %1638 = vmatprep.subr.mxu0 0.0
    %1639 = vmatpush2.msra.mxu0 0.0
    %1640 = vmatprep.subr.mxu0 0.0
    %1641 = vmatpush2.msra.mxu0 0.0
    %1642 = vmatprep.subr.mxu0 0.0
    %1643 = vmatpush2.msra.mxu0 0.0
    %1644 = vmatprep.subr.mxu0 0.0
    %1645 = vmatpush2.msra.mxu0 0.0
    %1646 = vmatprep.subr.mxu0 0.0
    %1647 = vmatpush2.msra.mxu0 0.0
    %1648 = vmatprep.subr.mxu0 0.0
    %1649 = vmatpush2.msra.mxu0 0.0
    %1650 = vmatprep.subr.mxu0 0.0
    %1651 = vmatpush2.msra.mxu0 0.0
    %1652 = vmatprep.subr.mxu0 0.0
    %1653 = vmatpush2.msra.mxu0 0.0
    %1654 = vmatprep.subr.mxu0 0.0
    %1655 = vmatpush2.msra.mxu0 0.0
    %1656 = vmatprep.subr.mxu0 0.0
    %1657 = vmatpush2.msra.mxu0 0.0
    %1658 = vmatprep.subr.mxu0 0.0
    %1659 = vmatpush2.msra.mxu0 0.0
    %1660 = vmatprep.subr.mxu0 0.0
    %1661 = vmatpush2.msra.mxu0 0.0
    %1662 = vmatprep.subr.mxu0 0.0
    %1663 = vmatpush2.msra.mxu0 0.0
    %1664 = vmatprep.subr.mxu0 0.0
    %1665 = vmatpush2.msra.mxu0 0.0
    %1666 = vmatprep.subr.mxu0 0.0
    %1667 = vmatpush2.msra.mxu0 0.0
    %1668 = vmatprep.subr.mxu0 0.0
    %1669 = vmatpush2.msra.mxu0 0.0
    %1670 = vmatprep.mubr.f32.mxu0 0.0
    %1671 = vmatmul.mubr.f32.gmra.mxu0 %v1319
    %v1672 = vpop.f32.mrf.mxu0
    %v1673 = vadd.f32 0.0, %v1672
    %v1674 = vpop.f32.mrf.mxu0
    %1675 = vdwg.mxu0
    %v1676 = vadd.f32 %v267, %v1673
    %1677 = vmatprep.subr.mxu0 0.0
    %1678 = vmatpush1.msra.mxu0 0.0
    %1679 = vmatprep.subr.mxu0 0.0
    %1680 = vmatpush1.msra.mxu0 0.0
    %1681 = vmatprep.subr.mxu0 0.0
    %1682 = vmatpush1.msra.mxu0 0.0
    %1683 = vmatprep.subr.mxu0 0.0
    %1684 = vmatpush1.msra.mxu0 0.0
    %1685 = vmatprep.subr.mxu0 0.0
    %1686 = vmatpush1.msra.mxu0 0.0
    %1687 = vmatprep.subr.mxu0 0.0
    %1688 = vmatpush1.msra.mxu0 0.0
    %1689 = vmatprep.subr.mxu0 0.0
    %1690 = vmatpush1.msra.mxu0 0.0
    %1691 = vmatprep.subr.mxu0 0.0
    %1692 = vmatpush1.msra.mxu0 0.0
    %1693 = vmatprep.subr.mxu0 0.0
    %1694 = vmatpush1.msra.mxu0 0.0
    %1695 = vmatprep.subr.mxu0 0.0
    %1696 = vmatpush1.msra.mxu0 0.0
    %1697 = vmatprep.subr.mxu0 0.0
    %1698 = vmatpush1.msra.mxu0 0.0
    %1699 = vmatprep.subr.mxu0 0.0
    %1700 = vmatpush1.msra.mxu0 0.0
    %1701 = vmatprep.subr.mxu0 0.0
    %1702 = vmatpush1.msra.mxu0 %v465
    %1703 = vmatprep.subr.mxu0 0.0
    %1704 = vmatpush1.msra.mxu0 %v464
    %1705 = vmatprep.subr.mxu0 0.0
    %1706 = vmatpush1.msra.mxu0 %v463
    %1707 = vmatprep.subr.mxu0 0.0
    %1708 = vmatpush1.msra.mxu0 %v462
    %1709 = vmatprep.subr.mxu0 0.0
    %1710 = vmatpush2.msra.mxu0 0.0
    %1711 = vmatprep.subr.mxu0 0.0
    %1712 = vmatpush2.msra.mxu0 0.0
    %1713 = vmatprep.subr.mxu0 0.0
    %1714 = vmatpush2.msra.mxu0 0.0
    %1715 = vmatprep.subr.mxu0 0.0
    %1716 = vmatpush2.msra.mxu0 0.0
    %1717 = vmatprep.subr.mxu0 0.0
    %1718 = vmatpush2.msra.mxu0 0.0
    %1719 = vmatprep.subr.mxu0 0.0
    %1720 = vmatpush2.msra.mxu0 0.0
    %1721 = vmatprep.subr.mxu0 0.0
    %1722 = vmatpush2.msra.mxu0 0.0
    %1723 = vmatprep.subr.mxu0 0.0
    %1724 = vmatpush2.msra.mxu0 0.0
    %1725 = vmatprep.subr.mxu0 0.0
    %1726 = vmatpush2.msra.mxu0 0.0
    %1727 = vmatprep.subr.mxu0 0.0
    %1728 = vmatpush2.msra.mxu0 0.0
    %1729 = vmatprep.subr.mxu0 0.0
    %1730 = vmatpush2.msra.mxu0 0.0
    %1731 = vmatprep.subr.mxu0 0.0
    %1732 = vmatpush2.msra.mxu0 0.0
    %1733 = vmatprep.subr.mxu0 0.0
    %1734 = vmatpush2.msra.mxu0 0.0
    %1735 = vmatprep.subr.mxu0 0.0
    %1736 = vmatpush2.msra.mxu0 0.0
    %1737 = vmatprep.subr.mxu0 0.0
    %1738 = vmatpush2.msra.mxu0 0.0
    %1739 = vmatprep.subr.mxu0 0.0
    %1740 = vmatpush2.msra.mxu0 0.0
    %1741 = vmatprep.mubr.f32.mxu0 0.0
    %1742 = vmatmul.mubr.f32.gmra.mxu0 %v1471
    %v1743 = vpop.f32.mrf.mxu0
    %v1744 = vadd.f32 0.0, %v1743
    %v1745 = vpop.f32.mrf.mxu0
    %1746 = vdwg.mxu0
    %v1747 = vadd.f32 %v426, %v1744
    %v1748 = vxor.u32 %v1676, 2147483648
    %v1749 = vmul.f32 %v1748, 1.442695
    %v1750 = vpow.pop %v1749
    %v1751 = vadd.f32 %v1750, 1.0
    %v1752 = vrcp.pop %v1751
    %v1753 = vmul.f32 1.0, %v1752
    %v1754 = vtanh.pop %v1676
    %v1756 = vrot.slane %v1206, 4
    %v1758 = vmul.f32 %v1753, %v1756
    %1760 = vrot.lane.b32.xlu0 %v1754, 64
    %v1761 = vpop.permute.xlu0 %1760
    %v1763 = vmul.f32 %v1753, %v1761
    %1765 = vrot.lane.b32.xlu0 %v1763, 32
    %v1766 = vpop.permute.xlu0 %1765
    %v1768 = vadd.f32 %v1758, %v1766
    %v1769 = vtanh.pop %v1768
    %1771 = vrot.lane.b32.xlu0 %v1769, 64
    %v1772 = vpop.permute.xlu0 %1771
    %v1774 = vmul.f32 %v1753, %v1772
    %v1775 = vxor.u32 %v1747, 2147483648
    %v1776 = vmul.f32 %v1775, 1.442695
    %v1777 = vpow.pop %v1776
    %v1778 = vadd.f32 %v1777, 1.0
    %v1779 = vrcp.pop %v1778
    %v1780 = vmul.f32 1.0, %v1779
    %v1781 = vtanh.pop %v1747
    %v1783 = vrot.slane %v1233, 4
    %v1785 = vmul.f32 %v1780, %v1783
    %1787 = vrot.lane.b32.xlu0 %v1781, 64
    %v1788 = vpop.permute.xlu0 %1787
    %v1790 = vmul.f32 %v1780, %v1788
    %1792 = vrot.lane.b32.xlu0 %v1790, 32
    %v1793 = vpop.permute.xlu0 %1792
    %v1795 = vadd.f32 %v1785, %v1793
    %v1796 = vtanh.pop %v1795
    %1798 = vrot.lane.b32.xlu0 %v1796, 64
    %v1799 = vpop.permute.xlu0 %1798
    %v1801 = vmul.f32 %v1780, %v1799
    %1803 = vrot.lane.b32.xlu0 %v1567, 32
    %v1804 = vpop.permute.xlu0 %1803
    %v1805 = vsel %vm176, %v1804, 0
    %1807 = vmatprep.subr.mxu0 0.0
    %1808 = vmatpush1.msra.mxu0 0.0
    %1809 = vmatprep.subr.mxu0 0.0
    %1810 = vmatpush1.msra.mxu0 0.0
    %1811 = vmatprep.subr.mxu0 0.0
    %1812 = vmatpush1.msra.mxu0 0.0
    %1813 = vmatprep.subr.mxu0 0.0
    %1814 = vmatpush1.msra.mxu0 0.0
    %1815 = vmatprep.subr.mxu0 0.0
    %1816 = vmatpush1.msra.mxu0 0.0
    %1817 = vmatprep.subr.mxu0 0.0
    %1818 = vmatpush1.msra.mxu0 0.0
    %1819 = vmatprep.subr.mxu0 0.0
    %1820 = vmatpush1.msra.mxu0 0.0
    %1821 = vmatprep.subr.mxu0 0.0
    %1822 = vmatpush1.msra.mxu0 0.0
    %1823 = vmatprep.subr.mxu0 0.0
    %1824 = vmatpush1.msra.mxu0 0.0
    %1825 = vmatprep.subr.mxu0 0.0
    %1826 = vmatpush1.msra.mxu0 0.0
    %1827 = vmatprep.subr.mxu0 0.0
    %1828 = vmatpush1.msra.mxu0 0.0
    %1829 = vmatprep.subr.mxu0 0.0
    %1830 = vmatpush1.msra.mxu0 0.0
    %1831 = vmatprep.subr.mxu0 0.0
    %1832 = vmatpush1.msra.mxu0 %v460
    %1833 = vmatprep.subr.mxu0 0.0
    %1834 = vmatpush1.msra.mxu0 %v459
    %1835 = vmatprep.subr.mxu0 0.0
    %1836 = vmatpush1.msra.mxu0 %v458
    %1837 = vmatprep.subr.mxu0 0.0
    %1838 = vmatpush1.msra.mxu0 %v457
    %1839 = vmatprep.subr.mxu0 0.0
    %1840 = vmatpush2.msra.mxu0 0.0
    %1841 = vmatprep.subr.mxu0 0.0
    %1842 = vmatpush2.msra.mxu0 0.0
    %1843 = vmatprep.subr.mxu0 0.0
    %1844 = vmatpush2.msra.mxu0 0.0
    %1845 = vmatprep.subr.mxu0 0.0
    %1846 = vmatpush2.msra.mxu0 0.0
    %1847 = vmatprep.subr.mxu0 0.0
    %1848 = vmatpush2.msra.mxu0 0.0
    %1849 = vmatprep.subr.mxu0 0.0
    %1850 = vmatpush2.msra.mxu0 0.0
    %1851 = vmatprep.subr.mxu0 0.0
    %1852 = vmatpush2.msra.mxu0 0.0
    %1853 = vmatprep.subr.mxu0 0.0
    %1854 = vmatpush2.msra.mxu0 0.0
    %1855 = vmatprep.subr.mxu0 0.0
    %1856 = vmatpush2.msra.mxu0 0.0
    %1857 = vmatprep.subr.mxu0 0.0
    %1858 = vmatpush2.msra.mxu0 0.0
    %1859 = vmatprep.subr.mxu0 0.0
    %1860 = vmatpush2.msra.mxu0 0.0
    %1861 = vmatprep.subr.mxu0 0.0
    %1862 = vmatpush2.msra.mxu0 0.0
    %1863 = vmatprep.subr.mxu0 0.0
    %1864 = vmatpush2.msra.mxu0 0.0
    %1865 = vmatprep.subr.mxu0 0.0
    %1866 = vmatpush2.msra.mxu0 0.0
    %1867 = vmatprep.subr.mxu0 0.0
    %1868 = vmatpush2.msra.mxu0 0.0
    %1869 = vmatprep.subr.mxu0 0.0
    %1870 = vmatpush2.msra.mxu0 0.0
    %1871 = vmatprep.mubr.f32.mxu0 0.0
    %1872 = vmatmul.mubr.f32.gmra.mxu0 %v1805
    %v1873 = vpop.f32.mrf.mxu0
    %v1874 = vadd.f32 0.0, %v1873
    %v1875 = vpop.f32.mrf.mxu0
    %1876 = vdwg.mxu0
    %1878 = vrot.lane.b32.xlu0 %v1774, 32
    %v1879 = vpop.permute.xlu0 %1878
    %v1880 = vsel %vm176, %v1879, 0
    %1882 = vmatprep.subr.mxu0 0.0
    %1883 = vmatpush1.msra.mxu0 0.0
    %1884 = vmatprep.subr.mxu0 0.0
    %1885 = vmatpush1.msra.mxu0 0.0
    %1886 = vmatprep.subr.mxu0 0.0
    %1887 = vmatpush1.msra.mxu0 0.0
    %1888 = vmatprep.subr.mxu0 0.0
    %1889 = vmatpush1.msra.mxu0 0.0
    %1890 = vmatprep.subr.mxu0 0.0
    %1891 = vmatpush1.msra.mxu0 0.0
    %1892 = vmatprep.subr.mxu0 0.0
    %1893 = vmatpush1.msra.mxu0 0.0
    %1894 = vmatprep.subr.mxu0 0.0
    %1895 = vmatpush1.msra.mxu0 0.0
    %1896 = vmatprep.subr.mxu0 0.0
    %1897 = vmatpush1.msra.mxu0 0.0
    %1898 = vmatprep.subr.mxu0 0.0
    %1899 = vmatpush1.msra.mxu0 0.0
    %1900 = vmatprep.subr.mxu0 0.0
    %1901 = vmatpush1.msra.mxu0 0.0
    %1902 = vmatprep.subr.mxu0 0.0
    %1903 = vmatpush1.msra.mxu0 0.0
    %1904 = vmatprep.subr.mxu0 0.0
    %1905 = vmatpush1.msra.mxu0 0.0
    %1906 = vmatprep.subr.mxu0 0.0
    %1907 = vmatpush1.msra.mxu0 %v456
    %1908 = vmatprep.subr.mxu0 0.0
    %1909 = vmatpush1.msra.mxu0 %v455
    %1910 = vmatprep.subr.mxu0 0.0
    %1911 = vmatpush1.msra.mxu0 %v454
    %1912 = vmatprep.subr.mxu0 0.0
    %1913 = vmatpush1.msra.mxu0 %v453
    %1914 = vmatprep.subr.mxu0 0.0
    %1915 = vmatpush2.msra.mxu0 0.0
    %1916 = vmatprep.subr.mxu0 0.0
    %1917 = vmatpush2.msra.mxu0 0.0
    %1918 = vmatprep.subr.mxu0 0.0
    %1919 = vmatpush2.msra.mxu0 0.0
    %1920 = vmatprep.subr.mxu0 0.0
    %1921 = vmatpush2.msra.mxu0 0.0
    %1922 = vmatprep.subr.mxu0 0.0
    %1923 = vmatpush2.msra.mxu0 0.0
    %1924 = vmatprep.subr.mxu0 0.0
    %1925 = vmatpush2.msra.mxu0 0.0
    %1926 = vmatprep.subr.mxu0 0.0
    %1927 = vmatpush2.msra.mxu0 0.0
    %1928 = vmatprep.subr.mxu0 0.0
    %1929 = vmatpush2.msra.mxu0 0.0
    %1930 = vmatprep.subr.mxu0 0.0
    %1931 = vmatpush2.msra.mxu0 0.0
    %1932 = vmatprep.subr.mxu0 0.0
    %1933 = vmatpush2.msra.mxu0 0.0
    %1934 = vmatprep.subr.mxu0 0.0
    %1935 = vmatpush2.msra.mxu0 0.0
    %1936 = vmatprep.subr.mxu0 0.0
    %1937 = vmatpush2.msra.mxu0 0.0
    %1938 = vmatprep.subr.mxu0 0.0
    %1939 = vmatpush2.msra.mxu0 0.0
    %1940 = vmatprep.subr.mxu0 0.0
    %1941 = vmatpush2.msra.mxu0 0.0
    %1942 = vmatprep.subr.mxu0 0.0
    %1943 = vmatpush2.msra.mxu0 0.0
    %1944 = vmatprep.subr.mxu0 0.0
    %1945 = vmatpush2.msra.mxu0 0.0
    %1946 = vmatprep.mubr.f32.mxu0 0.0
    %1947 = vmatmul.mubr.f32.gmra.mxu0 %v1880
    %v1948 = vpop.f32.mrf.mxu0
    %v1949 = vadd.f32 %v1874, %v1948
    %v1950 = vpop.f32.mrf.mxu0
    %1951 = vdwg.mxu0
    %v1952 = vadd.f32 %v1949, %v821
    %1954 = vrot.lane.b32.xlu0 %v1591, 32
    %v1955 = vpop.permute.xlu0 %1954
    %v1956 = vsel %vm176, %v1955, 0
    %1958 = vmatprep.subr.mxu0 0.0
    %1959 = vmatpush1.msra.mxu0 0.0
    %1960 = vmatprep.subr.mxu0 0.0
    %1961 = vmatpush1.msra.mxu0 0.0
    %1962 = vmatprep.subr.mxu0 0.0
    %1963 = vmatpush1.msra.mxu0 0.0
    %1964 = vmatprep.subr.mxu0 0.0
    %1965 = vmatpush1.msra.mxu0 0.0
    %1966 = vmatprep.subr.mxu0 0.0
    %1967 = vmatpush1.msra.mxu0 0.0
    %1968 = vmatprep.subr.mxu0 0.0
    %1969 = vmatpush1.msra.mxu0 0.0
    %1970 = vmatprep.subr.mxu0 0.0
    %1971 = vmatpush1.msra.mxu0 0.0
    %1972 = vmatprep.subr.mxu0 0.0
    %1973 = vmatpush1.msra.mxu0 0.0
    %1974 = vmatprep.subr.mxu0 0.0
    %1975 = vmatpush1.msra.mxu0 0.0
    %1976 = vmatprep.subr.mxu0 0.0
    %1977 = vmatpush1.msra.mxu0 0.0
    %1978 = vmatprep.subr.mxu0 0.0
    %1979 = vmatpush1.msra.mxu0 0.0
    %1980 = vmatprep.subr.mxu0 0.0
    %1981 = vmatpush1.msra.mxu0 0.0
    %1982 = vmatprep.subr.mxu0 0.0
    %1983 = vmatpush1.msra.mxu0 %v473
    %1984 = vmatprep.subr.mxu0 0.0
    %1985 = vmatpush1.msra.mxu0 %v472
    %1986 = vmatprep.subr.mxu0 0.0
    %1987 = vmatpush1.msra.mxu0 %v471
    %1988 = vmatprep.subr.mxu0 0.0
    %1989 = vmatpush1.msra.mxu0 %v470
    %1990 = vmatprep.subr.mxu0 0.0
    %1991 = vmatpush2.msra.mxu0 0.0
    %1992 = vmatprep.subr.mxu0 0.0
    %1993 = vmatpush2.msra.mxu0 0.0
    %1994 = vmatprep.subr.mxu0 0.0
    %1995 = vmatpush2.msra.mxu0 0.0
    %1996 = vmatprep.subr.mxu0 0.0
    %1997 = vmatpush2.msra.mxu0 0.0
    %1998 = vmatprep.subr.mxu0 0.0
    %1999 = vmatpush2.msra.mxu0 0.0
    %2000 = vmatprep.subr.mxu0 0.0
    %2001 = vmatpush2.msra.mxu0 0.0
    %2002 = vmatprep.subr.mxu0 0.0
    %2003 = vmatpush2.msra.mxu0 0.0
    %2004 = vmatprep.subr.mxu0 0.0
    %2005 = vmatpush2.msra.mxu0 0.0
    %2006 = vmatprep.subr.mxu0 0.0
    %2007 = vmatpush2.msra.mxu0 0.0
    %2008 = vmatprep.subr.mxu0 0.0
    %2009 = vmatpush2.msra.mxu0 0.0
    %2010 = vmatprep.subr.mxu0 0.0
    %2011 = vmatpush2.msra.mxu0 0.0
    %2012 = vmatprep.subr.mxu0 0.0
    %2013 = vmatpush2.msra.mxu0 0.0
    %2014 = vmatprep.subr.mxu0 0.0
    %2015 = vmatpush2.msra.mxu0 0.0
    %2016 = vmatprep.subr.mxu0 0.0
    %2017 = vmatpush2.msra.mxu0 0.0
    %2018 = vmatprep.subr.mxu0 0.0
    %2019 = vmatpush2.msra.mxu0 0.0
    %2020 = vmatprep.subr.mxu0 0.0
    %2021 = vmatpush2.msra.mxu0 0.0
    %2022 = vmatprep.mubr.f32.mxu0 0.0
    %2023 = vmatmul.mubr.f32.gmra.mxu0 %v1956
    %v2024 = vpop.f32.mrf.mxu0
    %v2025 = vadd.f32 0.0, %v2024
    %v2026 = vpop.f32.mrf.mxu0
    %2027 = vdwg.mxu0
    %2029 = vrot.lane.b32.xlu0 %v1801, 32
    %v2030 = vpop.permute.xlu0 %2029
    %v2031 = vsel %vm176, %v2030, 0
    %2033 = vmatprep.subr.mxu0 0.0
    %2034 = vmatpush1.msra.mxu0 0.0
    %2035 = vmatprep.subr.mxu0 0.0
    %2036 = vmatpush1.msra.mxu0 0.0
    %2037 = vmatprep.subr.mxu0 0.0
    %2038 = vmatpush1.msra.mxu0 0.0
    %2039 = vmatprep.subr.mxu0 0.0
    %2040 = vmatpush1.msra.mxu0 0.0
    %2041 = vmatprep.subr.mxu0 0.0
    %2042 = vmatpush1.msra.mxu0 0.0
    %2043 = vmatprep.subr.mxu0 0.0
    %2044 = vmatpush1.msra.mxu0 0.0
    %2045 = vmatprep.subr.mxu0 0.0
    %2046 = vmatpush1.msra.mxu0 0.0
    %2047 = vmatprep.subr.mxu0 0.0
    %2048 = vmatpush1.msra.mxu0 0.0
    %2049 = vmatprep.subr.mxu0 0.0
    %2050 = vmatpush1.msra.mxu0 0.0
    %2051 = vmatprep.subr.mxu0 0.0
    %2052 = vmatpush1.msra.mxu0 0.0
    %2053 = vmatprep.subr.mxu0 0.0
    %2054 = vmatpush1.msra.mxu0 0.0
    %2055 = vmatprep.subr.mxu0 0.0
    %2056 = vmatpush1.msra.mxu0 0.0
    %2057 = vmatprep.subr.mxu0 0.0
    %2058 = vmatpush1.msra.mxu0 %v469
    %2059 = vmatprep.subr.mxu0 0.0
    %2060 = vmatpush1.msra.mxu0 %v468
    %2061 = vmatprep.subr.mxu0 0.0
    %2062 = vmatpush1.msra.mxu0 %v467
    %2063 = vmatprep.subr.mxu0 0.0
    %2064 = vmatpush1.msra.mxu0 %v466
    %2065 = vmatprep.subr.mxu0 0.0
    %2066 = vmatpush2.msra.mxu0 0.0
    %2067 = vmatprep.subr.mxu0 0.0
    %2068 = vmatpush2.msra.mxu0 0.0
    %2069 = vmatprep.subr.mxu0 0.0
    %2070 = vmatpush2.msra.mxu0 0.0
    %2071 = vmatprep.subr.mxu0 0.0
    %2072 = vmatpush2.msra.mxu0 0.0
    %2073 = vmatprep.subr.mxu0 0.0
    %2074 = vmatpush2.msra.mxu0 0.0
    %2075 = vmatprep.subr.mxu0 0.0
    %2076 = vmatpush2.msra.mxu0 0.0
    %2077 = vmatprep.subr.mxu0 0.0
    %2078 = vmatpush2.msra.mxu0 0.0
    %2079 = vmatprep.subr.mxu0 0.0
    %2080 = vmatpush2.msra.mxu0 0.0
    %2081 = vmatprep.subr.mxu0 0.0
    %2082 = vmatpush2.msra.mxu0 0.0
    %2083 = vmatprep.subr.mxu0 0.0
    %2084 = vmatpush2.msra.mxu0 0.0
    %2085 = vmatprep.subr.mxu0 0.0
    %2086 = vmatpush2.msra.mxu0 0.0
    %2087 = vmatprep.subr.mxu0 0.0
    %2088 = vmatpush2.msra.mxu0 0.0
    %2089 = vmatprep.subr.mxu0 0.0
    %2090 = vmatpush2.msra.mxu0 0.0
    %2091 = vmatprep.subr.mxu0 0.0
    %2092 = vmatpush2.msra.mxu0 0.0
    %2093 = vmatprep.subr.mxu0 0.0
    %2094 = vmatpush2.msra.mxu0 0.0
    %2095 = vmatprep.subr.mxu0 0.0
    %2096 = vmatpush2.msra.mxu0 0.0
    %2097 = vmatprep.mubr.f32.mxu0 0.0
    %2098 = vmatmul.mubr.f32.gmra.mxu0 %v2031
    %v2099 = vpop.f32.mrf.mxu0
    %v2100 = vadd.f32 %v2025, %v2099
    %v2101 = vpop.f32.mrf.mxu0
    %2102 = vdwg.mxu0
    %v2103 = vadd.f32 %v2100, %v973
    %v2104 = vxor.u32 %v1952, 2147483648
    %v2105 = vmul.f32 %v2104, 1.442695
    %v2106 = vpow.pop %v2105
    %v2107 = vadd.f32 %v2106, 1.0
    %v2108 = vrcp.pop %v2107
    %v2109 = vmul.f32 1.0, %v2108
    %v2110 = vtanh.pop %v1952
    %v2111 = vmul.f32 %v2109, %v1561
    %2113 = vrot.lane.b32.xlu0 %v2110, 64
    %v2114 = vpop.permute.xlu0 %2113
    %v2116 = vmul.f32 %v2109, %v2114
    %2118 = vrot.lane.b32.xlu0 %v2116, 32
    %v2119 = vpop.permute.xlu0 %2118
    %v2121 = vadd.f32 %v2111, %v2119
    %v2122 = vtanh.pop %v2121
    %2124 = vrot.lane.b32.xlu0 %v2122, 64
    %v2125 = vpop.permute.xlu0 %2124
    %v2127 = vmul.f32 %v2109, %v2125
    %v2128 = vxor.u32 %v2103, 2147483648
    %v2129 = vmul.f32 %v2128, 1.442695
    %v2130 = vpow.pop %v2129
    %v2131 = vadd.f32 %v2130, 1.0
    %v2132 = vrcp.pop %v2131
    %v2133 = vmul.f32 1.0, %v2132
    %v2134 = vtanh.pop %v2103
    %v2135 = vmul.f32 %v2133, %v1585
    %2137 = vrot.lane.b32.xlu0 %v2134, 64
    %v2138 = vpop.permute.xlu0 %2137
    %v2140 = vmul.f32 %v2133, %v2138
    %2142 = vrot.lane.b32.xlu0 %v2140, 32
    %v2143 = vpop.permute.xlu0 %2142
    %v2145 = vadd.f32 %v2135, %v2143
    %v2146 = vtanh.pop %v2145
    %2148 = vrot.lane.b32.xlu0 %v2146, 64
    %v2149 = vpop.permute.xlu0 %2148
    %v2151 = vmul.f32 %v2133, %v2149
    %vm2152 = vcmp.eq.s32.totalorder %v476, 2
    %v2153 = vsel %vm2152, 1, 0
    %2154 = vset.pattern.permute.xlu0 0
    %2155 = vperm.xlu0 %2154, %v2153
    %v2156 = vpop.permute.xlu0 %2155
    %vm2157 = vcmp.eq.s32.totalorder %v2156, 1
    %v2158 = vsel %vm2157, %v2127, %v1598
    %vm2159 = vcmp.eq.s32.totalorder %v478, 2
    %v2160 = vsel %vm2159, 1, 0
    %2161 = vset.pattern.permute.xlu0 0
    %2162 = vperm.xlu0 %2161, %v2160
    %v2163 = vpop.permute.xlu0 %2162
    %vm2164 = vcmp.eq.s32.totalorder %v2163, 1
    %v2165 = vsel %vm2164, %v2151, %v1605
    %2166 = vmatprep.subr.mxu0 0.0
    %2167 = vmatpush1.msra.mxu0 0.0
    %2168 = vmatprep.subr.mxu0 0.0
    %2169 = vmatpush1.msra.mxu0 0.0
    %2170 = vmatprep.subr.mxu0 0.0
    %2171 = vmatpush1.msra.mxu0 0.0
    %2172 = vmatprep.subr.mxu0 0.0
    %2173 = vmatpush1.msra.mxu0 0.0
    %2174 = vmatprep.subr.mxu0 0.0
    %2175 = vmatpush1.msra.mxu0 0.0
    %2176 = vmatprep.subr.mxu0 0.0
    %2177 = vmatpush1.msra.mxu0 0.0
    %2178 = vmatprep.subr.mxu0 0.0
    %2179 = vmatpush1.msra.mxu0 0.0
    %2180 = vmatprep.subr.mxu0 0.0
    %2181 = vmatpush1.msra.mxu0 0.0
    %2182 = vmatprep.subr.mxu0 0.0
    %2183 = vmatpush1.msra.mxu0 0.0
    %2184 = vmatprep.subr.mxu0 0.0
    %2185 = vmatpush1.msra.mxu0 0.0
    %2186 = vmatprep.subr.mxu0 0.0
    %2187 = vmatpush1.msra.mxu0 0.0
    %2188 = vmatprep.subr.mxu0 0.0
    %2189 = vmatpush1.msra.mxu0 0.0
    %2190 = vmatprep.subr.mxu0 0.0
    %2191 = vmatpush1.msra.mxu0 %v452
    %2192 = vmatprep.subr.mxu0 0.0
    %2193 = vmatpush1.msra.mxu0 %v451
    %2194 = vmatprep.subr.mxu0 0.0
    %2195 = vmatpush1.msra.mxu0 %v450
    %2196 = vmatprep.subr.mxu0 0.0
    %2197 = vmatpush1.msra.mxu0 %v449
    %2198 = vmatprep.subr.mxu0 0.0
    %2199 = vmatpush2.msra.mxu0 0.0
    %2200 = vmatprep.subr.mxu0 0.0
    %2201 = vmatpush2.msra.mxu0 0.0
    %2202 = vmatprep.subr.mxu0 0.0
    %2203 = vmatpush2.msra.mxu0 0.0
    %2204 = vmatprep.subr.mxu0 0.0
    %2205 = vmatpush2.msra.mxu0 0.0
    %2206 = vmatprep.subr.mxu0 0.0
    %2207 = vmatpush2.msra.mxu0 0.0
    %2208 = vmatprep.subr.mxu0 0.0
    %2209 = vmatpush2.msra.mxu0 0.0
    %2210 = vmatprep.subr.mxu0 0.0
    %2211 = vmatpush2.msra.mxu0 0.0
    %2212 = vmatprep.subr.mxu0 0.0
    %2213 = vmatpush2.msra.mxu0 0.0
    %2214 = vmatprep.subr.mxu0 0.0
    %2215 = vmatpush2.msra.mxu0 0.0
    %2216 = vmatprep.subr.mxu0 0.0
    %2217 = vmatpush2.msra.mxu0 0.0
    %2218 = vmatprep.subr.mxu0 0.0
    %2219 = vmatpush2.msra.mxu0 0.0
    %2220 = vmatprep.subr.mxu0 0.0
    %2221 = vmatpush2.msra.mxu0 0.0
    %2222 = vmatprep.subr.mxu0 0.0
    %2223 = vmatpush2.msra.mxu0 0.0
    %2224 = vmatprep.subr.mxu0 0.0
    %2225 = vmatpush2.msra.mxu0 0.0
    %2226 = vmatprep.subr.mxu0 0.0
    %2227 = vmatpush2.msra.mxu0 0.0
    %2228 = vmatprep.subr.mxu0 0.0
    %2229 = vmatpush2.msra.mxu0 0.0
    %2230 = vmatprep.mubr.f32.mxu0 0.0
    %2231 = vmatmul.mubr.f32.gmra.mxu0 %v1880
    %v2232 = vpop.f32.mrf.mxu0
    %v2233 = vadd.f32 0.0, %v2232
    %v2234 = vpop.f32.mrf.mxu0
    %2235 = vdwg.mxu0
    %v2237 = vrot.slane %v2233, 4
    %v2239 = vadd.f32 %v267, %v2237
    %2240 = vmatprep.subr.mxu0 0.0
    %2241 = vmatpush1.msra.mxu0 0.0
    %2242 = vmatprep.subr.mxu0 0.0
    %2243 = vmatpush1.msra.mxu0 0.0
    %2244 = vmatprep.subr.mxu0 0.0
    %2245 = vmatpush1.msra.mxu0 0.0
    %2246 = vmatprep.subr.mxu0 0.0
    %2247 = vmatpush1.msra.mxu0 0.0
    %2248 = vmatprep.subr.mxu0 0.0
    %2249 = vmatpush1.msra.mxu0 0.0
    %2250 = vmatprep.subr.mxu0 0.0
    %2251 = vmatpush1.msra.mxu0 0.0
    %2252 = vmatprep.subr.mxu0 0.0
    %2253 = vmatpush1.msra.mxu0 0.0
    %2254 = vmatprep.subr.mxu0 0.0
    %2255 = vmatpush1.msra.mxu0 0.0
    %2256 = vmatprep.subr.mxu0 0.0
    %2257 = vmatpush1.msra.mxu0 0.0
    %2258 = vmatprep.subr.mxu0 0.0
    %2259 = vmatpush1.msra.mxu0 0.0
    %2260 = vmatprep.subr.mxu0 0.0
    %2261 = vmatpush1.msra.mxu0 0.0
    %2262 = vmatprep.subr.mxu0 0.0
    %2263 = vmatpush1.msra.mxu0 0.0
    %2264 = vmatprep.subr.mxu0 0.0
    %2265 = vmatpush1.msra.mxu0 %v465
    %2266 = vmatprep.subr.mxu0 0.0
    %2267 = vmatpush1.msra.mxu0 %v464
    %2268 = vmatprep.subr.mxu0 0.0
    %2269 = vmatpush1.msra.mxu0 %v463
    %2270 = vmatprep.subr.mxu0 0.0
    %2271 = vmatpush1.msra.mxu0 %v462
    %2272 = vmatprep.subr.mxu0 0.0
    %2273 = vmatpush2.msra.mxu0 0.0
    %2274 = vmatprep.subr.mxu0 0.0
    %2275 = vmatpush2.msra.mxu0 0.0
    %2276 = vmatprep.subr.mxu0 0.0
    %2277 = vmatpush2.msra.mxu0 0.0
    %2278 = vmatprep.subr.mxu0 0.0
    %2279 = vmatpush2.msra.mxu0 0.0
    %2280 = vmatprep.subr.mxu0 0.0
    %2281 = vmatpush2.msra.mxu0 0.0
    %2282 = vmatprep.subr.mxu0 0.0
    %2283 = vmatpush2.msra.mxu0 0.0
    %2284 = vmatprep.subr.mxu0 0.0
    %2285 = vmatpush2.msra.mxu0 0.0
    %2286 = vmatprep.subr.mxu0 0.0
    %2287 = vmatpush2.msra.mxu0 0.0
    %2288 = vmatprep.subr.mxu0 0.0
    %2289 = vmatpush2.msra.mxu0 0.0
    %2290 = vmatprep.subr.mxu0 0.0
    %2291 = vmatpush2.msra.mxu0 0.0
    %2292 = vmatprep.subr.mxu0 0.0
    %2293 = vmatpush2.msra.mxu0 0.0
    %2294 = vmatprep.subr.mxu0 0.0
    %2295 = vmatpush2.msra.mxu0 0.0
    %2296 = vmatprep.subr.mxu0 0.0
    %2297 = vmatpush2.msra.mxu0 0.0
    %2298 = vmatprep.subr.mxu0 0.0
    %2299 = vmatpush2.msra.mxu0 0.0
    %2300 = vmatprep.subr.mxu0 0.0
    %2301 = vmatpush2.msra.mxu0 0.0
    %2302 = vmatprep.subr.mxu0 0.0
    %2303 = vmatpush2.msra.mxu0 0.0
    %2304 = vmatprep.mubr.f32.mxu0 0.0
    %2305 = vmatmul.mubr.f32.gmra.mxu0 %v2031
    %v2306 = vpop.f32.mrf.mxu0
    %v2307 = vadd.f32 0.0, %v2306
    %v2308 = vpop.f32.mrf.mxu0
    %2309 = vdwg.mxu0
    %v2311 = vrot.slane %v2307, 4
    %v2313 = vadd.f32 %v426, %v2311
    %v2314 = vxor.u32 %v2239, 2147483648
    %v2315 = vmul.f32 %v2314, 1.442695
    %v2316 = vpow.pop %v2315
    %v2317 = vadd.f32 %v2316, 1.0
    %v2318 = vrcp.pop %v2317
    %v2319 = vmul.f32 1.0, %v2318
    %v2320 = vtanh.pop %v2239
    %v2322 = vrot.slane %v1768, 4
    %v2324 = vmul.f32 %v2319, %v2322
    %2326 = vrot.lane.b32.xlu0 %v2320, 64
    %v2327 = vpop.permute.xlu0 %2326
    %v2329 = vmul.f32 %v2319, %v2327
    %2331 = vrot.lane.b32.xlu0 %v2329, 32
    %v2332 = vpop.permute.xlu0 %2331
    %v2334 = vadd.f32 %v2324, %v2332
    %v2335 = vtanh.pop %v2334
    %2337 = vrot.lane.b32.xlu0 %v2335, 64
    %v2338 = vpop.permute.xlu0 %2337
    %v2340 = vmul.f32 %v2319, %v2338
    %v2341 = vxor.u32 %v2313, 2147483648
    %v2342 = vmul.f32 %v2341, 1.442695
    %v2343 = vpow.pop %v2342
    %v2344 = vadd.f32 %v2343, 1.0
    %v2345 = vrcp.pop %v2344
    %v2346 = vmul.f32 1.0, %v2345
    %v2347 = vtanh.pop %v2313
    %v2349 = vrot.slane %v1795, 4
    %v2351 = vmul.f32 %v2346, %v2349
    %2353 = vrot.lane.b32.xlu0 %v2347, 64
    %v2354 = vpop.permute.xlu0 %2353
    %v2356 = vmul.f32 %v2346, %v2354
    %2358 = vrot.lane.b32.xlu0 %v2356, 32
    %v2359 = vpop.permute.xlu0 %2358
    %v2361 = vadd.f32 %v2351, %v2359
    %v2362 = vtanh.pop %v2361
    %2364 = vrot.lane.b32.xlu0 %v2362, 64
    %v2365 = vpop.permute.xlu0 %2364
    %v2367 = vmul.f32 %v2346, %v2365
    %2369 = vrot.lane.b32.xlu0 %v2127, 32
    %v2370 = vpop.permute.xlu0 %2369
    %v2371 = vsel %vm176, %v2370, 0
    %2373 = vmatprep.subr.mxu0 0.0
    %2374 = vmatpush1.msra.mxu0 0.0
    %2375 = vmatprep.subr.mxu0 0.0
    %2376 = vmatpush1.msra.mxu0 0.0
    %2377 = vmatprep.subr.mxu0 0.0
    %2378 = vmatpush1.msra.mxu0 0.0
    %2379 = vmatprep.subr.mxu0 0.0
    %2380 = vmatpush1.msra.mxu0 0.0
    %2381 = vmatprep.subr.mxu0 0.0
    %2382 = vmatpush1.msra.mxu0 0.0
    %2383 = vmatprep.subr.mxu0 0.0
    %2384 = vmatpush1.msra.mxu0 0.0
    %2385 = vmatprep.subr.mxu0 0.0
    %2386 = vmatpush1.msra.mxu0 0.0
    %2387 = vmatprep.subr.mxu0 0.0
    %2388 = vmatpush1.msra.mxu0 0.0
    %2389 = vmatprep.subr.mxu0 0.0
    %2390 = vmatpush1.msra.mxu0 0.0
    %2391 = vmatprep.subr.mxu0 0.0
    %2392 = vmatpush1.msra.mxu0 0.0
    %2393 = vmatprep.subr.mxu0 0.0
    %2394 = vmatpush1.msra.mxu0 0.0
    %2395 = vmatprep.subr.mxu0 0.0
    %2396 = vmatpush1.msra.mxu0 0.0
    %2397 = vmatprep.subr.mxu0 0.0
    %2398 = vmatpush1.msra.mxu0 %v460
    %2399 = vmatprep.subr.mxu0 0.0
    %2400 = vmatpush1.msra.mxu0 %v459
    %2401 = vmatprep.subr.mxu0 0.0
    %2402 = vmatpush1.msra.mxu0 %v458
    %2403 = vmatprep.subr.mxu0 0.0
    %2404 = vmatpush1.msra.mxu0 %v457
    %2405 = vmatprep.subr.mxu0 0.0
    %2406 = vmatpush2.msra.mxu0 0.0
    %2407 = vmatprep.subr.mxu0 0.0
    %2408 = vmatpush2.msra.mxu0 0.0
    %2409 = vmatprep.subr.mxu0 0.0
    %2410 = vmatpush2.msra.mxu0 0.0
    %2411 = vmatprep.subr.mxu0 0.0
    %2412 = vmatpush2.msra.mxu0 0.0
    %2413 = vmatprep.subr.mxu0 0.0
    %2414 = vmatpush2.msra.mxu0 0.0
    %2415 = vmatprep.subr.mxu0 0.0
    %2416 = vmatpush2.msra.mxu0 0.0
    %2417 = vmatprep.subr.mxu0 0.0
    %2418 = vmatpush2.msra.mxu0 0.0
    %2419 = vmatprep.subr.mxu0 0.0
    %2420 = vmatpush2.msra.mxu0 0.0
    %2421 = vmatprep.subr.mxu0 0.0
    %2422 = vmatpush2.msra.mxu0 0.0
    %2423 = vmatprep.subr.mxu0 0.0
    %2424 = vmatpush2.msra.mxu0 0.0
    %2425 = vmatprep.subr.mxu0 0.0
    %2426 = vmatpush2.msra.mxu0 0.0
    %2427 = vmatprep.subr.mxu0 0.0
    %2428 = vmatpush2.msra.mxu0 0.0
    %2429 = vmatprep.subr.mxu0 0.0
    %2430 = vmatpush2.msra.mxu0 0.0
    %2431 = vmatprep.subr.mxu0 0.0
    %2432 = vmatpush2.msra.mxu0 0.0
    %2433 = vmatprep.subr.mxu0 0.0
    %2434 = vmatpush2.msra.mxu0 0.0
    %2435 = vmatprep.subr.mxu0 0.0
    %2436 = vmatpush2.msra.mxu0 0.0
    %2437 = vmatprep.mubr.f32.mxu0 0.0
    %2438 = vmatmul.mubr.f32.gmra.mxu0 %v2371
    %v2439 = vpop.f32.mrf.mxu0
    %v2440 = vadd.f32 0.0, %v2439
    %v2441 = vpop.f32.mrf.mxu0
    %2442 = vdwg.mxu0
    %v2444 = vrot.slane %v2340, 4
    %2445 = vrot.lane.b32.xlu0 %v2444, 32
    %v2446 = vpop.permute.xlu0 %2445
    %v2447 = vsel %vm176, %v2446, 0
    %2449 = vmatprep.subr.mxu0 0.0
    %2450 = vmatpush1.msra.mxu0 0.0
    %2451 = vmatprep.subr.mxu0 0.0
    %2452 = vmatpush1.msra.mxu0 0.0
    %2453 = vmatprep.subr.mxu0 0.0
    %2454 = vmatpush1.msra.mxu0 0.0
    %2455 = vmatprep.subr.mxu0 0.0
    %2456 = vmatpush1.msra.mxu0 0.0
    %2457 = vmatprep.subr.mxu0 0.0
    %2458 = vmatpush1.msra.mxu0 0.0
    %2459 = vmatprep.subr.mxu0 0.0
    %2460 = vmatpush1.msra.mxu0 0.0
    %2461 = vmatprep.subr.mxu0 0.0
    %2462 = vmatpush1.msra.mxu0 0.0
    %2463 = vmatprep.subr.mxu0 0.0
    %2464 = vmatpush1.msra.mxu0 0.0
    %2465 = vmatprep.subr.mxu0 0.0
    %2466 = vmatpush1.msra.mxu0 0.0
    %2467 = vmatprep.subr.mxu0 0.0
    %2468 = vmatpush1.msra.mxu0 0.0
    %2469 = vmatprep.subr.mxu0 0.0
    %2470 = vmatpush1.msra.mxu0 0.0
    %2471 = vmatprep.subr.mxu0 0.0
    %2472 = vmatpush1.msra.mxu0 0.0
    %2473 = vmatprep.subr.mxu0 0.0
    %2474 = vmatpush1.msra.mxu0 %v456
    %2475 = vmatprep.subr.mxu0 0.0
    %2476 = vmatpush1.msra.mxu0 %v455
    %2477 = vmatprep.subr.mxu0 0.0
    %2478 = vmatpush1.msra.mxu0 %v454
    %2479 = vmatprep.subr.mxu0 0.0
    %2480 = vmatpush1.msra.mxu0 %v453
    %2481 = vmatprep.subr.mxu0 0.0
    %2482 = vmatpush2.msra.mxu0 0.0
    %2483 = vmatprep.subr.mxu0 0.0
    %2484 = vmatpush2.msra.mxu0 0.0
    %2485 = vmatprep.subr.mxu0 0.0
    %2486 = vmatpush2.msra.mxu0 0.0
    %2487 = vmatprep.subr.mxu0 0.0
    %2488 = vmatpush2.msra.mxu0 0.0
    %2489 = vmatprep.subr.mxu0 0.0
    %2490 = vmatpush2.msra.mxu0 0.0
    %2491 = vmatprep.subr.mxu0 0.0
    %2492 = vmatpush2.msra.mxu0 0.0
    %2493 = vmatprep.subr.mxu0 0.0
    %2494 = vmatpush2.msra.mxu0 0.0
    %2495 = vmatprep.subr.mxu0 0.0
    %2496 = vmatpush2.msra.mxu0 0.0
    %2497 = vmatprep.subr.mxu0 0.0
    %2498 = vmatpush2.msra.mxu0 0.0
    %2499 = vmatprep.subr.mxu0 0.0
    %2500 = vmatpush2.msra.mxu0 0.0
    %2501 = vmatprep.subr.mxu0 0.0
    %2502 = vmatpush2.msra.mxu0 0.0
    %2503 = vmatprep.subr.mxu0 0.0
    %2504 = vmatpush2.msra.mxu0 0.0
    %2505 = vmatprep.subr.mxu0 0.0
    %2506 = vmatpush2.msra.mxu0 0.0
    %2507 = vmatprep.subr.mxu0 0.0
    %2508 = vmatpush2.msra.mxu0 0.0
    %2509 = vmatprep.subr.mxu0 0.0
    %2510 = vmatpush2.msra.mxu0 0.0
    %2511 = vmatprep.subr.mxu0 0.0
    %2512 = vmatpush2.msra.mxu0 0.0
    %2513 = vmatprep.mubr.f32.mxu0 0.0
    %2514 = vmatmul.mubr.f32.gmra.mxu0 %v2447
    %v2515 = vpop.f32.mrf.mxu0
    %v2516 = vadd.f32 %v2440, %v2515
    %v2517 = vpop.f32.mrf.mxu0
    %2518 = vdwg.mxu0
    %v2519 = vadd.f32 %v2516, %v821
    %2521 = vrot.lane.b32.xlu0 %v2151, 32
    %v2522 = vpop.permute.xlu0 %2521
    %v2523 = vsel %vm176, %v2522, 0
    %2525 = vmatprep.subr.mxu0 0.0
    %2526 = vmatpush1.msra.mxu0 0.0
    %2527 = vmatprep.subr.mxu0 0.0
    %2528 = vmatpush1.msra.mxu0 0.0
    %2529 = vmatprep.subr.mxu0 0.0
    %2530 = vmatpush1.msra.mxu0 0.0
    %2531 = vmatprep.subr.mxu0 0.0
    %2532 = vmatpush1.msra.mxu0 0.0
    %2533 = vmatprep.subr.mxu0 0.0
    %2534 = vmatpush1.msra.mxu0 0.0
    %2535 = vmatprep.subr.mxu0 0.0
    %2536 = vmatpush1.msra.mxu0 0.0
    %2537 = vmatprep.subr.mxu0 0.0
    %2538 = vmatpush1.msra.mxu0 0.0
    %2539 = vmatprep.subr.mxu0 0.0
    %2540 = vmatpush1.msra.mxu0 0.0
    %2541 = vmatprep.subr.mxu0 0.0
    %2542 = vmatpush1.msra.mxu0 0.0
    %2543 = vmatprep.subr.mxu0 0.0
    %2544 = vmatpush1.msra.mxu0 0.0
    %2545 = vmatprep.subr.mxu0 0.0
    %2546 = vmatpush1.msra.mxu0 0.0
    %2547 = vmatprep.subr.mxu0 0.0
    %2548 = vmatpush1.msra.mxu0 0.0
    %2549 = vmatprep.subr.mxu0 0.0
    %2550 = vmatpush1.msra.mxu0 %v473
    %2551 = vmatprep.subr.mxu0 0.0
    %2552 = vmatpush1.msra.mxu0 %v472
    %2553 = vmatprep.subr.mxu0 0.0
    %2554 = vmatpush1.msra.mxu0 %v471
    %2555 = vmatprep.subr.mxu0 0.0
    %2556 = vmatpush1.msra.mxu0 %v470
    %2557 = vmatprep.subr.mxu0 0.0
    %2558 = vmatpush2.msra.mxu0 0.0
    %2559 = vmatprep.subr.mxu0 0.0
    %2560 = vmatpush2.msra.mxu0 0.0
    %2561 = vmatprep.subr.mxu0 0.0
    %2562 = vmatpush2.msra.mxu0 0.0
    %2563 = vmatprep.subr.mxu0 0.0
    %2564 = vmatpush2.msra.mxu0 0.0
    %2565 = vmatprep.subr.mxu0 0.0
    %2566 = vmatpush2.msra.mxu0 0.0
    %2567 = vmatprep.subr.mxu0 0.0
    %2568 = vmatpush2.msra.mxu0 0.0
    %2569 = vmatprep.subr.mxu0 0.0
    %2570 = vmatpush2.msra.mxu0 0.0
    %2571 = vmatprep.subr.mxu0 0.0
    %2572 = vmatpush2.msra.mxu0 0.0
    %2573 = vmatprep.subr.mxu0 0.0
    %2574 = vmatpush2.msra.mxu0 0.0
    %2575 = vmatprep.subr.mxu0 0.0
    %2576 = vmatpush2.msra.mxu0 0.0
    %2577 = vmatprep.subr.mxu0 0.0
    %2578 = vmatpush2.msra.mxu0 0.0
    %2579 = vmatprep.subr.mxu0 0.0
    %2580 = vmatpush2.msra.mxu0 0.0
    %2581 = vmatprep.subr.mxu0 0.0
    %2582 = vmatpush2.msra.mxu0 0.0
    %2583 = vmatprep.subr.mxu0 0.0
    %2584 = vmatpush2.msra.mxu0 0.0
    %2585 = vmatprep.subr.mxu0 0.0
    %2586 = vmatpush2.msra.mxu0 0.0
    %2587 = vmatprep.subr.mxu0 0.0
    %2588 = vmatpush2.msra.mxu0 0.0
    %2589 = vmatprep.mubr.f32.mxu0 0.0
    %2590 = vmatmul.mubr.f32.gmra.mxu0 %v2523
    %v2591 = vpop.f32.mrf.mxu0
    %v2592 = vadd.f32 0.0, %v2591
    %v2593 = vpop.f32.mrf.mxu0
    %2594 = vdwg.mxu0
    %v2596 = vrot.slane %v2367, 4
    %2597 = vrot.lane.b32.xlu0 %v2596, 32
    %v2598 = vpop.permute.xlu0 %2597
    %v2599 = vsel %vm176, %v2598, 0
    %2601 = vmatprep.subr.mxu0 0.0
    %2602 = vmatpush1.msra.mxu0 0.0
    %2603 = vmatprep.subr.mxu0 0.0
    %2604 = vmatpush1.msra.mxu0 0.0
    %2605 = vmatprep.subr.mxu0 0.0
    %2606 = vmatpush1.msra.mxu0 0.0
    %2607 = vmatprep.subr.mxu0 0.0
    %2608 = vmatpush1.msra.mxu0 0.0
    %2609 = vmatprep.subr.mxu0 0.0
    %2610 = vmatpush1.msra.mxu0 0.0
    %2611 = vmatprep.subr.mxu0 0.0
    %2612 = vmatpush1.msra.mxu0 0.0
    %2613 = vmatprep.subr.mxu0 0.0
    %2614 = vmatpush1.msra.mxu0 0.0
    %2615 = vmatprep.subr.mxu0 0.0
    %2616 = vmatpush1.msra.mxu0 0.0
    %2617 = vmatprep.subr.mxu0 0.0
    %2618 = vmatpush1.msra.mxu0 0.0
    %2619 = vmatprep.subr.mxu0 0.0
    %2620 = vmatpush1.msra.mxu0 0.0
    %2621 = vmatprep.subr.mxu0 0.0
    %2622 = vmatpush1.msra.mxu0 0.0
    %2623 = vmatprep.subr.mxu0 0.0
    %2624 = vmatpush1.msra.mxu0 0.0
    %2625 = vmatprep.subr.mxu0 0.0
    %2626 = vmatpush1.msra.mxu0 %v469
    %2627 = vmatprep.subr.mxu0 0.0
    %2628 = vmatpush1.msra.mxu0 %v468
    %2629 = vmatprep.subr.mxu0 0.0
    %2630 = vmatpush1.msra.mxu0 %v467
    %2631 = vmatprep.subr.mxu0 0.0
    %2632 = vmatpush1.msra.mxu0 %v466
    %2633 = vmatprep.subr.mxu0 0.0
    %2634 = vmatpush2.msra.mxu0 0.0
    %2635 = vmatprep.subr.mxu0 0.0
    %2636 = vmatpush2.msra.mxu0 0.0
    %2637 = vmatprep.subr.mxu0 0.0
    %2638 = vmatpush2.msra.mxu0 0.0
    %2639 = vmatprep.subr.mxu0 0.0
    %2640 = vmatpush2.msra.mxu0 0.0
    %2641 = vmatprep.subr.mxu0 0.0
    %2642 = vmatpush2.msra.mxu0 0.0
    %2643 = vmatprep.subr.mxu0 0.0
    %2644 = vmatpush2.msra.mxu0 0.0
    %2645 = vmatprep.subr.mxu0 0.0
    %2646 = vmatpush2.msra.mxu0 0.0
    %2647 = vmatprep.subr.mxu0 0.0
    %2648 = vmatpush2.msra.mxu0 0.0
    %2649 = vmatprep.subr.mxu0 0.0
    %2650 = vmatpush2.msra.mxu0 0.0
    %2651 = vmatprep.subr.mxu0 0.0
    %2652 = vmatpush2.msra.mxu0 0.0
    %2653 = vmatprep.subr.mxu0 0.0
    %2654 = vmatpush2.msra.mxu0 0.0
    %2655 = vmatprep.subr.mxu0 0.0
    %2656 = vmatpush2.msra.mxu0 0.0
    %2657 = vmatprep.subr.mxu0 0.0
    %2658 = vmatpush2.msra.mxu0 0.0
    %2659 = vmatprep.subr.mxu0 0.0
    %2660 = vmatpush2.msra.mxu0 0.0
    %2661 = vmatprep.subr.mxu0 0.0
    %2662 = vmatpush2.msra.mxu0 0.0
    %2663 = vmatprep.subr.mxu0 0.0
    %2664 = vmatpush2.msra.mxu0 0.0
    %2665 = vmatprep.mubr.f32.mxu0 0.0
    %2666 = vmatmul.mubr.f32.gmra.mxu0 %v2599
    %v2667 = vpop.f32.mrf.mxu0
    %v2668 = vadd.f32 %v2592, %v2667
    %v2669 = vpop.f32.mrf.mxu0
    %2670 = vdwg.mxu0
    %v2671 = vadd.f32 %v2668, %v973
    %v2672 = vxor.u32 %v2519, 2147483648
    %v2673 = vmul.f32 %v2672, 1.442695
    %v2674 = vpow.pop %v2673
    %v2675 = vadd.f32 %v2674, 1.0
    %v2676 = vrcp.pop %v2675
    %v2677 = vmul.f32 1.0, %v2676
    %v2678 = vtanh.pop %v2519
    %v2679 = vmul.f32 %v2677, %v2121
    %2681 = vrot.lane.b32.xlu0 %v2678, 64
    %v2682 = vpop.permute.xlu0 %2681
    %v2684 = vmul.f32 %v2677, %v2682
    %2686 = vrot.lane.b32.xlu0 %v2684, 32
    %v2687 = vpop.permute.xlu0 %2686
    %v2689 = vadd.f32 %v2679, %v2687
    %v2690 = vtanh.pop %v2689
    %2692 = vrot.lane.b32.xlu0 %v2690, 64
    %v2693 = vpop.permute.xlu0 %2692
    %v2695 = vmul.f32 %v2677, %v2693
    %v2696 = vxor.u32 %v2671, 2147483648
    %v2697 = vmul.f32 %v2696, 1.442695
    %v2698 = vpow.pop %v2697
    %v2699 = vadd.f32 %v2698, 1.0
    %v2700 = vrcp.pop %v2699
    %v2701 = vmul.f32 1.0, %v2700
    %v2702 = vtanh.pop %v2671
    %v2703 = vmul.f32 %v2701, %v2145
    %2705 = vrot.lane.b32.xlu0 %v2702, 64
    %v2706 = vpop.permute.xlu0 %2705
    %v2708 = vmul.f32 %v2701, %v2706
    %2710 = vrot.lane.b32.xlu0 %v2708, 32
    %v2711 = vpop.permute.xlu0 %2710
    %v2713 = vadd.f32 %v2703, %v2711
    %v2714 = vtanh.pop %v2713
    %2716 = vrot.lane.b32.xlu0 %v2714, 64
    %v2717 = vpop.permute.xlu0 %2716
    %v2719 = vmul.f32 %v2701, %v2717
    %vm2720 = vcmp.eq.s32.totalorder %v476, 3
    %v2721 = vsel %vm2720, 1, 0
    %2722 = vset.pattern.permute.xlu0 0
    %2723 = vperm.xlu0 %2722, %v2721
    %v2724 = vpop.permute.xlu0 %2723
    %vm2725 = vcmp.eq.s32.totalorder %v2724, 1
    %v2726 = vsel %vm2725, %v2695, %v2158
    %vm2727 = vcmp.eq.s32.totalorder %v478, 3
    %v2728 = vsel %vm2727, 1, 0
    %2729 = vset.pattern.permute.xlu0 0
    %2730 = vperm.xlu0 %2729, %v2728
    %v2731 = vpop.permute.xlu0 %2730
    %vm2732 = vcmp.eq.s32.totalorder %v2731, 1
    %v2733 = vsel %vm2732, %v2719, %v2165
    %2734 = vmatprep.subr.mxu0 0.0
    %2735 = vmatpush1.msra.mxu0 0.0
    %2736 = vmatprep.subr.mxu0 0.0
    %2737 = vmatpush1.msra.mxu0 0.0
    %2738 = vmatprep.subr.mxu0 0.0
    %2739 = vmatpush1.msra.mxu0 0.0
    %2740 = vmatprep.subr.mxu0 0.0
    %2741 = vmatpush1.msra.mxu0 0.0
    %2742 = vmatprep.subr.mxu0 0.0
    %2743 = vmatpush1.msra.mxu0 0.0
    %2744 = vmatprep.subr.mxu0 0.0
    %2745 = vmatpush1.msra.mxu0 0.0
    %2746 = vmatprep.subr.mxu0 0.0
    %2747 = vmatpush1.msra.mxu0 0.0
    %2748 = vmatprep.subr.mxu0 0.0
    %2749 = vmatpush1.msra.mxu0 0.0
    %2750 = vmatprep.subr.mxu0 0.0
    %2751 = vmatpush1.msra.mxu0 0.0
    %2752 = vmatprep.subr.mxu0 0.0
    %2753 = vmatpush1.msra.mxu0 0.0
    %2754 = vmatprep.subr.mxu0 0.0
    %2755 = vmatpush1.msra.mxu0 0.0
    %2756 = vmatprep.subr.mxu0 0.0
    %2757 = vmatpush1.msra.mxu0 0.0
    %2758 = vmatprep.subr.mxu0 0.0
    %2759 = vmatpush1.msra.mxu0 %v452
    %2760 = vmatprep.subr.mxu0 0.0
    %2761 = vmatpush1.msra.mxu0 %v451
    %2762 = vmatprep.subr.mxu0 0.0
    %2763 = vmatpush1.msra.mxu0 %v450
    %2764 = vmatprep.subr.mxu0 0.0
    %2765 = vmatpush1.msra.mxu0 %v449
    %2766 = vmatprep.subr.mxu0 0.0
    %2767 = vmatpush2.msra.mxu0 0.0
    %2768 = vmatprep.subr.mxu0 0.0
    %2769 = vmatpush2.msra.mxu0 0.0
    %2770 = vmatprep.subr.mxu0 0.0
    %2771 = vmatpush2.msra.mxu0 0.0
    %2772 = vmatprep.subr.mxu0 0.0
    %2773 = vmatpush2.msra.mxu0 0.0
    %2774 = vmatprep.subr.mxu0 0.0
    %2775 = vmatpush2.msra.mxu0 0.0
    %2776 = vmatprep.subr.mxu0 0.0
    %2777 = vmatpush2.msra.mxu0 0.0
    %2778 = vmatprep.subr.mxu0 0.0
    %2779 = vmatpush2.msra.mxu0 0.0
    %2780 = vmatprep.subr.mxu0 0.0
    %2781 = vmatpush2.msra.mxu0 0.0
    %2782 = vmatprep.subr.mxu0 0.0
    %2783 = vmatpush2.msra.mxu0 0.0
    %2784 = vmatprep.subr.mxu0 0.0
    %2785 = vmatpush2.msra.mxu0 0.0
    %2786 = vmatprep.subr.mxu0 0.0
    %2787 = vmatpush2.msra.mxu0 0.0
    %2788 = vmatprep.subr.mxu0 0.0
    %2789 = vmatpush2.msra.mxu0 0.0
    %2790 = vmatprep.subr.mxu0 0.0
    %2791 = vmatpush2.msra.mxu0 0.0
    %2792 = vmatprep.subr.mxu0 0.0
    %2793 = vmatpush2.msra.mxu0 0.0
    %2794 = vmatprep.subr.mxu0 0.0
    %2795 = vmatpush2.msra.mxu0 0.0
    %2796 = vmatprep.subr.mxu0 0.0
    %2797 = vmatpush2.msra.mxu0 0.0
    %2798 = vmatprep.mubr.f32.mxu0 0.0
    %2799 = vmatmul.mubr.f32.gmra.mxu0 %v2447
    %v2800 = vpop.f32.mrf.mxu0
    %v2801 = vadd.f32 0.0, %v2800
    %v2802 = vpop.f32.mrf.mxu0
    %2803 = vdwg.mxu0
    %v2804 = vadd.f32 %v272, %v2801
    %2805 = vmatprep.subr.mxu0 0.0
    %2806 = vmatpush1.msra.mxu0 0.0
    %2807 = vmatprep.subr.mxu0 0.0
    %2808 = vmatpush1.msra.mxu0 0.0
    %2809 = vmatprep.subr.mxu0 0.0
    %2810 = vmatpush1.msra.mxu0 0.0
    %2811 = vmatprep.subr.mxu0 0.0
    %2812 = vmatpush1.msra.mxu0 0.0
    %2813 = vmatprep.subr.mxu0 0.0
    %2814 = vmatpush1.msra.mxu0 0.0
    %2815 = vmatprep.subr.mxu0 0.0
    %2816 = vmatpush1.msra.mxu0 0.0
    %2817 = vmatprep.subr.mxu0 0.0
    %2818 = vmatpush1.msra.mxu0 0.0
    %2819 = vmatprep.subr.mxu0 0.0
    %2820 = vmatpush1.msra.mxu0 0.0
    %2821 = vmatprep.subr.mxu0 0.0
    %2822 = vmatpush1.msra.mxu0 0.0
    %2823 = vmatprep.subr.mxu0 0.0
    %2824 = vmatpush1.msra.mxu0 0.0
    %2825 = vmatprep.subr.mxu0 0.0
    %2826 = vmatpush1.msra.mxu0 0.0
    %2827 = vmatprep.subr.mxu0 0.0
    %2828 = vmatpush1.msra.mxu0 0.0
    %2829 = vmatprep.subr.mxu0 0.0
    %2830 = vmatpush1.msra.mxu0 %v465
    %2831 = vmatprep.subr.mxu0 0.0
    %2832 = vmatpush1.msra.mxu0 %v464
    %2833 = vmatprep.subr.mxu0 0.0
    %2834 = vmatpush1.msra.mxu0 %v463
    %2835 = vmatprep.subr.mxu0 0.0
    %2836 = vmatpush1.msra.mxu0 %v462
    %2837 = vmatprep.subr.mxu0 0.0
    %2838 = vmatpush2.msra.mxu0 0.0
    %2839 = vmatprep.subr.mxu0 0.0
    %2840 = vmatpush2.msra.mxu0 0.0
    %2841 = vmatprep.subr.mxu0 0.0
    %2842 = vmatpush2.msra.mxu0 0.0
    %2843 = vmatprep.subr.mxu0 0.0
    %2844 = vmatpush2.msra.mxu0 0.0
    %2845 = vmatprep.subr.mxu0 0.0
    %2846 = vmatpush2.msra.mxu0 0.0
    %2847 = vmatprep.subr.mxu0 0.0
    %2848 = vmatpush2.msra.mxu0 0.0
    %2849 = vmatprep.subr.mxu0 0.0
    %2850 = vmatpush2.msra.mxu0 0.0
    %2851 = vmatprep.subr.mxu0 0.0
    %2852 = vmatpush2.msra.mxu0 0.0
    %2853 = vmatprep.subr.mxu0 0.0
    %2854 = vmatpush2.msra.mxu0 0.0
    %2855 = vmatprep.subr.mxu0 0.0
    %2856 = vmatpush2.msra.mxu0 0.0
    %2857 = vmatprep.subr.mxu0 0.0
    %2858 = vmatpush2.msra.mxu0 0.0
    %2859 = vmatprep.subr.mxu0 0.0
    %2860 = vmatpush2.msra.mxu0 0.0
    %2861 = vmatprep.subr.mxu0 0.0
    %2862 = vmatpush2.msra.mxu0 0.0
    %2863 = vmatprep.subr.mxu0 0.0
    %2864 = vmatpush2.msra.mxu0 0.0
    %2865 = vmatprep.subr.mxu0 0.0
    %2866 = vmatpush2.msra.mxu0 0.0
    %2867 = vmatprep.subr.mxu0 0.0
    %2868 = vmatpush2.msra.mxu0 0.0
    %2869 = vmatprep.mubr.f32.mxu0 0.0
    %2870 = vmatmul.mubr.f32.gmra.mxu0 %v2599
    %v2871 = vpop.f32.mrf.mxu0
    %v2872 = vadd.f32 0.0, %v2871
    %v2873 = vpop.f32.mrf.mxu0
    %2874 = vdwg.mxu0
    %v2875 = vadd.f32 %v431, %v2872
    %v2876 = vxor.u32 %v2804, 2147483648
    %v2877 = vmul.f32 %v2876, 1.442695
    %v2878 = vpow.pop %v2877
    %v2879 = vadd.f32 %v2878, 1.0
    %v2880 = vrcp.pop %v2879
    %v2881 = vmul.f32 1.0, %v2880
    %v2882 = vtanh.pop %v2804
    %v2884 = vrot.slane %v2334, 4
    %v2886 = vmul.f32 %v2881, %v2884
    %2888 = vrot.lane.b32.xlu0 %v2882, 64
    %v2889 = vpop.permute.xlu0 %2888
    %v2891 = vmul.f32 %v2881, %v2889
    %2893 = vrot.lane.b32.xlu0 %v2891, 32
    %v2894 = vpop.permute.xlu0 %2893
    %v2896 = vadd.f32 %v2886, %v2894
    %v2897 = vtanh.pop %v2896
    %2899 = vrot.lane.b32.xlu0 %v2897, 64
    %v2900 = vpop.permute.xlu0 %2899
    %v2902 = vmul.f32 %v2881, %v2900
    %v2903 = vxor.u32 %v2875, 2147483648
    %v2904 = vmul.f32 %v2903, 1.442695
    %v2905 = vpow.pop %v2904
    %v2906 = vadd.f32 %v2905, 1.0
    %v2907 = vrcp.pop %v2906
    %v2908 = vmul.f32 1.0, %v2907
    %v2909 = vtanh.pop %v2875
    %v2911 = vrot.slane %v2361, 4
    %v2913 = vmul.f32 %v2908, %v2911
    %2915 = vrot.lane.b32.xlu0 %v2909, 64
    %v2916 = vpop.permute.xlu0 %2915
    %v2918 = vmul.f32 %v2908, %v2916
    %2920 = vrot.lane.b32.xlu0 %v2918, 32
    %v2921 = vpop.permute.xlu0 %2920
    %v2923 = vadd.f32 %v2913, %v2921
    %v2924 = vtanh.pop %v2923
    %2926 = vrot.lane.b32.xlu0 %v2924, 64
    %v2927 = vpop.permute.xlu0 %2926
    %v2929 = vmul.f32 %v2908, %v2927
    %2931 = vrot.lane.b32.xlu0 %v2695, 32
    %v2932 = vpop.permute.xlu0 %2931
    %v2933 = vsel %vm176, %v2932, 0
    %2935 = vmatprep.subr.mxu0 0.0
    %2936 = vmatpush1.msra.mxu0 0.0
    %2937 = vmatprep.subr.mxu0 0.0
    %2938 = vmatpush1.msra.mxu0 0.0
    %2939 = vmatprep.subr.mxu0 0.0
    %2940 = vmatpush1.msra.mxu0 0.0
    %2941 = vmatprep.subr.mxu0 0.0
    %2942 = vmatpush1.msra.mxu0 0.0
    %2943 = vmatprep.subr.mxu0 0.0
    %2944 = vmatpush1.msra.mxu0 0.0
    %2945 = vmatprep.subr.mxu0 0.0
    %2946 = vmatpush1.msra.mxu0 0.0
    %2947 = vmatprep.subr.mxu0 0.0
    %2948 = vmatpush1.msra.mxu0 0.0
    %2949 = vmatprep.subr.mxu0 0.0
    %2950 = vmatpush1.msra.mxu0 0.0
    %2951 = vmatprep.subr.mxu0 0.0
    %2952 = vmatpush1.msra.mxu0 0.0
    %2953 = vmatprep.subr.mxu0 0.0
    %2954 = vmatpush1.msra.mxu0 0.0
    %2955 = vmatprep.subr.mxu0 0.0
    %2956 = vmatpush1.msra.mxu0 0.0
    %2957 = vmatprep.subr.mxu0 0.0
    %2958 = vmatpush1.msra.mxu0 0.0
    %2959 = vmatprep.subr.mxu0 0.0
    %2960 = vmatpush1.msra.mxu0 %v460
    %2961 = vmatprep.subr.mxu0 0.0
    %2962 = vmatpush1.msra.mxu0 %v459
    %2963 = vmatprep.subr.mxu0 0.0
    %2964 = vmatpush1.msra.mxu0 %v458
    %2965 = vmatprep.subr.mxu0 0.0
    %2966 = vmatpush1.msra.mxu0 %v457
    %2967 = vmatprep.subr.mxu0 0.0
    %2968 = vmatpush2.msra.mxu0 0.0
    %2969 = vmatprep.subr.mxu0 0.0
    %2970 = vmatpush2.msra.mxu0 0.0
    %2971 = vmatprep.subr.mxu0 0.0
    %2972 = vmatpush2.msra.mxu0 0.0
    %2973 = vmatprep.subr.mxu0 0.0
    %2974 = vmatpush2.msra.mxu0 0.0
    %2975 = vmatprep.subr.mxu0 0.0
    %2976 = vmatpush2.msra.mxu0 0.0
    %2977 = vmatprep.subr.mxu0 0.0
    %2978 = vmatpush2.msra.mxu0 0.0
    %2979 = vmatprep.subr.mxu0 0.0
    %2980 = vmatpush2.msra.mxu0 0.0
    %2981 = vmatprep.subr.mxu0 0.0
    %2982 = vmatpush2.msra.mxu0 0.0
    %2983 = vmatprep.subr.mxu0 0.0
    %2984 = vmatpush2.msra.mxu0 0.0
    %2985 = vmatprep.subr.mxu0 0.0
    %2986 = vmatpush2.msra.mxu0 0.0
    %2987 = vmatprep.subr.mxu0 0.0
    %2988 = vmatpush2.msra.mxu0 0.0
    %2989 = vmatprep.subr.mxu0 0.0
    %2990 = vmatpush2.msra.mxu0 0.0
    %2991 = vmatprep.subr.mxu0 0.0
    %2992 = vmatpush2.msra.mxu0 0.0
    %2993 = vmatprep.subr.mxu0 0.0
    %2994 = vmatpush2.msra.mxu0 0.0
    %2995 = vmatprep.subr.mxu0 0.0
    %2996 = vmatpush2.msra.mxu0 0.0
    %2997 = vmatprep.subr.mxu0 0.0
    %2998 = vmatpush2.msra.mxu0 0.0
    %2999 = vmatprep.mubr.f32.mxu0 0.0
    %3000 = vmatmul.mubr.f32.gmra.mxu0 %v2933
    %v3001 = vpop.f32.mrf.mxu0
    %v3002 = vadd.f32 0.0, %v3001
    %v3003 = vpop.f32.mrf.mxu0
    %3004 = vdwg.mxu0
    %3006 = vrot.lane.b32.xlu0 %v2902, 32
    %v3007 = vpop.permute.xlu0 %3006
    %v3008 = vsel %vm176, %v3007, 0
    %3010 = vmatprep.subr.mxu0 0.0
    %3011 = vmatpush1.msra.mxu0 0.0
    %3012 = vmatprep.subr.mxu0 0.0
    %3013 = vmatpush1.msra.mxu0 0.0
    %3014 = vmatprep.subr.mxu0 0.0
    %3015 = vmatpush1.msra.mxu0 0.0
    %3016 = vmatprep.subr.mxu0 0.0
    %3017 = vmatpush1.msra.mxu0 0.0
    %3018 = vmatprep.subr.mxu0 0.0
    %3019 = vmatpush1.msra.mxu0 0.0
    %3020 = vmatprep.subr.mxu0 0.0
    %3021 = vmatpush1.msra.mxu0 0.0
    %3022 = vmatprep.subr.mxu0 0.0
    %3023 = vmatpush1.msra.mxu0 0.0
    %3024 = vmatprep.subr.mxu0 0.0
    %3025 = vmatpush1.msra.mxu0 0.0
    %3026 = vmatprep.subr.mxu0 0.0
    %3027 = vmatpush1.msra.mxu0 0.0
    %3028 = vmatprep.subr.mxu0 0.0
    %3029 = vmatpush1.msra.mxu0 0.0
    %3030 = vmatprep.subr.mxu0 0.0
    %3031 = vmatpush1.msra.mxu0 0.0
    %3032 = vmatprep.subr.mxu0 0.0
    %3033 = vmatpush1.msra.mxu0 0.0
    %3034 = vmatprep.subr.mxu0 0.0
    %3035 = vmatpush1.msra.mxu0 %v456
    %3036 = vmatprep.subr.mxu0 0.0
    %3037 = vmatpush1.msra.mxu0 %v455
    %3038 = vmatprep.subr.mxu0 0.0
    %3039 = vmatpush1.msra.mxu0 %v454
    %3040 = vmatprep.subr.mxu0 0.0
    %3041 = vmatpush1.msra.mxu0 %v453
    %3042 = vmatprep.subr.mxu0 0.0
    %3043 = vmatpush2.msra.mxu0 0.0
    %3044 = vmatprep.subr.mxu0 0.0
    %3045 = vmatpush2.msra.mxu0 0.0
    %3046 = vmatprep.subr.mxu0 0.0
    %3047 = vmatpush2.msra.mxu0 0.0
    %3048 = vmatprep.subr.mxu0 0.0
    %3049 = vmatpush2.msra.mxu0 0.0
    %3050 = vmatprep.subr.mxu0 0.0
    %3051 = vmatpush2.msra.mxu0 0.0
    %3052 = vmatprep.subr.mxu0 0.0
    %3053 = vmatpush2.msra.mxu0 0.0
    %3054 = vmatprep.subr.mxu0 0.0
    %3055 = vmatpush2.msra.mxu0 0.0
    %3056 = vmatprep.subr.mxu0 0.0
    %3057 = vmatpush2.msra.mxu0 0.0
    %3058 = vmatprep.subr.mxu0 0.0
    %3059 = vmatpush2.msra.mxu0 0.0
    %3060 = vmatprep.subr.mxu0 0.0
    %3061 = vmatpush2.msra.mxu0 0.0
    %3062 = vmatprep.subr.mxu0 0.0
    %3063 = vmatpush2.msra.mxu0 0.0
    %3064 = vmatprep.subr.mxu0 0.0
    %3065 = vmatpush2.msra.mxu0 0.0
    %3066 = vmatprep.subr.mxu0 0.0
    %3067 = vmatpush2.msra.mxu0 0.0
    %3068 = vmatprep.subr.mxu0 0.0
    %3069 = vmatpush2.msra.mxu0 0.0
    %3070 = vmatprep.subr.mxu0 0.0
    %3071 = vmatpush2.msra.mxu0 0.0
    %3072 = vmatprep.subr.mxu0 0.0
    %3073 = vmatpush2.msra.mxu0 0.0
    %3074 = vmatprep.mubr.f32.mxu0 0.0
    %3075 = vmatmul.mubr.f32.gmra.mxu0 %v3008
    %v3076 = vpop.f32.mrf.mxu0
    %v3077 = vadd.f32 %v3002, %v3076
    %v3078 = vpop.f32.mrf.mxu0
    %3079 = vdwg.mxu0
    %v3080 = vadd.f32 %v3077, %v821
    %3082 = vrot.lane.b32.xlu0 %v2719, 32
    %v3083 = vpop.permute.xlu0 %3082
    %v3084 = vsel %vm176, %v3083, 0
    %3086 = vmatprep.subr.mxu0 0.0
    %3087 = vmatpush1.msra.mxu0 0.0
    %3088 = vmatprep.subr.mxu0 0.0
    %3089 = vmatpush1.msra.mxu0 0.0
    %3090 = vmatprep.subr.mxu0 0.0
    %3091 = vmatpush1.msra.mxu0 0.0
    %3092 = vmatprep.subr.mxu0 0.0
    %3093 = vmatpush1.msra.mxu0 0.0
    %3094 = vmatprep.subr.mxu0 0.0
    %3095 = vmatpush1.msra.mxu0 0.0
    %3096 = vmatprep.subr.mxu0 0.0
    %3097 = vmatpush1.msra.mxu0 0.0
    %3098 = vmatprep.subr.mxu0 0.0
    %3099 = vmatpush1.msra.mxu0 0.0
    %3100 = vmatprep.subr.mxu0 0.0
    %3101 = vmatpush1.msra.mxu0 0.0
    %3102 = vmatprep.subr.mxu0 0.0
    %3103 = vmatpush1.msra.mxu0 0.0
    %3104 = vmatprep.subr.mxu0 0.0
    %3105 = vmatpush1.msra.mxu0 0.0
    %3106 = vmatprep.subr.mxu0 0.0
    %3107 = vmatpush1.msra.mxu0 0.0
    %3108 = vmatprep.subr.mxu0 0.0
    %3109 = vmatpush1.msra.mxu0 0.0
    %3110 = vmatprep.subr.mxu0 0.0
    %3111 = vmatpush1.msra.mxu0 %v473
    %3112 = vmatprep.subr.mxu0 0.0
    %3113 = vmatpush1.msra.mxu0 %v472
    %3114 = vmatprep.subr.mxu0 0.0
    %3115 = vmatpush1.msra.mxu0 %v471
    %3116 = vmatprep.subr.mxu0 0.0
    %3117 = vmatpush1.msra.mxu0 %v470
    %3118 = vmatprep.subr.mxu0 0.0
    %3119 = vmatpush2.msra.mxu0 0.0
    %3120 = vmatprep.subr.mxu0 0.0
    %3121 = vmatpush2.msra.mxu0 0.0
    %3122 = vmatprep.subr.mxu0 0.0
    %3123 = vmatpush2.msra.mxu0 0.0
    %3124 = vmatprep.subr.mxu0 0.0
    %3125 = vmatpush2.msra.mxu0 0.0
    %3126 = vmatprep.subr.mxu0 0.0
    %3127 = vmatpush2.msra.mxu0 0.0
    %3128 = vmatprep.subr.mxu0 0.0
    %3129 = vmatpush2.msra.mxu0 0.0
    %3130 = vmatprep.subr.mxu0 0.0
    %3131 = vmatpush2.msra.mxu0 0.0
    %3132 = vmatprep.subr.mxu0 0.0
    %3133 = vmatpush2.msra.mxu0 0.0
    %3134 = vmatprep.subr.mxu0 0.0
    %3135 = vmatpush2.msra.mxu0 0.0
    %3136 = vmatprep.subr.mxu0 0.0
    %3137 = vmatpush2.msra.mxu0 0.0
    %3138 = vmatprep.subr.mxu0 0.0
    %3139 = vmatpush2.msra.mxu0 0.0
    %3140 = vmatprep.subr.mxu0 0.0
    %3141 = vmatpush2.msra.mxu0 0.0
    %3142 = vmatprep.subr.mxu0 0.0
    %3143 = vmatpush2.msra.mxu0 0.0
    %3144 = vmatprep.subr.mxu0 0.0
    %3145 = vmatpush2.msra.mxu0 0.0
    %3146 = vmatprep.subr.mxu0 0.0
    %3147 = vmatpush2.msra.mxu0 0.0
    %3148 = vmatprep.subr.mxu0 0.0
    %3149 = vmatpush2.msra.mxu0 0.0
    %3150 = vmatprep.mubr.f32.mxu0 0.0
    %3151 = vmatmul.mubr.f32.gmra.mxu0 %v3084
    %v3152 = vpop.f32.mrf.mxu0
    %v3153 = vadd.f32 0.0, %v3152
    %v3154 = vpop.f32.mrf.mxu0
    %3155 = vdwg.mxu0
    %3157 = vrot.lane.b32.xlu0 %v2929, 32
    %v3158 = vpop.permute.xlu0 %3157
    %v3159 = vsel %vm176, %v3158, 0
    %3161 = vmatprep.subr.mxu0 0.0
    %3162 = vmatpush1.msra.mxu0 0.0
    %3163 = vmatprep.subr.mxu0 0.0
    %3164 = vmatpush1.msra.mxu0 0.0
    %3165 = vmatprep.subr.mxu0 0.0
    %3166 = vmatpush1.msra.mxu0 0.0
    %3167 = vmatprep.subr.mxu0 0.0
    %3168 = vmatpush1.msra.mxu0 0.0
    %3169 = vmatprep.subr.mxu0 0.0
    %3170 = vmatpush1.msra.mxu0 0.0
    %3171 = vmatprep.subr.mxu0 0.0
    %3172 = vmatpush1.msra.mxu0 0.0
    %3173 = vmatprep.subr.mxu0 0.0
    %3174 = vmatpush1.msra.mxu0 0.0
    %3175 = vmatprep.subr.mxu0 0.0
    %3176 = vmatpush1.msra.mxu0 0.0
    %3177 = vmatprep.subr.mxu0 0.0
    %3178 = vmatpush1.msra.mxu0 0.0
    %3179 = vmatprep.subr.mxu0 0.0
    %3180 = vmatpush1.msra.mxu0 0.0
    %3181 = vmatprep.subr.mxu0 0.0
    %3182 = vmatpush1.msra.mxu0 0.0
    %3183 = vmatprep.subr.mxu0 0.0
    %3184 = vmatpush1.msra.mxu0 0.0
    %3185 = vmatprep.subr.mxu0 0.0
    %3186 = vmatpush1.msra.mxu0 %v469
    %3187 = vmatprep.subr.mxu0 0.0
    %3188 = vmatpush1.msra.mxu0 %v468
    %3189 = vmatprep.subr.mxu0 0.0
    %3190 = vmatpush1.msra.mxu0 %v467
    %3191 = vmatprep.subr.mxu0 0.0
    %3192 = vmatpush1.msra.mxu0 %v466
    %3193 = vmatprep.subr.mxu0 0.0
    %3194 = vmatpush2.msra.mxu0 0.0
    %3195 = vmatprep.subr.mxu0 0.0
    %3196 = vmatpush2.msra.mxu0 0.0
    %3197 = vmatprep.subr.mxu0 0.0
    %3198 = vmatpush2.msra.mxu0 0.0
    %3199 = vmatprep.subr.mxu0 0.0
    %3200 = vmatpush2.msra.mxu0 0.0
    %3201 = vmatprep.subr.mxu0 0.0
    %3202 = vmatpush2.msra.mxu0 0.0
    %3203 = vmatprep.subr.mxu0 0.0
    %3204 = vmatpush2.msra.mxu0 0.0
    %3205 = vmatprep.subr.mxu0 0.0
    %3206 = vmatpush2.msra.mxu0 0.0
    %3207 = vmatprep.subr.mxu0 0.0
    %3208 = vmatpush2.msra.mxu0 0.0
    %3209 = vmatprep.subr.mxu0 0.0
    %3210 = vmatpush2.msra.mxu0 0.0
    %3211 = vmatprep.subr.mxu0 0.0
    %3212 = vmatpush2.msra.mxu0 0.0
    %3213 = vmatprep.subr.mxu0 0.0
    %3214 = vmatpush2.msra.mxu0 0.0
    %3215 = vmatprep.subr.mxu0 0.0
    %3216 = vmatpush2.msra.mxu0 0.0
    %3217 = vmatprep.subr.mxu0 0.0
    %3218 = vmatpush2.msra.mxu0 0.0
    %3219 = vmatprep.subr.mxu0 0.0
    %3220 = vmatpush2.msra.mxu0 0.0
    %3221 = vmatprep.subr.mxu0 0.0
    %3222 = vmatpush2.msra.mxu0 0.0
    %3223 = vmatprep.subr.mxu0 0.0
    %3224 = vmatpush2.msra.mxu0 0.0
    %3225 = vmatprep.mubr.f32.mxu0 0.0
    %3226 = vmatmul.mubr.f32.gmra.mxu0 %v3159
    %v3227 = vpop.f32.mrf.mxu0
    %v3228 = vadd.f32 %v3153, %v3227
    %v3229 = vpop.f32.mrf.mxu0
    %3230 = vdwg.mxu0
    %v3231 = vadd.f32 %v3228, %v973
    %v3232 = vxor.u32 %v3080, 2147483648
    %v3233 = vmul.f32 %v3232, 1.442695
    %v3234 = vpow.pop %v3233
    %v3235 = vadd.f32 %v3234, 1.0
    %v3236 = vrcp.pop %v3235
    %v3237 = vmul.f32 1.0, %v3236
    %v3238 = vtanh.pop %v3080
    %v3239 = vmul.f32 %v3237, %v2689
    %3241 = vrot.lane.b32.xlu0 %v3238, 64
    %v3242 = vpop.permute.xlu0 %3241
    %v3244 = vmul.f32 %v3237, %v3242
    %3246 = vrot.lane.b32.xlu0 %v3244, 32
    %v3247 = vpop.permute.xlu0 %3246
    %v3249 = vadd.f32 %v3239, %v3247
    %v3250 = vtanh.pop %v3249
    %3252 = vrot.lane.b32.xlu0 %v3250, 64
    %v3253 = vpop.permute.xlu0 %3252
    %v3255 = vmul.f32 %v3237, %v3253
    %v3256 = vxor.u32 %v3231, 2147483648
    %v3257 = vmul.f32 %v3256, 1.442695
    %v3258 = vpow.pop %v3257
    %v3259 = vadd.f32 %v3258, 1.0
    %v3260 = vrcp.pop %v3259
    %v3261 = vmul.f32 1.0, %v3260
    %v3262 = vtanh.pop %v3231
    %v3263 = vmul.f32 %v3261, %v2713
    %3265 = vrot.lane.b32.xlu0 %v3262, 64
    %v3266 = vpop.permute.xlu0 %3265
    %v3268 = vmul.f32 %v3261, %v3266
    %3270 = vrot.lane.b32.xlu0 %v3268, 32
    %v3271 = vpop.permute.xlu0 %3270
    %v3273 = vadd.f32 %v3263, %v3271
    %v3274 = vtanh.pop %v3273
    %3276 = vrot.lane.b32.xlu0 %v3274, 64
    %v3277 = vpop.permute.xlu0 %3276
    %v3279 = vmul.f32 %v3261, %v3277
    %vm3280 = vcmp.eq.s32.totalorder %v476, 4
    %v3281 = vsel %vm3280, 1, 0
    %3282 = vset.pattern.permute.xlu0 0
    %3283 = vperm.xlu0 %3282, %v3281
    %v3284 = vpop.permute.xlu0 %3283
    %vm3285 = vcmp.eq.s32.totalorder %v3284, 1
    %v3286 = vsel %vm3285, %v3255, %v2726
    %vm3287 = vcmp.eq.s32.totalorder %v478, 4
    %v3288 = vsel %vm3287, 1, 0
    %3289 = vset.pattern.permute.xlu0 0
    %3290 = vperm.xlu0 %3289, %v3288
    %v3291 = vpop.permute.xlu0 %3290
    %vm3292 = vcmp.eq.s32.totalorder %v3291, 1
    %v3293 = vsel %vm3292, %v3279, %v2733
    %3294 = vmatprep.subr.mxu0 0.0
    %3295 = vmatpush1.msra.mxu0 0.0
    %3296 = vmatprep.subr.mxu0 0.0
    %3297 = vmatpush1.msra.mxu0 0.0
    %3298 = vmatprep.subr.mxu0 0.0
    %3299 = vmatpush1.msra.mxu0 0.0
    %3300 = vmatprep.subr.mxu0 0.0
    %3301 = vmatpush1.msra.mxu0 0.0
    %3302 = vmatprep.subr.mxu0 0.0
    %3303 = vmatpush1.msra.mxu0 0.0
    %3304 = vmatprep.subr.mxu0 0.0
    %3305 = vmatpush1.msra.mxu0 0.0
    %3306 = vmatprep.subr.mxu0 0.0
    %3307 = vmatpush1.msra.mxu0 0.0
    %3308 = vmatprep.subr.mxu0 0.0
    %3309 = vmatpush1.msra.mxu0 0.0
    %3310 = vmatprep.subr.mxu0 0.0
    %3311 = vmatpush1.msra.mxu0 0.0
    %3312 = vmatprep.subr.mxu0 0.0
    %3313 = vmatpush1.msra.mxu0 0.0
    %3314 = vmatprep.subr.mxu0 0.0
    %3315 = vmatpush1.msra.mxu0 0.0
    %3316 = vmatprep.subr.mxu0 0.0
    %3317 = vmatpush1.msra.mxu0 0.0
    %3318 = vmatprep.subr.mxu0 0.0
    %3319 = vmatpush1.msra.mxu0 %v452
    %3320 = vmatprep.subr.mxu0 0.0
    %3321 = vmatpush1.msra.mxu0 %v451
    %3322 = vmatprep.subr.mxu0 0.0
    %3323 = vmatpush1.msra.mxu0 %v450
    %3324 = vmatprep.subr.mxu0 0.0
    %3325 = vmatpush1.msra.mxu0 %v449
    %3326 = vmatprep.subr.mxu0 0.0
    %3327 = vmatpush2.msra.mxu0 0.0
    %3328 = vmatprep.subr.mxu0 0.0
    %3329 = vmatpush2.msra.mxu0 0.0
    %3330 = vmatprep.subr.mxu0 0.0
    %3331 = vmatpush2.msra.mxu0 0.0
    %3332 = vmatprep.subr.mxu0 0.0
    %3333 = vmatpush2.msra.mxu0 0.0
    %3334 = vmatprep.subr.mxu0 0.0
    %3335 = vmatpush2.msra.mxu0 0.0
    %3336 = vmatprep.subr.mxu0 0.0
    %3337 = vmatpush2.msra.mxu0 0.0
    %3338 = vmatprep.subr.mxu0 0.0
    %3339 = vmatpush2.msra.mxu0 0.0
    %3340 = vmatprep.subr.mxu0 0.0
    %3341 = vmatpush2.msra.mxu0 0.0
    %3342 = vmatprep.subr.mxu0 0.0
    %3343 = vmatpush2.msra.mxu0 0.0
    %3344 = vmatprep.subr.mxu0 0.0
    %3345 = vmatpush2.msra.mxu0 0.0
    %3346 = vmatprep.subr.mxu0 0.0
    %3347 = vmatpush2.msra.mxu0 0.0
    %3348 = vmatprep.subr.mxu0 0.0
    %3349 = vmatpush2.msra.mxu0 0.0
    %3350 = vmatprep.subr.mxu0 0.0
    %3351 = vmatpush2.msra.mxu0 0.0
    %3352 = vmatprep.subr.mxu0 0.0
    %3353 = vmatpush2.msra.mxu0 0.0
    %3354 = vmatprep.subr.mxu0 0.0
    %3355 = vmatpush2.msra.mxu0 0.0
    %3356 = vmatprep.subr.mxu0 0.0
    %3357 = vmatpush2.msra.mxu0 0.0
    %3358 = vmatprep.mubr.f32.mxu0 0.0
    %3359 = vmatmul.mubr.f32.gmra.mxu0 %v3008
    %v3360 = vpop.f32.mrf.mxu0
    %v3361 = vadd.f32 0.0, %v3360
    %v3362 = vpop.f32.mrf.mxu0
    %3363 = vdwg.mxu0
    %v3365 = vrot.slane %v3361, 4
    %v3367 = vadd.f32 %v272, %v3365
    %3368 = vmatprep.subr.mxu0 0.0
    %3369 = vmatpush1.msra.mxu0 0.0
    %3370 = vmatprep.subr.mxu0 0.0
    %3371 = vmatpush1.msra.mxu0 0.0
    %3372 = vmatprep.subr.mxu0 0.0
    %3373 = vmatpush1.msra.mxu0 0.0
    %3374 = vmatprep.subr.mxu0 0.0
    %3375 = vmatpush1.msra.mxu0 0.0
    %3376 = vmatprep.subr.mxu0 0.0
    %3377 = vmatpush1.msra.mxu0 0.0
    %3378 = vmatprep.subr.mxu0 0.0
    %3379 = vmatpush1.msra.mxu0 0.0
    %3380 = vmatprep.subr.mxu0 0.0
    %3381 = vmatpush1.msra.mxu0 0.0
    %3382 = vmatprep.subr.mxu0 0.0
    %3383 = vmatpush1.msra.mxu0 0.0
    %3384 = vmatprep.subr.mxu0 0.0
    %3385 = vmatpush1.msra.mxu0 0.0
    %3386 = vmatprep.subr.mxu0 0.0
    %3387 = vmatpush1.msra.mxu0 0.0
    %3388 = vmatprep.subr.mxu0 0.0
    %3389 = vmatpush1.msra.mxu0 0.0
    %3390 = vmatprep.subr.mxu0 0.0
    %3391 = vmatpush1.msra.mxu0 0.0
    %3392 = vmatprep.subr.mxu0 0.0
    %3393 = vmatpush1.msra.mxu0 %v465
    %3394 = vmatprep.subr.mxu0 0.0
    %3395 = vmatpush1.msra.mxu0 %v464
    %3396 = vmatprep.subr.mxu0 0.0
    %3397 = vmatpush1.msra.mxu0 %v463
    %3398 = vmatprep.subr.mxu0 0.0
    %3399 = vmatpush1.msra.mxu0 %v462
    %3400 = vmatprep.subr.mxu0 0.0
    %3401 = vmatpush2.msra.mxu0 0.0
    %3402 = vmatprep.subr.mxu0 0.0
    %3403 = vmatpush2.msra.mxu0 0.0
    %3404 = vmatprep.subr.mxu0 0.0
    %3405 = vmatpush2.msra.mxu0 0.0
    %3406 = vmatprep.subr.mxu0 0.0
    %3407 = vmatpush2.msra.mxu0 0.0
    %3408 = vmatprep.subr.mxu0 0.0
    %3409 = vmatpush2.msra.mxu0 0.0
    %3410 = vmatprep.subr.mxu0 0.0
    %3411 = vmatpush2.msra.mxu0 0.0
    %3412 = vmatprep.subr.mxu0 0.0
    %3413 = vmatpush2.msra.mxu0 0.0
    %3414 = vmatprep.subr.mxu0 0.0
    %3415 = vmatpush2.msra.mxu0 0.0
    %3416 = vmatprep.subr.mxu0 0.0
    %3417 = vmatpush2.msra.mxu0 0.0
    %3418 = vmatprep.subr.mxu0 0.0
    %3419 = vmatpush2.msra.mxu0 0.0
    %3420 = vmatprep.subr.mxu0 0.0
    %3421 = vmatpush2.msra.mxu0 0.0
    %3422 = vmatprep.subr.mxu0 0.0
    %3423 = vmatpush2.msra.mxu0 0.0
    %3424 = vmatprep.subr.mxu0 0.0
    %3425 = vmatpush2.msra.mxu0 0.0
    %3426 = vmatprep.subr.mxu0 0.0
    %3427 = vmatpush2.msra.mxu0 0.0
    %3428 = vmatprep.subr.mxu0 0.0
    %3429 = vmatpush2.msra.mxu0 0.0
    %3430 = vmatprep.subr.mxu0 0.0
    %3431 = vmatpush2.msra.mxu0 0.0
    %3432 = vmatprep.mubr.f32.mxu0 0.0
    %3433 = vmatmul.mubr.f32.gmra.mxu0 %v3159
    %v3434 = vpop.f32.mrf.mxu0
    %v3435 = vadd.f32 0.0, %v3434
    %v3436 = vpop.f32.mrf.mxu0
    %3437 = vdwg.mxu0
    %v3439 = vrot.slane %v3435, 4
    %v3441 = vadd.f32 %v431, %v3439
    %v3442 = vxor.u32 %v3367, 2147483648
    %v3443 = vmul.f32 %v3442, 1.442695
    %v3444 = vpow.pop %v3443
    %v3445 = vadd.f32 %v3444, 1.0
    %v3446 = vrcp.pop %v3445
    %v3447 = vmul.f32 1.0, %v3446
    %v3448 = vtanh.pop %v3367
    %v3450 = vrot.slane %v2896, 4
    %v3452 = vmul.f32 %v3447, %v3450
    %3454 = vrot.lane.b32.xlu0 %v3448, 64
    %v3455 = vpop.permute.xlu0 %3454
    %v3457 = vmul.f32 %v3447, %v3455
    %3459 = vrot.lane.b32.xlu0 %v3457, 32
    %v3460 = vpop.permute.xlu0 %3459
    %v3462 = vadd.f32 %v3452, %v3460
    %v3463 = vtanh.pop %v3462
    %3465 = vrot.lane.b32.xlu0 %v3463, 64
    %v3466 = vpop.permute.xlu0 %3465
    %v3468 = vmul.f32 %v3447, %v3466
    %v3469 = vxor.u32 %v3441, 2147483648
    %v3470 = vmul.f32 %v3469, 1.442695
    %v3471 = vpow.pop %v3470
    %v3472 = vadd.f32 %v3471, 1.0
    %v3473 = vrcp.pop %v3472
    %v3474 = vmul.f32 1.0, %v3473
    %v3475 = vtanh.pop %v3441
    %v3477 = vrot.slane %v2923, 4
    %v3479 = vmul.f32 %v3474, %v3477
    %3481 = vrot.lane.b32.xlu0 %v3475, 64
    %v3482 = vpop.permute.xlu0 %3481
    %v3484 = vmul.f32 %v3474, %v3482
    %3486 = vrot.lane.b32.xlu0 %v3484, 32
    %v3487 = vpop.permute.xlu0 %3486
    %v3489 = vadd.f32 %v3479, %v3487
    %v3490 = vtanh.pop %v3489
    %3492 = vrot.lane.b32.xlu0 %v3490, 64
    %v3493 = vpop.permute.xlu0 %3492
    %v3495 = vmul.f32 %v3474, %v3493
    %3497 = vrot.lane.b32.xlu0 %v3255, 32
    %v3498 = vpop.permute.xlu0 %3497
    %v3499 = vsel %vm176, %v3498, 0
    %3501 = vmatprep.subr.mxu0 0.0
    %3502 = vmatpush1.msra.mxu0 0.0
    %3503 = vmatprep.subr.mxu0 0.0
    %3504 = vmatpush1.msra.mxu0 0.0
    %3505 = vmatprep.subr.mxu0 0.0
    %3506 = vmatpush1.msra.mxu0 0.0
    %3507 = vmatprep.subr.mxu0 0.0
    %3508 = vmatpush1.msra.mxu0 0.0
    %3509 = vmatprep.subr.mxu0 0.0
    %3510 = vmatpush1.msra.mxu0 0.0
    %3511 = vmatprep.subr.mxu0 0.0
    %3512 = vmatpush1.msra.mxu0 0.0
    %3513 = vmatprep.subr.mxu0 0.0
    %3514 = vmatpush1.msra.mxu0 0.0
    %3515 = vmatprep.subr.mxu0 0.0
    %3516 = vmatpush1.msra.mxu0 0.0
    %3517 = vmatprep.subr.mxu0 0.0
    %3518 = vmatpush1.msra.mxu0 0.0
    %3519 = vmatprep.subr.mxu0 0.0
    %3520 = vmatpush1.msra.mxu0 0.0
    %3521 = vmatprep.subr.mxu0 0.0
    %3522 = vmatpush1.msra.mxu0 0.0
    %3523 = vmatprep.subr.mxu0 0.0
    %3524 = vmatpush1.msra.mxu0 0.0
    %3525 = vmatprep.subr.mxu0 0.0
    %3526 = vmatpush1.msra.mxu0 %v460
    %3527 = vmatprep.subr.mxu0 0.0
    %3528 = vmatpush1.msra.mxu0 %v459
    %3529 = vmatprep.subr.mxu0 0.0
    %3530 = vmatpush1.msra.mxu0 %v458
    %3531 = vmatprep.subr.mxu0 0.0
    %3532 = vmatpush1.msra.mxu0 %v457
    %3533 = vmatprep.subr.mxu0 0.0
    %3534 = vmatpush2.msra.mxu0 0.0
    %3535 = vmatprep.subr.mxu0 0.0
    %3536 = vmatpush2.msra.mxu0 0.0
    %3537 = vmatprep.subr.mxu0 0.0
    %3538 = vmatpush2.msra.mxu0 0.0
    %3539 = vmatprep.subr.mxu0 0.0
    %3540 = vmatpush2.msra.mxu0 0.0
    %3541 = vmatprep.subr.mxu0 0.0
    %3542 = vmatpush2.msra.mxu0 0.0
    %3543 = vmatprep.subr.mxu0 0.0
    %3544 = vmatpush2.msra.mxu0 0.0
    %3545 = vmatprep.subr.mxu0 0.0
    %3546 = vmatpush2.msra.mxu0 0.0
    %3547 = vmatprep.subr.mxu0 0.0
    %3548 = vmatpush2.msra.mxu0 0.0
    %3549 = vmatprep.subr.mxu0 0.0
    %3550 = vmatpush2.msra.mxu0 0.0
    %3551 = vmatprep.subr.mxu0 0.0
    %3552 = vmatpush2.msra.mxu0 0.0
    %3553 = vmatprep.subr.mxu0 0.0
    %3554 = vmatpush2.msra.mxu0 0.0
    %3555 = vmatprep.subr.mxu0 0.0
    %3556 = vmatpush2.msra.mxu0 0.0
    %3557 = vmatprep.subr.mxu0 0.0
    %3558 = vmatpush2.msra.mxu0 0.0
    %3559 = vmatprep.subr.mxu0 0.0
    %3560 = vmatpush2.msra.mxu0 0.0
    %3561 = vmatprep.subr.mxu0 0.0
    %3562 = vmatpush2.msra.mxu0 0.0
    %3563 = vmatprep.subr.mxu0 0.0
    %3564 = vmatpush2.msra.mxu0 0.0
    %3565 = vmatprep.mubr.f32.mxu0 0.0
    %3566 = vmatmul.mubr.f32.gmra.mxu0 %v3499
    %v3567 = vpop.f32.mrf.mxu0
    %v3568 = vadd.f32 0.0, %v3567
    %v3569 = vpop.f32.mrf.mxu0
    %3570 = vdwg.mxu0
    %v3572 = vrot.slane %v3468, 4
    %3573 = vrot.lane.b32.xlu0 %v3572, 32
    %v3574 = vpop.permute.xlu0 %3573
    %v3575 = vsel %vm176, %v3574, 0
    %3577 = vmatprep.subr.mxu0 0.0
    %3578 = vmatpush1.msra.mxu0 0.0
    %3579 = vmatprep.subr.mxu0 0.0
    %3580 = vmatpush1.msra.mxu0 0.0
    %3581 = vmatprep.subr.mxu0 0.0
    %3582 = vmatpush1.msra.mxu0 0.0
    %3583 = vmatprep.subr.mxu0 0.0
    %3584 = vmatpush1.msra.mxu0 0.0
    %3585 = vmatprep.subr.mxu0 0.0
    %3586 = vmatpush1.msra.mxu0 0.0
    %3587 = vmatprep.subr.mxu0 0.0
    %3588 = vmatpush1.msra.mxu0 0.0
    %3589 = vmatprep.subr.mxu0 0.0
    %3590 = vmatpush1.msra.mxu0 0.0
    %3591 = vmatprep.subr.mxu0 0.0
    %3592 = vmatpush1.msra.mxu0 0.0
    %3593 = vmatprep.subr.mxu0 0.0
    %3594 = vmatpush1.msra.mxu0 0.0
    %3595 = vmatprep.subr.mxu0 0.0
    %3596 = vmatpush1.msra.mxu0 0.0
    %3597 = vmatprep.subr.mxu0 0.0
    %3598 = vmatpush1.msra.mxu0 0.0
    %3599 = vmatprep.subr.mxu0 0.0
    %3600 = vmatpush1.msra.mxu0 0.0
    %3601 = vmatprep.subr.mxu0 0.0
    %3602 = vmatpush1.msra.mxu0 %v456
    %3603 = vmatprep.subr.mxu0 0.0
    %3604 = vmatpush1.msra.mxu0 %v455
    %3605 = vmatprep.subr.mxu0 0.0
    %3606 = vmatpush1.msra.mxu0 %v454
    %3607 = vmatprep.subr.mxu0 0.0
    %3608 = vmatpush1.msra.mxu0 %v453
    %3609 = vmatprep.subr.mxu0 0.0
    %3610 = vmatpush2.msra.mxu0 0.0
    %3611 = vmatprep.subr.mxu0 0.0
    %3612 = vmatpush2.msra.mxu0 0.0
    %3613 = vmatprep.subr.mxu0 0.0
    %3614 = vmatpush2.msra.mxu0 0.0
    %3615 = vmatprep.subr.mxu0 0.0
    %3616 = vmatpush2.msra.mxu0 0.0
    %3617 = vmatprep.subr.mxu0 0.0
    %3618 = vmatpush2.msra.mxu0 0.0
    %3619 = vmatprep.subr.mxu0 0.0
    %3620 = vmatpush2.msra.mxu0 0.0
    %3621 = vmatprep.subr.mxu0 0.0
    %3622 = vmatpush2.msra.mxu0 0.0
    %3623 = vmatprep.subr.mxu0 0.0
    %3624 = vmatpush2.msra.mxu0 0.0
    %3625 = vmatprep.subr.mxu0 0.0
    %3626 = vmatpush2.msra.mxu0 0.0
    %3627 = vmatprep.subr.mxu0 0.0
    %3628 = vmatpush2.msra.mxu0 0.0
    %3629 = vmatprep.subr.mxu0 0.0
    %3630 = vmatpush2.msra.mxu0 0.0
    %3631 = vmatprep.subr.mxu0 0.0
    %3632 = vmatpush2.msra.mxu0 0.0
    %3633 = vmatprep.subr.mxu0 0.0
    %3634 = vmatpush2.msra.mxu0 0.0
    %3635 = vmatprep.subr.mxu0 0.0
    %3636 = vmatpush2.msra.mxu0 0.0
    %3637 = vmatprep.subr.mxu0 0.0
    %3638 = vmatpush2.msra.mxu0 0.0
    %3639 = vmatprep.subr.mxu0 0.0
    %3640 = vmatpush2.msra.mxu0 0.0
    %3641 = vmatprep.mubr.f32.mxu0 0.0
    %3642 = vmatmul.mubr.f32.gmra.mxu0 %v3575
    %v3643 = vpop.f32.mrf.mxu0
    %v3644 = vadd.f32 %v3568, %v3643
    %v3645 = vpop.f32.mrf.mxu0
    %3646 = vdwg.mxu0
    %v3647 = vadd.f32 %v3644, %v821
    %3649 = vrot.lane.b32.xlu0 %v3279, 32
    %v3650 = vpop.permute.xlu0 %3649
    %v3651 = vsel %vm176, %v3650, 0
    %3653 = vmatprep.subr.mxu0 0.0
    %3654 = vmatpush1.msra.mxu0 0.0
    %3655 = vmatprep.subr.mxu0 0.0
    %3656 = vmatpush1.msra.mxu0 0.0
    %3657 = vmatprep.subr.mxu0 0.0
    %3658 = vmatpush1.msra.mxu0 0.0
    %3659 = vmatprep.subr.mxu0 0.0
    %3660 = vmatpush1.msra.mxu0 0.0
    %3661 = vmatprep.subr.mxu0 0.0
    %3662 = vmatpush1.msra.mxu0 0.0
    %3663 = vmatprep.subr.mxu0 0.0
    %3664 = vmatpush1.msra.mxu0 0.0
    %3665 = vmatprep.subr.mxu0 0.0
    %3666 = vmatpush1.msra.mxu0 0.0
    %3667 = vmatprep.subr.mxu0 0.0
    %3668 = vmatpush1.msra.mxu0 0.0
    %3669 = vmatprep.subr.mxu0 0.0
    %3670 = vmatpush1.msra.mxu0 0.0
    %3671 = vmatprep.subr.mxu0 0.0
    %3672 = vmatpush1.msra.mxu0 0.0
    %3673 = vmatprep.subr.mxu0 0.0
    %3674 = vmatpush1.msra.mxu0 0.0
    %3675 = vmatprep.subr.mxu0 0.0
    %3676 = vmatpush1.msra.mxu0 0.0
    %3677 = vmatprep.subr.mxu0 0.0
    %3678 = vmatpush1.msra.mxu0 %v473
    %3679 = vmatprep.subr.mxu0 0.0
    %3680 = vmatpush1.msra.mxu0 %v472
    %3681 = vmatprep.subr.mxu0 0.0
    %3682 = vmatpush1.msra.mxu0 %v471
    %3683 = vmatprep.subr.mxu0 0.0
    %3684 = vmatpush1.msra.mxu0 %v470
    %3685 = vmatprep.subr.mxu0 0.0
    %3686 = vmatpush2.msra.mxu0 0.0
    %3687 = vmatprep.subr.mxu0 0.0
    %3688 = vmatpush2.msra.mxu0 0.0
    %3689 = vmatprep.subr.mxu0 0.0
    %3690 = vmatpush2.msra.mxu0 0.0
    %3691 = vmatprep.subr.mxu0 0.0
    %3692 = vmatpush2.msra.mxu0 0.0
    %3693 = vmatprep.subr.mxu0 0.0
    %3694 = vmatpush2.msra.mxu0 0.0
    %3695 = vmatprep.subr.mxu0 0.0
    %3696 = vmatpush2.msra.mxu0 0.0
    %3697 = vmatprep.subr.mxu0 0.0
    %3698 = vmatpush2.msra.mxu0 0.0
    %3699 = vmatprep.subr.mxu0 0.0
    %3700 = vmatpush2.msra.mxu0 0.0
    %3701 = vmatprep.subr.mxu0 0.0
    %3702 = vmatpush2.msra.mxu0 0.0
    %3703 = vmatprep.subr.mxu0 0.0
    %3704 = vmatpush2.msra.mxu0 0.0
    %3705 = vmatprep.subr.mxu0 0.0
    %3706 = vmatpush2.msra.mxu0 0.0
    %3707 = vmatprep.subr.mxu0 0.0
    %3708 = vmatpush2.msra.mxu0 0.0
    %3709 = vmatprep.subr.mxu0 0.0
    %3710 = vmatpush2.msra.mxu0 0.0
    %3711 = vmatprep.subr.mxu0 0.0
    %3712 = vmatpush2.msra.mxu0 0.0
    %3713 = vmatprep.subr.mxu0 0.0
    %3714 = vmatpush2.msra.mxu0 0.0
    %3715 = vmatprep.subr.mxu0 0.0
    %3716 = vmatpush2.msra.mxu0 0.0
    %3717 = vmatprep.mubr.f32.mxu0 0.0
    %3718 = vmatmul.mubr.f32.gmra.mxu0 %v3651
    %v3719 = vpop.f32.mrf.mxu0
    %v3720 = vadd.f32 0.0, %v3719
    %v3721 = vpop.f32.mrf.mxu0
    %3722 = vdwg.mxu0
    %v3724 = vrot.slane %v3495, 4
    %3725 = vrot.lane.b32.xlu0 %v3724, 32
    %v3726 = vpop.permute.xlu0 %3725
    %v3727 = vsel %vm176, %v3726, 0
    %3729 = vmatprep.subr.mxu0 0.0
    %3730 = vmatpush1.msra.mxu0 0.0
    %3731 = vmatprep.subr.mxu0 0.0
    %3732 = vmatpush1.msra.mxu0 0.0
    %3733 = vmatprep.subr.mxu0 0.0
    %3734 = vmatpush1.msra.mxu0 0.0
    %3735 = vmatprep.subr.mxu0 0.0
    %3736 = vmatpush1.msra.mxu0 0.0
    %3737 = vmatprep.subr.mxu0 0.0
    %3738 = vmatpush1.msra.mxu0 0.0
    %3739 = vmatprep.subr.mxu0 0.0
    %3740 = vmatpush1.msra.mxu0 0.0
    %3741 = vmatprep.subr.mxu0 0.0
    %3742 = vmatpush1.msra.mxu0 0.0
    %3743 = vmatprep.subr.mxu0 0.0
    %3744 = vmatpush1.msra.mxu0 0.0
    %3745 = vmatprep.subr.mxu0 0.0
    %3746 = vmatpush1.msra.mxu0 0.0
    %3747 = vmatprep.subr.mxu0 0.0
    %3748 = vmatpush1.msra.mxu0 0.0
    %3749 = vmatprep.subr.mxu0 0.0
    %3750 = vmatpush1.msra.mxu0 0.0
    %3751 = vmatprep.subr.mxu0 0.0
    %3752 = vmatpush1.msra.mxu0 0.0
    %3753 = vmatprep.subr.mxu0 0.0
    %3754 = vmatpush1.msra.mxu0 %v469
    %3755 = vmatprep.subr.mxu0 0.0
    %3756 = vmatpush1.msra.mxu0 %v468
    %3757 = vmatprep.subr.mxu0 0.0
    %3758 = vmatpush1.msra.mxu0 %v467
    %3759 = vmatprep.subr.mxu0 0.0
    %3760 = vmatpush1.msra.mxu0 %v466
    %3761 = vmatprep.subr.mxu0 0.0
    %3762 = vmatpush2.msra.mxu0 0.0
    %3763 = vmatprep.subr.mxu0 0.0
    %3764 = vmatpush2.msra.mxu0 0.0
    %3765 = vmatprep.subr.mxu0 0.0
    %3766 = vmatpush2.msra.mxu0 0.0
    %3767 = vmatprep.subr.mxu0 0.0
    %3768 = vmatpush2.msra.mxu0 0.0
    %3769 = vmatprep.subr.mxu0 0.0
    %3770 = vmatpush2.msra.mxu0 0.0
    %3771 = vmatprep.subr.mxu0 0.0
    %3772 = vmatpush2.msra.mxu0 0.0
    %3773 = vmatprep.subr.mxu0 0.0
    %3774 = vmatpush2.msra.mxu0 0.0
    %3775 = vmatprep.subr.mxu0 0.0
    %3776 = vmatpush2.msra.mxu0 0.0
    %3777 = vmatprep.subr.mxu0 0.0
    %3778 = vmatpush2.msra.mxu0 0.0
    %3779 = vmatprep.subr.mxu0 0.0
    %3780 = vmatpush2.msra.mxu0 0.0
    %3781 = vmatprep.subr.mxu0 0.0
    %3782 = vmatpush2.msra.mxu0 0.0
    %3783 = vmatprep.subr.mxu0 0.0
    %3784 = vmatpush2.msra.mxu0 0.0
    %3785 = vmatprep.subr.mxu0 0.0
    %3786 = vmatpush2.msra.mxu0 0.0
    %3787 = vmatprep.subr.mxu0 0.0
    %3788 = vmatpush2.msra.mxu0 0.0
    %3789 = vmatprep.subr.mxu0 0.0
    %3790 = vmatpush2.msra.mxu0 0.0
    %3791 = vmatprep.subr.mxu0 0.0
    %3792 = vmatpush2.msra.mxu0 0.0
    %3793 = vmatprep.mubr.f32.mxu0 0.0
    %3794 = vmatmul.mubr.f32.gmra.mxu0 %v3727
    %v3795 = vpop.f32.mrf.mxu0
    %v3796 = vadd.f32 %v3720, %v3795
    %v3797 = vpop.f32.mrf.mxu0
    %3798 = vdwg.mxu0
    %v3799 = vadd.f32 %v3796, %v973
    %v3800 = vxor.u32 %v3647, 2147483648
    %v3801 = vmul.f32 %v3800, 1.442695
    %v3802 = vpow.pop %v3801
    %v3803 = vadd.f32 %v3802, 1.0
    %v3804 = vrcp.pop %v3803
    %v3805 = vmul.f32 1.0, %v3804
    %v3806 = vtanh.pop %v3647
    %v3807 = vmul.f32 %v3805, %v3249
    %3809 = vrot.lane.b32.xlu0 %v3806, 64
    %v3810 = vpop.permute.xlu0 %3809
    %v3812 = vmul.f32 %v3805, %v3810
    %3814 = vrot.lane.b32.xlu0 %v3812, 32
    %v3815 = vpop.permute.xlu0 %3814
    %v3817 = vadd.f32 %v3807, %v3815
    %v3818 = vtanh.pop %v3817
    %3820 = vrot.lane.b32.xlu0 %v3818, 64
    %v3821 = vpop.permute.xlu0 %3820
    %v3823 = vmul.f32 %v3805, %v3821
    %v3824 = vxor.u32 %v3799, 2147483648
    %v3825 = vmul.f32 %v3824, 1.442695
    %v3826 = vpow.pop %v3825
    %v3827 = vadd.f32 %v3826, 1.0
    %v3828 = vrcp.pop %v3827
    %v3829 = vmul.f32 1.0, %v3828
    %v3830 = vtanh.pop %v3799
    %v3831 = vmul.f32 %v3829, %v3273
    %3833 = vrot.lane.b32.xlu0 %v3830, 64
    %v3834 = vpop.permute.xlu0 %3833
    %v3836 = vmul.f32 %v3829, %v3834
    %3838 = vrot.lane.b32.xlu0 %v3836, 32
    %v3839 = vpop.permute.xlu0 %3838
    %v3841 = vadd.f32 %v3831, %v3839
    %v3842 = vtanh.pop %v3841
    %3844 = vrot.lane.b32.xlu0 %v3842, 64
    %v3845 = vpop.permute.xlu0 %3844
    %v3847 = vmul.f32 %v3829, %v3845
    %vm3848 = vcmp.eq.s32.totalorder %v476, 5
    %v3849 = vsel %vm3848, 1, 0
    %3850 = vset.pattern.permute.xlu0 0
    %3851 = vperm.xlu0 %3850, %v3849
    %v3852 = vpop.permute.xlu0 %3851
    %vm3853 = vcmp.eq.s32.totalorder %v3852, 1
    %v3854 = vsel %vm3853, %v3823, %v3286
    %vm3855 = vcmp.eq.s32.totalorder %v478, 5
    %v3856 = vsel %vm3855, 1, 0
    %3857 = vset.pattern.permute.xlu0 0
    %3858 = vperm.xlu0 %3857, %v3856
    %v3859 = vpop.permute.xlu0 %3858
    %vm3860 = vcmp.eq.s32.totalorder %v3859, 1
    %v3861 = vsel %vm3860, %v3847, %v3293
    %3862 = vmatprep.subr.mxu0 0.0
    %3863 = vmatpush1.msra.mxu0 0.0
    %3864 = vmatprep.subr.mxu0 0.0
    %3865 = vmatpush1.msra.mxu0 0.0
    %3866 = vmatprep.subr.mxu0 0.0
    %3867 = vmatpush1.msra.mxu0 0.0
    %3868 = vmatprep.subr.mxu0 0.0
    %3869 = vmatpush1.msra.mxu0 0.0
    %3870 = vmatprep.subr.mxu0 0.0
    %3871 = vmatpush1.msra.mxu0 0.0
    %3872 = vmatprep.subr.mxu0 0.0
    %3873 = vmatpush1.msra.mxu0 0.0
    %3874 = vmatprep.subr.mxu0 0.0
    %3875 = vmatpush1.msra.mxu0 0.0
    %3876 = vmatprep.subr.mxu0 0.0
    %3877 = vmatpush1.msra.mxu0 0.0
    %3878 = vmatprep.subr.mxu0 0.0
    %3879 = vmatpush1.msra.mxu0 0.0
    %3880 = vmatprep.subr.mxu0 0.0
    %3881 = vmatpush1.msra.mxu0 0.0
    %3882 = vmatprep.subr.mxu0 0.0
    %3883 = vmatpush1.msra.mxu0 0.0
    %3884 = vmatprep.subr.mxu0 0.0
    %3885 = vmatpush1.msra.mxu0 0.0
    %3886 = vmatprep.subr.mxu0 0.0
    %3887 = vmatpush1.msra.mxu0 %v452
    %3888 = vmatprep.subr.mxu0 0.0
    %3889 = vmatpush1.msra.mxu0 %v451
    %3890 = vmatprep.subr.mxu0 0.0
    %3891 = vmatpush1.msra.mxu0 %v450
    %3892 = vmatprep.subr.mxu0 0.0
    %3893 = vmatpush1.msra.mxu0 %v449
    %3894 = vmatprep.subr.mxu0 0.0
    %3895 = vmatpush2.msra.mxu0 0.0
    %3896 = vmatprep.subr.mxu0 0.0
    %3897 = vmatpush2.msra.mxu0 0.0
    %3898 = vmatprep.subr.mxu0 0.0
    %3899 = vmatpush2.msra.mxu0 0.0
    %3900 = vmatprep.subr.mxu0 0.0
    %3901 = vmatpush2.msra.mxu0 0.0
    %3902 = vmatprep.subr.mxu0 0.0
    %3903 = vmatpush2.msra.mxu0 0.0
    %3904 = vmatprep.subr.mxu0 0.0
    %3905 = vmatpush2.msra.mxu0 0.0
    %3906 = vmatprep.subr.mxu0 0.0
    %3907 = vmatpush2.msra.mxu0 0.0
    %3908 = vmatprep.subr.mxu0 0.0
    %3909 = vmatpush2.msra.mxu0 0.0
    %3910 = vmatprep.subr.mxu0 0.0
    %3911 = vmatpush2.msra.mxu0 0.0
    %3912 = vmatprep.subr.mxu0 0.0
    %3913 = vmatpush2.msra.mxu0 0.0
    %3914 = vmatprep.subr.mxu0 0.0
    %3915 = vmatpush2.msra.mxu0 0.0
    %3916 = vmatprep.subr.mxu0 0.0
    %3917 = vmatpush2.msra.mxu0 0.0
    %3918 = vmatprep.subr.mxu0 0.0
    %3919 = vmatpush2.msra.mxu0 0.0
    %3920 = vmatprep.subr.mxu0 0.0
    %3921 = vmatpush2.msra.mxu0 0.0
    %3922 = vmatprep.subr.mxu0 0.0
    %3923 = vmatpush2.msra.mxu0 0.0
    %3924 = vmatprep.subr.mxu0 0.0
    %3925 = vmatpush2.msra.mxu0 0.0
    %3926 = vmatprep.mubr.f32.mxu0 0.0
    %3927 = vmatmul.mubr.f32.gmra.mxu0 %v3575
    %v3928 = vpop.f32.mrf.mxu0
    %v3929 = vadd.f32 0.0, %v3928
    %v3930 = vpop.f32.mrf.mxu0
    %3931 = vdwg.mxu0
    %v3932 = vadd.f32 %v277, %v3929
    %3933 = vmatprep.subr.mxu0 0.0
    %3934 = vmatpush1.msra.mxu0 0.0
    %3935 = vmatprep.subr.mxu0 0.0
    %3936 = vmatpush1.msra.mxu0 0.0
    %3937 = vmatprep.subr.mxu0 0.0
    %3938 = vmatpush1.msra.mxu0 0.0
    %3939 = vmatprep.subr.mxu0 0.0
    %3940 = vmatpush1.msra.mxu0 0.0
    %3941 = vmatprep.subr.mxu0 0.0
    %3942 = vmatpush1.msra.mxu0 0.0
    %3943 = vmatprep.subr.mxu0 0.0
    %3944 = vmatpush1.msra.mxu0 0.0
    %3945 = vmatprep.subr.mxu0 0.0
    %3946 = vmatpush1.msra.mxu0 0.0
    %3947 = vmatprep.subr.mxu0 0.0
    %3948 = vmatpush1.msra.mxu0 0.0
    %3949 = vmatprep.subr.mxu0 0.0
    %3950 = vmatpush1.msra.mxu0 0.0
    %3951 = vmatprep.subr.mxu0 0.0
    %3952 = vmatpush1.msra.mxu0 0.0
    %3953 = vmatprep.subr.mxu0 0.0
    %3954 = vmatpush1.msra.mxu0 0.0
    %3955 = vmatprep.subr.mxu0 0.0
    %3956 = vmatpush1.msra.mxu0 0.0
    %3957 = vmatprep.subr.mxu0 0.0
    %3958 = vmatpush1.msra.mxu0 %v465
    %3959 = vmatprep.subr.mxu0 0.0
    %3960 = vmatpush1.msra.mxu0 %v464
    %3961 = vmatprep.subr.mxu0 0.0
    %3962 = vmatpush1.msra.mxu0 %v463
    %3963 = vmatprep.subr.mxu0 0.0
    %3964 = vmatpush1.msra.mxu0 %v462
    %3965 = vmatprep.subr.mxu0 0.0
    %3966 = vmatpush2.msra.mxu0 0.0
    %3967 = vmatprep.subr.mxu0 0.0
    %3968 = vmatpush2.msra.mxu0 0.0
    %3969 = vmatprep.subr.mxu0 0.0
    %3970 = vmatpush2.msra.mxu0 0.0
    %3971 = vmatprep.subr.mxu0 0.0
    %3972 = vmatpush2.msra.mxu0 0.0
    %3973 = vmatprep.subr.mxu0 0.0
    %3974 = vmatpush2.msra.mxu0 0.0
    %3975 = vmatprep.subr.mxu0 0.0
    %3976 = vmatpush2.msra.mxu0 0.0
    %3977 = vmatprep.subr.mxu0 0.0
    %3978 = vmatpush2.msra.mxu0 0.0
    %3979 = vmatprep.subr.mxu0 0.0
    %3980 = vmatpush2.msra.mxu0 0.0
    %3981 = vmatprep.subr.mxu0 0.0
    %3982 = vmatpush2.msra.mxu0 0.0
    %3983 = vmatprep.subr.mxu0 0.0
    %3984 = vmatpush2.msra.mxu0 0.0
    %3985 = vmatprep.subr.mxu0 0.0
    %3986 = vmatpush2.msra.mxu0 0.0
    %3987 = vmatprep.subr.mxu0 0.0
    %3988 = vmatpush2.msra.mxu0 0.0
    %3989 = vmatprep.subr.mxu0 0.0
    %3990 = vmatpush2.msra.mxu0 0.0
    %3991 = vmatprep.subr.mxu0 0.0
    %3992 = vmatpush2.msra.mxu0 0.0
    %3993 = vmatprep.subr.mxu0 0.0
    %3994 = vmatpush2.msra.mxu0 0.0
    %3995 = vmatprep.subr.mxu0 0.0
    %3996 = vmatpush2.msra.mxu0 0.0
    %3997 = vmatprep.mubr.f32.mxu0 0.0
    %3998 = vmatmul.mubr.f32.gmra.mxu0 %v3727
    %v3999 = vpop.f32.mrf.mxu0
    %v4000 = vadd.f32 0.0, %v3999
    %v4001 = vpop.f32.mrf.mxu0
    %4002 = vdwg.mxu0
    %v4003 = vadd.f32 %v436, %v4000
    %v4004 = vxor.u32 %v3932, 2147483648
    %v4005 = vmul.f32 %v4004, 1.442695
    %v4006 = vpow.pop %v4005
    %v4007 = vadd.f32 %v4006, 1.0
    %v4008 = vrcp.pop %v4007
    %v4009 = vmul.f32 1.0, %v4008
    %v4010 = vtanh.pop %v3932
    %v4012 = vrot.slane %v3462, 4
    %v4014 = vmul.f32 %v4009, %v4012
    %4016 = vrot.lane.b32.xlu0 %v4010, 64
    %v4017 = vpop.permute.xlu0 %4016
    %v4019 = vmul.f32 %v4009, %v4017
    %4021 = vrot.lane.b32.xlu0 %v4019, 32
    %v4022 = vpop.permute.xlu0 %4021
    %v4024 = vadd.f32 %v4014, %v4022
    %v4025 = vtanh.pop %v4024
    %4027 = vrot.lane.b32.xlu0 %v4025, 64
    %v4028 = vpop.permute.xlu0 %4027
    %v4030 = vmul.f32 %v4009, %v4028
    %v4031 = vxor.u32 %v4003, 2147483648
    %v4032 = vmul.f32 %v4031, 1.442695
    %v4033 = vpow.pop %v4032
    %v4034 = vadd.f32 %v4033, 1.0
    %v4035 = vrcp.pop %v4034
    %v4036 = vmul.f32 1.0, %v4035
    %v4037 = vtanh.pop %v4003
    %v4039 = vrot.slane %v3489, 4
    %v4041 = vmul.f32 %v4036, %v4039
    %4043 = vrot.lane.b32.xlu0 %v4037, 64
    %v4044 = vpop.permute.xlu0 %4043
    %v4046 = vmul.f32 %v4036, %v4044
    %4048 = vrot.lane.b32.xlu0 %v4046, 32
    %v4049 = vpop.permute.xlu0 %4048
    %v4051 = vadd.f32 %v4041, %v4049
    %v4052 = vtanh.pop %v4051
    %4054 = vrot.lane.b32.xlu0 %v4052, 64
    %v4055 = vpop.permute.xlu0 %4054
    %v4057 = vmul.f32 %v4036, %v4055
    %4059 = vrot.lane.b32.xlu0 %v3823, 32
    %v4060 = vpop.permute.xlu0 %4059
    %v4061 = vsel %vm176, %v4060, 0
    %4063 = vmatprep.subr.mxu0 0.0
    %4064 = vmatpush1.msra.mxu0 0.0
    %4065 = vmatprep.subr.mxu0 0.0
    %4066 = vmatpush1.msra.mxu0 0.0
    %4067 = vmatprep.subr.mxu0 0.0
    %4068 = vmatpush1.msra.mxu0 0.0
    %4069 = vmatprep.subr.mxu0 0.0
    %4070 = vmatpush1.msra.mxu0 0.0
    %4071 = vmatprep.subr.mxu0 0.0
    %4072 = vmatpush1.msra.mxu0 0.0
    %4073 = vmatprep.subr.mxu0 0.0
    %4074 = vmatpush1.msra.mxu0 0.0
    %4075 = vmatprep.subr.mxu0 0.0
    %4076 = vmatpush1.msra.mxu0 0.0
    %4077 = vmatprep.subr.mxu0 0.0
    %4078 = vmatpush1.msra.mxu0 0.0
    %4079 = vmatprep.subr.mxu0 0.0
    %4080 = vmatpush1.msra.mxu0 0.0
    %4081 = vmatprep.subr.mxu0 0.0
    %4082 = vmatpush1.msra.mxu0 0.0
    %4083 = vmatprep.subr.mxu0 0.0
    %4084 = vmatpush1.msra.mxu0 0.0
    %4085 = vmatprep.subr.mxu0 0.0
    %4086 = vmatpush1.msra.mxu0 0.0
    %4087 = vmatprep.subr.mxu0 0.0
    %4088 = vmatpush1.msra.mxu0 %v460
    %4089 = vmatprep.subr.mxu0 0.0
    %4090 = vmatpush1.msra.mxu0 %v459
    %4091 = vmatprep.subr.mxu0 0.0
    %4092 = vmatpush1.msra.mxu0 %v458
    %4093 = vmatprep.subr.mxu0 0.0
    %4094 = vmatpush1.msra.mxu0 %v457
    %4095 = vmatprep.subr.mxu0 0.0
    %4096 = vmatpush2.msra.mxu0 0.0
    %4097 = vmatprep.subr.mxu0 0.0
    %4098 = vmatpush2.msra.mxu0 0.0
    %4099 = vmatprep.subr.mxu0 0.0
    %4100 = vmatpush2.msra.mxu0 0.0
    %4101 = vmatprep.subr.mxu0 0.0
    %4102 = vmatpush2.msra.mxu0 0.0
    %4103 = vmatprep.subr.mxu0 0.0
    %4104 = vmatpush2.msra.mxu0 0.0
    %4105 = vmatprep.subr.mxu0 0.0
    %4106 = vmatpush2.msra.mxu0 0.0
    %4107 = vmatprep.subr.mxu0 0.0
    %4108 = vmatpush2.msra.mxu0 0.0
    %4109 = vmatprep.subr.mxu0 0.0
    %4110 = vmatpush2.msra.mxu0 0.0
    %4111 = vmatprep.subr.mxu0 0.0
    %4112 = vmatpush2.msra.mxu0 0.0
    %4113 = vmatprep.subr.mxu0 0.0
    %4114 = vmatpush2.msra.mxu0 0.0
    %4115 = vmatprep.subr.mxu0 0.0
    %4116 = vmatpush2.msra.mxu0 0.0
    %4117 = vmatprep.subr.mxu0 0.0
    %4118 = vmatpush2.msra.mxu0 0.0
    %4119 = vmatprep.subr.mxu0 0.0
    %4120 = vmatpush2.msra.mxu0 0.0
    %4121 = vmatprep.subr.mxu0 0.0
    %4122 = vmatpush2.msra.mxu0 0.0
    %4123 = vmatprep.subr.mxu0 0.0
    %4124 = vmatpush2.msra.mxu0 0.0
    %4125 = vmatprep.subr.mxu0 0.0
    %4126 = vmatpush2.msra.mxu0 0.0
    %4127 = vmatprep.mubr.f32.mxu0 0.0
    %4128 = vmatmul.mubr.f32.gmra.mxu0 %v4061
    %v4129 = vpop.f32.mrf.mxu0
    %v4130 = vadd.f32 0.0, %v4129
    %v4131 = vpop.f32.mrf.mxu0
    %4132 = vdwg.mxu0
    %4134 = vrot.lane.b32.xlu0 %v4030, 32
    %v4135 = vpop.permute.xlu0 %4134
    %v4136 = vsel %vm176, %v4135, 0
    %4138 = vmatprep.subr.mxu0 0.0
    %4139 = vmatpush1.msra.mxu0 0.0
    %4140 = vmatprep.subr.mxu0 0.0
    %4141 = vmatpush1.msra.mxu0 0.0
    %4142 = vmatprep.subr.mxu0 0.0
    %4143 = vmatpush1.msra.mxu0 0.0
    %4144 = vmatprep.subr.mxu0 0.0
    %4145 = vmatpush1.msra.mxu0 0.0
    %4146 = vmatprep.subr.mxu0 0.0
    %4147 = vmatpush1.msra.mxu0 0.0
    %4148 = vmatprep.subr.mxu0 0.0
    %4149 = vmatpush1.msra.mxu0 0.0
    %4150 = vmatprep.subr.mxu0 0.0
    %4151 = vmatpush1.msra.mxu0 0.0
    %4152 = vmatprep.subr.mxu0 0.0
    %4153 = vmatpush1.msra.mxu0 0.0
    %4154 = vmatprep.subr.mxu0 0.0
    %4155 = vmatpush1.msra.mxu0 0.0
    %4156 = vmatprep.subr.mxu0 0.0
    %4157 = vmatpush1.msra.mxu0 0.0
    %4158 = vmatprep.subr.mxu0 0.0
    %4159 = vmatpush1.msra.mxu0 0.0
    %4160 = vmatprep.subr.mxu0 0.0
    %4161 = vmatpush1.msra.mxu0 0.0
    %4162 = vmatprep.subr.mxu0 0.0
    %4163 = vmatpush1.msra.mxu0 %v456
    %4164 = vmatprep.subr.mxu0 0.0
    %4165 = vmatpush1.msra.mxu0 %v455
    %4166 = vmatprep.subr.mxu0 0.0
    %4167 = vmatpush1.msra.mxu0 %v454
    %4168 = vmatprep.subr.mxu0 0.0
    %4169 = vmatpush1.msra.mxu0 %v453
    %4170 = vmatprep.subr.mxu0 0.0
    %4171 = vmatpush2.msra.mxu0 0.0
    %4172 = vmatprep.subr.mxu0 0.0
    %4173 = vmatpush2.msra.mxu0 0.0
    %4174 = vmatprep.subr.mxu0 0.0
    %4175 = vmatpush2.msra.mxu0 0.0
    %4176 = vmatprep.subr.mxu0 0.0
    %4177 = vmatpush2.msra.mxu0 0.0
    %4178 = vmatprep.subr.mxu0 0.0
    %4179 = vmatpush2.msra.mxu0 0.0
    %4180 = vmatprep.subr.mxu0 0.0
    %4181 = vmatpush2.msra.mxu0 0.0
    %4182 = vmatprep.subr.mxu0 0.0
    %4183 = vmatpush2.msra.mxu0 0.0
    %4184 = vmatprep.subr.mxu0 0.0
    %4185 = vmatpush2.msra.mxu0 0.0
    %4186 = vmatprep.subr.mxu0 0.0
    %4187 = vmatpush2.msra.mxu0 0.0
    %4188 = vmatprep.subr.mxu0 0.0
    %4189 = vmatpush2.msra.mxu0 0.0
    %4190 = vmatprep.subr.mxu0 0.0
    %4191 = vmatpush2.msra.mxu0 0.0
    %4192 = vmatprep.subr.mxu0 0.0
    %4193 = vmatpush2.msra.mxu0 0.0
    %4194 = vmatprep.subr.mxu0 0.0
    %4195 = vmatpush2.msra.mxu0 0.0
    %4196 = vmatprep.subr.mxu0 0.0
    %4197 = vmatpush2.msra.mxu0 0.0
    %4198 = vmatprep.subr.mxu0 0.0
    %4199 = vmatpush2.msra.mxu0 0.0
    %4200 = vmatprep.subr.mxu0 0.0
    %4201 = vmatpush2.msra.mxu0 0.0
    %4202 = vmatprep.mubr.f32.mxu0 0.0
    %4203 = vmatmul.mubr.f32.gmra.mxu0 %v4136
    %v4204 = vpop.f32.mrf.mxu0
    %v4205 = vadd.f32 %v4130, %v4204
    %v4206 = vpop.f32.mrf.mxu0
    %4207 = vdwg.mxu0
    %v4208 = vadd.f32 %v4205, %v821
    %4210 = vrot.lane.b32.xlu0 %v3847, 32
    %v4211 = vpop.permute.xlu0 %4210
    %v4212 = vsel %vm176, %v4211, 0
    %4214 = vmatprep.subr.mxu0 0.0
    %4215 = vmatpush1.msra.mxu0 0.0
    %4216 = vmatprep.subr.mxu0 0.0
    %4217 = vmatpush1.msra.mxu0 0.0
    %4218 = vmatprep.subr.mxu0 0.0
    %4219 = vmatpush1.msra.mxu0 0.0
    %4220 = vmatprep.subr.mxu0 0.0
    %4221 = vmatpush1.msra.mxu0 0.0
    %4222 = vmatprep.subr.mxu0 0.0
    %4223 = vmatpush1.msra.mxu0 0.0
    %4224 = vmatprep.subr.mxu0 0.0
    %4225 = vmatpush1.msra.mxu0 0.0
    %4226 = vmatprep.subr.mxu0 0.0
    %4227 = vmatpush1.msra.mxu0 0.0
    %4228 = vmatprep.subr.mxu0 0.0
    %4229 = vmatpush1.msra.mxu0 0.0
    %4230 = vmatprep.subr.mxu0 0.0
    %4231 = vmatpush1.msra.mxu0 0.0
    %4232 = vmatprep.subr.mxu0 0.0
    %4233 = vmatpush1.msra.mxu0 0.0
    %4234 = vmatprep.subr.mxu0 0.0
    %4235 = vmatpush1.msra.mxu0 0.0
    %4236 = vmatprep.subr.mxu0 0.0
    %4237 = vmatpush1.msra.mxu0 0.0
    %4238 = vmatprep.subr.mxu0 0.0
    %4239 = vmatpush1.msra.mxu0 %v473
    %4240 = vmatprep.subr.mxu0 0.0
    %4241 = vmatpush1.msra.mxu0 %v472
    %4242 = vmatprep.subr.mxu0 0.0
    %4243 = vmatpush1.msra.mxu0 %v471
    %4244 = vmatprep.subr.mxu0 0.0
    %4245 = vmatpush1.msra.mxu0 %v470
    %4246 = vmatprep.subr.mxu0 0.0
    %4247 = vmatpush2.msra.mxu0 0.0
    %4248 = vmatprep.subr.mxu0 0.0
    %4249 = vmatpush2.msra.mxu0 0.0
    %4250 = vmatprep.subr.mxu0 0.0
    %4251 = vmatpush2.msra.mxu0 0.0
    %4252 = vmatprep.subr.mxu0 0.0
    %4253 = vmatpush2.msra.mxu0 0.0
    %4254 = vmatprep.subr.mxu0 0.0
    %4255 = vmatpush2.msra.mxu0 0.0
    %4256 = vmatprep.subr.mxu0 0.0
    %4257 = vmatpush2.msra.mxu0 0.0
    %4258 = vmatprep.subr.mxu0 0.0
    %4259 = vmatpush2.msra.mxu0 0.0
    %4260 = vmatprep.subr.mxu0 0.0
    %4261 = vmatpush2.msra.mxu0 0.0
    %4262 = vmatprep.subr.mxu0 0.0
    %4263 = vmatpush2.msra.mxu0 0.0
    %4264 = vmatprep.subr.mxu0 0.0
    %4265 = vmatpush2.msra.mxu0 0.0
    %4266 = vmatprep.subr.mxu0 0.0
    %4267 = vmatpush2.msra.mxu0 0.0
    %4268 = vmatprep.subr.mxu0 0.0
    %4269 = vmatpush2.msra.mxu0 0.0
    %4270 = vmatprep.subr.mxu0 0.0
    %4271 = vmatpush2.msra.mxu0 0.0
    %4272 = vmatprep.subr.mxu0 0.0
    %4273 = vmatpush2.msra.mxu0 0.0
    %4274 = vmatprep.subr.mxu0 0.0
    %4275 = vmatpush2.msra.mxu0 0.0
    %4276 = vmatprep.subr.mxu0 0.0
    %4277 = vmatpush2.msra.mxu0 0.0
    %4278 = vmatprep.mubr.f32.mxu0 0.0
    %4279 = vmatmul.mubr.f32.gmra.mxu0 %v4212
    %v4280 = vpop.f32.mrf.mxu0
    %v4281 = vadd.f32 0.0, %v4280
    %v4282 = vpop.f32.mrf.mxu0
    %4283 = vdwg.mxu0
    %4285 = vrot.lane.b32.xlu0 %v4057, 32
    %v4286 = vpop.permute.xlu0 %4285
    %v4287 = vsel %vm176, %v4286, 0
    %4289 = vmatprep.subr.mxu0 0.0
    %4290 = vmatpush1.msra.mxu0 0.0
    %4291 = vmatprep.subr.mxu0 0.0
    %4292 = vmatpush1.msra.mxu0 0.0
    %4293 = vmatprep.subr.mxu0 0.0
    %4294 = vmatpush1.msra.mxu0 0.0
    %4295 = vmatprep.subr.mxu0 0.0
    %4296 = vmatpush1.msra.mxu0 0.0
    %4297 = vmatprep.subr.mxu0 0.0
    %4298 = vmatpush1.msra.mxu0 0.0
    %4299 = vmatprep.subr.mxu0 0.0
    %4300 = vmatpush1.msra.mxu0 0.0
    %4301 = vmatprep.subr.mxu0 0.0
    %4302 = vmatpush1.msra.mxu0 0.0
    %4303 = vmatprep.subr.mxu0 0.0
    %4304 = vmatpush1.msra.mxu0 0.0
    %4305 = vmatprep.subr.mxu0 0.0
    %4306 = vmatpush1.msra.mxu0 0.0
    %4307 = vmatprep.subr.mxu0 0.0
    %4308 = vmatpush1.msra.mxu0 0.0
    %4309 = vmatprep.subr.mxu0 0.0
    %4310 = vmatpush1.msra.mxu0 0.0
    %4311 = vmatprep.subr.mxu0 0.0
    %4312 = vmatpush1.msra.mxu0 0.0
    %4313 = vmatprep.subr.mxu0 0.0
    %4314 = vmatpush1.msra.mxu0 %v469
    %4315 = vmatprep.subr.mxu0 0.0
    %4316 = vmatpush1.msra.mxu0 %v468
    %4317 = vmatprep.subr.mxu0 0.0
    %4318 = vmatpush1.msra.mxu0 %v467
    %4319 = vmatprep.subr.mxu0 0.0
    %4320 = vmatpush1.msra.mxu0 %v466
    %4321 = vmatprep.subr.mxu0 0.0
    %4322 = vmatpush2.msra.mxu0 0.0
    %4323 = vmatprep.subr.mxu0 0.0
    %4324 = vmatpush2.msra.mxu0 0.0
    %4325 = vmatprep.subr.mxu0 0.0
    %4326 = vmatpush2.msra.mxu0 0.0
    %4327 = vmatprep.subr.mxu0 0.0
    %4328 = vmatpush2.msra.mxu0 0.0
    %4329 = vmatprep.subr.mxu0 0.0
    %4330 = vmatpush2.msra.mxu0 0.0
    %4331 = vmatprep.subr.mxu0 0.0
    %4332 = vmatpush2.msra.mxu0 0.0
    %4333 = vmatprep.subr.mxu0 0.0
    %4334 = vmatpush2.msra.mxu0 0.0
    %4335 = vmatprep.subr.mxu0 0.0
    %4336 = vmatpush2.msra.mxu0 0.0
    %4337 = vmatprep.subr.mxu0 0.0
    %4338 = vmatpush2.msra.mxu0 0.0
    %4339 = vmatprep.subr.mxu0 0.0
    %4340 = vmatpush2.msra.mxu0 0.0
    %4341 = vmatprep.subr.mxu0 0.0
    %4342 = vmatpush2.msra.mxu0 0.0
    %4343 = vmatprep.subr.mxu0 0.0
    %4344 = vmatpush2.msra.mxu0 0.0
    %4345 = vmatprep.subr.mxu0 0.0
    %4346 = vmatpush2.msra.mxu0 0.0
    %4347 = vmatprep.subr.mxu0 0.0
    %4348 = vmatpush2.msra.mxu0 0.0
    %4349 = vmatprep.subr.mxu0 0.0
    %4350 = vmatpush2.msra.mxu0 0.0
    %4351 = vmatprep.subr.mxu0 0.0
    %4352 = vmatpush2.msra.mxu0 0.0
    %4353 = vmatprep.mubr.f32.mxu0 0.0
    %4354 = vmatmul.mubr.f32.gmra.mxu0 %v4287
    %v4355 = vpop.f32.mrf.mxu0
    %v4356 = vadd.f32 %v4281, %v4355
    %v4357 = vpop.f32.mrf.mxu0
    %4358 = vdwg.mxu0
    %v4359 = vadd.f32 %v4356, %v973
    %v4360 = vxor.u32 %v4208, 2147483648
    %v4361 = vmul.f32 %v4360, 1.442695
    %v4362 = vpow.pop %v4361
    %v4363 = vadd.f32 %v4362, 1.0
    %v4364 = vrcp.pop %v4363
    %v4365 = vmul.f32 1.0, %v4364
    %v4366 = vtanh.pop %v4208
    %v4367 = vmul.f32 %v4365, %v3817
    %4369 = vrot.lane.b32.xlu0 %v4366, 64
    %v4370 = vpop.permute.xlu0 %4369
    %v4372 = vmul.f32 %v4365, %v4370
    %4374 = vrot.lane.b32.xlu0 %v4372, 32
    %v4375 = vpop.permute.xlu0 %4374
    %v4377 = vadd.f32 %v4367, %v4375
    %v4378 = vtanh.pop %v4377
    %4380 = vrot.lane.b32.xlu0 %v4378, 64
    %v4381 = vpop.permute.xlu0 %4380
    %v4383 = vmul.f32 %v4365, %v4381
    %v4384 = vxor.u32 %v4359, 2147483648
    %v4385 = vmul.f32 %v4384, 1.442695
    %v4386 = vpow.pop %v4385
    %v4387 = vadd.f32 %v4386, 1.0
    %v4388 = vrcp.pop %v4387
    %v4389 = vmul.f32 1.0, %v4388
    %v4390 = vtanh.pop %v4359
    %v4391 = vmul.f32 %v4389, %v3841
    %4393 = vrot.lane.b32.xlu0 %v4390, 64
    %v4394 = vpop.permute.xlu0 %4393
    %v4396 = vmul.f32 %v4389, %v4394
    %4398 = vrot.lane.b32.xlu0 %v4396, 32
    %v4399 = vpop.permute.xlu0 %4398
    %v4401 = vadd.f32 %v4391, %v4399
    %v4402 = vtanh.pop %v4401
    %4404 = vrot.lane.b32.xlu0 %v4402, 64
    %v4405 = vpop.permute.xlu0 %4404
    %v4407 = vmul.f32 %v4389, %v4405
    %vm4408 = vcmp.eq.s32.totalorder %v476, 6
    %v4409 = vsel %vm4408, 1, 0
    %4410 = vset.pattern.permute.xlu0 0
    %4411 = vperm.xlu0 %4410, %v4409
    %v4412 = vpop.permute.xlu0 %4411
    %vm4413 = vcmp.eq.s32.totalorder %v4412, 1
    %v4414 = vsel %vm4413, %v4383, %v3854
    %vm4415 = vcmp.eq.s32.totalorder %v478, 6
    %v4416 = vsel %vm4415, 1, 0
    %4417 = vset.pattern.permute.xlu0 0
    %4418 = vperm.xlu0 %4417, %v4416
    %v4419 = vpop.permute.xlu0 %4418
    %vm4420 = vcmp.eq.s32.totalorder %v4419, 1
    %v4421 = vsel %vm4420, %v4407, %v3861
    %4422 = vmatprep.subr.mxu0 0.0
    %4423 = vmatpush1.msra.mxu0 0.0
    %4424 = vmatprep.subr.mxu0 0.0
    %4425 = vmatpush1.msra.mxu0 0.0
    %4426 = vmatprep.subr.mxu0 0.0
    %4427 = vmatpush1.msra.mxu0 0.0
    %4428 = vmatprep.subr.mxu0 0.0
    %4429 = vmatpush1.msra.mxu0 0.0
    %4430 = vmatprep.subr.mxu0 0.0
    %4431 = vmatpush1.msra.mxu0 0.0
    %4432 = vmatprep.subr.mxu0 0.0
    %4433 = vmatpush1.msra.mxu0 0.0
    %4434 = vmatprep.subr.mxu0 0.0
    %4435 = vmatpush1.msra.mxu0 0.0
    %4436 = vmatprep.subr.mxu0 0.0
    %4437 = vmatpush1.msra.mxu0 0.0
    %4438 = vmatprep.subr.mxu0 0.0
    %4439 = vmatpush1.msra.mxu0 0.0
    %4440 = vmatprep.subr.mxu0 0.0
    %4441 = vmatpush1.msra.mxu0 0.0
    %4442 = vmatprep.subr.mxu0 0.0
    %4443 = vmatpush1.msra.mxu0 0.0
    %4444 = vmatprep.subr.mxu0 0.0
    %4445 = vmatpush1.msra.mxu0 0.0
    %4446 = vmatprep.subr.mxu0 0.0
    %4447 = vmatpush1.msra.mxu0 %v452
    %4448 = vmatprep.subr.mxu0 0.0
    %4449 = vmatpush1.msra.mxu0 %v451
    %4450 = vmatprep.subr.mxu0 0.0
    %4451 = vmatpush1.msra.mxu0 %v450
    %4452 = vmatprep.subr.mxu0 0.0
    %4453 = vmatpush1.msra.mxu0 %v449
    %4454 = vmatprep.subr.mxu0 0.0
    %4455 = vmatpush2.msra.mxu0 0.0
    %4456 = vmatprep.subr.mxu0 0.0
    %4457 = vmatpush2.msra.mxu0 0.0
    %4458 = vmatprep.subr.mxu0 0.0
    %4459 = vmatpush2.msra.mxu0 0.0
    %4460 = vmatprep.subr.mxu0 0.0
    %4461 = vmatpush2.msra.mxu0 0.0
    %4462 = vmatprep.subr.mxu0 0.0
    %4463 = vmatpush2.msra.mxu0 0.0
    %4464 = vmatprep.subr.mxu0 0.0
    %4465 = vmatpush2.msra.mxu0 0.0
    %4466 = vmatprep.subr.mxu0 0.0
    %4467 = vmatpush2.msra.mxu0 0.0
    %4468 = vmatprep.subr.mxu0 0.0
    %4469 = vmatpush2.msra.mxu0 0.0
    %4470 = vmatprep.subr.mxu0 0.0
    %4471 = vmatpush2.msra.mxu0 0.0
    %4472 = vmatprep.subr.mxu0 0.0
    %4473 = vmatpush2.msra.mxu0 0.0
    %4474 = vmatprep.subr.mxu0 0.0
    %4475 = vmatpush2.msra.mxu0 0.0
    %4476 = vmatprep.subr.mxu0 0.0
    %4477 = vmatpush2.msra.mxu0 0.0
    %4478 = vmatprep.subr.mxu0 0.0
    %4479 = vmatpush2.msra.mxu0 0.0
    %4480 = vmatprep.subr.mxu0 0.0
    %4481 = vmatpush2.msra.mxu0 0.0
    %4482 = vmatprep.subr.mxu0 0.0
    %4483 = vmatpush2.msra.mxu0 0.0
    %4484 = vmatprep.subr.mxu0 0.0
    %4485 = vmatpush2.msra.mxu0 0.0
    %4486 = vmatprep.mubr.f32.mxu0 0.0
    %4487 = vmatmul.mubr.f32.gmra.mxu0 %v4136
    %v4488 = vpop.f32.mrf.mxu0
    %v4489 = vadd.f32 0.0, %v4488
    %v4490 = vpop.f32.mrf.mxu0
    %4491 = vdwg.mxu0
    %v4493 = vrot.slane %v4489, 4
    %v4495 = vadd.f32 %v277, %v4493
    %4496 = vmatprep.subr.mxu0 0.0
    %4497 = vmatpush1.msra.mxu0 0.0
    %4498 = vmatprep.subr.mxu0 0.0
    %4499 = vmatpush1.msra.mxu0 0.0
    %4500 = vmatprep.subr.mxu0 0.0
    %4501 = vmatpush1.msra.mxu0 0.0
    %4502 = vmatprep.subr.mxu0 0.0
    %4503 = vmatpush1.msra.mxu0 0.0
    %4504 = vmatprep.subr.mxu0 0.0
    %4505 = vmatpush1.msra.mxu0 0.0
    %4506 = vmatprep.subr.mxu0 0.0
    %4507 = vmatpush1.msra.mxu0 0.0
    %4508 = vmatprep.subr.mxu0 0.0
    %4509 = vmatpush1.msra.mxu0 0.0
    %4510 = vmatprep.subr.mxu0 0.0
    %4511 = vmatpush1.msra.mxu0 0.0
    %4512 = vmatprep.subr.mxu0 0.0
    %4513 = vmatpush1.msra.mxu0 0.0
    %4514 = vmatprep.subr.mxu0 0.0
    %4515 = vmatpush1.msra.mxu0 0.0
    %4516 = vmatprep.subr.mxu0 0.0
    %4517 = vmatpush1.msra.mxu0 0.0
    %4518 = vmatprep.subr.mxu0 0.0
    %4519 = vmatpush1.msra.mxu0 0.0
    %4520 = vmatprep.subr.mxu0 0.0
    %4521 = vmatpush1.msra.mxu0 %v465
    %4522 = vmatprep.subr.mxu0 0.0
    %4523 = vmatpush1.msra.mxu0 %v464
    %4524 = vmatprep.subr.mxu0 0.0
    %4525 = vmatpush1.msra.mxu0 %v463
    %4526 = vmatprep.subr.mxu0 0.0
    %4527 = vmatpush1.msra.mxu0 %v462
    %4528 = vmatprep.subr.mxu0 0.0
    %4529 = vmatpush2.msra.mxu0 0.0
    %4530 = vmatprep.subr.mxu0 0.0
    %4531 = vmatpush2.msra.mxu0 0.0
    %4532 = vmatprep.subr.mxu0 0.0
    %4533 = vmatpush2.msra.mxu0 0.0
    %4534 = vmatprep.subr.mxu0 0.0
    %4535 = vmatpush2.msra.mxu0 0.0
    %4536 = vmatprep.subr.mxu0 0.0
    %4537 = vmatpush2.msra.mxu0 0.0
    %4538 = vmatprep.subr.mxu0 0.0
    %4539 = vmatpush2.msra.mxu0 0.0
    %4540 = vmatprep.subr.mxu0 0.0
    %4541 = vmatpush2.msra.mxu0 0.0
    %4542 = vmatprep.subr.mxu0 0.0
    %4543 = vmatpush2.msra.mxu0 0.0
    %4544 = vmatprep.subr.mxu0 0.0
    %4545 = vmatpush2.msra.mxu0 0.0
    %4546 = vmatprep.subr.mxu0 0.0
    %4547 = vmatpush2.msra.mxu0 0.0
    %4548 = vmatprep.subr.mxu0 0.0
    %4549 = vmatpush2.msra.mxu0 0.0
    %4550 = vmatprep.subr.mxu0 0.0
    %4551 = vmatpush2.msra.mxu0 0.0
    %4552 = vmatprep.subr.mxu0 0.0
    %4553 = vmatpush2.msra.mxu0 0.0
    %4554 = vmatprep.subr.mxu0 0.0
    %4555 = vmatpush2.msra.mxu0 0.0
    %4556 = vmatprep.subr.mxu0 0.0
    %4557 = vmatpush2.msra.mxu0 0.0
    %4558 = vmatprep.subr.mxu0 0.0
    %4559 = vmatpush2.msra.mxu0 0.0
    %4560 = vmatprep.mubr.f32.mxu0 0.0
    %4561 = vmatmul.mubr.f32.gmra.mxu0 %v4287
    %v4562 = vpop.f32.mrf.mxu0
    %v4563 = vadd.f32 0.0, %v4562
    %v4564 = vpop.f32.mrf.mxu0
    %4565 = vdwg.mxu0
    %v4567 = vrot.slane %v4563, 4
    %v4569 = vadd.f32 %v436, %v4567
    %v4570 = vxor.u32 %v4495, 2147483648
    %v4571 = vmul.f32 %v4570, 1.442695
    %v4572 = vpow.pop %v4571
    %v4573 = vadd.f32 %v4572, 1.0
    %v4574 = vrcp.pop %v4573
    %v4575 = vmul.f32 1.0, %v4574
    %v4576 = vtanh.pop %v4495
    %v4578 = vrot.slane %v4024, 4
    %v4580 = vmul.f32 %v4575, %v4578
    %4582 = vrot.lane.b32.xlu0 %v4576, 64
    %v4583 = vpop.permute.xlu0 %4582
    %v4585 = vmul.f32 %v4575, %v4583
    %4587 = vrot.lane.b32.xlu0 %v4585, 32
    %v4588 = vpop.permute.xlu0 %4587
    %v4590 = vadd.f32 %v4580, %v4588
    %v4591 = vtanh.pop %v4590
    %4593 = vrot.lane.b32.xlu0 %v4591, 64
    %v4594 = vpop.permute.xlu0 %4593
    %v4596 = vmul.f32 %v4575, %v4594
    %v4597 = vxor.u32 %v4569, 2147483648
    %v4598 = vmul.f32 %v4597, 1.442695
    %v4599 = vpow.pop %v4598
    %v4600 = vadd.f32 %v4599, 1.0
    %v4601 = vrcp.pop %v4600
    %v4602 = vmul.f32 1.0, %v4601
    %v4603 = vtanh.pop %v4569
    %v4605 = vrot.slane %v4051, 4
    %v4607 = vmul.f32 %v4602, %v4605
    %4609 = vrot.lane.b32.xlu0 %v4603, 64
    %v4610 = vpop.permute.xlu0 %4609
    %v4612 = vmul.f32 %v4602, %v4610
    %4614 = vrot.lane.b32.xlu0 %v4612, 32
    %v4615 = vpop.permute.xlu0 %4614
    %v4617 = vadd.f32 %v4607, %v4615
    %v4618 = vtanh.pop %v4617
    %4620 = vrot.lane.b32.xlu0 %v4618, 64
    %v4621 = vpop.permute.xlu0 %4620
    %v4623 = vmul.f32 %v4602, %v4621
    %4625 = vrot.lane.b32.xlu0 %v4383, 32
    %v4626 = vpop.permute.xlu0 %4625
    %v4627 = vsel %vm176, %v4626, 0
    %4629 = vmatprep.subr.mxu0 0.0
    %4630 = vmatpush1.msra.mxu0 0.0
    %4631 = vmatprep.subr.mxu0 0.0
    %4632 = vmatpush1.msra.mxu0 0.0
    %4633 = vmatprep.subr.mxu0 0.0
    %4634 = vmatpush1.msra.mxu0 0.0
    %4635 = vmatprep.subr.mxu0 0.0
    %4636 = vmatpush1.msra.mxu0 0.0
    %4637 = vmatprep.subr.mxu0 0.0
    %4638 = vmatpush1.msra.mxu0 0.0
    %4639 = vmatprep.subr.mxu0 0.0
    %4640 = vmatpush1.msra.mxu0 0.0
    %4641 = vmatprep.subr.mxu0 0.0
    %4642 = vmatpush1.msra.mxu0 0.0
    %4643 = vmatprep.subr.mxu0 0.0
    %4644 = vmatpush1.msra.mxu0 0.0
    %4645 = vmatprep.subr.mxu0 0.0
    %4646 = vmatpush1.msra.mxu0 0.0
    %4647 = vmatprep.subr.mxu0 0.0
    %4648 = vmatpush1.msra.mxu0 0.0
    %4649 = vmatprep.subr.mxu0 0.0
    %4650 = vmatpush1.msra.mxu0 0.0
    %4651 = vmatprep.subr.mxu0 0.0
    %4652 = vmatpush1.msra.mxu0 0.0
    %4653 = vmatprep.subr.mxu0 0.0
    %4654 = vmatpush1.msra.mxu0 %v460
    %4655 = vmatprep.subr.mxu0 0.0
    %4656 = vmatpush1.msra.mxu0 %v459
    %4657 = vmatprep.subr.mxu0 0.0
    %4658 = vmatpush1.msra.mxu0 %v458
    %4659 = vmatprep.subr.mxu0 0.0
    %4660 = vmatpush1.msra.mxu0 %v457
    %4661 = vmatprep.subr.mxu0 0.0
    %4662 = vmatpush2.msra.mxu0 0.0
    %4663 = vmatprep.subr.mxu0 0.0
    %4664 = vmatpush2.msra.mxu0 0.0
    %4665 = vmatprep.subr.mxu0 0.0
    %4666 = vmatpush2.msra.mxu0 0.0
    %4667 = vmatprep.subr.mxu0 0.0
    %4668 = vmatpush2.msra.mxu0 0.0
    %4669 = vmatprep.subr.mxu0 0.0
    %4670 = vmatpush2.msra.mxu0 0.0
    %4671 = vmatprep.subr.mxu0 0.0
    %4672 = vmatpush2.msra.mxu0 0.0
    %4673 = vmatprep.subr.mxu0 0.0
    %4674 = vmatpush2.msra.mxu0 0.0
    %4675 = vmatprep.subr.mxu0 0.0
    %4676 = vmatpush2.msra.mxu0 0.0
    %4677 = vmatprep.subr.mxu0 0.0
    %4678 = vmatpush2.msra.mxu0 0.0
    %4679 = vmatprep.subr.mxu0 0.0
    %4680 = vmatpush2.msra.mxu0 0.0
    %4681 = vmatprep.subr.mxu0 0.0
    %4682 = vmatpush2.msra.mxu0 0.0
    %4683 = vmatprep.subr.mxu0 0.0
    %4684 = vmatpush2.msra.mxu0 0.0
    %4685 = vmatprep.subr.mxu0 0.0
    %4686 = vmatpush2.msra.mxu0 0.0
    %4687 = vmatprep.subr.mxu0 0.0
    %4688 = vmatpush2.msra.mxu0 0.0
    %4689 = vmatprep.subr.mxu0 0.0
    %4690 = vmatpush2.msra.mxu0 0.0
    %4691 = vmatprep.subr.mxu0 0.0
    %4692 = vmatpush2.msra.mxu0 0.0
    %4693 = vmatprep.mubr.f32.mxu0 0.0
    %4694 = vmatmul.mubr.f32.gmra.mxu0 %v4627
    %v4695 = vpop.f32.mrf.mxu0
    %v4696 = vadd.f32 0.0, %v4695
    %v4697 = vpop.f32.mrf.mxu0
    %4698 = vdwg.mxu0
    %v4700 = vrot.slane %v4596, 4
    %4701 = vrot.lane.b32.xlu0 %v4700, 32
    %v4702 = vpop.permute.xlu0 %4701
    %v4703 = vsel %vm176, %v4702, 0
    %4705 = vmatprep.subr.mxu0 0.0
    %4706 = vmatpush1.msra.mxu0 0.0
    %4707 = vmatprep.subr.mxu0 0.0
    %4708 = vmatpush1.msra.mxu0 0.0
    %4709 = vmatprep.subr.mxu0 0.0
    %4710 = vmatpush1.msra.mxu0 0.0
    %4711 = vmatprep.subr.mxu0 0.0
    %4712 = vmatpush1.msra.mxu0 0.0
    %4713 = vmatprep.subr.mxu0 0.0
    %4714 = vmatpush1.msra.mxu0 0.0
    %4715 = vmatprep.subr.mxu0 0.0
    %4716 = vmatpush1.msra.mxu0 0.0
    %4717 = vmatprep.subr.mxu0 0.0
    %4718 = vmatpush1.msra.mxu0 0.0
    %4719 = vmatprep.subr.mxu0 0.0
    %4720 = vmatpush1.msra.mxu0 0.0
    %4721 = vmatprep.subr.mxu0 0.0
    %4722 = vmatpush1.msra.mxu0 0.0
    %4723 = vmatprep.subr.mxu0 0.0
    %4724 = vmatpush1.msra.mxu0 0.0
    %4725 = vmatprep.subr.mxu0 0.0
    %4726 = vmatpush1.msra.mxu0 0.0
    %4727 = vmatprep.subr.mxu0 0.0
    %4728 = vmatpush1.msra.mxu0 0.0
    %4729 = vmatprep.subr.mxu0 0.0
    %4730 = vmatpush1.msra.mxu0 %v456
    %4731 = vmatprep.subr.mxu0 0.0
    %4732 = vmatpush1.msra.mxu0 %v455
    %4733 = vmatprep.subr.mxu0 0.0
    %4734 = vmatpush1.msra.mxu0 %v454
    %4735 = vmatprep.subr.mxu0 0.0
    %4736 = vmatpush1.msra.mxu0 %v453
    %4737 = vmatprep.subr.mxu0 0.0
    %4738 = vmatpush2.msra.mxu0 0.0
    %4739 = vmatprep.subr.mxu0 0.0
    %4740 = vmatpush2.msra.mxu0 0.0
    %4741 = vmatprep.subr.mxu0 0.0
    %4742 = vmatpush2.msra.mxu0 0.0
    %4743 = vmatprep.subr.mxu0 0.0
    %4744 = vmatpush2.msra.mxu0 0.0
    %4745 = vmatprep.subr.mxu0 0.0
    %4746 = vmatpush2.msra.mxu0 0.0
    %4747 = vmatprep.subr.mxu0 0.0
    %4748 = vmatpush2.msra.mxu0 0.0
    %4749 = vmatprep.subr.mxu0 0.0
    %4750 = vmatpush2.msra.mxu0 0.0
    %4751 = vmatprep.subr.mxu0 0.0
    %4752 = vmatpush2.msra.mxu0 0.0
    %4753 = vmatprep.subr.mxu0 0.0
    %4754 = vmatpush2.msra.mxu0 0.0
    %4755 = vmatprep.subr.mxu0 0.0
    %4756 = vmatpush2.msra.mxu0 0.0
    %4757 = vmatprep.subr.mxu0 0.0
    %4758 = vmatpush2.msra.mxu0 0.0
    %4759 = vmatprep.subr.mxu0 0.0
    %4760 = vmatpush2.msra.mxu0 0.0
    %4761 = vmatprep.subr.mxu0 0.0
    %4762 = vmatpush2.msra.mxu0 0.0
    %4763 = vmatprep.subr.mxu0 0.0
    %4764 = vmatpush2.msra.mxu0 0.0
    %4765 = vmatprep.subr.mxu0 0.0
    %4766 = vmatpush2.msra.mxu0 0.0
    %4767 = vmatprep.subr.mxu0 0.0
    %4768 = vmatpush2.msra.mxu0 0.0
    %4769 = vmatprep.mubr.f32.mxu0 0.0
    %4770 = vmatmul.mubr.f32.gmra.mxu0 %v4703
    %v4771 = vpop.f32.mrf.mxu0
    %v4772 = vadd.f32 %v4696, %v4771
    %v4773 = vpop.f32.mrf.mxu0
    %4774 = vdwg.mxu0
    %v4775 = vadd.f32 %v4772, %v821
    %4777 = vrot.lane.b32.xlu0 %v4407, 32
    %v4778 = vpop.permute.xlu0 %4777
    %v4779 = vsel %vm176, %v4778, 0
    %4781 = vmatprep.subr.mxu0 0.0
    %4782 = vmatpush1.msra.mxu0 0.0
    %4783 = vmatprep.subr.mxu0 0.0
    %4784 = vmatpush1.msra.mxu0 0.0
    %4785 = vmatprep.subr.mxu0 0.0
    %4786 = vmatpush1.msra.mxu0 0.0
    %4787 = vmatprep.subr.mxu0 0.0
    %4788 = vmatpush1.msra.mxu0 0.0
    %4789 = vmatprep.subr.mxu0 0.0
    %4790 = vmatpush1.msra.mxu0 0.0
    %4791 = vmatprep.subr.mxu0 0.0
    %4792 = vmatpush1.msra.mxu0 0.0
    %4793 = vmatprep.subr.mxu0 0.0
    %4794 = vmatpush1.msra.mxu0 0.0
    %4795 = vmatprep.subr.mxu0 0.0
    %4796 = vmatpush1.msra.mxu0 0.0
    %4797 = vmatprep.subr.mxu0 0.0
    %4798 = vmatpush1.msra.mxu0 0.0
    %4799 = vmatprep.subr.mxu0 0.0
    %4800 = vmatpush1.msra.mxu0 0.0
    %4801 = vmatprep.subr.mxu0 0.0
    %4802 = vmatpush1.msra.mxu0 0.0
    %4803 = vmatprep.subr.mxu0 0.0
    %4804 = vmatpush1.msra.mxu0 0.0
    %4805 = vmatprep.subr.mxu0 0.0
    %4806 = vmatpush1.msra.mxu0 %v473
    %4807 = vmatprep.subr.mxu0 0.0
    %4808 = vmatpush1.msra.mxu0 %v472
    %4809 = vmatprep.subr.mxu0 0.0
    %4810 = vmatpush1.msra.mxu0 %v471
    %4811 = vmatprep.subr.mxu0 0.0
    %4812 = vmatpush1.msra.mxu0 %v470
    %4813 = vmatprep.subr.mxu0 0.0
    %4814 = vmatpush2.msra.mxu0 0.0
    %4815 = vmatprep.subr.mxu0 0.0
    %4816 = vmatpush2.msra.mxu0 0.0
    %4817 = vmatprep.subr.mxu0 0.0
    %4818 = vmatpush2.msra.mxu0 0.0
    %4819 = vmatprep.subr.mxu0 0.0
    %4820 = vmatpush2.msra.mxu0 0.0
    %4821 = vmatprep.subr.mxu0 0.0
    %4822 = vmatpush2.msra.mxu0 0.0
    %4823 = vmatprep.subr.mxu0 0.0
    %4824 = vmatpush2.msra.mxu0 0.0
    %4825 = vmatprep.subr.mxu0 0.0
    %4826 = vmatpush2.msra.mxu0 0.0
    %4827 = vmatprep.subr.mxu0 0.0
    %4828 = vmatpush2.msra.mxu0 0.0
    %4829 = vmatprep.subr.mxu0 0.0
    %4830 = vmatpush2.msra.mxu0 0.0
    %4831 = vmatprep.subr.mxu0 0.0
    %4832 = vmatpush2.msra.mxu0 0.0
    %4833 = vmatprep.subr.mxu0 0.0
    %4834 = vmatpush2.msra.mxu0 0.0
    %4835 = vmatprep.subr.mxu0 0.0
    %4836 = vmatpush2.msra.mxu0 0.0
    %4837 = vmatprep.subr.mxu0 0.0
    %4838 = vmatpush2.msra.mxu0 0.0
    %4839 = vmatprep.subr.mxu0 0.0
    %4840 = vmatpush2.msra.mxu0 0.0
    %4841 = vmatprep.subr.mxu0 0.0
    %4842 = vmatpush2.msra.mxu0 0.0
    %4843 = vmatprep.subr.mxu0 0.0
    %4844 = vmatpush2.msra.mxu0 0.0
    %4845 = vmatprep.mubr.f32.mxu0 0.0
    %4846 = vmatmul.mubr.f32.gmra.mxu0 %v4779
    %v4847 = vpop.f32.mrf.mxu0
    %v4848 = vadd.f32 0.0, %v4847
    %v4849 = vpop.f32.mrf.mxu0
    %4850 = vdwg.mxu0
    %v4852 = vrot.slane %v4623, 4
    %4853 = vrot.lane.b32.xlu0 %v4852, 32
    %v4854 = vpop.permute.xlu0 %4853
    %v4855 = vsel %vm176, %v4854, 0
    %4857 = vmatprep.subr.mxu0 0.0
    %4858 = vmatpush1.msra.mxu0 0.0
    %4859 = vmatprep.subr.mxu0 0.0
    %4860 = vmatpush1.msra.mxu0 0.0
    %4861 = vmatprep.subr.mxu0 0.0
    %4862 = vmatpush1.msra.mxu0 0.0
    %4863 = vmatprep.subr.mxu0 0.0
    %4864 = vmatpush1.msra.mxu0 0.0
    %4865 = vmatprep.subr.mxu0 0.0
    %4866 = vmatpush1.msra.mxu0 0.0
    %4867 = vmatprep.subr.mxu0 0.0
    %4868 = vmatpush1.msra.mxu0 0.0
    %4869 = vmatprep.subr.mxu0 0.0
    %4870 = vmatpush1.msra.mxu0 0.0
    %4871 = vmatprep.subr.mxu0 0.0
    %4872 = vmatpush1.msra.mxu0 0.0
    %4873 = vmatprep.subr.mxu0 0.0
    %4874 = vmatpush1.msra.mxu0 0.0
    %4875 = vmatprep.subr.mxu0 0.0
    %4876 = vmatpush1.msra.mxu0 0.0
    %4877 = vmatprep.subr.mxu0 0.0
    %4878 = vmatpush1.msra.mxu0 0.0
    %4879 = vmatprep.subr.mxu0 0.0
    %4880 = vmatpush1.msra.mxu0 0.0
    %4881 = vmatprep.subr.mxu0 0.0
    %4882 = vmatpush1.msra.mxu0 %v469
    %4883 = vmatprep.subr.mxu0 0.0
    %4884 = vmatpush1.msra.mxu0 %v468
    %4885 = vmatprep.subr.mxu0 0.0
    %4886 = vmatpush1.msra.mxu0 %v467
    %4887 = vmatprep.subr.mxu0 0.0
    %4888 = vmatpush1.msra.mxu0 %v466
    %4889 = vmatprep.subr.mxu0 0.0
    %4890 = vmatpush2.msra.mxu0 0.0
    %4891 = vmatprep.subr.mxu0 0.0
    %4892 = vmatpush2.msra.mxu0 0.0
    %4893 = vmatprep.subr.mxu0 0.0
    %4894 = vmatpush2.msra.mxu0 0.0
    %4895 = vmatprep.subr.mxu0 0.0
    %4896 = vmatpush2.msra.mxu0 0.0
    %4897 = vmatprep.subr.mxu0 0.0
    %4898 = vmatpush2.msra.mxu0 0.0
    %4899 = vmatprep.subr.mxu0 0.0
    %4900 = vmatpush2.msra.mxu0 0.0
    %4901 = vmatprep.subr.mxu0 0.0
    %4902 = vmatpush2.msra.mxu0 0.0
    %4903 = vmatprep.subr.mxu0 0.0
    %4904 = vmatpush2.msra.mxu0 0.0
    %4905 = vmatprep.subr.mxu0 0.0
    %4906 = vmatpush2.msra.mxu0 0.0
    %4907 = vmatprep.subr.mxu0 0.0
    %4908 = vmatpush2.msra.mxu0 0.0
    %4909 = vmatprep.subr.mxu0 0.0
    %4910 = vmatpush2.msra.mxu0 0.0
    %4911 = vmatprep.subr.mxu0 0.0
    %4912 = vmatpush2.msra.mxu0 0.0
    %4913 = vmatprep.subr.mxu0 0.0
    %4914 = vmatpush2.msra.mxu0 0.0
    %4915 = vmatprep.subr.mxu0 0.0
    %4916 = vmatpush2.msra.mxu0 0.0
    %4917 = vmatprep.subr.mxu0 0.0
    %4918 = vmatpush2.msra.mxu0 0.0
    %4919 = vmatprep.subr.mxu0 0.0
    %4920 = vmatpush2.msra.mxu0 0.0
    %4921 = vmatprep.mubr.f32.mxu0 0.0
    %4922 = vmatmul.mubr.f32.gmra.mxu0 %v4855
    %v4923 = vpop.f32.mrf.mxu0
    %v4924 = vadd.f32 %v4848, %v4923
    %v4925 = vpop.f32.mrf.mxu0
    %4926 = vdwg.mxu0
    %v4927 = vadd.f32 %v4924, %v973
    %v4928 = vxor.u32 %v4775, 2147483648
    %v4929 = vmul.f32 %v4928, 1.442695
    %v4930 = vpow.pop %v4929
    %v4931 = vadd.f32 %v4930, 1.0
    %v4932 = vrcp.pop %v4931
    %v4933 = vmul.f32 1.0, %v4932
    %v4934 = vtanh.pop %v4775
    %v4935 = vmul.f32 %v4933, %v4377
    %4937 = vrot.lane.b32.xlu0 %v4934, 64
    %v4938 = vpop.permute.xlu0 %4937
    %v4940 = vmul.f32 %v4933, %v4938
    %4942 = vrot.lane.b32.xlu0 %v4940, 32
    %v4943 = vpop.permute.xlu0 %4942
    %v4945 = vadd.f32 %v4935, %v4943
    %v4946 = vtanh.pop %v4945
    %4948 = vrot.lane.b32.xlu0 %v4946, 64
    %v4949 = vpop.permute.xlu0 %4948
    %v4951 = vmul.f32 %v4933, %v4949
    %v4952 = vxor.u32 %v4927, 2147483648
    %v4953 = vmul.f32 %v4952, 1.442695
    %v4954 = vpow.pop %v4953
    %v4955 = vadd.f32 %v4954, 1.0
    %v4956 = vrcp.pop %v4955
    %v4957 = vmul.f32 1.0, %v4956
    %v4958 = vtanh.pop %v4927
    %v4959 = vmul.f32 %v4957, %v4401
    %4961 = vrot.lane.b32.xlu0 %v4958, 64
    %v4962 = vpop.permute.xlu0 %4961
    %v4964 = vmul.f32 %v4957, %v4962
    %4966 = vrot.lane.b32.xlu0 %v4964, 32
    %v4967 = vpop.permute.xlu0 %4966
    %v4969 = vadd.f32 %v4959, %v4967
    %v4970 = vtanh.pop %v4969
    %4972 = vrot.lane.b32.xlu0 %v4970, 64
    %v4973 = vpop.permute.xlu0 %4972
    %v4975 = vmul.f32 %v4957, %v4973
    %vm4976 = vcmp.eq.s32.totalorder %v476, 7
    %v4977 = vsel %vm4976, 1, 0
    %4978 = vset.pattern.permute.xlu0 0
    %4979 = vperm.xlu0 %4978, %v4977
    %v4980 = vpop.permute.xlu0 %4979
    %vm4981 = vcmp.eq.s32.totalorder %v4980, 1
    %v4982 = vsel %vm4981, %v4951, %v4414
    %vm4983 = vcmp.eq.s32.totalorder %v478, 7
    %v4984 = vsel %vm4983, 1, 0
    %4985 = vset.pattern.permute.xlu0 0
    %4986 = vperm.xlu0 %4985, %v4984
    %v4987 = vpop.permute.xlu0 %4986
    %vm4988 = vcmp.eq.s32.totalorder %v4987, 1
    %v4989 = vsel %vm4988, %v4975, %v4421
    %4990 = vmatprep.subr.mxu0 0.0
    %4991 = vmatpush1.msra.mxu0 0.0
    %4992 = vmatprep.subr.mxu0 0.0
    %4993 = vmatpush1.msra.mxu0 0.0
    %4994 = vmatprep.subr.mxu0 0.0
    %4995 = vmatpush1.msra.mxu0 0.0
    %4996 = vmatprep.subr.mxu0 0.0
    %4997 = vmatpush1.msra.mxu0 0.0
    %4998 = vmatprep.subr.mxu0 0.0
    %4999 = vmatpush1.msra.mxu0 0.0
    %5000 = vmatprep.subr.mxu0 0.0
    %5001 = vmatpush1.msra.mxu0 0.0
    %5002 = vmatprep.subr.mxu0 0.0
    %5003 = vmatpush1.msra.mxu0 0.0
    %5004 = vmatprep.subr.mxu0 0.0
    %5005 = vmatpush1.msra.mxu0 0.0
    %5006 = vmatprep.subr.mxu0 0.0
    %5007 = vmatpush1.msra.mxu0 0.0
    %5008 = vmatprep.subr.mxu0 0.0
    %5009 = vmatpush1.msra.mxu0 0.0
    %5010 = vmatprep.subr.mxu0 0.0
    %5011 = vmatpush1.msra.mxu0 0.0
    %5012 = vmatprep.subr.mxu0 0.0
    %5013 = vmatpush1.msra.mxu0 0.0
    %5014 = vmatprep.subr.mxu0 0.0
    %5015 = vmatpush1.msra.mxu0 %v452
    %5016 = vmatprep.subr.mxu0 0.0
    %5017 = vmatpush1.msra.mxu0 %v451
    %5018 = vmatprep.subr.mxu0 0.0
    %5019 = vmatpush1.msra.mxu0 %v450
    %5020 = vmatprep.subr.mxu0 0.0
    %5021 = vmatpush1.msra.mxu0 %v449
    %5022 = vmatprep.subr.mxu0 0.0
    %5023 = vmatpush2.msra.mxu0 0.0
    %5024 = vmatprep.subr.mxu0 0.0
    %5025 = vmatpush2.msra.mxu0 0.0
    %5026 = vmatprep.subr.mxu0 0.0
    %5027 = vmatpush2.msra.mxu0 0.0
    %5028 = vmatprep.subr.mxu0 0.0
    %5029 = vmatpush2.msra.mxu0 0.0
    %5030 = vmatprep.subr.mxu0 0.0
    %5031 = vmatpush2.msra.mxu0 0.0
    %5032 = vmatprep.subr.mxu0 0.0
    %5033 = vmatpush2.msra.mxu0 0.0
    %5034 = vmatprep.subr.mxu0 0.0
    %5035 = vmatpush2.msra.mxu0 0.0
    %5036 = vmatprep.subr.mxu0 0.0
    %5037 = vmatpush2.msra.mxu0 0.0
    %5038 = vmatprep.subr.mxu0 0.0
    %5039 = vmatpush2.msra.mxu0 0.0
    %5040 = vmatprep.subr.mxu0 0.0
    %5041 = vmatpush2.msra.mxu0 0.0
    %5042 = vmatprep.subr.mxu0 0.0
    %5043 = vmatpush2.msra.mxu0 0.0
    %5044 = vmatprep.subr.mxu0 0.0
    %5045 = vmatpush2.msra.mxu0 0.0
    %5046 = vmatprep.subr.mxu0 0.0
    %5047 = vmatpush2.msra.mxu0 0.0
    %5048 = vmatprep.subr.mxu0 0.0
    %5049 = vmatpush2.msra.mxu0 0.0
    %5050 = vmatprep.subr.mxu0 0.0
    %5051 = vmatpush2.msra.mxu0 0.0
    %5052 = vmatprep.subr.mxu0 0.0
    %5053 = vmatpush2.msra.mxu0 0.0
    %5054 = vmatprep.mubr.f32.mxu0 0.0
    %5055 = vmatmul.mubr.f32.gmra.mxu0 %v4703
    %v5056 = vpop.f32.mrf.mxu0
    %v5057 = vadd.f32 0.0, %v5056
    %v5058 = vpop.f32.mrf.mxu0
    %5059 = vdwg.mxu0
    %v5060 = vadd.f32 %v282, %v5057
    %5061 = vmatprep.subr.mxu0 0.0
    %5062 = vmatpush1.msra.mxu0 0.0
    %5063 = vmatprep.subr.mxu0 0.0
    %5064 = vmatpush1.msra.mxu0 0.0
    %5065 = vmatprep.subr.mxu0 0.0
    %5066 = vmatpush1.msra.mxu0 0.0
    %5067 = vmatprep.subr.mxu0 0.0
    %5068 = vmatpush1.msra.mxu0 0.0
    %5069 = vmatprep.subr.mxu0 0.0
    %5070 = vmatpush1.msra.mxu0 0.0
    %5071 = vmatprep.subr.mxu0 0.0
    %5072 = vmatpush1.msra.mxu0 0.0
    %5073 = vmatprep.subr.mxu0 0.0
    %5074 = vmatpush1.msra.mxu0 0.0
    %5075 = vmatprep.subr.mxu0 0.0
    %5076 = vmatpush1.msra.mxu0 0.0
    %5077 = vmatprep.subr.mxu0 0.0
    %5078 = vmatpush1.msra.mxu0 0.0
    %5079 = vmatprep.subr.mxu0 0.0
    %5080 = vmatpush1.msra.mxu0 0.0
    %5081 = vmatprep.subr.mxu0 0.0
    %5082 = vmatpush1.msra.mxu0 0.0
    %5083 = vmatprep.subr.mxu0 0.0
    %5084 = vmatpush1.msra.mxu0 0.0
    %5085 = vmatprep.subr.mxu0 0.0
    %5086 = vmatpush1.msra.mxu0 %v465
    %5087 = vmatprep.subr.mxu0 0.0
    %5088 = vmatpush1.msra.mxu0 %v464
    %5089 = vmatprep.subr.mxu0 0.0
    %5090 = vmatpush1.msra.mxu0 %v463
    %5091 = vmatprep.subr.mxu0 0.0
    %5092 = vmatpush1.msra.mxu0 %v462
    %5093 = vmatprep.subr.mxu0 0.0
    %5094 = vmatpush2.msra.mxu0 0.0
    %5095 = vmatprep.subr.mxu0 0.0
    %5096 = vmatpush2.msra.mxu0 0.0
    %5097 = vmatprep.subr.mxu0 0.0
    %5098 = vmatpush2.msra.mxu0 0.0
    %5099 = vmatprep.subr.mxu0 0.0
    %5100 = vmatpush2.msra.mxu0 0.0
    %5101 = vmatprep.subr.mxu0 0.0
    %5102 = vmatpush2.msra.mxu0 0.0
    %5103 = vmatprep.subr.mxu0 0.0
    %5104 = vmatpush2.msra.mxu0 0.0
    %5105 = vmatprep.subr.mxu0 0.0
    %5106 = vmatpush2.msra.mxu0 0.0
    %5107 = vmatprep.subr.mxu0 0.0
    %5108 = vmatpush2.msra.mxu0 0.0
    %5109 = vmatprep.subr.mxu0 0.0
    %5110 = vmatpush2.msra.mxu0 0.0
    %5111 = vmatprep.subr.mxu0 0.0
    %5112 = vmatpush2.msra.mxu0 0.0
    %5113 = vmatprep.subr.mxu0 0.0
    %5114 = vmatpush2.msra.mxu0 0.0
    %5115 = vmatprep.subr.mxu0 0.0
    %5116 = vmatpush2.msra.mxu0 0.0
    %5117 = vmatprep.subr.mxu0 0.0
    %5118 = vmatpush2.msra.mxu0 0.0
    %5119 = vmatprep.subr.mxu0 0.0
    %5120 = vmatpush2.msra.mxu0 0.0
    %5121 = vmatprep.subr.mxu0 0.0
    %5122 = vmatpush2.msra.mxu0 0.0
    %5123 = vmatprep.subr.mxu0 0.0
    %5124 = vmatpush2.msra.mxu0 0.0
    %5125 = vmatprep.mubr.f32.mxu0 0.0
    %5126 = vmatmul.mubr.f32.gmra.mxu0 %v4855
    %v5127 = vpop.f32.mrf.mxu0
    %v5128 = vadd.f32 0.0, %v5127
    %v5129 = vpop.f32.mrf.mxu0
    %5130 = vdwg.mxu0
    %v5131 = vadd.f32 %v441, %v5128
    %v5132 = vxor.u32 %v5060, 2147483648
    %v5133 = vmul.f32 %v5132, 1.442695
    %v5134 = vpow.pop %v5133
    %v5135 = vadd.f32 %v5134, 1.0
    %v5136 = vrcp.pop %v5135
    %v5137 = vmul.f32 1.0, %v5136
    %v5138 = vtanh.pop %v5060
    %v5140 = vrot.slane %v4590, 4
    %v5142 = vmul.f32 %v5137, %v5140
    %5144 = vrot.lane.b32.xlu0 %v5138, 64
    %v5145 = vpop.permute.xlu0 %5144
    %v5147 = vmul.f32 %v5137, %v5145
    %5149 = vrot.lane.b32.xlu0 %v5147, 32
    %v5150 = vpop.permute.xlu0 %5149
    %v5152 = vadd.f32 %v5142, %v5150
    %v5153 = vtanh.pop %v5152
    %5155 = vrot.lane.b32.xlu0 %v5153, 64
    %v5156 = vpop.permute.xlu0 %5155
    %v5158 = vmul.f32 %v5137, %v5156
    %v5159 = vxor.u32 %v5131, 2147483648
    %v5160 = vmul.f32 %v5159, 1.442695
    %v5161 = vpow.pop %v5160
    %v5162 = vadd.f32 %v5161, 1.0
    %v5163 = vrcp.pop %v5162
    %v5164 = vmul.f32 1.0, %v5163
    %v5165 = vtanh.pop %v5131
    %v5167 = vrot.slane %v4617, 4
    %v5169 = vmul.f32 %v5164, %v5167
    %5171 = vrot.lane.b32.xlu0 %v5165, 64
    %v5172 = vpop.permute.xlu0 %5171
    %v5174 = vmul.f32 %v5164, %v5172
    %5176 = vrot.lane.b32.xlu0 %v5174, 32
    %v5177 = vpop.permute.xlu0 %5176
    %v5179 = vadd.f32 %v5169, %v5177
    %v5180 = vtanh.pop %v5179
    %5182 = vrot.lane.b32.xlu0 %v5180, 64
    %v5183 = vpop.permute.xlu0 %5182
    %v5185 = vmul.f32 %v5164, %v5183
    %5187 = vrot.lane.b32.xlu0 %v4951, 32
    %v5188 = vpop.permute.xlu0 %5187
    %v5189 = vsel %vm176, %v5188, 0
    %5191 = vmatprep.subr.mxu0 0.0
    %5192 = vmatpush1.msra.mxu0 0.0
    %5193 = vmatprep.subr.mxu0 0.0
    %5194 = vmatpush1.msra.mxu0 0.0
    %5195 = vmatprep.subr.mxu0 0.0
    %5196 = vmatpush1.msra.mxu0 0.0
    %5197 = vmatprep.subr.mxu0 0.0
    %5198 = vmatpush1.msra.mxu0 0.0
    %5199 = vmatprep.subr.mxu0 0.0
    %5200 = vmatpush1.msra.mxu0 0.0
    %5201 = vmatprep.subr.mxu0 0.0
    %5202 = vmatpush1.msra.mxu0 0.0
    %5203 = vmatprep.subr.mxu0 0.0
    %5204 = vmatpush1.msra.mxu0 0.0
    %5205 = vmatprep.subr.mxu0 0.0
    %5206 = vmatpush1.msra.mxu0 0.0
    %5207 = vmatprep.subr.mxu0 0.0
    %5208 = vmatpush1.msra.mxu0 0.0
    %5209 = vmatprep.subr.mxu0 0.0
    %5210 = vmatpush1.msra.mxu0 0.0
    %5211 = vmatprep.subr.mxu0 0.0
    %5212 = vmatpush1.msra.mxu0 0.0
    %5213 = vmatprep.subr.mxu0 0.0
    %5214 = vmatpush1.msra.mxu0 0.0
    %5215 = vmatprep.subr.mxu0 0.0
    %5216 = vmatpush1.msra.mxu0 %v460
    %5217 = vmatprep.subr.mxu0 0.0
    %5218 = vmatpush1.msra.mxu0 %v459
    %5219 = vmatprep.subr.mxu0 0.0
    %5220 = vmatpush1.msra.mxu0 %v458
    %5221 = vmatprep.subr.mxu0 0.0
    %5222 = vmatpush1.msra.mxu0 %v457
    %5223 = vmatprep.subr.mxu0 0.0
    %5224 = vmatpush2.msra.mxu0 0.0
    %5225 = vmatprep.subr.mxu0 0.0
    %5226 = vmatpush2.msra.mxu0 0.0
    %5227 = vmatprep.subr.mxu0 0.0
    %5228 = vmatpush2.msra.mxu0 0.0
    %5229 = vmatprep.subr.mxu0 0.0
    %5230 = vmatpush2.msra.mxu0 0.0
    %5231 = vmatprep.subr.mxu0 0.0
    %5232 = vmatpush2.msra.mxu0 0.0
    %5233 = vmatprep.subr.mxu0 0.0
    %5234 = vmatpush2.msra.mxu0 0.0
    %5235 = vmatprep.subr.mxu0 0.0
    %5236 = vmatpush2.msra.mxu0 0.0
    %5237 = vmatprep.subr.mxu0 0.0
    %5238 = vmatpush2.msra.mxu0 0.0
    %5239 = vmatprep.subr.mxu0 0.0
    %5240 = vmatpush2.msra.mxu0 0.0
    %5241 = vmatprep.subr.mxu0 0.0
    %5242 = vmatpush2.msra.mxu0 0.0
    %5243 = vmatprep.subr.mxu0 0.0
    %5244 = vmatpush2.msra.mxu0 0.0
    %5245 = vmatprep.subr.mxu0 0.0
    %5246 = vmatpush2.msra.mxu0 0.0
    %5247 = vmatprep.subr.mxu0 0.0
    %5248 = vmatpush2.msra.mxu0 0.0
    %5249 = vmatprep.subr.mxu0 0.0
    %5250 = vmatpush2.msra.mxu0 0.0
    %5251 = vmatprep.subr.mxu0 0.0
    %5252 = vmatpush2.msra.mxu0 0.0
    %5253 = vmatprep.subr.mxu0 0.0
    %5254 = vmatpush2.msra.mxu0 0.0
    %5255 = vmatprep.mubr.f32.mxu0 0.0
    %5256 = vmatmul.mubr.f32.gmra.mxu0 %v5189
    %v5257 = vpop.f32.mrf.mxu0
    %v5258 = vadd.f32 0.0, %v5257
    %v5259 = vpop.f32.mrf.mxu0
    %5260 = vdwg.mxu0
    %5262 = vrot.lane.b32.xlu0 %v5158, 32
    %v5263 = vpop.permute.xlu0 %5262
    %v5264 = vsel %vm176, %v5263, 0
    %5266 = vmatprep.subr.mxu0 0.0
    %5267 = vmatpush1.msra.mxu0 0.0
    %5268 = vmatprep.subr.mxu0 0.0
    %5269 = vmatpush1.msra.mxu0 0.0
    %5270 = vmatprep.subr.mxu0 0.0
    %5271 = vmatpush1.msra.mxu0 0.0
    %5272 = vmatprep.subr.mxu0 0.0
    %5273 = vmatpush1.msra.mxu0 0.0
    %5274 = vmatprep.subr.mxu0 0.0
    %5275 = vmatpush1.msra.mxu0 0.0
    %5276 = vmatprep.subr.mxu0 0.0
    %5277 = vmatpush1.msra.mxu0 0.0
    %5278 = vmatprep.subr.mxu0 0.0
    %5279 = vmatpush1.msra.mxu0 0.0
    %5280 = vmatprep.subr.mxu0 0.0
    %5281 = vmatpush1.msra.mxu0 0.0
    %5282 = vmatprep.subr.mxu0 0.0
    %5283 = vmatpush1.msra.mxu0 0.0
    %5284 = vmatprep.subr.mxu0 0.0
    %5285 = vmatpush1.msra.mxu0 0.0
    %5286 = vmatprep.subr.mxu0 0.0
    %5287 = vmatpush1.msra.mxu0 0.0
    %5288 = vmatprep.subr.mxu0 0.0
    %5289 = vmatpush1.msra.mxu0 0.0
    %5290 = vmatprep.subr.mxu0 0.0
    %5291 = vmatpush1.msra.mxu0 %v456
    %5292 = vmatprep.subr.mxu0 0.0
    %5293 = vmatpush1.msra.mxu0 %v455
    %5294 = vmatprep.subr.mxu0 0.0
    %5295 = vmatpush1.msra.mxu0 %v454
    %5296 = vmatprep.subr.mxu0 0.0
    %5297 = vmatpush1.msra.mxu0 %v453
    %5298 = vmatprep.subr.mxu0 0.0
    %5299 = vmatpush2.msra.mxu0 0.0
    %5300 = vmatprep.subr.mxu0 0.0
    %5301 = vmatpush2.msra.mxu0 0.0
    %5302 = vmatprep.subr.mxu0 0.0
    %5303 = vmatpush2.msra.mxu0 0.0
    %5304 = vmatprep.subr.mxu0 0.0
    %5305 = vmatpush2.msra.mxu0 0.0
    %5306 = vmatprep.subr.mxu0 0.0
    %5307 = vmatpush2.msra.mxu0 0.0
    %5308 = vmatprep.subr.mxu0 0.0
    %5309 = vmatpush2.msra.mxu0 0.0
    %5310 = vmatprep.subr.mxu0 0.0
    %5311 = vmatpush2.msra.mxu0 0.0
    %5312 = vmatprep.subr.mxu0 0.0
    %5313 = vmatpush2.msra.mxu0 0.0
    %5314 = vmatprep.subr.mxu0 0.0
    %5315 = vmatpush2.msra.mxu0 0.0
    %5316 = vmatprep.subr.mxu0 0.0
    %5317 = vmatpush2.msra.mxu0 0.0
    %5318 = vmatprep.subr.mxu0 0.0
    %5319 = vmatpush2.msra.mxu0 0.0
    %5320 = vmatprep.subr.mxu0 0.0
    %5321 = vmatpush2.msra.mxu0 0.0
    %5322 = vmatprep.subr.mxu0 0.0
    %5323 = vmatpush2.msra.mxu0 0.0
    %5324 = vmatprep.subr.mxu0 0.0
    %5325 = vmatpush2.msra.mxu0 0.0
    %5326 = vmatprep.subr.mxu0 0.0
    %5327 = vmatpush2.msra.mxu0 0.0
    %5328 = vmatprep.subr.mxu0 0.0
    %5329 = vmatpush2.msra.mxu0 0.0
    %5330 = vmatprep.mubr.f32.mxu0 0.0
    %5331 = vmatmul.mubr.f32.gmra.mxu0 %v5264
    %v5332 = vpop.f32.mrf.mxu0
    %v5333 = vadd.f32 %v5258, %v5332
    %v5334 = vpop.f32.mrf.mxu0
    %5335 = vdwg.mxu0
    %v5336 = vadd.f32 %v5333, %v821
    %5338 = vrot.lane.b32.xlu0 %v4975, 32
    %v5339 = vpop.permute.xlu0 %5338
    %v5340 = vsel %vm176, %v5339, 0
    %5342 = vmatprep.subr.mxu0 0.0
    %5343 = vmatpush1.msra.mxu0 0.0
    %5344 = vmatprep.subr.mxu0 0.0
    %5345 = vmatpush1.msra.mxu0 0.0
    %5346 = vmatprep.subr.mxu0 0.0
    %5347 = vmatpush1.msra.mxu0 0.0
    %5348 = vmatprep.subr.mxu0 0.0
    %5349 = vmatpush1.msra.mxu0 0.0
    %5350 = vmatprep.subr.mxu0 0.0
    %5351 = vmatpush1.msra.mxu0 0.0
    %5352 = vmatprep.subr.mxu0 0.0
    %5353 = vmatpush1.msra.mxu0 0.0
    %5354 = vmatprep.subr.mxu0 0.0
    %5355 = vmatpush1.msra.mxu0 0.0
    %5356 = vmatprep.subr.mxu0 0.0
    %5357 = vmatpush1.msra.mxu0 0.0
    %5358 = vmatprep.subr.mxu0 0.0
    %5359 = vmatpush1.msra.mxu0 0.0
    %5360 = vmatprep.subr.mxu0 0.0
    %5361 = vmatpush1.msra.mxu0 0.0
    %5362 = vmatprep.subr.mxu0 0.0
    %5363 = vmatpush1.msra.mxu0 0.0
    %5364 = vmatprep.subr.mxu0 0.0
    %5365 = vmatpush1.msra.mxu0 0.0
    %5366 = vmatprep.subr.mxu0 0.0
    %5367 = vmatpush1.msra.mxu0 %v473
    %5368 = vmatprep.subr.mxu0 0.0
    %5369 = vmatpush1.msra.mxu0 %v472
    %5370 = vmatprep.subr.mxu0 0.0
    %5371 = vmatpush1.msra.mxu0 %v471
    %5372 = vmatprep.subr.mxu0 0.0
    %5373 = vmatpush1.msra.mxu0 %v470
    %5374 = vmatprep.subr.mxu0 0.0
    %5375 = vmatpush2.msra.mxu0 0.0
    %5376 = vmatprep.subr.mxu0 0.0
    %5377 = vmatpush2.msra.mxu0 0.0
    %5378 = vmatprep.subr.mxu0 0.0
    %5379 = vmatpush2.msra.mxu0 0.0
    %5380 = vmatprep.subr.mxu0 0.0
    %5381 = vmatpush2.msra.mxu0 0.0
    %5382 = vmatprep.subr.mxu0 0.0
    %5383 = vmatpush2.msra.mxu0 0.0
    %5384 = vmatprep.subr.mxu0 0.0
    %5385 = vmatpush2.msra.mxu0 0.0
    %5386 = vmatprep.subr.mxu0 0.0
    %5387 = vmatpush2.msra.mxu0 0.0
    %5388 = vmatprep.subr.mxu0 0.0
    %5389 = vmatpush2.msra.mxu0 0.0
    %5390 = vmatprep.subr.mxu0 0.0
    %5391 = vmatpush2.msra.mxu0 0.0
    %5392 = vmatprep.subr.mxu0 0.0
    %5393 = vmatpush2.msra.mxu0 0.0
    %5394 = vmatprep.subr.mxu0 0.0
    %5395 = vmatpush2.msra.mxu0 0.0
    %5396 = vmatprep.subr.mxu0 0.0
    %5397 = vmatpush2.msra.mxu0 0.0
    %5398 = vmatprep.subr.mxu0 0.0
    %5399 = vmatpush2.msra.mxu0 0.0
    %5400 = vmatprep.subr.mxu0 0.0
    %5401 = vmatpush2.msra.mxu0 0.0
    %5402 = vmatprep.subr.mxu0 0.0
    %5403 = vmatpush2.msra.mxu0 0.0
    %5404 = vmatprep.subr.mxu0 0.0
    %5405 = vmatpush2.msra.mxu0 0.0
    %5406 = vmatprep.mubr.f32.mxu0 0.0
    %5407 = vmatmul.mubr.f32.gmra.mxu0 %v5340
    %v5408 = vpop.f32.mrf.mxu0
    %v5409 = vadd.f32 0.0, %v5408
    %v5410 = vpop.f32.mrf.mxu0
    %5411 = vdwg.mxu0
    %5413 = vrot.lane.b32.xlu0 %v5185, 32
    %v5414 = vpop.permute.xlu0 %5413
    %v5415 = vsel %vm176, %v5414, 0
    %5417 = vmatprep.subr.mxu0 0.0
    %5418 = vmatpush1.msra.mxu0 0.0
    %5419 = vmatprep.subr.mxu0 0.0
    %5420 = vmatpush1.msra.mxu0 0.0
    %5421 = vmatprep.subr.mxu0 0.0
    %5422 = vmatpush1.msra.mxu0 0.0
    %5423 = vmatprep.subr.mxu0 0.0
    %5424 = vmatpush1.msra.mxu0 0.0
    %5425 = vmatprep.subr.mxu0 0.0
    %5426 = vmatpush1.msra.mxu0 0.0
    %5427 = vmatprep.subr.mxu0 0.0
    %5428 = vmatpush1.msra.mxu0 0.0
    %5429 = vmatprep.subr.mxu0 0.0
    %5430 = vmatpush1.msra.mxu0 0.0
    %5431 = vmatprep.subr.mxu0 0.0
    %5432 = vmatpush1.msra.mxu0 0.0
    %5433 = vmatprep.subr.mxu0 0.0
    %5434 = vmatpush1.msra.mxu0 0.0
    %5435 = vmatprep.subr.mxu0 0.0
    %5436 = vmatpush1.msra.mxu0 0.0
    %5437 = vmatprep.subr.mxu0 0.0
    %5438 = vmatpush1.msra.mxu0 0.0
    %5439 = vmatprep.subr.mxu0 0.0
    %5440 = vmatpush1.msra.mxu0 0.0
    %5441 = vmatprep.subr.mxu0 0.0
    %5442 = vmatpush1.msra.mxu0 %v469
    %5443 = vmatprep.subr.mxu0 0.0
    %5444 = vmatpush1.msra.mxu0 %v468
    %5445 = vmatprep.subr.mxu0 0.0
    %5446 = vmatpush1.msra.mxu0 %v467
    %5447 = vmatprep.subr.mxu0 0.0
    %5448 = vmatpush1.msra.mxu0 %v466
    %5449 = vmatprep.subr.mxu0 0.0
    %5450 = vmatpush2.msra.mxu0 0.0
    %5451 = vmatprep.subr.mxu0 0.0
    %5452 = vmatpush2.msra.mxu0 0.0
    %5453 = vmatprep.subr.mxu0 0.0
    %5454 = vmatpush2.msra.mxu0 0.0
    %5455 = vmatprep.subr.mxu0 0.0
    %5456 = vmatpush2.msra.mxu0 0.0
    %5457 = vmatprep.subr.mxu0 0.0
    %5458 = vmatpush2.msra.mxu0 0.0
    %5459 = vmatprep.subr.mxu0 0.0
    %5460 = vmatpush2.msra.mxu0 0.0
    %5461 = vmatprep.subr.mxu0 0.0
    %5462 = vmatpush2.msra.mxu0 0.0
    %5463 = vmatprep.subr.mxu0 0.0
    %5464 = vmatpush2.msra.mxu0 0.0
    %5465 = vmatprep.subr.mxu0 0.0
    %5466 = vmatpush2.msra.mxu0 0.0
    %5467 = vmatprep.subr.mxu0 0.0
    %5468 = vmatpush2.msra.mxu0 0.0
    %5469 = vmatprep.subr.mxu0 0.0
    %5470 = vmatpush2.msra.mxu0 0.0
    %5471 = vmatprep.subr.mxu0 0.0
    %5472 = vmatpush2.msra.mxu0 0.0
    %5473 = vmatprep.subr.mxu0 0.0
    %5474 = vmatpush2.msra.mxu0 0.0
    %5475 = vmatprep.subr.mxu0 0.0
    %5476 = vmatpush2.msra.mxu0 0.0
    %5477 = vmatprep.subr.mxu0 0.0
    %5478 = vmatpush2.msra.mxu0 0.0
    %5479 = vmatprep.subr.mxu0 0.0
    %5480 = vmatpush2.msra.mxu0 0.0
    %5481 = vmatprep.mubr.f32.mxu0 0.0
    %5482 = vmatmul.mubr.f32.gmra.mxu0 %v5415
    %v5483 = vpop.f32.mrf.mxu0
    %v5484 = vadd.f32 %v5409, %v5483
    %v5485 = vpop.f32.mrf.mxu0
    %5486 = vdwg.mxu0
    %v5487 = vadd.f32 %v5484, %v973
    %v5488 = vxor.u32 %v5336, 2147483648
    %v5489 = vmul.f32 %v5488, 1.442695
    %v5490 = vpow.pop %v5489
    %v5491 = vadd.f32 %v5490, 1.0
    %v5492 = vrcp.pop %v5491
    %v5493 = vmul.f32 1.0, %v5492
    %v5494 = vtanh.pop %v5336
    %v5495 = vmul.f32 %v5493, %v4945
    %5497 = vrot.lane.b32.xlu0 %v5494, 64
    %v5498 = vpop.permute.xlu0 %5497
    %v5500 = vmul.f32 %v5493, %v5498
    %5502 = vrot.lane.b32.xlu0 %v5500, 32
    %v5503 = vpop.permute.xlu0 %5502
    %v5505 = vadd.f32 %v5495, %v5503
    %v5506 = vtanh.pop %v5505
    %5508 = vrot.lane.b32.xlu0 %v5506, 64
    %v5509 = vpop.permute.xlu0 %5508
    %v5511 = vmul.f32 %v5493, %v5509
    %v5512 = vxor.u32 %v5487, 2147483648
    %v5513 = vmul.f32 %v5512, 1.442695
    %v5514 = vpow.pop %v5513
    %v5515 = vadd.f32 %v5514, 1.0
    %v5516 = vrcp.pop %v5515
    %v5517 = vmul.f32 1.0, %v5516
    %v5518 = vtanh.pop %v5487
    %v5519 = vmul.f32 %v5517, %v4969
    %5521 = vrot.lane.b32.xlu0 %v5518, 64
    %v5522 = vpop.permute.xlu0 %5521
    %v5524 = vmul.f32 %v5517, %v5522
    %5526 = vrot.lane.b32.xlu0 %v5524, 32
    %v5527 = vpop.permute.xlu0 %5526
    %v5529 = vadd.f32 %v5519, %v5527
    %v5530 = vtanh.pop %v5529
    %5532 = vrot.lane.b32.xlu0 %v5530, 64
    %v5533 = vpop.permute.xlu0 %5532
    %v5535 = vmul.f32 %v5517, %v5533
    %vm5536 = vcmp.eq.s32.totalorder %v476, 8
    %v5537 = vsel %vm5536, 1, 0
    %5538 = vset.pattern.permute.xlu0 0
    %5539 = vperm.xlu0 %5538, %v5537
    %v5540 = vpop.permute.xlu0 %5539
    %vm5541 = vcmp.eq.s32.totalorder %v5540, 1
    %v5542 = vsel %vm5541, %v5511, %v4982
    %vm5543 = vcmp.eq.s32.totalorder %v478, 8
    %v5544 = vsel %vm5543, 1, 0
    %5545 = vset.pattern.permute.xlu0 0
    %5546 = vperm.xlu0 %5545, %v5544
    %v5547 = vpop.permute.xlu0 %5546
    %vm5548 = vcmp.eq.s32.totalorder %v5547, 1
    %v5549 = vsel %vm5548, %v5535, %v4989
    %5550 = vmatprep.subr.mxu0 0.0
    %5551 = vmatpush1.msra.mxu0 0.0
    %5552 = vmatprep.subr.mxu0 0.0
    %5553 = vmatpush1.msra.mxu0 0.0
    %5554 = vmatprep.subr.mxu0 0.0
    %5555 = vmatpush1.msra.mxu0 0.0
    %5556 = vmatprep.subr.mxu0 0.0
    %5557 = vmatpush1.msra.mxu0 0.0
    %5558 = vmatprep.subr.mxu0 0.0
    %5559 = vmatpush1.msra.mxu0 0.0
    %5560 = vmatprep.subr.mxu0 0.0
    %5561 = vmatpush1.msra.mxu0 0.0
    %5562 = vmatprep.subr.mxu0 0.0
    %5563 = vmatpush1.msra.mxu0 0.0
    %5564 = vmatprep.subr.mxu0 0.0
    %5565 = vmatpush1.msra.mxu0 0.0
    %5566 = vmatprep.subr.mxu0 0.0
    %5567 = vmatpush1.msra.mxu0 0.0
    %5568 = vmatprep.subr.mxu0 0.0
    %5569 = vmatpush1.msra.mxu0 0.0
    %5570 = vmatprep.subr.mxu0 0.0
    %5571 = vmatpush1.msra.mxu0 0.0
    %5572 = vmatprep.subr.mxu0 0.0
    %5573 = vmatpush1.msra.mxu0 0.0
    %5574 = vmatprep.subr.mxu0 0.0
    %5575 = vmatpush1.msra.mxu0 %v452
    %5576 = vmatprep.subr.mxu0 0.0
    %5577 = vmatpush1.msra.mxu0 %v451
    %5578 = vmatprep.subr.mxu0 0.0
    %5579 = vmatpush1.msra.mxu0 %v450
    %5580 = vmatprep.subr.mxu0 0.0
    %5581 = vmatpush1.msra.mxu0 %v449
    %5582 = vmatprep.subr.mxu0 0.0
    %5583 = vmatpush2.msra.mxu0 0.0
    %5584 = vmatprep.subr.mxu0 0.0
    %5585 = vmatpush2.msra.mxu0 0.0
    %5586 = vmatprep.subr.mxu0 0.0
    %5587 = vmatpush2.msra.mxu0 0.0
    %5588 = vmatprep.subr.mxu0 0.0
    %5589 = vmatpush2.msra.mxu0 0.0
    %5590 = vmatprep.subr.mxu0 0.0
    %5591 = vmatpush2.msra.mxu0 0.0
    %5592 = vmatprep.subr.mxu0 0.0
    %5593 = vmatpush2.msra.mxu0 0.0
    %5594 = vmatprep.subr.mxu0 0.0
    %5595 = vmatpush2.msra.mxu0 0.0
    %5596 = vmatprep.subr.mxu0 0.0
    %5597 = vmatpush2.msra.mxu0 0.0
    %5598 = vmatprep.subr.mxu0 0.0
    %5599 = vmatpush2.msra.mxu0 0.0
    %5600 = vmatprep.subr.mxu0 0.0
    %5601 = vmatpush2.msra.mxu0 0.0
    %5602 = vmatprep.subr.mxu0 0.0
    %5603 = vmatpush2.msra.mxu0 0.0
    %5604 = vmatprep.subr.mxu0 0.0
    %5605 = vmatpush2.msra.mxu0 0.0
    %5606 = vmatprep.subr.mxu0 0.0
    %5607 = vmatpush2.msra.mxu0 0.0
    %5608 = vmatprep.subr.mxu0 0.0
    %5609 = vmatpush2.msra.mxu0 0.0
    %5610 = vmatprep.subr.mxu0 0.0
    %5611 = vmatpush2.msra.mxu0 0.0
    %5612 = vmatprep.subr.mxu0 0.0
    %5613 = vmatpush2.msra.mxu0 0.0
    %5614 = vmatprep.mubr.f32.mxu0 0.0
    %5615 = vmatmul.mubr.f32.gmra.mxu0 %v5264
    %v5616 = vpop.f32.mrf.mxu0
    %v5617 = vadd.f32 0.0, %v5616
    %v5618 = vpop.f32.mrf.mxu0
    %5619 = vdwg.mxu0
    %v5621 = vrot.slane %v5617, 4
    %v5623 = vadd.f32 %v282, %v5621
    %5624 = vmatprep.subr.mxu0 0.0
    %5625 = vmatpush1.msra.mxu0 0.0
    %5626 = vmatprep.subr.mxu0 0.0
    %5627 = vmatpush1.msra.mxu0 0.0
    %5628 = vmatprep.subr.mxu0 0.0
    %5629 = vmatpush1.msra.mxu0 0.0
    %5630 = vmatprep.subr.mxu0 0.0
    %5631 = vmatpush1.msra.mxu0 0.0
    %5632 = vmatprep.subr.mxu0 0.0
    %5633 = vmatpush1.msra.mxu0 0.0
    %5634 = vmatprep.subr.mxu0 0.0
    %5635 = vmatpush1.msra.mxu0 0.0
    %5636 = vmatprep.subr.mxu0 0.0
    %5637 = vmatpush1.msra.mxu0 0.0
    %5638 = vmatprep.subr.mxu0 0.0
    %5639 = vmatpush1.msra.mxu0 0.0
    %5640 = vmatprep.subr.mxu0 0.0
    %5641 = vmatpush1.msra.mxu0 0.0
    %5642 = vmatprep.subr.mxu0 0.0
    %5643 = vmatpush1.msra.mxu0 0.0
    %5644 = vmatprep.subr.mxu0 0.0
    %5645 = vmatpush1.msra.mxu0 0.0
    %5646 = vmatprep.subr.mxu0 0.0
    %5647 = vmatpush1.msra.mxu0 0.0
    %5648 = vmatprep.subr.mxu0 0.0
    %5649 = vmatpush1.msra.mxu0 %v465
    %5650 = vmatprep.subr.mxu0 0.0
    %5651 = vmatpush1.msra.mxu0 %v464
    %5652 = vmatprep.subr.mxu0 0.0
    %5653 = vmatpush1.msra.mxu0 %v463
    %5654 = vmatprep.subr.mxu0 0.0
    %5655 = vmatpush1.msra.mxu0 %v462
    %5656 = vmatprep.subr.mxu0 0.0
    %5657 = vmatpush2.msra.mxu0 0.0
    %5658 = vmatprep.subr.mxu0 0.0
    %5659 = vmatpush2.msra.mxu0 0.0
    %5660 = vmatprep.subr.mxu0 0.0
    %5661 = vmatpush2.msra.mxu0 0.0
    %5662 = vmatprep.subr.mxu0 0.0
    %5663 = vmatpush2.msra.mxu0 0.0
    %5664 = vmatprep.subr.mxu0 0.0
    %5665 = vmatpush2.msra.mxu0 0.0
    %5666 = vmatprep.subr.mxu0 0.0
    %5667 = vmatpush2.msra.mxu0 0.0
    %5668 = vmatprep.subr.mxu0 0.0
    %5669 = vmatpush2.msra.mxu0 0.0
    %5670 = vmatprep.subr.mxu0 0.0
    %5671 = vmatpush2.msra.mxu0 0.0
    %5672 = vmatprep.subr.mxu0 0.0
    %5673 = vmatpush2.msra.mxu0 0.0
    %5674 = vmatprep.subr.mxu0 0.0
    %5675 = vmatpush2.msra.mxu0 0.0
    %5676 = vmatprep.subr.mxu0 0.0
    %5677 = vmatpush2.msra.mxu0 0.0
    %5678 = vmatprep.subr.mxu0 0.0
    %5679 = vmatpush2.msra.mxu0 0.0
    %5680 = vmatprep.subr.mxu0 0.0
    %5681 = vmatpush2.msra.mxu0 0.0
    %5682 = vmatprep.subr.mxu0 0.0
    %5683 = vmatpush2.msra.mxu0 0.0
    %5684 = vmatprep.subr.mxu0 0.0
    %5685 = vmatpush2.msra.mxu0 0.0
    %5686 = vmatprep.subr.mxu0 0.0
    %5687 = vmatpush2.msra.mxu0 0.0
    %5688 = vmatprep.mubr.f32.mxu0 0.0
    %5689 = vmatmul.mubr.f32.gmra.mxu0 %v5415
    %v5690 = vpop.f32.mrf.mxu0
    %v5691 = vadd.f32 0.0, %v5690
    %v5692 = vpop.f32.mrf.mxu0
    %5693 = vdwg.mxu0
    %v5695 = vrot.slane %v5691, 4
    %v5697 = vadd.f32 %v441, %v5695
    %v5698 = vxor.u32 %v5623, 2147483648
    %v5699 = vmul.f32 %v5698, 1.442695
    %v5700 = vpow.pop %v5699
    %v5701 = vadd.f32 %v5700, 1.0
    %v5702 = vrcp.pop %v5701
    %v5703 = vmul.f32 1.0, %v5702
    %v5704 = vtanh.pop %v5623
    %v5706 = vrot.slane %v5152, 4
    %v5708 = vmul.f32 %v5703, %v5706
    %5710 = vrot.lane.b32.xlu0 %v5704, 64
    %v5711 = vpop.permute.xlu0 %5710
    %v5713 = vmul.f32 %v5703, %v5711
    %5715 = vrot.lane.b32.xlu0 %v5713, 32
    %v5716 = vpop.permute.xlu0 %5715
    %v5718 = vadd.f32 %v5708, %v5716
    %v5719 = vtanh.pop %v5718
    %5721 = vrot.lane.b32.xlu0 %v5719, 64
    %v5722 = vpop.permute.xlu0 %5721
    %v5724 = vmul.f32 %v5703, %v5722
    %v5725 = vxor.u32 %v5697, 2147483648
    %v5726 = vmul.f32 %v5725, 1.442695
    %v5727 = vpow.pop %v5726
    %v5728 = vadd.f32 %v5727, 1.0
    %v5729 = vrcp.pop %v5728
    %v5730 = vmul.f32 1.0, %v5729
    %v5731 = vtanh.pop %v5697
    %v5733 = vrot.slane %v5179, 4
    %v5735 = vmul.f32 %v5730, %v5733
    %5737 = vrot.lane.b32.xlu0 %v5731, 64
    %v5738 = vpop.permute.xlu0 %5737
    %v5740 = vmul.f32 %v5730, %v5738
    %5742 = vrot.lane.b32.xlu0 %v5740, 32
    %v5743 = vpop.permute.xlu0 %5742
    %v5745 = vadd.f32 %v5735, %v5743
    %v5746 = vtanh.pop %v5745
    %5748 = vrot.lane.b32.xlu0 %v5746, 64
    %v5749 = vpop.permute.xlu0 %5748
    %v5751 = vmul.f32 %v5730, %v5749
    %5753 = vrot.lane.b32.xlu0 %v5511, 32
    %v5754 = vpop.permute.xlu0 %5753
    %v5755 = vsel %vm176, %v5754, 0
    %5757 = vmatprep.subr.mxu0 0.0
    %5758 = vmatpush1.msra.mxu0 0.0
    %5759 = vmatprep.subr.mxu0 0.0
    %5760 = vmatpush1.msra.mxu0 0.0
    %5761 = vmatprep.subr.mxu0 0.0
    %5762 = vmatpush1.msra.mxu0 0.0
    %5763 = vmatprep.subr.mxu0 0.0
    %5764 = vmatpush1.msra.mxu0 0.0
    %5765 = vmatprep.subr.mxu0 0.0
    %5766 = vmatpush1.msra.mxu0 0.0
    %5767 = vmatprep.subr.mxu0 0.0
    %5768 = vmatpush1.msra.mxu0 0.0
    %5769 = vmatprep.subr.mxu0 0.0
    %5770 = vmatpush1.msra.mxu0 0.0
    %5771 = vmatprep.subr.mxu0 0.0
    %5772 = vmatpush1.msra.mxu0 0.0
    %5773 = vmatprep.subr.mxu0 0.0
    %5774 = vmatpush1.msra.mxu0 0.0
    %5775 = vmatprep.subr.mxu0 0.0
    %5776 = vmatpush1.msra.mxu0 0.0
    %5777 = vmatprep.subr.mxu0 0.0
    %5778 = vmatpush1.msra.mxu0 0.0
    %5779 = vmatprep.subr.mxu0 0.0
    %5780 = vmatpush1.msra.mxu0 0.0
    %5781 = vmatprep.subr.mxu0 0.0
    %5782 = vmatpush1.msra.mxu0 %v460
    %5783 = vmatprep.subr.mxu0 0.0
    %5784 = vmatpush1.msra.mxu0 %v459
    %5785 = vmatprep.subr.mxu0 0.0
    %5786 = vmatpush1.msra.mxu0 %v458
    %5787 = vmatprep.subr.mxu0 0.0
    %5788 = vmatpush1.msra.mxu0 %v457
    %5789 = vmatprep.subr.mxu0 0.0
    %5790 = vmatpush2.msra.mxu0 0.0
    %5791 = vmatprep.subr.mxu0 0.0
    %5792 = vmatpush2.msra.mxu0 0.0
    %5793 = vmatprep.subr.mxu0 0.0
    %5794 = vmatpush2.msra.mxu0 0.0
    %5795 = vmatprep.subr.mxu0 0.0
    %5796 = vmatpush2.msra.mxu0 0.0
    %5797 = vmatprep.subr.mxu0 0.0
    %5798 = vmatpush2.msra.mxu0 0.0
    %5799 = vmatprep.subr.mxu0 0.0
    %5800 = vmatpush2.msra.mxu0 0.0
    %5801 = vmatprep.subr.mxu0 0.0
    %5802 = vmatpush2.msra.mxu0 0.0
    %5803 = vmatprep.subr.mxu0 0.0
    %5804 = vmatpush2.msra.mxu0 0.0
    %5805 = vmatprep.subr.mxu0 0.0
    %5806 = vmatpush2.msra.mxu0 0.0
    %5807 = vmatprep.subr.mxu0 0.0
    %5808 = vmatpush2.msra.mxu0 0.0
    %5809 = vmatprep.subr.mxu0 0.0
    %5810 = vmatpush2.msra.mxu0 0.0
    %5811 = vmatprep.subr.mxu0 0.0
    %5812 = vmatpush2.msra.mxu0 0.0
    %5813 = vmatprep.subr.mxu0 0.0
    %5814 = vmatpush2.msra.mxu0 0.0
    %5815 = vmatprep.subr.mxu0 0.0
    %5816 = vmatpush2.msra.mxu0 0.0
    %5817 = vmatprep.subr.mxu0 0.0
    %5818 = vmatpush2.msra.mxu0 0.0
    %5819 = vmatprep.subr.mxu0 0.0
    %5820 = vmatpush2.msra.mxu0 0.0
    %5821 = vmatprep.mubr.f32.mxu0 0.0
    %5822 = vmatmul.mubr.f32.gmra.mxu0 %v5755
    %v5823 = vpop.f32.mrf.mxu0
    %v5824 = vadd.f32 0.0, %v5823
    %v5825 = vpop.f32.mrf.mxu0
    %5826 = vdwg.mxu0
    %v5828 = vrot.slane %v5724, 4
    %5829 = vrot.lane.b32.xlu0 %v5828, 32
    %v5830 = vpop.permute.xlu0 %5829
    %v5831 = vsel %vm176, %v5830, 0
    %5833 = vmatprep.subr.mxu0 0.0
    %5834 = vmatpush1.msra.mxu0 0.0
    %5835 = vmatprep.subr.mxu0 0.0
    %5836 = vmatpush1.msra.mxu0 0.0
    %5837 = vmatprep.subr.mxu0 0.0
    %5838 = vmatpush1.msra.mxu0 0.0
    %5839 = vmatprep.subr.mxu0 0.0
    %5840 = vmatpush1.msra.mxu0 0.0
    %5841 = vmatprep.subr.mxu0 0.0
    %5842 = vmatpush1.msra.mxu0 0.0
    %5843 = vmatprep.subr.mxu0 0.0
    %5844 = vmatpush1.msra.mxu0 0.0
    %5845 = vmatprep.subr.mxu0 0.0
    %5846 = vmatpush1.msra.mxu0 0.0
    %5847 = vmatprep.subr.mxu0 0.0
    %5848 = vmatpush1.msra.mxu0 0.0
    %5849 = vmatprep.subr.mxu0 0.0
    %5850 = vmatpush1.msra.mxu0 0.0
    %5851 = vmatprep.subr.mxu0 0.0
    %5852 = vmatpush1.msra.mxu0 0.0
    %5853 = vmatprep.subr.mxu0 0.0
    %5854 = vmatpush1.msra.mxu0 0.0
    %5855 = vmatprep.subr.mxu0 0.0
    %5856 = vmatpush1.msra.mxu0 0.0
    %5857 = vmatprep.subr.mxu0 0.0
    %5858 = vmatpush1.msra.mxu0 %v456
    %5859 = vmatprep.subr.mxu0 0.0
    %5860 = vmatpush1.msra.mxu0 %v455
    %5861 = vmatprep.subr.mxu0 0.0
    %5862 = vmatpush1.msra.mxu0 %v454
    %5863 = vmatprep.subr.mxu0 0.0
    %5864 = vmatpush1.msra.mxu0 %v453
    %5865 = vmatprep.subr.mxu0 0.0
    %5866 = vmatpush2.msra.mxu0 0.0
    %5867 = vmatprep.subr.mxu0 0.0
    %5868 = vmatpush2.msra.mxu0 0.0
    %5869 = vmatprep.subr.mxu0 0.0
    %5870 = vmatpush2.msra.mxu0 0.0
    %5871 = vmatprep.subr.mxu0 0.0
    %5872 = vmatpush2.msra.mxu0 0.0
    %5873 = vmatprep.subr.mxu0 0.0
    %5874 = vmatpush2.msra.mxu0 0.0
    %5875 = vmatprep.subr.mxu0 0.0
    %5876 = vmatpush2.msra.mxu0 0.0
    %5877 = vmatprep.subr.mxu0 0.0
    %5878 = vmatpush2.msra.mxu0 0.0
    %5879 = vmatprep.subr.mxu0 0.0
    %5880 = vmatpush2.msra.mxu0 0.0
    %5881 = vmatprep.subr.mxu0 0.0
    %5882 = vmatpush2.msra.mxu0 0.0
    %5883 = vmatprep.subr.mxu0 0.0
    %5884 = vmatpush2.msra.mxu0 0.0
    %5885 = vmatprep.subr.mxu0 0.0
    %5886 = vmatpush2.msra.mxu0 0.0
    %5887 = vmatprep.subr.mxu0 0.0
    %5888 = vmatpush2.msra.mxu0 0.0
    %5889 = vmatprep.subr.mxu0 0.0
    %5890 = vmatpush2.msra.mxu0 0.0
    %5891 = vmatprep.subr.mxu0 0.0
    %5892 = vmatpush2.msra.mxu0 0.0
    %5893 = vmatprep.subr.mxu0 0.0
    %5894 = vmatpush2.msra.mxu0 0.0
    %5895 = vmatprep.subr.mxu0 0.0
    %5896 = vmatpush2.msra.mxu0 0.0
    %5897 = vmatprep.mubr.f32.mxu0 0.0
    %5898 = vmatmul.mubr.f32.gmra.mxu0 %v5831
    %v5899 = vpop.f32.mrf.mxu0
    %v5900 = vadd.f32 %v5824, %v5899
    %v5901 = vpop.f32.mrf.mxu0
    %5902 = vdwg.mxu0
    %v5903 = vadd.f32 %v5900, %v821
    %5905 = vrot.lane.b32.xlu0 %v5535, 32
    %v5906 = vpop.permute.xlu0 %5905
    %v5907 = vsel %vm176, %v5906, 0
    %5909 = vmatprep.subr.mxu0 0.0
    %5910 = vmatpush1.msra.mxu0 0.0
    %5911 = vmatprep.subr.mxu0 0.0
    %5912 = vmatpush1.msra.mxu0 0.0
    %5913 = vmatprep.subr.mxu0 0.0
    %5914 = vmatpush1.msra.mxu0 0.0
    %5915 = vmatprep.subr.mxu0 0.0
    %5916 = vmatpush1.msra.mxu0 0.0
    %5917 = vmatprep.subr.mxu0 0.0
    %5918 = vmatpush1.msra.mxu0 0.0
    %5919 = vmatprep.subr.mxu0 0.0
    %5920 = vmatpush1.msra.mxu0 0.0
    %5921 = vmatprep.subr.mxu0 0.0
    %5922 = vmatpush1.msra.mxu0 0.0
    %5923 = vmatprep.subr.mxu0 0.0
    %5924 = vmatpush1.msra.mxu0 0.0
    %5925 = vmatprep.subr.mxu0 0.0
    %5926 = vmatpush1.msra.mxu0 0.0
    %5927 = vmatprep.subr.mxu0 0.0
    %5928 = vmatpush1.msra.mxu0 0.0
    %5929 = vmatprep.subr.mxu0 0.0
    %5930 = vmatpush1.msra.mxu0 0.0
    %5931 = vmatprep.subr.mxu0 0.0
    %5932 = vmatpush1.msra.mxu0 0.0
    %5933 = vmatprep.subr.mxu0 0.0
    %5934 = vmatpush1.msra.mxu0 %v473
    %5935 = vmatprep.subr.mxu0 0.0
    %5936 = vmatpush1.msra.mxu0 %v472
    %5937 = vmatprep.subr.mxu0 0.0
    %5938 = vmatpush1.msra.mxu0 %v471
    %5939 = vmatprep.subr.mxu0 0.0
    %5940 = vmatpush1.msra.mxu0 %v470
    %5941 = vmatprep.subr.mxu0 0.0
    %5942 = vmatpush2.msra.mxu0 0.0
    %5943 = vmatprep.subr.mxu0 0.0
    %5944 = vmatpush2.msra.mxu0 0.0
    %5945 = vmatprep.subr.mxu0 0.0
    %5946 = vmatpush2.msra.mxu0 0.0
    %5947 = vmatprep.subr.mxu0 0.0
    %5948 = vmatpush2.msra.mxu0 0.0
    %5949 = vmatprep.subr.mxu0 0.0
    %5950 = vmatpush2.msra.mxu0 0.0
    %5951 = vmatprep.subr.mxu0 0.0
    %5952 = vmatpush2.msra.mxu0 0.0
    %5953 = vmatprep.subr.mxu0 0.0
    %5954 = vmatpush2.msra.mxu0 0.0
    %5955 = vmatprep.subr.mxu0 0.0
    %5956 = vmatpush2.msra.mxu0 0.0
    %5957 = vmatprep.subr.mxu0 0.0
    %5958 = vmatpush2.msra.mxu0 0.0
    %5959 = vmatprep.subr.mxu0 0.0
    %5960 = vmatpush2.msra.mxu0 0.0
    %5961 = vmatprep.subr.mxu0 0.0
    %5962 = vmatpush2.msra.mxu0 0.0
    %5963 = vmatprep.subr.mxu0 0.0
    %5964 = vmatpush2.msra.mxu0 0.0
    %5965 = vmatprep.subr.mxu0 0.0
    %5966 = vmatpush2.msra.mxu0 0.0
    %5967 = vmatprep.subr.mxu0 0.0
    %5968 = vmatpush2.msra.mxu0 0.0
    %5969 = vmatprep.subr.mxu0 0.0
    %5970 = vmatpush2.msra.mxu0 0.0
    %5971 = vmatprep.subr.mxu0 0.0
    %5972 = vmatpush2.msra.mxu0 0.0
    %5973 = vmatprep.mubr.f32.mxu0 0.0
    %5974 = vmatmul.mubr.f32.gmra.mxu0 %v5907
    %v5975 = vpop.f32.mrf.mxu0
    %v5976 = vadd.f32 0.0, %v5975
    %v5977 = vpop.f32.mrf.mxu0
    %5978 = vdwg.mxu0
    %v5980 = vrot.slane %v5751, 4
    %5981 = vrot.lane.b32.xlu0 %v5980, 32
    %v5982 = vpop.permute.xlu0 %5981
    %v5983 = vsel %vm176, %v5982, 0
    %5985 = vmatprep.subr.mxu0 0.0
    %5986 = vmatpush1.msra.mxu0 0.0
    %5987 = vmatprep.subr.mxu0 0.0
    %5988 = vmatpush1.msra.mxu0 0.0
    %5989 = vmatprep.subr.mxu0 0.0
    %5990 = vmatpush1.msra.mxu0 0.0
    %5991 = vmatprep.subr.mxu0 0.0
    %5992 = vmatpush1.msra.mxu0 0.0
    %5993 = vmatprep.subr.mxu0 0.0
    %5994 = vmatpush1.msra.mxu0 0.0
    %5995 = vmatprep.subr.mxu0 0.0
    %5996 = vmatpush1.msra.mxu0 0.0
    %5997 = vmatprep.subr.mxu0 0.0
    %5998 = vmatpush1.msra.mxu0 0.0
    %5999 = vmatprep.subr.mxu0 0.0
    %6000 = vmatpush1.msra.mxu0 0.0
    %6001 = vmatprep.subr.mxu0 0.0
    %6002 = vmatpush1.msra.mxu0 0.0
    %6003 = vmatprep.subr.mxu0 0.0
    %6004 = vmatpush1.msra.mxu0 0.0
    %6005 = vmatprep.subr.mxu0 0.0
    %6006 = vmatpush1.msra.mxu0 0.0
    %6007 = vmatprep.subr.mxu0 0.0
    %6008 = vmatpush1.msra.mxu0 0.0
    %6009 = vmatprep.subr.mxu0 0.0
    %6010 = vmatpush1.msra.mxu0 %v469
    %6011 = vmatprep.subr.mxu0 0.0
    %6012 = vmatpush1.msra.mxu0 %v468
    %6013 = vmatprep.subr.mxu0 0.0
    %6014 = vmatpush1.msra.mxu0 %v467
    %6015 = vmatprep.subr.mxu0 0.0
    %6016 = vmatpush1.msra.mxu0 %v466
    %6017 = vmatprep.subr.mxu0 0.0
    %6018 = vmatpush2.msra.mxu0 0.0
    %6019 = vmatprep.subr.mxu0 0.0
    %6020 = vmatpush2.msra.mxu0 0.0
    %6021 = vmatprep.subr.mxu0 0.0
    %6022 = vmatpush2.msra.mxu0 0.0
    %6023 = vmatprep.subr.mxu0 0.0
    %6024 = vmatpush2.msra.mxu0 0.0
    %6025 = vmatprep.subr.mxu0 0.0
    %6026 = vmatpush2.msra.mxu0 0.0
    %6027 = vmatprep.subr.mxu0 0.0
    %6028 = vmatpush2.msra.mxu0 0.0
    %6029 = vmatprep.subr.mxu0 0.0
    %6030 = vmatpush2.msra.mxu0 0.0
    %6031 = vmatprep.subr.mxu0 0.0
    %6032 = vmatpush2.msra.mxu0 0.0
    %6033 = vmatprep.subr.mxu0 0.0
    %6034 = vmatpush2.msra.mxu0 0.0
    %6035 = vmatprep.subr.mxu0 0.0
    %6036 = vmatpush2.msra.mxu0 0.0
    %6037 = vmatprep.subr.mxu0 0.0
    %6038 = vmatpush2.msra.mxu0 0.0
    %6039 = vmatprep.subr.mxu0 0.0
    %6040 = vmatpush2.msra.mxu0 0.0
    %6041 = vmatprep.subr.mxu0 0.0
    %6042 = vmatpush2.msra.mxu0 0.0
    %6043 = vmatprep.subr.mxu0 0.0
    %6044 = vmatpush2.msra.mxu0 0.0
    %6045 = vmatprep.subr.mxu0 0.0
    %6046 = vmatpush2.msra.mxu0 0.0
    %6047 = vmatprep.subr.mxu0 0.0
    %6048 = vmatpush2.msra.mxu0 0.0
    %6049 = vmatprep.mubr.f32.mxu0 0.0
    %6050 = vmatmul.mubr.f32.gmra.mxu0 %v5983
    %v6051 = vpop.f32.mrf.mxu0
    %v6052 = vadd.f32 %v5976, %v6051
    %v6053 = vpop.f32.mrf.mxu0
    %6054 = vdwg.mxu0
    %v6055 = vadd.f32 %v6052, %v973
    %v6056 = vxor.u32 %v5903, 2147483648
    %v6057 = vmul.f32 %v6056, 1.442695
    %v6058 = vpow.pop %v6057
    %v6059 = vadd.f32 %v6058, 1.0
    %v6060 = vrcp.pop %v6059
    %v6061 = vmul.f32 1.0, %v6060
    %v6062 = vtanh.pop %v5903
    %v6063 = vmul.f32 %v6061, %v5505
    %6065 = vrot.lane.b32.xlu0 %v6062, 64
    %v6066 = vpop.permute.xlu0 %6065
    %v6068 = vmul.f32 %v6061, %v6066
    %6070 = vrot.lane.b32.xlu0 %v6068, 32
    %v6071 = vpop.permute.xlu0 %6070
    %v6073 = vadd.f32 %v6063, %v6071
    %v6074 = vtanh.pop %v6073
    %6076 = vrot.lane.b32.xlu0 %v6074, 64
    %v6077 = vpop.permute.xlu0 %6076
    %v6079 = vmul.f32 %v6061, %v6077
    %v6080 = vxor.u32 %v6055, 2147483648
    %v6081 = vmul.f32 %v6080, 1.442695
    %v6082 = vpow.pop %v6081
    %v6083 = vadd.f32 %v6082, 1.0
    %v6084 = vrcp.pop %v6083
    %v6085 = vmul.f32 1.0, %v6084
    %v6086 = vtanh.pop %v6055
    %v6087 = vmul.f32 %v6085, %v5529
    %6089 = vrot.lane.b32.xlu0 %v6086, 64
    %v6090 = vpop.permute.xlu0 %6089
    %v6092 = vmul.f32 %v6085, %v6090
    %6094 = vrot.lane.b32.xlu0 %v6092, 32
    %v6095 = vpop.permute.xlu0 %6094
    %v6097 = vadd.f32 %v6087, %v6095
    %v6098 = vtanh.pop %v6097
    %6100 = vrot.lane.b32.xlu0 %v6098, 64
    %v6101 = vpop.permute.xlu0 %6100
    %v6103 = vmul.f32 %v6085, %v6101
    %vm6104 = vcmp.eq.s32.totalorder %v476, 9
    %v6105 = vsel %vm6104, 1, 0
    %6106 = vset.pattern.permute.xlu0 0
    %6107 = vperm.xlu0 %6106, %v6105
    %v6108 = vpop.permute.xlu0 %6107
    %vm6109 = vcmp.eq.s32.totalorder %v6108, 1
    %v6110 = vsel %vm6109, %v6079, %v5542
    %vm6111 = vcmp.eq.s32.totalorder %v478, 9
    %v6112 = vsel %vm6111, 1, 0
    %6113 = vset.pattern.permute.xlu0 0
    %6114 = vperm.xlu0 %6113, %v6112
    %v6115 = vpop.permute.xlu0 %6114
    %vm6116 = vcmp.eq.s32.totalorder %v6115, 1
    %v6117 = vsel %vm6116, %v6103, %v5549
    %6118 = vmatprep.subr.mxu0 0.0
    %6119 = vmatpush1.msra.mxu0 0.0
    %6120 = vmatprep.subr.mxu0 0.0
    %6121 = vmatpush1.msra.mxu0 0.0
    %6122 = vmatprep.subr.mxu0 0.0
    %6123 = vmatpush1.msra.mxu0 0.0
    %6124 = vmatprep.subr.mxu0 0.0
    %6125 = vmatpush1.msra.mxu0 0.0
    %6126 = vmatprep.subr.mxu0 0.0
    %6127 = vmatpush1.msra.mxu0 0.0
    %6128 = vmatprep.subr.mxu0 0.0
    %6129 = vmatpush1.msra.mxu0 0.0
    %6130 = vmatprep.subr.mxu0 0.0
    %6131 = vmatpush1.msra.mxu0 0.0
    %6132 = vmatprep.subr.mxu0 0.0
    %6133 = vmatpush1.msra.mxu0 0.0
    %6134 = vmatprep.subr.mxu0 0.0
    %6135 = vmatpush1.msra.mxu0 0.0
    %6136 = vmatprep.subr.mxu0 0.0
    %6137 = vmatpush1.msra.mxu0 0.0
    %6138 = vmatprep.subr.mxu0 0.0
    %6139 = vmatpush1.msra.mxu0 0.0
    %6140 = vmatprep.subr.mxu0 0.0
    %6141 = vmatpush1.msra.mxu0 0.0
    %6142 = vmatprep.subr.mxu0 0.0
    %6143 = vmatpush1.msra.mxu0 %v452
    %6144 = vmatprep.subr.mxu0 0.0
    %6145 = vmatpush1.msra.mxu0 %v451
    %6146 = vmatprep.subr.mxu0 0.0
    %6147 = vmatpush1.msra.mxu0 %v450
    %6148 = vmatprep.subr.mxu0 0.0
    %6149 = vmatpush1.msra.mxu0 %v449
    %6150 = vmatprep.subr.mxu0 0.0
    %6151 = vmatpush2.msra.mxu0 0.0
    %6152 = vmatprep.subr.mxu0 0.0
    %6153 = vmatpush2.msra.mxu0 0.0
    %6154 = vmatprep.subr.mxu0 0.0
    %6155 = vmatpush2.msra.mxu0 0.0
    %6156 = vmatprep.subr.mxu0 0.0
    %6157 = vmatpush2.msra.mxu0 0.0
    %6158 = vmatprep.subr.mxu0 0.0
    %6159 = vmatpush2.msra.mxu0 0.0
    %6160 = vmatprep.subr.mxu0 0.0
    %6161 = vmatpush2.msra.mxu0 0.0
    %6162 = vmatprep.subr.mxu0 0.0
    %6163 = vmatpush2.msra.mxu0 0.0
    %6164 = vmatprep.subr.mxu0 0.0
    %6165 = vmatpush2.msra.mxu0 0.0
    %6166 = vmatprep.subr.mxu0 0.0
    %6167 = vmatpush2.msra.mxu0 0.0
    %6168 = vmatprep.subr.mxu0 0.0
    %6169 = vmatpush2.msra.mxu0 0.0
    %6170 = vmatprep.subr.mxu0 0.0
    %6171 = vmatpush2.msra.mxu0 0.0
    %6172 = vmatprep.subr.mxu0 0.0
    %6173 = vmatpush2.msra.mxu0 0.0
    %6174 = vmatprep.subr.mxu0 0.0
    %6175 = vmatpush2.msra.mxu0 0.0
    %6176 = vmatprep.subr.mxu0 0.0
    %6177 = vmatpush2.msra.mxu0 0.0
    %6178 = vmatprep.subr.mxu0 0.0
    %6179 = vmatpush2.msra.mxu0 0.0
    %6180 = vmatprep.subr.mxu0 0.0
    %6181 = vmatpush2.msra.mxu0 0.0
    %6182 = vmatprep.mubr.f32.mxu0 0.0
    %6183 = vmatmul.mubr.f32.gmra.mxu0 %v5831
    %v6184 = vpop.f32.mrf.mxu0
    %v6185 = vadd.f32 0.0, %v6184
    %v6186 = vpop.f32.mrf.mxu0
    %6187 = vdwg.mxu0
    %v6188 = vadd.f32 %v287, %v6185
    %6189 = vmatprep.subr.mxu0 0.0
    %6190 = vmatpush1.msra.mxu0 0.0
    %6191 = vmatprep.subr.mxu0 0.0
    %6192 = vmatpush1.msra.mxu0 0.0
    %6193 = vmatprep.subr.mxu0 0.0
    %6194 = vmatpush1.msra.mxu0 0.0
    %6195 = vmatprep.subr.mxu0 0.0
    %6196 = vmatpush1.msra.mxu0 0.0
    %6197 = vmatprep.subr.mxu0 0.0
    %6198 = vmatpush1.msra.mxu0 0.0
    %6199 = vmatprep.subr.mxu0 0.0
    %6200 = vmatpush1.msra.mxu0 0.0
    %6201 = vmatprep.subr.mxu0 0.0
    %6202 = vmatpush1.msra.mxu0 0.0
    %6203 = vmatprep.subr.mxu0 0.0
    %6204 = vmatpush1.msra.mxu0 0.0
    %6205 = vmatprep.subr.mxu0 0.0
    %6206 = vmatpush1.msra.mxu0 0.0
    %6207 = vmatprep.subr.mxu0 0.0
    %6208 = vmatpush1.msra.mxu0 0.0
    %6209 = vmatprep.subr.mxu0 0.0
    %6210 = vmatpush1.msra.mxu0 0.0
    %6211 = vmatprep.subr.mxu0 0.0
    %6212 = vmatpush1.msra.mxu0 0.0
    %6213 = vmatprep.subr.mxu0 0.0
    %6214 = vmatpush1.msra.mxu0 %v465
    %6215 = vmatprep.subr.mxu0 0.0
    %6216 = vmatpush1.msra.mxu0 %v464
    %6217 = vmatprep.subr.mxu0 0.0
    %6218 = vmatpush1.msra.mxu0 %v463
    %6219 = vmatprep.subr.mxu0 0.0
    %6220 = vmatpush1.msra.mxu0 %v462
    %6221 = vmatprep.subr.mxu0 0.0
    %6222 = vmatpush2.msra.mxu0 0.0
    %6223 = vmatprep.subr.mxu0 0.0
    %6224 = vmatpush2.msra.mxu0 0.0
    %6225 = vmatprep.subr.mxu0 0.0
    %6226 = vmatpush2.msra.mxu0 0.0
    %6227 = vmatprep.subr.mxu0 0.0
    %6228 = vmatpush2.msra.mxu0 0.0
    %6229 = vmatprep.subr.mxu0 0.0
    %6230 = vmatpush2.msra.mxu0 0.0
    %6231 = vmatprep.subr.mxu0 0.0
    %6232 = vmatpush2.msra.mxu0 0.0
    %6233 = vmatprep.subr.mxu0 0.0
    %6234 = vmatpush2.msra.mxu0 0.0
    %6235 = vmatprep.subr.mxu0 0.0
    %6236 = vmatpush2.msra.mxu0 0.0
    %6237 = vmatprep.subr.mxu0 0.0
    %6238 = vmatpush2.msra.mxu0 0.0
    %6239 = vmatprep.subr.mxu0 0.0
    %6240 = vmatpush2.msra.mxu0 0.0
    %6241 = vmatprep.subr.mxu0 0.0
    %6242 = vmatpush2.msra.mxu0 0.0
    %6243 = vmatprep.subr.mxu0 0.0
    %6244 = vmatpush2.msra.mxu0 0.0
    %6245 = vmatprep.subr.mxu0 0.0
    %6246 = vmatpush2.msra.mxu0 0.0
    %6247 = vmatprep.subr.mxu0 0.0
    %6248 = vmatpush2.msra.mxu0 0.0
    %6249 = vmatprep.subr.mxu0 0.0
    %6250 = vmatpush2.msra.mxu0 0.0
    %6251 = vmatprep.subr.mxu0 0.0
    %6252 = vmatpush2.msra.mxu0 0.0
    %6253 = vmatprep.mubr.f32.mxu0 0.0
    %6254 = vmatmul.mubr.f32.gmra.mxu0 %v5983
    %v6255 = vpop.f32.mrf.mxu0
    %v6256 = vadd.f32 0.0, %v6255
    %v6257 = vpop.f32.mrf.mxu0
    %6258 = vdwg.mxu0
    %v6259 = vadd.f32 %v446, %v6256
    %v6260 = vxor.u32 %v6188, 2147483648
    %v6261 = vmul.f32 %v6260, 1.442695
    %v6262 = vpow.pop %v6261
    %v6263 = vadd.f32 %v6262, 1.0
    %v6264 = vrcp.pop %v6263
    %v6265 = vmul.f32 1.0, %v6264
    %v6266 = vtanh.pop %v6188
    %v6268 = vrot.slane %v5718, 4
    %v6270 = vmul.f32 %v6265, %v6268
    %6272 = vrot.lane.b32.xlu0 %v6266, 64
    %v6273 = vpop.permute.xlu0 %6272
    %v6275 = vmul.f32 %v6265, %v6273
    %6277 = vrot.lane.b32.xlu0 %v6275, 32
    %v6278 = vpop.permute.xlu0 %6277
    %v6280 = vadd.f32 %v6270, %v6278
    %v6281 = vtanh.pop %v6280
    %6283 = vrot.lane.b32.xlu0 %v6281, 64
    %v6284 = vpop.permute.xlu0 %6283
    %v6286 = vmul.f32 %v6265, %v6284
    %v6287 = vxor.u32 %v6259, 2147483648
    %v6288 = vmul.f32 %v6287, 1.442695
    %v6289 = vpow.pop %v6288
    %v6290 = vadd.f32 %v6289, 1.0
    %v6291 = vrcp.pop %v6290
    %v6292 = vmul.f32 1.0, %v6291
    %v6293 = vtanh.pop %v6259
    %v6295 = vrot.slane %v5745, 4
    %v6297 = vmul.f32 %v6292, %v6295
    %6299 = vrot.lane.b32.xlu0 %v6293, 64
    %v6300 = vpop.permute.xlu0 %6299
    %v6302 = vmul.f32 %v6292, %v6300
    %6304 = vrot.lane.b32.xlu0 %v6302, 32
    %v6305 = vpop.permute.xlu0 %6304
    %v6307 = vadd.f32 %v6297, %v6305
    %v6308 = vtanh.pop %v6307
    %6310 = vrot.lane.b32.xlu0 %v6308, 64
    %v6311 = vpop.permute.xlu0 %6310
    %v6313 = vmul.f32 %v6292, %v6311
    %6315 = vrot.lane.b32.xlu0 %v6079, 32
    %v6316 = vpop.permute.xlu0 %6315
    %v6317 = vsel %vm176, %v6316, 0
    %6319 = vmatprep.subr.mxu0 0.0
    %6320 = vmatpush1.msra.mxu0 0.0
    %6321 = vmatprep.subr.mxu0 0.0
    %6322 = vmatpush1.msra.mxu0 0.0
    %6323 = vmatprep.subr.mxu0 0.0
    %6324 = vmatpush1.msra.mxu0 0.0
    %6325 = vmatprep.subr.mxu0 0.0
    %6326 = vmatpush1.msra.mxu0 0.0
    %6327 = vmatprep.subr.mxu0 0.0
    %6328 = vmatpush1.msra.mxu0 0.0
    %6329 = vmatprep.subr.mxu0 0.0
    %6330 = vmatpush1.msra.mxu0 0.0
    %6331 = vmatprep.subr.mxu0 0.0
    %6332 = vmatpush1.msra.mxu0 0.0
    %6333 = vmatprep.subr.mxu0 0.0
    %6334 = vmatpush1.msra.mxu0 0.0
    %6335 = vmatprep.subr.mxu0 0.0
    %6336 = vmatpush1.msra.mxu0 0.0
    %6337 = vmatprep.subr.mxu0 0.0
    %6338 = vmatpush1.msra.mxu0 0.0
    %6339 = vmatprep.subr.mxu0 0.0
    %6340 = vmatpush1.msra.mxu0 0.0
    %6341 = vmatprep.subr.mxu0 0.0
    %6342 = vmatpush1.msra.mxu0 0.0
    %6343 = vmatprep.subr.mxu0 0.0
    %6344 = vmatpush1.msra.mxu0 %v460
    %6345 = vmatprep.subr.mxu0 0.0
    %6346 = vmatpush1.msra.mxu0 %v459
    %6347 = vmatprep.subr.mxu0 0.0
    %6348 = vmatpush1.msra.mxu0 %v458
    %6349 = vmatprep.subr.mxu0 0.0
    %6350 = vmatpush1.msra.mxu0 %v457
    %6351 = vmatprep.subr.mxu0 0.0
    %6352 = vmatpush2.msra.mxu0 0.0
    %6353 = vmatprep.subr.mxu0 0.0
    %6354 = vmatpush2.msra.mxu0 0.0
    %6355 = vmatprep.subr.mxu0 0.0
    %6356 = vmatpush2.msra.mxu0 0.0
    %6357 = vmatprep.subr.mxu0 0.0
    %6358 = vmatpush2.msra.mxu0 0.0
    %6359 = vmatprep.subr.mxu0 0.0
    %6360 = vmatpush2.msra.mxu0 0.0
    %6361 = vmatprep.subr.mxu0 0.0
    %6362 = vmatpush2.msra.mxu0 0.0
    %6363 = vmatprep.subr.mxu0 0.0
    %6364 = vmatpush2.msra.mxu0 0.0
    %6365 = vmatprep.subr.mxu0 0.0
    %6366 = vmatpush2.msra.mxu0 0.0
    %6367 = vmatprep.subr.mxu0 0.0
    %6368 = vmatpush2.msra.mxu0 0.0
    %6369 = vmatprep.subr.mxu0 0.0
    %6370 = vmatpush2.msra.mxu0 0.0
    %6371 = vmatprep.subr.mxu0 0.0
    %6372 = vmatpush2.msra.mxu0 0.0
    %6373 = vmatprep.subr.mxu0 0.0
    %6374 = vmatpush2.msra.mxu0 0.0
    %6375 = vmatprep.subr.mxu0 0.0
    %6376 = vmatpush2.msra.mxu0 0.0
    %6377 = vmatprep.subr.mxu0 0.0
    %6378 = vmatpush2.msra.mxu0 0.0
    %6379 = vmatprep.subr.mxu0 0.0
    %6380 = vmatpush2.msra.mxu0 0.0
    %6381 = vmatprep.subr.mxu0 0.0
    %6382 = vmatpush2.msra.mxu0 0.0
    %6383 = vmatprep.mubr.f32.mxu0 0.0
    %6384 = vmatmul.mubr.f32.gmra.mxu0 %v6317
    %v6385 = vpop.f32.mrf.mxu0
    %v6386 = vadd.f32 0.0, %v6385
    %v6387 = vpop.f32.mrf.mxu0
    %6388 = vdwg.mxu0
    %6390 = vrot.lane.b32.xlu0 %v6286, 32
    %v6391 = vpop.permute.xlu0 %6390
    %v6392 = vsel %vm176, %v6391, 0
    %6394 = vmatprep.subr.mxu0 0.0
    %6395 = vmatpush1.msra.mxu0 0.0
    %6396 = vmatprep.subr.mxu0 0.0
    %6397 = vmatpush1.msra.mxu0 0.0
    %6398 = vmatprep.subr.mxu0 0.0
    %6399 = vmatpush1.msra.mxu0 0.0
    %6400 = vmatprep.subr.mxu0 0.0
    %6401 = vmatpush1.msra.mxu0 0.0
    %6402 = vmatprep.subr.mxu0 0.0
    %6403 = vmatpush1.msra.mxu0 0.0
    %6404 = vmatprep.subr.mxu0 0.0
    %6405 = vmatpush1.msra.mxu0 0.0
    %6406 = vmatprep.subr.mxu0 0.0
    %6407 = vmatpush1.msra.mxu0 0.0
    %6408 = vmatprep.subr.mxu0 0.0
    %6409 = vmatpush1.msra.mxu0 0.0
    %6410 = vmatprep.subr.mxu0 0.0
    %6411 = vmatpush1.msra.mxu0 0.0
    %6412 = vmatprep.subr.mxu0 0.0
    %6413 = vmatpush1.msra.mxu0 0.0
    %6414 = vmatprep.subr.mxu0 0.0
    %6415 = vmatpush1.msra.mxu0 0.0
    %6416 = vmatprep.subr.mxu0 0.0
    %6417 = vmatpush1.msra.mxu0 0.0
    %6418 = vmatprep.subr.mxu0 0.0
    %6419 = vmatpush1.msra.mxu0 %v456
    %6420 = vmatprep.subr.mxu0 0.0
    %6421 = vmatpush1.msra.mxu0 %v455
    %6422 = vmatprep.subr.mxu0 0.0
    %6423 = vmatpush1.msra.mxu0 %v454
    %6424 = vmatprep.subr.mxu0 0.0
    %6425 = vmatpush1.msra.mxu0 %v453
    %6426 = vmatprep.subr.mxu0 0.0
    %6427 = vmatpush2.msra.mxu0 0.0
    %6428 = vmatprep.subr.mxu0 0.0
    %6429 = vmatpush2.msra.mxu0 0.0
    %6430 = vmatprep.subr.mxu0 0.0
    %6431 = vmatpush2.msra.mxu0 0.0
    %6432 = vmatprep.subr.mxu0 0.0
    %6433 = vmatpush2.msra.mxu0 0.0
    %6434 = vmatprep.subr.mxu0 0.0
    %6435 = vmatpush2.msra.mxu0 0.0
    %6436 = vmatprep.subr.mxu0 0.0
    %6437 = vmatpush2.msra.mxu0 0.0
    %6438 = vmatprep.subr.mxu0 0.0
    %6439 = vmatpush2.msra.mxu0 0.0
    %6440 = vmatprep.subr.mxu0 0.0
    %6441 = vmatpush2.msra.mxu0 0.0
    %6442 = vmatprep.subr.mxu0 0.0
    %6443 = vmatpush2.msra.mxu0 0.0
    %6444 = vmatprep.subr.mxu0 0.0
    %6445 = vmatpush2.msra.mxu0 0.0
    %6446 = vmatprep.subr.mxu0 0.0
    %6447 = vmatpush2.msra.mxu0 0.0
    %6448 = vmatprep.subr.mxu0 0.0
    %6449 = vmatpush2.msra.mxu0 0.0
    %6450 = vmatprep.subr.mxu0 0.0
    %6451 = vmatpush2.msra.mxu0 0.0
    %6452 = vmatprep.subr.mxu0 0.0
    %6453 = vmatpush2.msra.mxu0 0.0
    %6454 = vmatprep.subr.mxu0 0.0
    %6455 = vmatpush2.msra.mxu0 0.0
    %6456 = vmatprep.subr.mxu0 0.0
    %6457 = vmatpush2.msra.mxu0 0.0
    %6458 = vmatprep.mubr.f32.mxu0 0.0
    %6459 = vmatmul.mubr.f32.gmra.mxu0 %v6392
    %v6460 = vpop.f32.mrf.mxu0
    %v6461 = vadd.f32 %v6386, %v6460
    %v6462 = vpop.f32.mrf.mxu0
    %6463 = vdwg.mxu0
    %v6464 = vadd.f32 %v6461, %v821
    %6466 = vrot.lane.b32.xlu0 %v6103, 32
    %v6467 = vpop.permute.xlu0 %6466
    %v6468 = vsel %vm176, %v6467, 0
    %6470 = vmatprep.subr.mxu0 0.0
    %6471 = vmatpush1.msra.mxu0 0.0
    %6472 = vmatprep.subr.mxu0 0.0
    %6473 = vmatpush1.msra.mxu0 0.0
    %6474 = vmatprep.subr.mxu0 0.0
    %6475 = vmatpush1.msra.mxu0 0.0
    %6476 = vmatprep.subr.mxu0 0.0
    %6477 = vmatpush1.msra.mxu0 0.0
    %6478 = vmatprep.subr.mxu0 0.0
    %6479 = vmatpush1.msra.mxu0 0.0
    %6480 = vmatprep.subr.mxu0 0.0
    %6481 = vmatpush1.msra.mxu0 0.0
    %6482 = vmatprep.subr.mxu0 0.0
    %6483 = vmatpush1.msra.mxu0 0.0
    %6484 = vmatprep.subr.mxu0 0.0
    %6485 = vmatpush1.msra.mxu0 0.0
    %6486 = vmatprep.subr.mxu0 0.0
    %6487 = vmatpush1.msra.mxu0 0.0
    %6488 = vmatprep.subr.mxu0 0.0
    %6489 = vmatpush1.msra.mxu0 0.0
    %6490 = vmatprep.subr.mxu0 0.0
    %6491 = vmatpush1.msra.mxu0 0.0
    %6492 = vmatprep.subr.mxu0 0.0
    %6493 = vmatpush1.msra.mxu0 0.0
    %6494 = vmatprep.subr.mxu0 0.0
    %6495 = vmatpush1.msra.mxu0 %v473
    %6496 = vmatprep.subr.mxu0 0.0
    %6497 = vmatpush1.msra.mxu0 %v472
    %6498 = vmatprep.subr.mxu0 0.0
    %6499 = vmatpush1.msra.mxu0 %v471
    %6500 = vmatprep.subr.mxu0 0.0
    %6501 = vmatpush1.msra.mxu0 %v470
    %6502 = vmatprep.subr.mxu0 0.0
    %6503 = vmatpush2.msra.mxu0 0.0
    %6504 = vmatprep.subr.mxu0 0.0
    %6505 = vmatpush2.msra.mxu0 0.0
    %6506 = vmatprep.subr.mxu0 0.0
    %6507 = vmatpush2.msra.mxu0 0.0
    %6508 = vmatprep.subr.mxu0 0.0
    %6509 = vmatpush2.msra.mxu0 0.0
    %6510 = vmatprep.subr.mxu0 0.0
    %6511 = vmatpush2.msra.mxu0 0.0
    %6512 = vmatprep.subr.mxu0 0.0
    %6513 = vmatpush2.msra.mxu0 0.0
    %6514 = vmatprep.subr.mxu0 0.0
    %6515 = vmatpush2.msra.mxu0 0.0
    %6516 = vmatprep.subr.mxu0 0.0
    %6517 = vmatpush2.msra.mxu0 0.0
    %6518 = vmatprep.subr.mxu0 0.0
    %6519 = vmatpush2.msra.mxu0 0.0
    %6520 = vmatprep.subr.mxu0 0.0
    %6521 = vmatpush2.msra.mxu0 0.0
    %6522 = vmatprep.subr.mxu0 0.0
    %6523 = vmatpush2.msra.mxu0 0.0
    %6524 = vmatprep.subr.mxu0 0.0
    %6525 = vmatpush2.msra.mxu0 0.0
    %6526 = vmatprep.subr.mxu0 0.0
    %6527 = vmatpush2.msra.mxu0 0.0
    %6528 = vmatprep.subr.mxu0 0.0
    %6529 = vmatpush2.msra.mxu0 0.0
    %6530 = vmatprep.subr.mxu0 0.0
    %6531 = vmatpush2.msra.mxu0 0.0
    %6532 = vmatprep.subr.mxu0 0.0
    %6533 = vmatpush2.msra.mxu0 0.0
    %6534 = vmatprep.mubr.f32.mxu0 0.0
    %6535 = vmatmul.mubr.f32.gmra.mxu0 %v6468
    %v6536 = vpop.f32.mrf.mxu0
    %v6537 = vadd.f32 0.0, %v6536
    %v6538 = vpop.f32.mrf.mxu0
    %6539 = vdwg.mxu0
    %6541 = vrot.lane.b32.xlu0 %v6313, 32
    %v6542 = vpop.permute.xlu0 %6541
    %v6543 = vsel %vm176, %v6542, 0
    %6545 = vmatprep.subr.mxu0 0.0
    %6546 = vmatpush1.msra.mxu0 0.0
    %6547 = vmatprep.subr.mxu0 0.0
    %6548 = vmatpush1.msra.mxu0 0.0
    %6549 = vmatprep.subr.mxu0 0.0
    %6550 = vmatpush1.msra.mxu0 0.0
    %6551 = vmatprep.subr.mxu0 0.0
    %6552 = vmatpush1.msra.mxu0 0.0
    %6553 = vmatprep.subr.mxu0 0.0
    %6554 = vmatpush1.msra.mxu0 0.0
    %6555 = vmatprep.subr.mxu0 0.0
    %6556 = vmatpush1.msra.mxu0 0.0
    %6557 = vmatprep.subr.mxu0 0.0
    %6558 = vmatpush1.msra.mxu0 0.0
    %6559 = vmatprep.subr.mxu0 0.0
    %6560 = vmatpush1.msra.mxu0 0.0
    %6561 = vmatprep.subr.mxu0 0.0
    %6562 = vmatpush1.msra.mxu0 0.0
    %6563 = vmatprep.subr.mxu0 0.0
    %6564 = vmatpush1.msra.mxu0 0.0
    %6565 = vmatprep.subr.mxu0 0.0
    %6566 = vmatpush1.msra.mxu0 0.0
    %6567 = vmatprep.subr.mxu0 0.0
    %6568 = vmatpush1.msra.mxu0 0.0
    %6569 = vmatprep.subr.mxu0 0.0
    %6570 = vmatpush1.msra.mxu0 %v469
    %6571 = vmatprep.subr.mxu0 0.0
    %6572 = vmatpush1.msra.mxu0 %v468
    %6573 = vmatprep.subr.mxu0 0.0
    %6574 = vmatpush1.msra.mxu0 %v467
    %6575 = vmatprep.subr.mxu0 0.0
    %6576 = vmatpush1.msra.mxu0 %v466
    %6577 = vmatprep.subr.mxu0 0.0
    %6578 = vmatpush2.msra.mxu0 0.0
    %6579 = vmatprep.subr.mxu0 0.0
    %6580 = vmatpush2.msra.mxu0 0.0
    %6581 = vmatprep.subr.mxu0 0.0
    %6582 = vmatpush2.msra.mxu0 0.0
    %6583 = vmatprep.subr.mxu0 0.0
    %6584 = vmatpush2.msra.mxu0 0.0
    %6585 = vmatprep.subr.mxu0 0.0
    %6586 = vmatpush2.msra.mxu0 0.0
    %6587 = vmatprep.subr.mxu0 0.0
    %6588 = vmatpush2.msra.mxu0 0.0
    %6589 = vmatprep.subr.mxu0 0.0
    %6590 = vmatpush2.msra.mxu0 0.0
    %6591 = vmatprep.subr.mxu0 0.0
    %6592 = vmatpush2.msra.mxu0 0.0
    %6593 = vmatprep.subr.mxu0 0.0
    %6594 = vmatpush2.msra.mxu0 0.0
    %6595 = vmatprep.subr.mxu0 0.0
    %6596 = vmatpush2.msra.mxu0 0.0
    %6597 = vmatprep.subr.mxu0 0.0
    %6598 = vmatpush2.msra.mxu0 0.0
    %6599 = vmatprep.subr.mxu0 0.0
    %6600 = vmatpush2.msra.mxu0 0.0
    %6601 = vmatprep.subr.mxu0 0.0
    %6602 = vmatpush2.msra.mxu0 0.0
    %6603 = vmatprep.subr.mxu0 0.0
    %6604 = vmatpush2.msra.mxu0 0.0
    %6605 = vmatprep.subr.mxu0 0.0
    %6606 = vmatpush2.msra.mxu0 0.0
    %6607 = vmatprep.subr.mxu0 0.0
    %6608 = vmatpush2.msra.mxu0 0.0
    %6609 = vmatprep.mubr.f32.mxu0 0.0
    %6610 = vmatmul.mubr.f32.gmra.mxu0 %v6543
    %v6611 = vpop.f32.mrf.mxu0
    %v6612 = vadd.f32 %v6537, %v6611
    %v6613 = vpop.f32.mrf.mxu0
    %6614 = vdwg.mxu0
    %v6615 = vadd.f32 %v6612, %v973
    %v6616 = vxor.u32 %v6464, 2147483648
    %v6617 = vmul.f32 %v6616, 1.442695
    %v6618 = vpow.pop %v6617
    %v6619 = vadd.f32 %v6618, 1.0
    %v6620 = vrcp.pop %v6619
    %v6621 = vmul.f32 1.0, %v6620
    %v6622 = vtanh.pop %v6464
    %v6623 = vmul.f32 %v6621, %v6073
    %6625 = vrot.lane.b32.xlu0 %v6622, 64
    %v6626 = vpop.permute.xlu0 %6625
    %v6628 = vmul.f32 %v6621, %v6626
    %6630 = vrot.lane.b32.xlu0 %v6628, 32
    %v6631 = vpop.permute.xlu0 %6630
    %v6633 = vadd.f32 %v6623, %v6631
    %v6634 = vtanh.pop %v6633
    %6636 = vrot.lane.b32.xlu0 %v6634, 64
    %v6637 = vpop.permute.xlu0 %6636
    %v6639 = vmul.f32 %v6621, %v6637
    %v6640 = vxor.u32 %v6615, 2147483648
    %v6641 = vmul.f32 %v6640, 1.442695
    %v6642 = vpow.pop %v6641
    %v6643 = vadd.f32 %v6642, 1.0
    %v6644 = vrcp.pop %v6643
    %v6645 = vmul.f32 1.0, %v6644
    %v6646 = vtanh.pop %v6615
    %v6647 = vmul.f32 %v6645, %v6097
    %6649 = vrot.lane.b32.xlu0 %v6646, 64
    %v6650 = vpop.permute.xlu0 %6649
    %v6652 = vmul.f32 %v6645, %v6650
    %6654 = vrot.lane.b32.xlu0 %v6652, 32
    %v6655 = vpop.permute.xlu0 %6654
    %v6657 = vadd.f32 %v6647, %v6655
    %v6658 = vtanh.pop %v6657
    %6660 = vrot.lane.b32.xlu0 %v6658, 64
    %v6661 = vpop.permute.xlu0 %6660
    %v6663 = vmul.f32 %v6645, %v6661
    %vm6664 = vcmp.eq.s32.totalorder %v476, 10
    %v6665 = vsel %vm6664, 1, 0
    %6666 = vset.pattern.permute.xlu0 0
    %6667 = vperm.xlu0 %6666, %v6665
    %v6668 = vpop.permute.xlu0 %6667
    %vm6669 = vcmp.eq.s32.totalorder %v6668, 1
    %v6670 = vsel %vm6669, %v6639, %v6110
    %vm6671 = vcmp.eq.s32.totalorder %v478, 10
    %v6672 = vsel %vm6671, 1, 0
    %6673 = vset.pattern.permute.xlu0 0
    %6674 = vperm.xlu0 %6673, %v6672
    %v6675 = vpop.permute.xlu0 %6674
    %vm6676 = vcmp.eq.s32.totalorder %v6675, 1
    %v6677 = vsel %vm6676, %v6663, %v6117
    %6678 = vmatprep.subr.mxu0 0.0
    %6679 = vmatpush1.msra.mxu0 0.0
    %6680 = vmatprep.subr.mxu0 0.0
    %6681 = vmatpush1.msra.mxu0 0.0
    %6682 = vmatprep.subr.mxu0 0.0
    %6683 = vmatpush1.msra.mxu0 0.0
    %6684 = vmatprep.subr.mxu0 0.0
    %6685 = vmatpush1.msra.mxu0 0.0
    %6686 = vmatprep.subr.mxu0 0.0
    %6687 = vmatpush1.msra.mxu0 0.0
    %6688 = vmatprep.subr.mxu0 0.0
    %6689 = vmatpush1.msra.mxu0 0.0
    %6690 = vmatprep.subr.mxu0 0.0
    %6691 = vmatpush1.msra.mxu0 0.0
    %6692 = vmatprep.subr.mxu0 0.0
    %6693 = vmatpush1.msra.mxu0 0.0
    %6694 = vmatprep.subr.mxu0 0.0
    %6695 = vmatpush1.msra.mxu0 0.0
    %6696 = vmatprep.subr.mxu0 0.0
    %6697 = vmatpush1.msra.mxu0 0.0
    %6698 = vmatprep.subr.mxu0 0.0
    %6699 = vmatpush1.msra.mxu0 0.0
    %6700 = vmatprep.subr.mxu0 0.0
    %6701 = vmatpush1.msra.mxu0 0.0
    %6702 = vmatprep.subr.mxu0 0.0
    %6703 = vmatpush1.msra.mxu0 %v452
    %6704 = vmatprep.subr.mxu0 0.0
    %6705 = vmatpush1.msra.mxu0 %v451
    %6706 = vmatprep.subr.mxu0 0.0
    %6707 = vmatpush1.msra.mxu0 %v450
    %6708 = vmatprep.subr.mxu0 0.0
    %6709 = vmatpush1.msra.mxu0 %v449
    %6710 = vmatprep.subr.mxu0 0.0
    %6711 = vmatpush2.msra.mxu0 0.0
    %6712 = vmatprep.subr.mxu0 0.0
    %6713 = vmatpush2.msra.mxu0 0.0
    %6714 = vmatprep.subr.mxu0 0.0
    %6715 = vmatpush2.msra.mxu0 0.0
    %6716 = vmatprep.subr.mxu0 0.0
    %6717 = vmatpush2.msra.mxu0 0.0
    %6718 = vmatprep.subr.mxu0 0.0
    %6719 = vmatpush2.msra.mxu0 0.0
    %6720 = vmatprep.subr.mxu0 0.0
    %6721 = vmatpush2.msra.mxu0 0.0
    %6722 = vmatprep.subr.mxu0 0.0
    %6723 = vmatpush2.msra.mxu0 0.0
    %6724 = vmatprep.subr.mxu0 0.0
    %6725 = vmatpush2.msra.mxu0 0.0
    %6726 = vmatprep.subr.mxu0 0.0
    %6727 = vmatpush2.msra.mxu0 0.0
    %6728 = vmatprep.subr.mxu0 0.0
    %6729 = vmatpush2.msra.mxu0 0.0
    %6730 = vmatprep.subr.mxu0 0.0
    %6731 = vmatpush2.msra.mxu0 0.0
    %6732 = vmatprep.subr.mxu0 0.0
    %6733 = vmatpush2.msra.mxu0 0.0
    %6734 = vmatprep.subr.mxu0 0.0
    %6735 = vmatpush2.msra.mxu0 0.0
    %6736 = vmatprep.subr.mxu0 0.0
    %6737 = vmatpush2.msra.mxu0 0.0
    %6738 = vmatprep.subr.mxu0 0.0
    %6739 = vmatpush2.msra.mxu0 0.0
    %6740 = vmatprep.subr.mxu0 0.0
    %6741 = vmatpush2.msra.mxu0 0.0
    %6742 = vmatprep.mubr.f32.mxu0 0.0
    %6743 = vmatmul.mubr.f32.gmra.mxu0 %v6392
    %v6744 = vpop.f32.mrf.mxu0
    %v6745 = vadd.f32 0.0, %v6744
    %v6746 = vpop.f32.mrf.mxu0
    %6747 = vdwg.mxu0
    %v6749 = vrot.slane %v6745, 4
    %v6751 = vadd.f32 %v287, %v6749
    %6752 = vmatprep.subr.mxu0 0.0
    %6753 = vmatpush1.msra.mxu0 0.0
    %6754 = vmatprep.subr.mxu0 0.0
    %6755 = vmatpush1.msra.mxu0 0.0
    %6756 = vmatprep.subr.mxu0 0.0
    %6757 = vmatpush1.msra.mxu0 0.0
    %6758 = vmatprep.subr.mxu0 0.0
    %6759 = vmatpush1.msra.mxu0 0.0
    %6760 = vmatprep.subr.mxu0 0.0
    %6761 = vmatpush1.msra.mxu0 0.0
    %6762 = vmatprep.subr.mxu0 0.0
    %6763 = vmatpush1.msra.mxu0 0.0
    %6764 = vmatprep.subr.mxu0 0.0
    %6765 = vmatpush1.msra.mxu0 0.0
    %6766 = vmatprep.subr.mxu0 0.0
    %6767 = vmatpush1.msra.mxu0 0.0
    %6768 = vmatprep.subr.mxu0 0.0
    %6769 = vmatpush1.msra.mxu0 0.0
    %6770 = vmatprep.subr.mxu0 0.0
    %6771 = vmatpush1.msra.mxu0 0.0
    %6772 = vmatprep.subr.mxu0 0.0
    %6773 = vmatpush1.msra.mxu0 0.0
    %6774 = vmatprep.subr.mxu0 0.0
    %6775 = vmatpush1.msra.mxu0 0.0
    %6776 = vmatprep.subr.mxu0 0.0
    %6777 = vmatpush1.msra.mxu0 %v465
    %6778 = vmatprep.subr.mxu0 0.0
    %6779 = vmatpush1.msra.mxu0 %v464
    %6780 = vmatprep.subr.mxu0 0.0
    %6781 = vmatpush1.msra.mxu0 %v463
    %6782 = vmatprep.subr.mxu0 0.0
    %6783 = vmatpush1.msra.mxu0 %v462
    %6784 = vmatprep.subr.mxu0 0.0
    %6785 = vmatpush2.msra.mxu0 0.0
    %6786 = vmatprep.subr.mxu0 0.0
    %6787 = vmatpush2.msra.mxu0 0.0
    %6788 = vmatprep.subr.mxu0 0.0
    %6789 = vmatpush2.msra.mxu0 0.0
    %6790 = vmatprep.subr.mxu0 0.0
    %6791 = vmatpush2.msra.mxu0 0.0
    %6792 = vmatprep.subr.mxu0 0.0
    %6793 = vmatpush2.msra.mxu0 0.0
    %6794 = vmatprep.subr.mxu0 0.0
    %6795 = vmatpush2.msra.mxu0 0.0
    %6796 = vmatprep.subr.mxu0 0.0
    %6797 = vmatpush2.msra.mxu0 0.0
    %6798 = vmatprep.subr.mxu0 0.0
    %6799 = vmatpush2.msra.mxu0 0.0
    %6800 = vmatprep.subr.mxu0 0.0
    %6801 = vmatpush2.msra.mxu0 0.0
    %6802 = vmatprep.subr.mxu0 0.0
    %6803 = vmatpush2.msra.mxu0 0.0
    %6804 = vmatprep.subr.mxu0 0.0
    %6805 = vmatpush2.msra.mxu0 0.0
    %6806 = vmatprep.subr.mxu0 0.0
    %6807 = vmatpush2.msra.mxu0 0.0
    %6808 = vmatprep.subr.mxu0 0.0
    %6809 = vmatpush2.msra.mxu0 0.0
    %6810 = vmatprep.subr.mxu0 0.0
    %6811 = vmatpush2.msra.mxu0 0.0
    %6812 = vmatprep.subr.mxu0 0.0
    %6813 = vmatpush2.msra.mxu0 0.0
    %6814 = vmatprep.subr.mxu0 0.0
    %6815 = vmatpush2.msra.mxu0 0.0
    %6816 = vmatprep.mubr.f32.mxu0 0.0
    %6817 = vmatmul.mubr.f32.gmra.mxu0 %v6543
    %v6818 = vpop.f32.mrf.mxu0
    %v6819 = vadd.f32 0.0, %v6818
    %v6820 = vpop.f32.mrf.mxu0
    %6821 = vdwg.mxu0
    %v6823 = vrot.slane %v6819, 4
    %v6825 = vadd.f32 %v446, %v6823
    %v6826 = vxor.u32 %v6751, 2147483648
    %v6827 = vmul.f32 %v6826, 1.442695
    %v6828 = vpow.pop %v6827
    %v6829 = vadd.f32 %v6828, 1.0
    %v6830 = vrcp.pop %v6829
    %v6831 = vmul.f32 1.0, %v6830
    %v6832 = vtanh.pop %v6751
    %v6834 = vrot.slane %v6280, 4
    %v6836 = vmul.f32 %v6831, %v6834
    %6838 = vrot.lane.b32.xlu0 %v6832, 64
    %v6839 = vpop.permute.xlu0 %6838
    %v6841 = vmul.f32 %v6831, %v6839
    %6843 = vrot.lane.b32.xlu0 %v6841, 32
    %v6844 = vpop.permute.xlu0 %6843
    %v6846 = vadd.f32 %v6836, %v6844
    %v6847 = vtanh.pop %v6846
    %6849 = vrot.lane.b32.xlu0 %v6847, 64
    %v6850 = vpop.permute.xlu0 %6849
    %v6852 = vmul.f32 %v6831, %v6850
    %v6853 = vxor.u32 %v6825, 2147483648
    %v6854 = vmul.f32 %v6853, 1.442695
    %v6855 = vpow.pop %v6854
    %v6856 = vadd.f32 %v6855, 1.0
    %v6857 = vrcp.pop %v6856
    %v6858 = vmul.f32 1.0, %v6857
    %v6859 = vtanh.pop %v6825
    %v6861 = vrot.slane %v6307, 4
    %v6863 = vmul.f32 %v6858, %v6861
    %6865 = vrot.lane.b32.xlu0 %v6859, 64
    %v6866 = vpop.permute.xlu0 %6865
    %v6868 = vmul.f32 %v6858, %v6866
    %6870 = vrot.lane.b32.xlu0 %v6868, 32
    %v6871 = vpop.permute.xlu0 %6870
    %v6873 = vadd.f32 %v6863, %v6871
    %v6874 = vtanh.pop %v6873
    %6876 = vrot.lane.b32.xlu0 %v6874, 64
    %v6877 = vpop.permute.xlu0 %6876
    %v6879 = vmul.f32 %v6858, %v6877
    %6881 = vrot.lane.b32.xlu0 %v6639, 32
    %v6882 = vpop.permute.xlu0 %6881
    %v6883 = vsel %vm176, %v6882, 0
    %6885 = vmatprep.subr.mxu0 0.0
    %6886 = vmatpush1.msra.mxu0 0.0
    %6887 = vmatprep.subr.mxu0 0.0
    %6888 = vmatpush1.msra.mxu0 0.0
    %6889 = vmatprep.subr.mxu0 0.0
    %6890 = vmatpush1.msra.mxu0 0.0
    %6891 = vmatprep.subr.mxu0 0.0
    %6892 = vmatpush1.msra.mxu0 0.0
    %6893 = vmatprep.subr.mxu0 0.0
    %6894 = vmatpush1.msra.mxu0 0.0
    %6895 = vmatprep.subr.mxu0 0.0
    %6896 = vmatpush1.msra.mxu0 0.0
    %6897 = vmatprep.subr.mxu0 0.0
    %6898 = vmatpush1.msra.mxu0 0.0
    %6899 = vmatprep.subr.mxu0 0.0
    %6900 = vmatpush1.msra.mxu0 0.0
    %6901 = vmatprep.subr.mxu0 0.0
    %6902 = vmatpush1.msra.mxu0 0.0
    %6903 = vmatprep.subr.mxu0 0.0
    %6904 = vmatpush1.msra.mxu0 0.0
    %6905 = vmatprep.subr.mxu0 0.0
    %6906 = vmatpush1.msra.mxu0 0.0
    %6907 = vmatprep.subr.mxu0 0.0
    %6908 = vmatpush1.msra.mxu0 0.0
    %6909 = vmatprep.subr.mxu0 0.0
    %6910 = vmatpush1.msra.mxu0 %v460
    %6911 = vmatprep.subr.mxu0 0.0
    %6912 = vmatpush1.msra.mxu0 %v459
    %6913 = vmatprep.subr.mxu0 0.0
    %6914 = vmatpush1.msra.mxu0 %v458
    %6915 = vmatprep.subr.mxu0 0.0
    %6916 = vmatpush1.msra.mxu0 %v457
    %6917 = vmatprep.subr.mxu0 0.0
    %6918 = vmatpush2.msra.mxu0 0.0
    %6919 = vmatprep.subr.mxu0 0.0
    %6920 = vmatpush2.msra.mxu0 0.0
    %6921 = vmatprep.subr.mxu0 0.0
    %6922 = vmatpush2.msra.mxu0 0.0
    %6923 = vmatprep.subr.mxu0 0.0
    %6924 = vmatpush2.msra.mxu0 0.0
    %6925 = vmatprep.subr.mxu0 0.0
    %6926 = vmatpush2.msra.mxu0 0.0
    %6927 = vmatprep.subr.mxu0 0.0
    %6928 = vmatpush2.msra.mxu0 0.0
    %6929 = vmatprep.subr.mxu0 0.0
    %6930 = vmatpush2.msra.mxu0 0.0
    %6931 = vmatprep.subr.mxu0 0.0
    %6932 = vmatpush2.msra.mxu0 0.0
    %6933 = vmatprep.subr.mxu0 0.0
    %6934 = vmatpush2.msra.mxu0 0.0
    %6935 = vmatprep.subr.mxu0 0.0
    %6936 = vmatpush2.msra.mxu0 0.0
    %6937 = vmatprep.subr.mxu0 0.0
    %6938 = vmatpush2.msra.mxu0 0.0
    %6939 = vmatprep.subr.mxu0 0.0
    %6940 = vmatpush2.msra.mxu0 0.0
    %6941 = vmatprep.subr.mxu0 0.0
    %6942 = vmatpush2.msra.mxu0 0.0
    %6943 = vmatprep.subr.mxu0 0.0
    %6944 = vmatpush2.msra.mxu0 0.0
    %6945 = vmatprep.subr.mxu0 0.0
    %6946 = vmatpush2.msra.mxu0 0.0
    %6947 = vmatprep.subr.mxu0 0.0
    %6948 = vmatpush2.msra.mxu0 0.0
    %6949 = vmatprep.mubr.f32.mxu0 0.0
    %6950 = vmatmul.mubr.f32.gmra.mxu0 %v6883
    %v6951 = vpop.f32.mrf.mxu0
    %v6952 = vadd.f32 0.0, %v6951
    %v6953 = vpop.f32.mrf.mxu0
    %6954 = vdwg.mxu0
    %v6956 = vrot.slane %v6852, 4
    %6957 = vrot.lane.b32.xlu0 %v6956, 32
    %v6958 = vpop.permute.xlu0 %6957
    %v6959 = vsel %vm176, %v6958, 0
    %6961 = vmatprep.subr.mxu0 0.0
    %6962 = vmatpush1.msra.mxu0 0.0
    %6963 = vmatprep.subr.mxu0 0.0
    %6964 = vmatpush1.msra.mxu0 0.0
    %6965 = vmatprep.subr.mxu0 0.0
    %6966 = vmatpush1.msra.mxu0 0.0
    %6967 = vmatprep.subr.mxu0 0.0
    %6968 = vmatpush1.msra.mxu0 0.0
    %6969 = vmatprep.subr.mxu0 0.0
    %6970 = vmatpush1.msra.mxu0 0.0
    %6971 = vmatprep.subr.mxu0 0.0
    %6972 = vmatpush1.msra.mxu0 0.0
    %6973 = vmatprep.subr.mxu0 0.0
    %6974 = vmatpush1.msra.mxu0 0.0
    %6975 = vmatprep.subr.mxu0 0.0
    %6976 = vmatpush1.msra.mxu0 0.0
    %6977 = vmatprep.subr.mxu0 0.0
    %6978 = vmatpush1.msra.mxu0 0.0
    %6979 = vmatprep.subr.mxu0 0.0
    %6980 = vmatpush1.msra.mxu0 0.0
    %6981 = vmatprep.subr.mxu0 0.0
    %6982 = vmatpush1.msra.mxu0 0.0
    %6983 = vmatprep.subr.mxu0 0.0
    %6984 = vmatpush1.msra.mxu0 0.0
    %6985 = vmatprep.subr.mxu0 0.0
    %6986 = vmatpush1.msra.mxu0 %v456
    %6987 = vmatprep.subr.mxu0 0.0
    %6988 = vmatpush1.msra.mxu0 %v455
    %6989 = vmatprep.subr.mxu0 0.0
    %6990 = vmatpush1.msra.mxu0 %v454
    %6991 = vmatprep.subr.mxu0 0.0
    %6992 = vmatpush1.msra.mxu0 %v453
    %6993 = vmatprep.subr.mxu0 0.0
    %6994 = vmatpush2.msra.mxu0 0.0
    %6995 = vmatprep.subr.mxu0 0.0
    %6996 = vmatpush2.msra.mxu0 0.0
    %6997 = vmatprep.subr.mxu0 0.0
    %6998 = vmatpush2.msra.mxu0 0.0
    %6999 = vmatprep.subr.mxu0 0.0
    %7000 = vmatpush2.msra.mxu0 0.0
    %7001 = vmatprep.subr.mxu0 0.0
    %7002 = vmatpush2.msra.mxu0 0.0
    %7003 = vmatprep.subr.mxu0 0.0
    %7004 = vmatpush2.msra.mxu0 0.0
    %7005 = vmatprep.subr.mxu0 0.0
    %7006 = vmatpush2.msra.mxu0 0.0
    %7007 = vmatprep.subr.mxu0 0.0
    %7008 = vmatpush2.msra.mxu0 0.0
    %7009 = vmatprep.subr.mxu0 0.0
    %7010 = vmatpush2.msra.mxu0 0.0
    %7011 = vmatprep.subr.mxu0 0.0
    %7012 = vmatpush2.msra.mxu0 0.0
    %7013 = vmatprep.subr.mxu0 0.0
    %7014 = vmatpush2.msra.mxu0 0.0
    %7015 = vmatprep.subr.mxu0 0.0
    %7016 = vmatpush2.msra.mxu0 0.0
    %7017 = vmatprep.subr.mxu0 0.0
    %7018 = vmatpush2.msra.mxu0 0.0
    %7019 = vmatprep.subr.mxu0 0.0
    %7020 = vmatpush2.msra.mxu0 0.0
    %7021 = vmatprep.subr.mxu0 0.0
    %7022 = vmatpush2.msra.mxu0 0.0
    %7023 = vmatprep.subr.mxu0 0.0
    %7024 = vmatpush2.msra.mxu0 0.0
    %7025 = vmatprep.mubr.f32.mxu0 0.0
    %7026 = vmatmul.mubr.f32.gmra.mxu0 %v6959
    %v7027 = vpop.f32.mrf.mxu0
    %v7028 = vadd.f32 %v6952, %v7027
    %v7029 = vpop.f32.mrf.mxu0
    %7030 = vdwg.mxu0
    %v7031 = vadd.f32 %v7028, %v821
    %7033 = vrot.lane.b32.xlu0 %v6663, 32
    %v7034 = vpop.permute.xlu0 %7033
    %v7035 = vsel %vm176, %v7034, 0
    %7037 = vmatprep.subr.mxu0 0.0
    %7038 = vmatpush1.msra.mxu0 0.0
    %7039 = vmatprep.subr.mxu0 0.0
    %7040 = vmatpush1.msra.mxu0 0.0
    %7041 = vmatprep.subr.mxu0 0.0
    %7042 = vmatpush1.msra.mxu0 0.0
    %7043 = vmatprep.subr.mxu0 0.0
    %7044 = vmatpush1.msra.mxu0 0.0
    %7045 = vmatprep.subr.mxu0 0.0
    %7046 = vmatpush1.msra.mxu0 0.0
    %7047 = vmatprep.subr.mxu0 0.0
    %7048 = vmatpush1.msra.mxu0 0.0
    %7049 = vmatprep.subr.mxu0 0.0
    %7050 = vmatpush1.msra.mxu0 0.0
    %7051 = vmatprep.subr.mxu0 0.0
    %7052 = vmatpush1.msra.mxu0 0.0
    %7053 = vmatprep.subr.mxu0 0.0
    %7054 = vmatpush1.msra.mxu0 0.0
    %7055 = vmatprep.subr.mxu0 0.0
    %7056 = vmatpush1.msra.mxu0 0.0
    %7057 = vmatprep.subr.mxu0 0.0
    %7058 = vmatpush1.msra.mxu0 0.0
    %7059 = vmatprep.subr.mxu0 0.0
    %7060 = vmatpush1.msra.mxu0 0.0
    %7061 = vmatprep.subr.mxu0 0.0
    %7062 = vmatpush1.msra.mxu0 %v473
    %7063 = vmatprep.subr.mxu0 0.0
    %7064 = vmatpush1.msra.mxu0 %v472
    %7065 = vmatprep.subr.mxu0 0.0
    %7066 = vmatpush1.msra.mxu0 %v471
    %7067 = vmatprep.subr.mxu0 0.0
    %7068 = vmatpush1.msra.mxu0 %v470
    %7069 = vmatprep.subr.mxu0 0.0
    %7070 = vmatpush2.msra.mxu0 0.0
    %7071 = vmatprep.subr.mxu0 0.0
    %7072 = vmatpush2.msra.mxu0 0.0
    %7073 = vmatprep.subr.mxu0 0.0
    %7074 = vmatpush2.msra.mxu0 0.0
    %7075 = vmatprep.subr.mxu0 0.0
    %7076 = vmatpush2.msra.mxu0 0.0
    %7077 = vmatprep.subr.mxu0 0.0
    %7078 = vmatpush2.msra.mxu0 0.0
    %7079 = vmatprep.subr.mxu0 0.0
    %7080 = vmatpush2.msra.mxu0 0.0
    %7081 = vmatprep.subr.mxu0 0.0
    %7082 = vmatpush2.msra.mxu0 0.0
    %7083 = vmatprep.subr.mxu0 0.0
    %7084 = vmatpush2.msra.mxu0 0.0
    %7085 = vmatprep.subr.mxu0 0.0
    %7086 = vmatpush2.msra.mxu0 0.0
    %7087 = vmatprep.subr.mxu0 0.0
    %7088 = vmatpush2.msra.mxu0 0.0
    %7089 = vmatprep.subr.mxu0 0.0
    %7090 = vmatpush2.msra.mxu0 0.0
    %7091 = vmatprep.subr.mxu0 0.0
    %7092 = vmatpush2.msra.mxu0 0.0
    %7093 = vmatprep.subr.mxu0 0.0
    %7094 = vmatpush2.msra.mxu0 0.0
    %7095 = vmatprep.subr.mxu0 0.0
    %7096 = vmatpush2.msra.mxu0 0.0
    %7097 = vmatprep.subr.mxu0 0.0
    %7098 = vmatpush2.msra.mxu0 0.0
    %7099 = vmatprep.subr.mxu0 0.0
    %7100 = vmatpush2.msra.mxu0 0.0
    %7101 = vmatprep.mubr.f32.mxu0 0.0
    %7102 = vmatmul.mubr.f32.gmra.mxu0 %v7035
    %v7103 = vpop.f32.mrf.mxu0
    %v7104 = vadd.f32 0.0, %v7103
    %v7105 = vpop.f32.mrf.mxu0
    %7106 = vdwg.mxu0
    %v7108 = vrot.slane %v6879, 4
    %7109 = vrot.lane.b32.xlu0 %v7108, 32
    %v7110 = vpop.permute.xlu0 %7109
    %v7111 = vsel %vm176, %v7110, 0
    %7113 = vmatprep.subr.mxu0 0.0
    %7114 = vmatpush1.msra.mxu0 0.0
    %7115 = vmatprep.subr.mxu0 0.0
    %7116 = vmatpush1.msra.mxu0 0.0
    %7117 = vmatprep.subr.mxu0 0.0
    %7118 = vmatpush1.msra.mxu0 0.0
    %7119 = vmatprep.subr.mxu0 0.0
    %7120 = vmatpush1.msra.mxu0 0.0
    %7121 = vmatprep.subr.mxu0 0.0
    %7122 = vmatpush1.msra.mxu0 0.0
    %7123 = vmatprep.subr.mxu0 0.0
    %7124 = vmatpush1.msra.mxu0 0.0
    %7125 = vmatprep.subr.mxu0 0.0
    %7126 = vmatpush1.msra.mxu0 0.0
    %7127 = vmatprep.subr.mxu0 0.0
    %7128 = vmatpush1.msra.mxu0 0.0
    %7129 = vmatprep.subr.mxu0 0.0
    %7130 = vmatpush1.msra.mxu0 0.0
    %7131 = vmatprep.subr.mxu0 0.0
    %7132 = vmatpush1.msra.mxu0 0.0
    %7133 = vmatprep.subr.mxu0 0.0
    %7134 = vmatpush1.msra.mxu0 0.0
    %7135 = vmatprep.subr.mxu0 0.0
    %7136 = vmatpush1.msra.mxu0 0.0
    %7137 = vmatprep.subr.mxu0 0.0
    %7138 = vmatpush1.msra.mxu0 %v469
    %7139 = vmatprep.subr.mxu0 0.0
    %7140 = vmatpush1.msra.mxu0 %v468
    %7141 = vmatprep.subr.mxu0 0.0
    %7142 = vmatpush1.msra.mxu0 %v467
    %7143 = vmatprep.subr.mxu0 0.0
    %7144 = vmatpush1.msra.mxu0 %v466
    %7145 = vmatprep.subr.mxu0 0.0
    %7146 = vmatpush2.msra.mxu0 0.0
    %7147 = vmatprep.subr.mxu0 0.0
    %7148 = vmatpush2.msra.mxu0 0.0
    %7149 = vmatprep.subr.mxu0 0.0
    %7150 = vmatpush2.msra.mxu0 0.0
    %7151 = vmatprep.subr.mxu0 0.0
    %7152 = vmatpush2.msra.mxu0 0.0
    %7153 = vmatprep.subr.mxu0 0.0
    %7154 = vmatpush2.msra.mxu0 0.0
    %7155 = vmatprep.subr.mxu0 0.0
    %7156 = vmatpush2.msra.mxu0 0.0
    %7157 = vmatprep.subr.mxu0 0.0
    %7158 = vmatpush2.msra.mxu0 0.0
    %7159 = vmatprep.subr.mxu0 0.0
    %7160 = vmatpush2.msra.mxu0 0.0
    %7161 = vmatprep.subr.mxu0 0.0
    %7162 = vmatpush2.msra.mxu0 0.0
    %7163 = vmatprep.subr.mxu0 0.0
    %7164 = vmatpush2.msra.mxu0 0.0
    %7165 = vmatprep.subr.mxu0 0.0
    %7166 = vmatpush2.msra.mxu0 0.0
    %7167 = vmatprep.subr.mxu0 0.0
    %7168 = vmatpush2.msra.mxu0 0.0
    %7169 = vmatprep.subr.mxu0 0.0
    %7170 = vmatpush2.msra.mxu0 0.0
    %7171 = vmatprep.subr.mxu0 0.0
    %7172 = vmatpush2.msra.mxu0 0.0
    %7173 = vmatprep.subr.mxu0 0.0
    %7174 = vmatpush2.msra.mxu0 0.0
    %7175 = vmatprep.subr.mxu0 0.0
    %7176 = vmatpush2.msra.mxu0 0.0
    %7177 = vmatprep.mubr.f32.mxu0 0.0
    %7178 = vmatmul.mubr.f32.gmra.mxu0 %v7111
    %v7179 = vpop.f32.mrf.mxu0
    %v7180 = vadd.f32 %v7104, %v7179
    %v7181 = vpop.f32.mrf.mxu0
    %7182 = vdwg.mxu0
    %v7183 = vadd.f32 %v7180, %v973
    %v7184 = vxor.u32 %v7031, 2147483648
    %v7185 = vmul.f32 %v7184, 1.442695
    %v7186 = vpow.pop %v7185
    %v7187 = vadd.f32 %v7186, 1.0
    %v7188 = vrcp.pop %v7187
    %v7189 = vmul.f32 1.0, %v7188
    %v7190 = vtanh.pop %v7031
    %v7191 = vmul.f32 %v7189, %v6633
    %7193 = vrot.lane.b32.xlu0 %v7190, 64
    %v7194 = vpop.permute.xlu0 %7193
    %v7196 = vmul.f32 %v7189, %v7194
    %7198 = vrot.lane.b32.xlu0 %v7196, 32
    %v7199 = vpop.permute.xlu0 %7198
    %v7201 = vadd.f32 %v7191, %v7199
    %v7202 = vtanh.pop %v7201
    %7204 = vrot.lane.b32.xlu0 %v7202, 64
    %v7205 = vpop.permute.xlu0 %7204
    %v7207 = vmul.f32 %v7189, %v7205
    %v7208 = vxor.u32 %v7183, 2147483648
    %v7209 = vmul.f32 %v7208, 1.442695
    %v7210 = vpow.pop %v7209
    %v7211 = vadd.f32 %v7210, 1.0
    %v7212 = vrcp.pop %v7211
    %v7213 = vmul.f32 1.0, %v7212
    %v7214 = vtanh.pop %v7183
    %v7215 = vmul.f32 %v7213, %v6657
    %7217 = vrot.lane.b32.xlu0 %v7214, 64
    %v7218 = vpop.permute.xlu0 %7217
    %v7220 = vmul.f32 %v7213, %v7218
    %7222 = vrot.lane.b32.xlu0 %v7220, 32
    %v7223 = vpop.permute.xlu0 %7222
    %v7225 = vadd.f32 %v7215, %v7223
    %v7226 = vtanh.pop %v7225
    %7228 = vrot.lane.b32.xlu0 %v7226, 64
    %v7229 = vpop.permute.xlu0 %7228
    %v7231 = vmul.f32 %v7213, %v7229
    %vm7232 = vcmp.eq.s32.totalorder %v476, 11
    %v7233 = vsel %vm7232, 1, 0
    %7234 = vset.pattern.permute.xlu0 0
    %7235 = vperm.xlu0 %7234, %v7233
    %v7236 = vpop.permute.xlu0 %7235
    %vm7237 = vcmp.eq.s32.totalorder %v7236, 1
    %v7238 = vsel %vm7237, %v7207, %v6670
    %vm7239 = vcmp.eq.s32.totalorder %v478, 11
    %v7240 = vsel %vm7239, 1, 0
    %7241 = vset.pattern.permute.xlu0 0
    %7242 = vperm.xlu0 %7241, %v7240
    %v7243 = vpop.permute.xlu0 %7242
    %vm7244 = vcmp.eq.s32.totalorder %v7243, 1
    %v7245 = vsel %vm7244, %v7231, %v6677
    %v7246 = vld [vmem:[#allocation8] sm:$0xff]
    %v7247 = vld [vmem:[#allocation8 + $0x8] sm:$0xff]
    %v7248 = vld [vmem:[#allocation8 + $0x10] sm:$0xff]
    %v7249 = vld [vmem:[#allocation8 + $0x18] sm:$0xff]
    %v7250 = vld [vmem:[#allocation10] sm:$0xff]
    %v7251 = vld [vmem:[#allocation10 + $0x8] sm:$0xff]
    %v7252 = vld [vmem:[#allocation10 + $0x10] sm:$0xff]
    %v7253 = vld [vmem:[#allocation10 + $0x18] sm:$0xff]
    %7255 = vrot.lane.b32.xlu0 %v7245, 32
    %v7256 = vpop.permute.xlu0 %7255
    %v7257 = vsel %vm176, %v7256, 0
    %7259 = vmatprep.subr.mxu0 0.0
    %7260 = vmatpush1.msra.mxu0 0.0
    %7261 = vmatprep.subr.mxu0 0.0
    %7262 = vmatpush1.msra.mxu0 0.0
    %7263 = vmatprep.subr.mxu0 0.0
    %7264 = vmatpush1.msra.mxu0 0.0
    %7265 = vmatprep.subr.mxu0 0.0
    %7266 = vmatpush1.msra.mxu0 0.0
    %7267 = vmatprep.subr.mxu0 0.0
    %7268 = vmatpush1.msra.mxu0 0.0
    %7269 = vmatprep.subr.mxu0 0.0
    %7270 = vmatpush1.msra.mxu0 0.0
    %7271 = vmatprep.subr.mxu0 0.0
    %7272 = vmatpush1.msra.mxu0 0.0
    %7273 = vmatprep.subr.mxu0 0.0
    %7274 = vmatpush1.msra.mxu0 0.0
    %7275 = vmatprep.subr.mxu0 0.0
    %7276 = vmatpush1.msra.mxu0 0.0
    %7277 = vmatprep.subr.mxu0 0.0
    %7278 = vmatpush1.msra.mxu0 0.0
    %7279 = vmatprep.subr.mxu0 0.0
    %7280 = vmatpush1.msra.mxu0 0.0
    %7281 = vmatprep.subr.mxu0 0.0
    %7282 = vmatpush1.msra.mxu0 0.0
    %7283 = vmatprep.subr.mxu0 0.0
    %7284 = vmatpush1.msra.mxu0 %v7253
    %7285 = vmatprep.subr.mxu0 0.0
    %7286 = vmatpush1.msra.mxu0 %v7252
    %7287 = vmatprep.subr.mxu0 0.0
    %7288 = vmatpush1.msra.mxu0 %v7251
    %7289 = vmatprep.subr.mxu0 0.0
    %7290 = vmatpush1.msra.mxu0 %v7250
    %7291 = vmatprep.subr.mxu0 0.0
    %7292 = vmatpush2.msra.mxu0 0.0
    %7293 = vmatprep.subr.mxu0 0.0
    %7294 = vmatpush2.msra.mxu0 0.0
    %7295 = vmatprep.subr.mxu0 0.0
    %7296 = vmatpush2.msra.mxu0 0.0
    %7297 = vmatprep.subr.mxu0 0.0
    %7298 = vmatpush2.msra.mxu0 0.0
    %7299 = vmatprep.subr.mxu0 0.0
    %7300 = vmatpush2.msra.mxu0 0.0
    %7301 = vmatprep.subr.mxu0 0.0
    %7302 = vmatpush2.msra.mxu0 0.0
    %7303 = vmatprep.subr.mxu0 0.0
    %7304 = vmatpush2.msra.mxu0 0.0
    %7305 = vmatprep.subr.mxu0 0.0
    %7306 = vmatpush2.msra.mxu0 0.0
    %7307 = vmatprep.subr.mxu0 0.0
    %7308 = vmatpush2.msra.mxu0 0.0
    %7309 = vmatprep.subr.mxu0 0.0
    %7310 = vmatpush2.msra.mxu0 0.0
    %7311 = vmatprep.subr.mxu0 0.0
    %7312 = vmatpush2.msra.mxu0 0.0
    %7313 = vmatprep.subr.mxu0 0.0
    %7314 = vmatpush2.msra.mxu0 0.0
    %7315 = vmatprep.subr.mxu0 0.0
    %7316 = vmatpush2.msra.mxu0 0.0
    %7317 = vmatprep.subr.mxu0 0.0
    %7318 = vmatpush2.msra.mxu0 0.0
    %7319 = vmatprep.subr.mxu0 0.0
    %7320 = vmatpush2.msra.mxu0 0.0
    %7321 = vmatprep.subr.mxu0 0.0
    %7322 = vmatpush2.msra.mxu0 0.0
    %7323 = vmatprep.mubr.f32.mxu0 0.0
    %7324 = vmatmul.mubr.f32.gmra.mxu0 %v7257
    %v7325 = vpop.f32.mrf.mxu0
    %v7326 = vadd.f32 0.0, %v7325
    %v7327 = vpop.f32.mrf.mxu0
    %7328 = vdwg.mxu0
    %7330 = vrot.lane.b32.xlu0 %v7238, 32
    %v7331 = vpop.permute.xlu0 %7330
    %v7332 = vsel %vm176, %v7331, 0
    %7334 = vmatprep.subr.mxu0 0.0
    %7335 = vmatpush1.msra.mxu0 0.0
    %7336 = vmatprep.subr.mxu0 0.0
    %7337 = vmatpush1.msra.mxu0 0.0
    %7338 = vmatprep.subr.mxu0 0.0
    %7339 = vmatpush1.msra.mxu0 0.0
    %7340 = vmatprep.subr.mxu0 0.0
    %7341 = vmatpush1.msra.mxu0 0.0
    %7342 = vmatprep.subr.mxu0 0.0
    %7343 = vmatpush1.msra.mxu0 0.0
    %7344 = vmatprep.subr.mxu0 0.0
    %7345 = vmatpush1.msra.mxu0 0.0
    %7346 = vmatprep.subr.mxu0 0.0
    %7347 = vmatpush1.msra.mxu0 0.0
    %7348 = vmatprep.subr.mxu0 0.0
    %7349 = vmatpush1.msra.mxu0 0.0
    %7350 = vmatprep.subr.mxu0 0.0
    %7351 = vmatpush1.msra.mxu0 0.0
    %7352 = vmatprep.subr.mxu0 0.0
    %7353 = vmatpush1.msra.mxu0 0.0
    %7354 = vmatprep.subr.mxu0 0.0
    %7355 = vmatpush1.msra.mxu0 0.0
    %7356 = vmatprep.subr.mxu0 0.0
    %7357 = vmatpush1.msra.mxu0 0.0
    %7358 = vmatprep.subr.mxu0 0.0
    %7359 = vmatpush1.msra.mxu0 %v7249
    %7360 = vmatprep.subr.mxu0 0.0
    %7361 = vmatpush1.msra.mxu0 %v7248
    %7362 = vmatprep.subr.mxu0 0.0
    %7363 = vmatpush1.msra.mxu0 %v7247
    %7364 = vmatprep.subr.mxu0 0.0
    %7365 = vmatpush1.msra.mxu0 %v7246
    %7366 = vmatprep.subr.mxu0 0.0
    %7367 = vmatpush2.msra.mxu0 0.0
    %7368 = vmatprep.subr.mxu0 0.0
    %7369 = vmatpush2.msra.mxu0 0.0
    %7370 = vmatprep.subr.mxu0 0.0
    %7371 = vmatpush2.msra.mxu0 0.0
    %7372 = vmatprep.subr.mxu0 0.0
    %7373 = vmatpush2.msra.mxu0 0.0
    %7374 = vmatprep.subr.mxu0 0.0
    %7375 = vmatpush2.msra.mxu0 0.0
    %7376 = vmatprep.subr.mxu0 0.0
    %7377 = vmatpush2.msra.mxu0 0.0
    %7378 = vmatprep.subr.mxu0 0.0
    %7379 = vmatpush2.msra.mxu0 0.0
    %7380 = vmatprep.subr.mxu0 0.0
    %7381 = vmatpush2.msra.mxu0 0.0
    %7382 = vmatprep.subr.mxu0 0.0
    %7383 = vmatpush2.msra.mxu0 0.0
    %7384 = vmatprep.subr.mxu0 0.0
    %7385 = vmatpush2.msra.mxu0 0.0
    %7386 = vmatprep.subr.mxu0 0.0
    %7387 = vmatpush2.msra.mxu0 0.0
    %7388 = vmatprep.subr.mxu0 0.0
    %7389 = vmatpush2.msra.mxu0 0.0
    %7390 = vmatprep.subr.mxu0 0.0
    %7391 = vmatpush2.msra.mxu0 0.0
    %7392 = vmatprep.subr.mxu0 0.0
    %7393 = vmatpush2.msra.mxu0 0.0
    %7394 = vmatprep.subr.mxu0 0.0
    %7395 = vmatpush2.msra.mxu0 0.0
    %7396 = vmatprep.subr.mxu0 0.0
    %7397 = vmatpush2.msra.mxu0 0.0
    %7398 = vmatprep.mubr.f32.mxu0 0.0
    %7399 = vmatmul.mubr.f32.gmra.mxu0 %v7332
    %v7400 = vpop.f32.mrf.mxu0
    %v7401 = vadd.f32 %v7326, %v7400
    %v7402 = vpop.f32.mrf.mxu0
    %7403 = vdwg.mxu0
    %v7404 = vld [vmem:[%s16] sm:$0x1]
    %v7406 = vlaneseq
    %v7407 = vshrl.u32 %v7406, 7
    %v7408 = vsub.s32 0, %v7407
    %v7409 = vrot.slane %v7404, %v7408
    %v7411 = vadd.f32 %v7401, %v7409
    %vm7412 = vcmp.ge.f32.partialorder %v7411, 0.0
    %v7413 = vmul.f32 %v7411, 0.01
    %v7414 = vsel %vm7412, %v7411, %v7413
    %v7415 = vld [vmem:[%s17] sm:$0xff]
    %v7416 = vld [vmem:[%s17 + $0x8] sm:$0xff]
    %v7417 = vld [vmem:[%s17 + $0x10] sm:$0xff]
    %v7418 = vld [vmem:[%s17 + $0x18] sm:$0xff]
    %v7419 = vld [vmem:[#allocation2] sm:$0x1]
    %v7421 = vlaneseq
    %v7422 = vshrl.u32 %v7421, 7
    %v7423 = vsub.s32 0, %v7422
    %v7424 = vrot.slane %v7419, %v7423
    %v7427 = vsel %vm176, %v7414, 0
    %7429 = vmatprep.subr.mxu0 0.0
    %7430 = vmatpush1.msra.mxu0 0.0
    %7431 = vmatprep.subr.mxu0 0.0
    %7432 = vmatpush1.msra.mxu0 0.0
    %7433 = vmatprep.subr.mxu0 0.0
    %7434 = vmatpush1.msra.mxu0 0.0
    %7435 = vmatprep.subr.mxu0 0.0
    %7436 = vmatpush1.msra.mxu0 0.0
    %7437 = vmatprep.subr.mxu0 0.0
    %7438 = vmatpush1.msra.mxu0 0.0
    %7439 = vmatprep.subr.mxu0 0.0
    %7440 = vmatpush1.msra.mxu0 0.0
    %7441 = vmatprep.subr.mxu0 0.0
    %7442 = vmatpush1.msra.mxu0 0.0
    %7443 = vmatprep.subr.mxu0 0.0
    %7444 = vmatpush1.msra.mxu0 0.0
    %7445 = vmatprep.subr.mxu0 0.0
    %7446 = vmatpush1.msra.mxu0 0.0
    %7447 = vmatprep.subr.mxu0 0.0
    %7448 = vmatpush1.msra.mxu0 0.0
    %7449 = vmatprep.subr.mxu0 0.0
    %7450 = vmatpush1.msra.mxu0 0.0
    %7451 = vmatprep.subr.mxu0 0.0
    %7452 = vmatpush1.msra.mxu0 0.0
    %7453 = vmatprep.subr.mxu0 0.0
    %7454 = vmatpush1.msra.mxu0 %v7418
    %7455 = vmatprep.subr.mxu0 0.0
    %7456 = vmatpush1.msra.mxu0 %v7417
    %7457 = vmatprep.subr.mxu0 0.0
    %7458 = vmatpush1.msra.mxu0 %v7416
    %7459 = vmatprep.subr.mxu0 0.0
    %7460 = vmatpush1.msra.mxu0 %v7415
    %7461 = vmatprep.subr.mxu0 0.0
    %7462 = vmatpush2.msra.mxu0 0.0
    %7463 = vmatprep.subr.mxu0 0.0
    %7464 = vmatpush2.msra.mxu0 0.0
    %7465 = vmatprep.subr.mxu0 0.0
    %7466 = vmatpush2.msra.mxu0 0.0
    %7467 = vmatprep.subr.mxu0 0.0
    %7468 = vmatpush2.msra.mxu0 0.0
    %7469 = vmatprep.subr.mxu0 0.0
    %7470 = vmatpush2.msra.mxu0 0.0
    %7471 = vmatprep.subr.mxu0 0.0
    %7472 = vmatpush2.msra.mxu0 0.0
    %7473 = vmatprep.subr.mxu0 0.0
    %7474 = vmatpush2.msra.mxu0 0.0
    %7475 = vmatprep.subr.mxu0 0.0
    %7476 = vmatpush2.msra.mxu0 0.0
    %7477 = vmatprep.subr.mxu0 0.0
    %7478 = vmatpush2.msra.mxu0 0.0
    %7479 = vmatprep.subr.mxu0 0.0
    %7480 = vmatpush2.msra.mxu0 0.0
    %7481 = vmatprep.subr.mxu0 0.0
    %7482 = vmatpush2.msra.mxu0 0.0
    %7483 = vmatprep.subr.mxu0 0.0
    %7484 = vmatpush2.msra.mxu0 0.0
    %7485 = vmatprep.subr.mxu0 0.0
    %7486 = vmatpush2.msra.mxu0 0.0
    %7487 = vmatprep.subr.mxu0 0.0
    %7488 = vmatpush2.msra.mxu0 0.0
    %7489 = vmatprep.subr.mxu0 0.0
    %7490 = vmatpush2.msra.mxu0 0.0
    %7491 = vmatprep.subr.mxu0 0.0
    %7492 = vmatpush2.msra.mxu0 0.0
    %7493 = vmatprep.mubr.f32.mxu0 0.0
    %7494 = vmatmul.mubr.f32.gmra.mxu0 %v7427
    %v7495 = vpop.f32.mrf.mxu0
    %v7496 = vadd.f32 %v7424, %v7495
    %v7497 = vpop.f32.mrf.mxu0
    %7498 = vdwg.mxu0
    %v7499 = vxor.u32 %v7496, 2147483648
    %v7500 = vmul.f32 %v7499, 1.442695
    %v7501 = vpow.pop %v7500
    %v7502 = vadd.f32 %v7501, 1.0
    %v7503 = vrcp.pop %v7502
    %v7504 = vmul.f32 1.0, %v7503
    %vm7505 = vcmask 3072
    %7506 = vst.msk [vmem:[%s19] sm:$0xf] %vm7505, %v7504
    // Predicated region
    $region98: #{forward.1} parent=1 // pred_check
      _
    $region99: #{forward.1} parent=1 // pred_check_branch
      %7508 = sbr.rel (0) target = $region101
    $region100: #{forward.1} parent=1 // pred_region
      _
    $region101: #{forward.1} parent=1 // pred_fallthru
      _
    // Predicated region
    $region102: #{forward.1} parent=1 // pred_check
      _
    $region103: #{forward.1} parent=1 // pred_check_branch
      %7510 = sbr.rel (0) target = $region105
    $region104: #{forward.1} parent=1 // pred_region
      _
    $region105: #{forward.1} parent=1 // pred_fallthru
      _
    %7511 = vsyncpa [#allocation4], 1
    %7512 = vsyncpa [#allocation6], 1
    %7513 = vsyncpa [#allocation9], 1

</llo_original>
